<compile_context>
chip_gen: v7x
topology: tpu7x:2x2x1
jax: 0.10.0
libtpu: 0.0.40
codegen_flags: <defaults>
</compile_context>

<pallas_src>
import functools

import jax
import jax.numpy as jnp
from jax.experimental import pallas as pl
from jax.experimental.pallas import tpu as pltpu

NUM_HIDDEN_LAYERS = 5   # matches ClassifierMLP(layers=5)
LANE = 128
NEG_INF = -1e30         # bias for padded classes -> exp() == 0 in softmax
MAX_TILE = 2048         # single-TC sweet spot; >=1024 is ~roofline, diminishing after


def _round_up(n, m):
    return ((n + m - 1) // m) * m


def _cdiv(a, b):
    return -(-a // b)


def _num_tensorcores_per_chip():
    """Best-effort count of TensorCores sharing one Pallas grid (megacore)."""
    try:
        kind = jax.devices()[0].device_kind.lower()
    except Exception:
        return 1
    # v4 / v7x expose 2 TensorCores per device; v5e / v6e have 1.
    return 2 if ("v7" in kind or "v4" in kind) else 1


def _mlp_kernel(x_ref, w_in_ref, b_in_ref, w_h_ref, b_h_ref, w_out_ref,
                b_out_ref, out_ref, *, num_classes):
    cdt = w_in_ref.dtype  # matmul-input dtype (bf16 by default, MXU-native)

    # input layer + ReLU (MXU accumulates in f32; bias/ReLU in f32 on the VPU)
    h = jnp.dot(x_ref[...].astype(cdt), w_in_ref[...],
                preferred_element_type=jnp.float32) + b_in_ref[...]
    h = jnp.maximum(h, 0.0)

    # hidden layers + ReLU, statically unrolled over the packed weight slab
    for i in range(NUM_HIDDEN_LAYERS):
        h = jnp.dot(h.astype(cdt), w_h_ref[i],
                    preferred_element_type=jnp.float32) + b_h_ref[i]
        h = jnp.maximum(h, 0.0)

    # output linear (padded class columns: zero weights and -1e30 bias)
    logits = jnp.dot(h.astype(cdt), w_out_ref[...],
                     preferred_element_type=jnp.float32) + b_out_ref[...]

    # numerically stable softmax over the lane-dense (padded) class dim;
    # padded lanes underflow to exactly 0 after exp
    m = jnp.max(logits, axis=-1, keepdims=True)
    e = jnp.exp(logits - m)
    denom = jnp.sum(e, axis=-1, keepdims=True)
    probs = e * pl.reciprocal(denom, approx=False)

    # narrow store: only the real class columns go back to HBM
    out_ref[...] = probs[:, :num_classes]


def pack_params(params, compute_dtype=jnp.bfloat16):
    """Pad + pack the flat [W, b, W, b, ...] list (W:[in,out], b:[1,out]) into
    lane-dense slabs: w_in, b_in, w_hidden[L,H,H], b_hidden[L,1,H], w_out, b_out.
    Weights are cast to `compute_dtype` (MXU inputs); biases stay f32."""
    n_pairs = len(params) // 2
    ws = [params[2 * i] for i in range(n_pairs)]
    bs = [params[2 * i + 1] for i in range(n_pairs)]
    input_dim, hidden = ws[0].shape
    num_classes = ws[-1].shape[-1]
    h_pad = _round_up(hidden, LANE)
    c_pad = _round_up(num_classes, LANE)

    def pad2(a, rows, cols):
        return jnp.pad(a, ((0, rows - a.shape[0]), (0, cols - a.shape[1])))

    w_in = pad2(ws[0], input_dim, h_pad).astype(compute_dtype)
    b_in = pad2(bs[0], 1, h_pad)                                            # f32
    w_h = jnp.stack([pad2(w, h_pad, h_pad) for w in ws[1:-1]]).astype(compute_dtype)
    b_h = jnp.stack([pad2(b, 1, h_pad) for b in bs[1:-1]])                  # f32
    w_out = pad2(ws[-1], h_pad, c_pad).astype(compute_dtype)
    # padded classes get a hugely negative bias so softmax gives them prob 0
    b_out = jnp.pad(bs[-1], ((0, 0), (0, c_pad - num_classes)),
                    constant_values=NEG_INF)                                # f32
    return (w_in, b_in, w_h, b_h, w_out, b_out), h_pad, c_pad


def classifier_mlp_forward(x, params, *, compute_dtype=jnp.bfloat16):
    """x: [batch, input_dim] float32. params: flat [W, b, ...] with W in
    [in, out] layout, b in [1, out]. Returns softmax probs [batch, num_classes]."""
    batch, input_dim = x.shape
    num_classes = params[-1].shape[-1]
    (w_in, b_in, w_h, b_h, w_out, b_out), h_pad, c_pad = pack_params(
        params, compute_dtype)
    n_hidden = w_h.shape[0]

    # Generation-aware tiling: single-TC chips (v5e/v6e) want the largest tile
    # (fewest ~0.35us grid steps); megacore chips (v4/v7x) want the tile count
    # to be a multiple of the TensorCore count so neither core idles.
    n_tc = _num_tensorcores_per_chip()
    batch_r = _round_up(batch, 8)
    n_tiles = max(n_tc, _cdiv(batch_r, MAX_TILE))
    n_tiles = _round_up(n_tiles, n_tc)
    batch_tile = _round_up(_cdiv(batch_r, n_tiles), 8)
    batch_pad = batch_tile * n_tiles
    if batch_pad != batch:
        # TODO(synk): a masked last-tile store would avoid this (small) pad copy
        # for ragged batches; at most 8*n_tiles-1 extra rows with this tiling.
        x = jnp.pad(x, ((0, batch_pad - batch), (0, 0)))
    grid = (n_tiles,)

    flops = 2 * batch_pad * (input_dim * h_pad
                             + n_hidden * h_pad * h_pad
                             + h_pad * c_pad)
    weight_bytes = sum(int(a.size) * a.dtype.itemsize
                       for a in (w_in, b_in, w_h, b_h, w_out, b_out))
    bytes_accessed = (4 * batch_pad * input_dim          # x in
                      + 4 * batch_pad * num_classes      # narrow probs out
                      + weight_bytes)
    cost = pl.CostEstimate(flops=flops,
                           transcendentals=batch_pad * c_pad,
                           bytes_accessed=bytes_accessed)

    kernel = functools.partial(_mlp_kernel, num_classes=num_classes)

    out = pl.pallas_call(
        kernel,
        out_shape=jax.ShapeDtypeStruct((batch_pad, num_classes), jnp.float32),
        grid_spec=pltpu.PrefetchScalarGridSpec(
            num_scalar_prefetch=0,
            grid=grid,
            in_specs=[
                pl.BlockSpec((batch_tile, input_dim), lambda i: (i, 0)),
                pl.BlockSpec(w_in.shape, lambda i: (0, 0)),
                pl.BlockSpec(b_in.shape, lambda i: (0, 0)),
                pl.BlockSpec(w_h.shape, lambda i: (0, 0, 0)),
                pl.BlockSpec(b_h.shape, lambda i: (0, 0, 0)),
                pl.BlockSpec(w_out.shape, lambda i: (0, 0)),
                pl.BlockSpec(b_out.shape, lambda i: (0, 0)),
            ],
            out_specs=pl.BlockSpec((batch_tile, num_classes), lambda i: (i, 0)),
        ),
        compiler_params=pltpu.CompilerParams(
            dimension_semantics=("parallel",),   # batch axis -> megacore shard
            # Working set is ~a few MB even at tile=2048; 32 MiB is ample
            # headroom on every generation (v7x VMEM is 64 MiB).
            vmem_limit_bytes=32 * 1024 * 1024,
        ),
        cost_estimate=cost,
    )(x, w_in, b_in, w_h, b_h, w_out, b_out)

    # only batch padding (if any) needs slicing; classes are already narrow
    return out[:batch] if batch_pad != batch else out


def init_params(key, input_dim, num_classes, hidden_dim=25, layers=NUM_HIDDEN_LAYERS):
    """Deterministic init mimicking nn.Linear default U(-1/sqrt(fan_in), 1/sqrt(fan_in)).
    Weights returned in [in, out] layout, biases as [1, out]."""
    dims = [(input_dim, hidden_dim)]
    dims += [(hidden_dim, hidden_dim)] * layers
    dims += [(hidden_dim, num_classes)]

    params = []
    for (fan_in, fan_out) in dims:
        key, kw, kb = jax.random.split(key, 3)
        bound = 1.0 / jnp.sqrt(float(fan_in))
        w = jax.random.uniform(kw, (fan_in, fan_out), jnp.float32, -bound, bound)
        b = jax.random.uniform(kb, (1, fan_out), jnp.float32, -bound, bound)
        params.extend([w, b])
    return params


def reference_forward(x, params):
    """Pure-JAX f32 reference of the same forward pass."""
    h = x
    n_pairs = len(params) // 2
    for idx in range(n_pairs):
        w, b = params[2 * idx], params[2 * idx + 1]
        h = h @ w + b
        if idx < n_pairs - 1:
            h = jnp.maximum(h, 0.0)
    return jax.nn.softmax(h, axis=-1)


if __name__ == "__main__":
    key = jax.random.PRNGKey(0)
    k_x, k_p = jax.random.split(key)

    # model dims per the module (hidden_dim=25, 5 hidden layers, 3 classes)
    batch, input_dim, num_classes, hidden_dim = 1024, 16, 3, 25
    x = jax.random.normal(k_x, (batch, input_dim), dtype=jnp.float32)
    params = init_params(k_p, input_dim, num_classes, hidden_dim)

    out = classifier_mlp_forward(x, params)
    out = jax.block_until_ready(out)

    ref = reference_forward(x, params)
    assert out.shape == (batch, num_classes)
    # bf16 MXU inputs -> loosened tolerance vs the f32 reference
    assert jnp.allclose(out, ref, atol=2e-2), "mismatch vs reference"
    assert jnp.allclose(jnp.sum(out, axis=-1), 1.0, atol=1e-5), "softmax rows must sum to 1"

    print("KERNEL_OK")
</pallas_src>

<mosaic_0001>
module attributes {stable_mosaic.version = 11 : i64} {
  func.func @_mlp_kernel(%arg0: i32, %arg1: memref<1024x16xf32, #tpu.memory_space<vmem>>, %arg2: memref<16x128xbf16, #tpu.memory_space<vmem>>, %arg3: memref<1x128xf32, #tpu.memory_space<vmem>>, %arg4: memref<5x128x128xbf16, #tpu.memory_space<vmem>>, %arg5: memref<5x1x128xf32, #tpu.memory_space<vmem>>, %arg6: memref<128x128xbf16, #tpu.memory_space<vmem>>, %arg7: memref<1x128xf32, #tpu.memory_space<vmem>>, %arg8: memref<1024x3xf32, #tpu.memory_space<vmem>>) attributes {dimension_semantics = [#tpu.dimension_semantics<parallel>], iteration_bounds = array<i64: 1>, scalar_prefetch = 0 : i64, scratch_operands = 0 : i64, tpu.core_type = #tpu.core_type<tc>, window_params = [{transform_indices = @transform_0, window_bounds = array<i64: 1024, 16>}, {pipeline_mode = #tpu.pipeline_mode<synchronous>, transform_indices = @transform_1, window_bounds = array<i64: 16, 128>}, {pipeline_mode = #tpu.pipeline_mode<synchronous>, transform_indices = @transform_2, window_bounds = array<i64: 1, 128>}, {pipeline_mode = #tpu.pipeline_mode<synchronous>, transform_indices = @transform_3, window_bounds = array<i64: 5, 128, 128>}, {pipeline_mode = #tpu.pipeline_mode<synchronous>, transform_indices = @transform_4, window_bounds = array<i64: 5, 1, 128>}, {pipeline_mode = #tpu.pipeline_mode<synchronous>, transform_indices = @transform_5, window_bounds = array<i64: 128, 128>}, {pipeline_mode = #tpu.pipeline_mode<synchronous>, transform_indices = @transform_6, window_bounds = array<i64: 1, 128>}, {transform_indices = @transform_7, window_bounds = array<i64: 1024, 3>}]} {
    %c0 = arith.constant 0 : index
    %c0_0 = arith.constant 0 : index
    %0 = vector.load %arg1[%c0, %c0_0] : memref<1024x16xf32, #tpu.memory_space<vmem>>, vector<1024x16xf32>
    %1 = arith.truncf %0 : vector<1024x16xf32> to vector<1024x16xbf16>
    %c0_1 = arith.constant 0 : index
    %c0_2 = arith.constant 0 : index
    %2 = vector.load %arg2[%c0_1, %c0_2] : memref<16x128xbf16, #tpu.memory_space<vmem>>, vector<16x128xbf16>
    %cst = arith.constant dense<0.000000e+00> : vector<1024x128xf32>
    %3 = tpu.matmul %1, %2, %cst {dimension_numbers = #tpu.dot_dimension_numbers<[1], [0], [0], [1], [0, 0, 1, 1], [], []>} : vector<1024x16xbf16>, vector<16x128xbf16>, vector<1024x128xf32> -> vector<1024x128xf32>
    %c0_3 = arith.constant 0 : index
    %c0_4 = arith.constant 0 : index
    %4 = vector.load %arg3[%c0_3, %c0_4] : memref<1x128xf32, #tpu.memory_space<vmem>>, vector<1x128xf32>
    %5 = vector.broadcast %4 : vector<1x128xf32> to vector<1024x128xf32>
    %6 = arith.addf %3, %5 : vector<1024x128xf32>
    %cst_5 = arith.constant 0.000000e+00 : f32
    %7 = vector.broadcast %cst_5 : f32 to vector<1024x128xf32>
    %8 = arith.maximumf %6, %7 : vector<1024x128xf32>
    %9 = arith.truncf %8 : vector<1024x128xf32> to vector<1024x128xbf16>
    %c0_6 = arith.constant 0 : index
    %c0_7 = arith.constant 0 : index
    %c0_8 = arith.constant 0 : index
    %10 = vector.load %arg4[%c0_6, %c0_7, %c0_8] : memref<5x128x128xbf16, #tpu.memory_space<vmem>>, vector<1x128x128xbf16>
    %11 = vector.shape_cast %10 : vector<1x128x128xbf16> to vector<128x128xbf16>
    %cst_9 = arith.constant dense<0.000000e+00> : vector<1024x128xf32>
    %12 = tpu.matmul %9, %11, %cst_9 {dimension_numbers = #tpu.dot_dimension_numbers<[1], [0], [0], [1], [0, 0, 1, 1], [], []>} : vector<1024x128xbf16>, vector<128x128xbf16>, vector<1024x128xf32> -> vector<1024x128xf32>
    %c0_10 = arith.constant 0 : index
    %c0_11 = arith.constant 0 : index
    %c0_12 = arith.constant 0 : index
    %13 = vector.load %arg5[%c0_10, %c0_11, %c0_12] : memref<5x1x128xf32, #tpu.memory_space<vmem>>, vector<1x1x128xf32>
    %14 = vector.shape_cast %13 : vector<1x1x128xf32> to vector<1x128xf32>
    %15 = vector.broadcast %14 : vector<1x128xf32> to vector<1024x128xf32>
    %16 = arith.addf %12, %15 : vector<1024x128xf32>
    %cst_13 = arith.constant 0.000000e+00 : f32
    %17 = vector.broadcast %cst_13 : f32 to vector<1024x128xf32>
    %18 = arith.maximumf %16, %17 : vector<1024x128xf32>
    %19 = arith.truncf %18 : vector<1024x128xf32> to vector<1024x128xbf16>
    %c1 = arith.constant 1 : index
    %c0_14 = arith.constant 0 : index
    %c0_15 = arith.constant 0 : index
    %20 = vector.load %arg4[%c1, %c0_14, %c0_15] : memref<5x128x128xbf16, #tpu.memory_space<vmem>>, vector<1x128x128xbf16>
    %21 = vector.shape_cast %20 : vector<1x128x128xbf16> to vector<128x128xbf16>
    %cst_16 = arith.constant dense<0.000000e+00> : vector<1024x128xf32>
    %22 = tpu.matmul %19, %21, %cst_16 {dimension_numbers = #tpu.dot_dimension_numbers<[1], [0], [0], [1], [0, 0, 1, 1], [], []>} : vector<1024x128xbf16>, vector<128x128xbf16>, vector<1024x128xf32> -> vector<1024x128xf32>
    %c1_17 = arith.constant 1 : index
    %c0_18 = arith.constant 0 : index
    %c0_19 = arith.constant 0 : index
    %23 = vector.load %arg5[%c1_17, %c0_18, %c0_19] : memref<5x1x128xf32, #tpu.memory_space<vmem>>, vector<1x1x128xf32>
    %24 = vector.shape_cast %23 : vector<1x1x128xf32> to vector<1x128xf32>
    %25 = vector.broadcast %24 : vector<1x128xf32> to vector<1024x128xf32>
    %26 = arith.addf %22, %25 : vector<1024x128xf32>
    %cst_20 = arith.constant 0.000000e+00 : f32
    %27 = vector.broadcast %cst_20 : f32 to vector<1024x128xf32>
    %28 = arith.maximumf %26, %27 : vector<1024x128xf32>
    %29 = arith.truncf %28 : vector<1024x128xf32> to vector<1024x128xbf16>
    %c2 = arith.constant 2 : index
    %c0_21 = arith.constant 0 : index
    %c0_22 = arith.constant 0 : index
    %30 = vector.load %arg4[%c2, %c0_21, %c0_22] : memref<5x128x128xbf16, #tpu.memory_space<vmem>>, vector<1x128x128xbf16>
    %31 = vector.shape_cast %30 : vector<1x128x128xbf16> to vector<128x128xbf16>
    %cst_23 = arith.constant dense<0.000000e+00> : vector<1024x128xf32>
    %32 = tpu.matmul %29, %31, %cst_23 {dimension_numbers = #tpu.dot_dimension_numbers<[1], [0], [0], [1], [0, 0, 1, 1], [], []>} : vector<1024x128xbf16>, vector<128x128xbf16>, vector<1024x128xf32> -> vector<1024x128xf32>
    %c2_24 = arith.constant 2 : index
    %c0_25 = arith.constant 0 : index
    %c0_26 = arith.constant 0 : index
    %33 = vector.load %arg5[%c2_24, %c0_25, %c0_26] : memref<5x1x128xf32, #tpu.memory_space<vmem>>, vector<1x1x128xf32>
    %34 = vector.shape_cast %33 : vector<1x1x128xf32> to vector<1x128xf32>
    %35 = vector.broadcast %34 : vector<1x128xf32> to vector<1024x128xf32>
    %36 = arith.addf %32, %35 : vector<1024x128xf32>
    %cst_27 = arith.constant 0.000000e+00 : f32
    %37 = vector.broadcast %cst_27 : f32 to vector<1024x128xf32>
    %38 = arith.maximumf %36, %37 : vector<1024x128xf32>
    %39 = arith.truncf %38 : vector<1024x128xf32> to vector<1024x128xbf16>
    %c3 = arith.constant 3 : index
    %c0_28 = arith.constant 0 : index
    %c0_29 = arith.constant 0 : index
    %40 = vector.load %arg4[%c3, %c0_28, %c0_29] : memref<5x128x128xbf16, #tpu.memory_space<vmem>>, vector<1x128x128xbf16>
    %41 = vector.shape_cast %40 : vector<1x128x128xbf16> to vector<128x128xbf16>
    %cst_30 = arith.constant dense<0.000000e+00> : vector<1024x128xf32>
    %42 = tpu.matmul %39, %41, %cst_30 {dimension_numbers = #tpu.dot_dimension_numbers<[1], [0], [0], [1], [0, 0, 1, 1], [], []>} : vector<1024x128xbf16>, vector<128x128xbf16>, vector<1024x128xf32> -> vector<1024x128xf32>
    %c3_31 = arith.constant 3 : index
    %c0_32 = arith.constant 0 : index
    %c0_33 = arith.constant 0 : index
    %43 = vector.load %arg5[%c3_31, %c0_32, %c0_33] : memref<5x1x128xf32, #tpu.memory_space<vmem>>, vector<1x1x128xf32>
    %44 = vector.shape_cast %43 : vector<1x1x128xf32> to vector<1x128xf32>
    %45 = vector.broadcast %44 : vector<1x128xf32> to vector<1024x128xf32>
    %46 = arith.addf %42, %45 : vector<1024x128xf32>
    %cst_34 = arith.constant 0.000000e+00 : f32
    %47 = vector.broadcast %cst_34 : f32 to vector<1024x128xf32>
    %48 = arith.maximumf %46, %47 : vector<1024x128xf32>
    %49 = arith.truncf %48 : vector<1024x128xf32> to vector<1024x128xbf16>
    %c4 = arith.constant 4 : index
    %c0_35 = arith.constant 0 : index
    %c0_36 = arith.constant 0 : index
    %50 = vector.load %arg4[%c4, %c0_35, %c0_36] : memref<5x128x128xbf16, #tpu.memory_space<vmem>>, vector<1x128x128xbf16>
    %51 = vector.shape_cast %50 : vector<1x128x128xbf16> to vector<128x128xbf16>
    %cst_37 = arith.constant dense<0.000000e+00> : vector<1024x128xf32>
    %52 = tpu.matmul %49, %51, %cst_37 {dimension_numbers = #tpu.dot_dimension_numbers<[1], [0], [0], [1], [0, 0, 1, 1], [], []>} : vector<1024x128xbf16>, vector<128x128xbf16>, vector<1024x128xf32> -> vector<1024x128xf32>
    %c4_38 = arith.constant 4 : index
    %c0_39 = arith.constant 0 : index
    %c0_40 = arith.constant 0 : index
    %53 = vector.load %arg5[%c4_38, %c0_39, %c0_40] : memref<5x1x128xf32, #tpu.memory_space<vmem>>, vector<1x1x128xf32>
    %54 = vector.shape_cast %53 : vector<1x1x128xf32> to vector<1x128xf32>
    %55 = vector.broadcast %54 : vector<1x128xf32> to vector<1024x128xf32>
    %56 = arith.addf %52, %55 : vector<1024x128xf32>
    %cst_41 = arith.constant 0.000000e+00 : f32
    %57 = vector.broadcast %cst_41 : f32 to vector<1024x128xf32>
    %58 = arith.maximumf %56, %57 : vector<1024x128xf32>
    %59 = arith.truncf %58 : vector<1024x128xf32> to vector<1024x128xbf16>
    %c0_42 = arith.constant 0 : index
    %c0_43 = arith.constant 0 : index
    %60 = vector.load %arg6[%c0_42, %c0_43] : memref<128x128xbf16, #tpu.memory_space<vmem>>, vector<128x128xbf16>
    %cst_44 = arith.constant dense<0.000000e+00> : vector<1024x128xf32>
    %61 = tpu.matmul %59, %60, %cst_44 {dimension_numbers = #tpu.dot_dimension_numbers<[1], [0], [0], [1], [0, 0, 1, 1], [], []>} : vector<1024x128xbf16>, vector<128x128xbf16>, vector<1024x128xf32> -> vector<1024x128xf32>
    %c0_45 = arith.constant 0 : index
    %c0_46 = arith.constant 0 : index
    %62 = vector.load %arg7[%c0_45, %c0_46] : memref<1x128xf32, #tpu.memory_space<vmem>>, vector<1x128xf32>
    %63 = vector.broadcast %62 : vector<1x128xf32> to vector<1024x128xf32>
    %64 = arith.addf %61, %63 : vector<1024x128xf32>
    %cst_47 = arith.constant dense<0xFF800000> : vector<1024xf32>
    %65 = vector.multi_reduction <maximumf>, %64, %cst_47 [1] : vector<1024x128xf32> to vector<1024xf32>
    %66 = vector.shape_cast %65 : vector<1024xf32> to vector<1024x1xf32>
    %67 = vector.broadcast %66 : vector<1024x1xf32> to vector<1024x128xf32>
    %68 = arith.subf %64, %67 : vector<1024x128xf32>
    %69 = math.exp %68 : vector<1024x128xf32>
    %cst_48 = arith.constant dense<0.000000e+00> : vector<1024xf32>
    %70 = vector.multi_reduction <add>, %69, %cst_48 [1] : vector<1024x128xf32> to vector<1024xf32>
    %71 = vector.shape_cast %70 : vector<1024xf32> to vector<1024x1xf32>
    %72 = tpu.reciprocal %71 : vector<1024x1xf32> -> vector<1024x1xf32>
    %73 = vector.broadcast %72 : vector<1024x1xf32> to vector<1024x128xf32>
    %74 = arith.mulf %69, %73 : vector<1024x128xf32>
    %75 = vector.extract_strided_slice %74 {offsets = [0, 0], sizes = [1024, 3], strides = [1, 1]} : vector<1024x128xf32> to vector<1024x3xf32>
    %c0_49 = arith.constant 0 : index
    %c0_50 = arith.constant 0 : index
    %76 = vector.load %arg8[%c0_49, %c0_50] : memref<1024x3xf32, #tpu.memory_space<vmem>>, vector<1024x3xf32>
    tpu.vector_store %arg8[%c0_49, %c0_50], %75 {strides = array<i32>} : memref<1024x3xf32, #tpu.memory_space<vmem>>, vector<1024x3xf32>,
    return
  }
  func.func @transform_0(%arg0: i32) -> (i32, i32) {
    %c0_i32 = arith.constant 0 : i32
    %c0_i32_0 = arith.constant 0 : i32
    return %arg0, %c0_i32 : i32, i32
  }
  func.func @transform_1(%arg0: i32) -> (i32, i32) {
    %c0_i32 = arith.constant 0 : i32
    %c0_i32_0 = arith.constant 0 : i32
    %c0_i32_1 = arith.constant 0 : i32
    return %c0_i32, %c0_i32_0 : i32, i32
  }
  func.func @transform_2(%arg0: i32) -> (i32, i32) {
    %c0_i32 = arith.constant 0 : i32
    %c0_i32_0 = arith.constant 0 : i32
    %c0_i32_1 = arith.constant 0 : i32
    return %c0_i32, %c0_i32_0 : i32, i32
  }
  func.func @transform_3(%arg0: i32) -> (i32, i32, i32) {
    %c0_i32 = arith.constant 0 : i32
    %c0_i32_0 = arith.constant 0 : i32
    %c0_i32_1 = arith.constant 0 : i32
    %c0_i32_2 = arith.constant 0 : i32
    return %c0_i32, %c0_i32_0, %c0_i32_1 : i32, i32, i32
  }
  func.func @transform_4(%arg0: i32) -> (i32, i32, i32) {
    %c0_i32 = arith.constant 0 : i32
    %c0_i32_0 = arith.constant 0 : i32
    %c0_i32_1 = arith.constant 0 : i32
    %c0_i32_2 = arith.constant 0 : i32
    return %c0_i32, %c0_i32_0, %c0_i32_1 : i32, i32, i32
  }
  func.func @transform_5(%arg0: i32) -> (i32, i32) {
    %c0_i32 = arith.constant 0 : i32
    %c0_i32_0 = arith.constant 0 : i32
    %c0_i32_1 = arith.constant 0 : i32
    return %c0_i32, %c0_i32_0 : i32, i32
  }
  func.func @transform_6(%arg0: i32) -> (i32, i32) {
    %c0_i32 = arith.constant 0 : i32
    %c0_i32_0 = arith.constant 0 : i32
    %c0_i32_1 = arith.constant 0 : i32
    return %c0_i32, %c0_i32_0 : i32, i32
  }
  func.func @transform_7(%arg0: i32) -> (i32, i32) {
    %c0_i32 = arith.constant 0 : i32
    %c0_i32_0 = arith.constant 0 : i32
    return %arg0, %c0_i32 : i32, i32
  }
}

</mosaic_0001>

<llo_original>
// kernel: tpu_custom_call.1
$region0: #{tpu_custom_call.1}
  #allocation0 [shape = 'u32[]', space=smem, size = 0x4, offset = 0x4, fixed_abs, tag = 'smem constant byte address 0x4 - core index']
  #allocation1 [shape = 'u32[144,128]{1,0:T(1,128)}', space=vmem, size = 0x12000, scoped, tag = 'internal scratch']
  %s0 = inlined_call_operand.vmem [shape: f32[1024,16], index: 0, kind: input, shape index: {}]
  %s1 = inlined_call_operand.vmem [shape: bf16[16,128], index: 1, kind: input, shape index: {}]
  %s2 = inlined_call_operand.vmem [shape: f32[1,128], index: 2, kind: input, shape index: {}]
  %s3 = inlined_call_operand.vmem [shape: bf16[5,128,128], index: 3, kind: input, shape index: {}]
  %s4 = inlined_call_operand.vmem [shape: f32[5,1,128], index: 4, kind: input, shape index: {}]
  %s5 = inlined_call_operand.vmem [shape: bf16[128,128], index: 5, kind: input, shape index: {}]
  %s6 = inlined_call_operand.vmem [shape: f32[1,128], index: 6, kind: input, shape index: {}]
  %s7 = inlined_call_operand.vmem [shape: f32[1024,3], index: 7, kind: output, shape index: {}]
  %s8 = sld [smem:[#allocation0]]
  $region38: #{tpu_custom_call.1} parent=0
    _
  %s10 = ssub.s32 1, %s8
  %s11 = scalar_select 0, %s10, %s8
  // Predicated region
  $region2: #{tpu_custom_call.1} parent=0 // pred_check
    _
  $region3: #{tpu_custom_call.1} parent=0 // pred_check_branch
    %13 = sbr.rel (0) target = $region5
  $region4: #{tpu_custom_call.1} parent=0 // pred_region
    _
  $region5: #{tpu_custom_call.1} parent=0 // pred_fallthru
    _
  // Predicated region
  $region6: #{tpu_custom_call.1} parent=0 // pred_check
    _
  $region7: #{tpu_custom_call.1} parent=0 // pred_check_branch
    %15 = sbr.rel (0) target = $region9
  $region8: #{tpu_custom_call.1} parent=0 // pred_region
    _
  $region9: #{tpu_custom_call.1} parent=0 // pred_fallthru
    _
  // Predicated region
  $region10: #{tpu_custom_call.1} parent=0 // pred_check
    _
  $region11: #{tpu_custom_call.1} parent=0 // pred_check_branch
    %17 = sbr.rel (0) target = $region13
  $region12: #{tpu_custom_call.1} parent=0 // pred_region
    _
  $region13: #{tpu_custom_call.1} parent=0 // pred_fallthru
    _
  // Predicated region
  $region14: #{tpu_custom_call.1} parent=0 // pred_check
    _
  $region15: #{tpu_custom_call.1} parent=0 // pred_check_branch
    %19 = sbr.rel (0) target = $region17
  $region16: #{tpu_custom_call.1} parent=0 // pred_region
    _
  $region17: #{tpu_custom_call.1} parent=0 // pred_fallthru
    _
  // Predicated region
  $region18: #{tpu_custom_call.1} parent=0 // pred_check
    _
  $region19: #{tpu_custom_call.1} parent=0 // pred_check_branch
    %21 = sbr.rel (0) target = $region21
  $region20: #{tpu_custom_call.1} parent=0 // pred_region
    _
  $region21: #{tpu_custom_call.1} parent=0 // pred_fallthru
    _
  // Predicated region
  $region22: #{tpu_custom_call.1} parent=0 // pred_check
    _
  $region23: #{tpu_custom_call.1} parent=0 // pred_check_branch
    %23 = sbr.rel (0) target = $region25
  $region24: #{tpu_custom_call.1} parent=0 // pred_region
    _
  $region25: #{tpu_custom_call.1} parent=0 // pred_fallthru
    _
  // Predicated region
  $region26: #{tpu_custom_call.1} parent=0 // pred_check
    _
  $region27: #{tpu_custom_call.1} parent=0 // pred_check_branch
    %25 = sbr.rel (0) target = $region29
  $region28: #{tpu_custom_call.1} parent=0 // pred_region
    _
  $region29: #{tpu_custom_call.1} parent=0 // pred_fallthru
    _
  %v27 = vld [vmem:[%s0] sm:$0xff]
  %v28 = vld [vmem:[%s0 + $0x8] sm:$0xff]
  %v29 = vld [vmem:[%s0 + $0x10] sm:$0xff]
  %v30 = vld [vmem:[%s0 + $0x18] sm:$0xff]
  %v31 = vld [vmem:[%s0 + $0x20] sm:$0xff]
  %v32 = vld [vmem:[%s0 + $0x28] sm:$0xff]
  %v33 = vld [vmem:[%s0 + $0x30] sm:$0xff]
  %v34 = vld [vmem:[%s0 + $0x38] sm:$0xff]
  %v35 = vld [vmem:[%s0 + $0x40] sm:$0xff]
  %v36 = vld [vmem:[%s0 + $0x48] sm:$0xff]
  %v37 = vld [vmem:[%s0 + $0x50] sm:$0xff]
  %v38 = vld [vmem:[%s0 + $0x58] sm:$0xff]
  %v39 = vld [vmem:[%s0 + $0x60] sm:$0xff]
  %v40 = vld [vmem:[%s0 + $0x68] sm:$0xff]
  %v41 = vld [vmem:[%s0 + $0x70] sm:$0xff]
  %v42 = vld [vmem:[%s0 + $0x78] sm:$0xff]
  %v43 = vld [vmem:[%s0 + $0x80] sm:$0xff]
  %v44 = vld [vmem:[%s0 + $0x88] sm:$0xff]
  %v45 = vld [vmem:[%s0 + $0x90] sm:$0xff]
  %v46 = vld [vmem:[%s0 + $0x98] sm:$0xff]
  %v47 = vld [vmem:[%s0 + $0xa0] sm:$0xff]
  %v48 = vld [vmem:[%s0 + $0xa8] sm:$0xff]
  %v49 = vld [vmem:[%s0 + $0xb0] sm:$0xff]
  %v50 = vld [vmem:[%s0 + $0xb8] sm:$0xff]
  %v51 = vld [vmem:[%s0 + $0xc0] sm:$0xff]
  %v52 = vld [vmem:[%s0 + $0xc8] sm:$0xff]
  %v53 = vld [vmem:[%s0 + $0xd0] sm:$0xff]
  %v54 = vld [vmem:[%s0 + $0xd8] sm:$0xff]
  %v55 = vld [vmem:[%s0 + $0xe0] sm:$0xff]
  %v56 = vld [vmem:[%s0 + $0xe8] sm:$0xff]
  %v57 = vld [vmem:[%s0 + $0xf0] sm:$0xff]
  %v58 = vld [vmem:[%s0 + $0xf8] sm:$0xff]
  %v59 = vld [vmem:[%s0 + $0x100] sm:$0xff]
  %v60 = vld [vmem:[%s0 + $0x108] sm:$0xff]
  %v61 = vld [vmem:[%s0 + $0x110] sm:$0xff]
  %v62 = vld [vmem:[%s0 + $0x118] sm:$0xff]
  %v63 = vld [vmem:[%s0 + $0x120] sm:$0xff]
  %v64 = vld [vmem:[%s0 + $0x128] sm:$0xff]
  %v65 = vld [vmem:[%s0 + $0x130] sm:$0xff]
  %v66 = vld [vmem:[%s0 + $0x138] sm:$0xff]
  %v67 = vld [vmem:[%s0 + $0x140] sm:$0xff]
  %v68 = vld [vmem:[%s0 + $0x148] sm:$0xff]
  %v69 = vld [vmem:[%s0 + $0x150] sm:$0xff]
  %v70 = vld [vmem:[%s0 + $0x158] sm:$0xff]
  %v71 = vld [vmem:[%s0 + $0x160] sm:$0xff]
  %v72 = vld [vmem:[%s0 + $0x168] sm:$0xff]
  %v73 = vld [vmem:[%s0 + $0x170] sm:$0xff]
  %v74 = vld [vmem:[%s0 + $0x178] sm:$0xff]
  %v75 = vld [vmem:[%s0 + $0x180] sm:$0xff]
  %v76 = vld [vmem:[%s0 + $0x188] sm:$0xff]
  %v77 = vld [vmem:[%s0 + $0x190] sm:$0xff]
  %v78 = vld [vmem:[%s0 + $0x198] sm:$0xff]
  %v79 = vld [vmem:[%s0 + $0x1a0] sm:$0xff]
  %v80 = vld [vmem:[%s0 + $0x1a8] sm:$0xff]
  %v81 = vld [vmem:[%s0 + $0x1b0] sm:$0xff]
  %v82 = vld [vmem:[%s0 + $0x1b8] sm:$0xff]
  %v83 = vld [vmem:[%s0 + $0x1c0] sm:$0xff]
  %v84 = vld [vmem:[%s0 + $0x1c8] sm:$0xff]
  %v85 = vld [vmem:[%s0 + $0x1d0] sm:$0xff]
  %v86 = vld [vmem:[%s0 + $0x1d8] sm:$0xff]
  %v87 = vld [vmem:[%s0 + $0x1e0] sm:$0xff]
  %v88 = vld [vmem:[%s0 + $0x1e8] sm:$0xff]
  %v89 = vld [vmem:[%s0 + $0x1f0] sm:$0xff]
  %v90 = vld [vmem:[%s0 + $0x1f8] sm:$0xff]
  %v91 = vld [vmem:[%s0 + $0x200] sm:$0xff]
  %v92 = vld [vmem:[%s0 + $0x208] sm:$0xff]
  %v93 = vld [vmem:[%s0 + $0x210] sm:$0xff]
  %v94 = vld [vmem:[%s0 + $0x218] sm:$0xff]
  %v95 = vld [vmem:[%s0 + $0x220] sm:$0xff]
  %v96 = vld [vmem:[%s0 + $0x228] sm:$0xff]
  %v97 = vld [vmem:[%s0 + $0x230] sm:$0xff]
  %v98 = vld [vmem:[%s0 + $0x238] sm:$0xff]
  %v99 = vld [vmem:[%s0 + $0x240] sm:$0xff]
  %v100 = vld [vmem:[%s0 + $0x248] sm:$0xff]
  %v101 = vld [vmem:[%s0 + $0x250] sm:$0xff]
  %v102 = vld [vmem:[%s0 + $0x258] sm:$0xff]
  %v103 = vld [vmem:[%s0 + $0x260] sm:$0xff]
  %v104 = vld [vmem:[%s0 + $0x268] sm:$0xff]
  %v105 = vld [vmem:[%s0 + $0x270] sm:$0xff]
  %v106 = vld [vmem:[%s0 + $0x278] sm:$0xff]
  %v107 = vld [vmem:[%s0 + $0x280] sm:$0xff]
  %v108 = vld [vmem:[%s0 + $0x288] sm:$0xff]
  %v109 = vld [vmem:[%s0 + $0x290] sm:$0xff]
  %v110 = vld [vmem:[%s0 + $0x298] sm:$0xff]
  %v111 = vld [vmem:[%s0 + $0x2a0] sm:$0xff]
  %v112 = vld [vmem:[%s0 + $0x2a8] sm:$0xff]
  %v113 = vld [vmem:[%s0 + $0x2b0] sm:$0xff]
  %v114 = vld [vmem:[%s0 + $0x2b8] sm:$0xff]
  %v115 = vld [vmem:[%s0 + $0x2c0] sm:$0xff]
  %v116 = vld [vmem:[%s0 + $0x2c8] sm:$0xff]
  %v117 = vld [vmem:[%s0 + $0x2d0] sm:$0xff]
  %v118 = vld [vmem:[%s0 + $0x2d8] sm:$0xff]
  %v119 = vld [vmem:[%s0 + $0x2e0] sm:$0xff]
  %v120 = vld [vmem:[%s0 + $0x2e8] sm:$0xff]
  %v121 = vld [vmem:[%s0 + $0x2f0] sm:$0xff]
  %v122 = vld [vmem:[%s0 + $0x2f8] sm:$0xff]
  %v123 = vld [vmem:[%s0 + $0x300] sm:$0xff]
  %v124 = vld [vmem:[%s0 + $0x308] sm:$0xff]
  %v125 = vld [vmem:[%s0 + $0x310] sm:$0xff]
  %v126 = vld [vmem:[%s0 + $0x318] sm:$0xff]
  %v127 = vld [vmem:[%s0 + $0x320] sm:$0xff]
  %v128 = vld [vmem:[%s0 + $0x328] sm:$0xff]
  %v129 = vld [vmem:[%s0 + $0x330] sm:$0xff]
  %v130 = vld [vmem:[%s0 + $0x338] sm:$0xff]
  %v131 = vld [vmem:[%s0 + $0x340] sm:$0xff]
  %v132 = vld [vmem:[%s0 + $0x348] sm:$0xff]
  %v133 = vld [vmem:[%s0 + $0x350] sm:$0xff]
  %v134 = vld [vmem:[%s0 + $0x358] sm:$0xff]
  %v135 = vld [vmem:[%s0 + $0x360] sm:$0xff]
  %v136 = vld [vmem:[%s0 + $0x368] sm:$0xff]
  %v137 = vld [vmem:[%s0 + $0x370] sm:$0xff]
  %v138 = vld [vmem:[%s0 + $0x378] sm:$0xff]
  %v139 = vld [vmem:[%s0 + $0x380] sm:$0xff]
  %v140 = vld [vmem:[%s0 + $0x388] sm:$0xff]
  %v141 = vld [vmem:[%s0 + $0x390] sm:$0xff]
  %v142 = vld [vmem:[%s0 + $0x398] sm:$0xff]
  %v143 = vld [vmem:[%s0 + $0x3a0] sm:$0xff]
  %v144 = vld [vmem:[%s0 + $0x3a8] sm:$0xff]
  %v145 = vld [vmem:[%s0 + $0x3b0] sm:$0xff]
  %v146 = vld [vmem:[%s0 + $0x3b8] sm:$0xff]
  %v147 = vld [vmem:[%s0 + $0x3c0] sm:$0xff]
  %v148 = vld [vmem:[%s0 + $0x3c8] sm:$0xff]
  %v149 = vld [vmem:[%s0 + $0x3d0] sm:$0xff]
  %v150 = vld [vmem:[%s0 + $0x3d8] sm:$0xff]
  %v151 = vld [vmem:[%s0 + $0x3e0] sm:$0xff]
  %v152 = vld [vmem:[%s0 + $0x3e8] sm:$0xff]
  %v153 = vld [vmem:[%s0 + $0x3f0] sm:$0xff]
  %v154 = vld [vmem:[%s0 + $0x3f8] sm:$0xff]
  %v155 = vpack.c.bf16 %v28, %v27
  %v156 = vpack.c.bf16 %v30, %v29
  %v157 = vpack.c.bf16 %v32, %v31
  %v158 = vpack.c.bf16 %v34, %v33
  %v159 = vpack.c.bf16 %v36, %v35
  %v160 = vpack.c.bf16 %v38, %v37
  %v161 = vpack.c.bf16 %v40, %v39
  %v162 = vpack.c.bf16 %v42, %v41
  %v163 = vpack.c.bf16 %v44, %v43
  %v164 = vpack.c.bf16 %v46, %v45
  %v165 = vpack.c.bf16 %v48, %v47
  %v166 = vpack.c.bf16 %v50, %v49
  %v167 = vpack.c.bf16 %v52, %v51
  %v168 = vpack.c.bf16 %v54, %v53
  %v169 = vpack.c.bf16 %v56, %v55
  %v170 = vpack.c.bf16 %v58, %v57
  %v171 = vpack.c.bf16 %v60, %v59
  %v172 = vpack.c.bf16 %v62, %v61
  %v173 = vpack.c.bf16 %v64, %v63
  %v174 = vpack.c.bf16 %v66, %v65
  %v175 = vpack.c.bf16 %v68, %v67
  %v176 = vpack.c.bf16 %v70, %v69
  %v177 = vpack.c.bf16 %v72, %v71
  %v178 = vpack.c.bf16 %v74, %v73
  %v179 = vpack.c.bf16 %v76, %v75
  %v180 = vpack.c.bf16 %v78, %v77
  %v181 = vpack.c.bf16 %v80, %v79
  %v182 = vpack.c.bf16 %v82, %v81
  %v183 = vpack.c.bf16 %v84, %v83
  %v184 = vpack.c.bf16 %v86, %v85
  %v185 = vpack.c.bf16 %v88, %v87
  %v186 = vpack.c.bf16 %v90, %v89
  %v187 = vpack.c.bf16 %v92, %v91
  %v188 = vpack.c.bf16 %v94, %v93
  %v189 = vpack.c.bf16 %v96, %v95
  %v190 = vpack.c.bf16 %v98, %v97
  %v191 = vpack.c.bf16 %v100, %v99
  %v192 = vpack.c.bf16 %v102, %v101
  %v193 = vpack.c.bf16 %v104, %v103
  %v194 = vpack.c.bf16 %v106, %v105
  %v195 = vpack.c.bf16 %v108, %v107
  %v196 = vpack.c.bf16 %v110, %v109
  %v197 = vpack.c.bf16 %v112, %v111
  %v198 = vpack.c.bf16 %v114, %v113
  %v199 = vpack.c.bf16 %v116, %v115
  %v200 = vpack.c.bf16 %v118, %v117
  %v201 = vpack.c.bf16 %v120, %v119
  %v202 = vpack.c.bf16 %v122, %v121
  %v203 = vpack.c.bf16 %v124, %v123
  %v204 = vpack.c.bf16 %v126, %v125
  %v205 = vpack.c.bf16 %v128, %v127
  %v206 = vpack.c.bf16 %v130, %v129
  %v207 = vpack.c.bf16 %v132, %v131
  %v208 = vpack.c.bf16 %v134, %v133
  %v209 = vpack.c.bf16 %v136, %v135
  %v210 = vpack.c.bf16 %v138, %v137
  %v211 = vpack.c.bf16 %v140, %v139
  %v212 = vpack.c.bf16 %v142, %v141
  %v213 = vpack.c.bf16 %v144, %v143
  %v214 = vpack.c.bf16 %v146, %v145
  %v215 = vpack.c.bf16 %v148, %v147
  %v216 = vpack.c.bf16 %v150, %v149
  %v217 = vpack.c.bf16 %v152, %v151
  %v218 = vpack.c.bf16 %v154, %v153
  %v219 = vld [vmem:[%s1] sm:$0xf]
  %v220 = vld [vmem:[%s1 + $0x4] sm:$0xf]
  %v221 = vld [vmem:[%s2] sm:$0x1]
  %v223 = vlaneseq
  %v224 = vshrl.u32 %v223, 7
  %v225 = vsub.s32 0, %v224
  %v226 = vrot.slane %v221, %v225
  %v230 = vunpack.c.l.b16 %v219
  %v231 = vunpack.c.l.b16 %v220
  %v232 = vpack.c.b16 %v231, %v230
  %vm234 = vcmask 130048
  %v236 = vsel %vm234, %v155, 0
  %v239 = vsel %vm234, %v156, 0
  %v242 = vsel %vm234, %v157, 0
  %v245 = vsel %vm234, %v158, 0
  %v248 = vsel %vm234, %v159, 0
  %v251 = vsel %vm234, %v160, 0
  %v254 = vsel %vm234, %v161, 0
  %v257 = vsel %vm234, %v162, 0
  %v260 = vsel %vm234, %v163, 0
  %v263 = vsel %vm234, %v164, 0
  %v266 = vsel %vm234, %v165, 0
  %v269 = vsel %vm234, %v166, 0
  %v272 = vsel %vm234, %v167, 0
  %v275 = vsel %vm234, %v168, 0
  %v278 = vsel %vm234, %v169, 0
  %v281 = vsel %vm234, %v170, 0
  %v284 = vsel %vm234, %v171, 0
  %v287 = vsel %vm234, %v172, 0
  %v290 = vsel %vm234, %v173, 0
  %v293 = vsel %vm234, %v174, 0
  %v296 = vsel %vm234, %v175, 0
  %v299 = vsel %vm234, %v176, 0
  %v302 = vsel %vm234, %v177, 0
  %v305 = vsel %vm234, %v178, 0
  %v308 = vsel %vm234, %v179, 0
  %v311 = vsel %vm234, %v180, 0
  %v314 = vsel %vm234, %v181, 0
  %v317 = vsel %vm234, %v182, 0
  %v320 = vsel %vm234, %v183, 0
  %v323 = vsel %vm234, %v184, 0
  %v326 = vsel %vm234, %v185, 0
  %v329 = vsel %vm234, %v186, 0
  %v332 = vsel %vm234, %v187, 0
  %v335 = vsel %vm234, %v188, 0
  %v338 = vsel %vm234, %v189, 0
  %v341 = vsel %vm234, %v190, 0
  %v344 = vsel %vm234, %v191, 0
  %v347 = vsel %vm234, %v192, 0
  %v350 = vsel %vm234, %v193, 0
  %v353 = vsel %vm234, %v194, 0
  %v356 = vsel %vm234, %v195, 0
  %v359 = vsel %vm234, %v196, 0
  %v362 = vsel %vm234, %v197, 0
  %v365 = vsel %vm234, %v198, 0
  %v368 = vsel %vm234, %v199, 0
  %v371 = vsel %vm234, %v200, 0
  %v374 = vsel %vm234, %v201, 0
  %v377 = vsel %vm234, %v202, 0
  %v380 = vsel %vm234, %v203, 0
  %v383 = vsel %vm234, %v204, 0
  %v386 = vsel %vm234, %v205, 0
  %v389 = vsel %vm234, %v206, 0
  %v392 = vsel %vm234, %v207, 0
  %v395 = vsel %vm234, %v208, 0
  %v398 = vsel %vm234, %v209, 0
  %v401 = vsel %vm234, %v210, 0
  %v404 = vsel %vm234, %v211, 0
  %v407 = vsel %vm234, %v212, 0
  %v410 = vsel %vm234, %v213, 0
  %v413 = vsel %vm234, %v214, 0
  %v416 = vsel %vm234, %v215, 0
  %v419 = vsel %vm234, %v216, 0
  %v422 = vsel %vm234, %v217, 0
  %v425 = vsel %vm234, %v218, 0
  %427 = vmatprep.subr.bf16.mxu0 0
  %428 = vmatpush1.bf16.msra.mxu0 %v232
  %429 = vmatprep.subr.bf16.mxu0 0
  %430 = vmatpush1.bf16.msra.mxu0 0
  %431 = vmatprep.subr.bf16.mxu0 0
  %432 = vmatpush1.bf16.msra.mxu0 0
  %433 = vmatprep.subr.bf16.mxu0 0
  %434 = vmatpush1.bf16.msra.mxu0 0
  %435 = vmatprep.subr.bf16.mxu0 0
  %436 = vmatpush1.bf16.msra.mxu0 0
  %437 = vmatprep.subr.bf16.mxu0 0
  %438 = vmatpush1.bf16.msra.mxu0 0
  %439 = vmatprep.subr.bf16.mxu0 0
  %440 = vmatpush1.bf16.msra.mxu0 0
  %441 = vmatprep.subr.bf16.mxu0 0
  %442 = vmatpush1.bf16.msra.mxu0 0
  %443 = vmatprep.subr.bf16.mxu0 0
  %444 = vmatpush1.bf16.msra.mxu0 0
  %445 = vmatprep.subr.bf16.mxu0 0
  %446 = vmatpush1.bf16.msra.mxu0 0
  %447 = vmatprep.subr.bf16.mxu0 0
  %448 = vmatpush1.bf16.msra.mxu0 0
  %449 = vmatprep.subr.bf16.mxu0 0
  %450 = vmatpush1.bf16.msra.mxu0 0
  %451 = vmatprep.subr.bf16.mxu0 0
  %452 = vmatpush1.bf16.msra.mxu0 0
  %453 = vmatprep.subr.bf16.mxu0 0
  %454 = vmatpush1.bf16.msra.mxu0 0
  %455 = vmatprep.subr.bf16.mxu0 0
  %456 = vmatpush1.bf16.msra.mxu0 0
  %457 = vmatprep.subr.bf16.mxu0 0
  %458 = vmatpush1.bf16.msra.mxu0 0
  %459 = vmatprep.mubr.bf16.mxu0 0
  %460 = vmatmul.mubr.bf16.gmra.mrb[0].mxu0 %v236
  %v461 = vpop.f32.mrb[0].mxu0
  %v462 = vadd.f32 %v226, %v461
  %v463 = vpop.f32.mrb[0].mxu0
  %v464 = vpop.f32.mrb[0].mxu0
  %v465 = vadd.f32 %v226, %v464
  %v466 = vpop.f32.mrb[0].mxu0
  %467 = vmatprep.mubr.bf16.mxu0 0
  %468 = vmatmul.mubr.bf16.gmra.mrb[0].mxu0 %v239
  %v469 = vpop.f32.mrb[0].mxu0
  %v470 = vadd.f32 %v226, %v469
  %v471 = vpop.f32.mrb[0].mxu0
  %v472 = vpop.f32.mrb[0].mxu0
  %v473 = vadd.f32 %v226, %v472
  %v474 = vpop.f32.mrb[0].mxu0
  %475 = vmatprep.mubr.bf16.mxu0 0
  %476 = vmatmul.mubr.bf16.gmra.mrb[0].mxu0 %v242
  %v477 = vpop.f32.mrb[0].mxu0
  %v478 = vadd.f32 %v226, %v477
  %v479 = vpop.f32.mrb[0].mxu0
  %v480 = vpop.f32.mrb[0].mxu0
  %v481 = vadd.f32 %v226, %v480
  %v482 = vpop.f32.mrb[0].mxu0
  %483 = vmatprep.mubr.bf16.mxu0 0
  %484 = vmatmul.mubr.bf16.gmra.mrb[0].mxu0 %v245
  %v485 = vpop.f32.mrb[0].mxu0
  %v486 = vadd.f32 %v226, %v485
  %v487 = vpop.f32.mrb[0].mxu0
  %v488 = vpop.f32.mrb[0].mxu0
  %v489 = vadd.f32 %v226, %v488
  %v490 = vpop.f32.mrb[0].mxu0
  %491 = vmatprep.mubr.bf16.mxu0 0
  %492 = vmatmul.mubr.bf16.gmra.mrb[0].mxu0 %v248
  %v493 = vpop.f32.mrb[0].mxu0
  %v494 = vadd.f32 %v226, %v493
  %v495 = vpop.f32.mrb[0].mxu0
  %v496 = vpop.f32.mrb[0].mxu0
  %v497 = vadd.f32 %v226, %v496
  %v498 = vpop.f32.mrb[0].mxu0
  %499 = vmatprep.mubr.bf16.mxu0 0
  %500 = vmatmul.mubr.bf16.gmra.mrb[0].mxu0 %v251
  %v501 = vpop.f32.mrb[0].mxu0
  %v502 = vadd.f32 %v226, %v501
  %v503 = vpop.f32.mrb[0].mxu0
  %v504 = vpop.f32.mrb[0].mxu0
  %v505 = vadd.f32 %v226, %v504
  %v506 = vpop.f32.mrb[0].mxu0
  %507 = vmatprep.mubr.bf16.mxu0 0
  %508 = vmatmul.mubr.bf16.gmra.mrb[0].mxu0 %v254
  %v509 = vpop.f32.mrb[0].mxu0
  %v510 = vadd.f32 %v226, %v509
  %v511 = vpop.f32.mrb[0].mxu0
  %v512 = vpop.f32.mrb[0].mxu0
  %v513 = vadd.f32 %v226, %v512
  %v514 = vpop.f32.mrb[0].mxu0
  %515 = vmatprep.mubr.bf16.mxu0 0
  %516 = vmatmul.mubr.bf16.gmra.mrb[0].mxu0 %v257
  %v517 = vpop.f32.mrb[0].mxu0
  %v518 = vadd.f32 %v226, %v517
  %v519 = vpop.f32.mrb[0].mxu0
  %v520 = vpop.f32.mrb[0].mxu0
  %v521 = vadd.f32 %v226, %v520
  %v522 = vpop.f32.mrb[0].mxu0
  %523 = vmatprep.mubr.bf16.mxu0 0
  %524 = vmatmul.mubr.bf16.gmra.mrb[0].mxu0 %v260
  %v525 = vpop.f32.mrb[0].mxu0
  %v526 = vadd.f32 %v226, %v525
  %v527 = vpop.f32.mrb[0].mxu0
  %v528 = vpop.f32.mrb[0].mxu0
  %v529 = vadd.f32 %v226, %v528
  %v530 = vpop.f32.mrb[0].mxu0
  %531 = vmatprep.mubr.bf16.mxu0 0
  %532 = vmatmul.mubr.bf16.gmra.mrb[0].mxu0 %v263
  %v533 = vpop.f32.mrb[0].mxu0
  %v534 = vadd.f32 %v226, %v533
  %v535 = vpop.f32.mrb[0].mxu0
  %v536 = vpop.f32.mrb[0].mxu0
  %v537 = vadd.f32 %v226, %v536
  %v538 = vpop.f32.mrb[0].mxu0
  %539 = vmatprep.mubr.bf16.mxu0 0
  %540 = vmatmul.mubr.bf16.gmra.mrb[0].mxu0 %v266
  %v541 = vpop.f32.mrb[0].mxu0
  %v542 = vadd.f32 %v226, %v541
  %v543 = vpop.f32.mrb[0].mxu0
  %v544 = vpop.f32.mrb[0].mxu0
  %v545 = vadd.f32 %v226, %v544
  %v546 = vpop.f32.mrb[0].mxu0
  %547 = vmatprep.mubr.bf16.mxu0 0
  %548 = vmatmul.mubr.bf16.gmra.mrb[0].mxu0 %v269
  %v549 = vpop.f32.mrb[0].mxu0
  %v550 = vadd.f32 %v226, %v549
  %v551 = vpop.f32.mrb[0].mxu0
  %v552 = vpop.f32.mrb[0].mxu0
  %v553 = vadd.f32 %v226, %v552
  %v554 = vpop.f32.mrb[0].mxu0
  %555 = vmatprep.mubr.bf16.mxu0 0
  %556 = vmatmul.mubr.bf16.gmra.mrb[0].mxu0 %v272
  %v557 = vpop.f32.mrb[0].mxu0
  %v558 = vadd.f32 %v226, %v557
  %v559 = vpop.f32.mrb[0].mxu0
  %v560 = vpop.f32.mrb[0].mxu0
  %v561 = vadd.f32 %v226, %v560
  %v562 = vpop.f32.mrb[0].mxu0
  %563 = vmatprep.mubr.bf16.mxu0 0
  %564 = vmatmul.mubr.bf16.gmra.mrb[0].mxu0 %v275
  %v565 = vpop.f32.mrb[0].mxu0
  %v566 = vadd.f32 %v226, %v565
  %v567 = vpop.f32.mrb[0].mxu0
  %v568 = vpop.f32.mrb[0].mxu0
  %v569 = vadd.f32 %v226, %v568
  %v570 = vpop.f32.mrb[0].mxu0
  %571 = vmatprep.mubr.bf16.mxu0 0
  %572 = vmatmul.mubr.bf16.gmra.mrb[0].mxu0 %v278
  %v573 = vpop.f32.mrb[0].mxu0
  %v574 = vadd.f32 %v226, %v573
  %v575 = vpop.f32.mrb[0].mxu0
  %v576 = vpop.f32.mrb[0].mxu0
  %v577 = vadd.f32 %v226, %v576
  %v578 = vpop.f32.mrb[0].mxu0
  %579 = vmatprep.mubr.bf16.mxu0 0
  %580 = vmatmul.mubr.bf16.gmra.mrb[0].mxu0 %v281
  %v581 = vpop.f32.mrb[0].mxu0
  %v582 = vadd.f32 %v226, %v581
  %v583 = vpop.f32.mrb[0].mxu0
  %v584 = vpop.f32.mrb[0].mxu0
  %v585 = vadd.f32 %v226, %v584
  %v586 = vpop.f32.mrb[0].mxu0
  %587 = vmatprep.mubr.bf16.mxu0 0
  %588 = vmatmul.mubr.bf16.gmra.mrb[0].mxu0 %v284
  %v589 = vpop.f32.mrb[0].mxu0
  %v590 = vadd.f32 %v226, %v589
  %v591 = vpop.f32.mrb[0].mxu0
  %v592 = vpop.f32.mrb[0].mxu0
  %v593 = vadd.f32 %v226, %v592
  %v594 = vpop.f32.mrb[0].mxu0
  %595 = vmatprep.mubr.bf16.mxu0 0
  %596 = vmatmul.mubr.bf16.gmra.mrb[0].mxu0 %v287
  %v597 = vpop.f32.mrb[0].mxu0
  %v598 = vadd.f32 %v226, %v597
  %v599 = vpop.f32.mrb[0].mxu0
  %v600 = vpop.f32.mrb[0].mxu0
  %v601 = vadd.f32 %v226, %v600
  %v602 = vpop.f32.mrb[0].mxu0
  %603 = vmatprep.mubr.bf16.mxu0 0
  %604 = vmatmul.mubr.bf16.gmra.mrb[0].mxu0 %v290
  %v605 = vpop.f32.mrb[0].mxu0
  %v606 = vadd.f32 %v226, %v605
  %v607 = vpop.f32.mrb[0].mxu0
  %v608 = vpop.f32.mrb[0].mxu0
  %v609 = vadd.f32 %v226, %v608
  %v610 = vpop.f32.mrb[0].mxu0
  %611 = vmatprep.mubr.bf16.mxu0 0
  %612 = vmatmul.mubr.bf16.gmra.mrb[0].mxu0 %v293
  %v613 = vpop.f32.mrb[0].mxu0
  %v614 = vadd.f32 %v226, %v613
  %v615 = vpop.f32.mrb[0].mxu0
  %v616 = vpop.f32.mrb[0].mxu0
  %v617 = vadd.f32 %v226, %v616
  %v618 = vpop.f32.mrb[0].mxu0
  %619 = vmatprep.mubr.bf16.mxu0 0
  %620 = vmatmul.mubr.bf16.gmra.mrb[0].mxu0 %v296
  %v621 = vpop.f32.mrb[0].mxu0
  %v622 = vadd.f32 %v226, %v621
  %v623 = vpop.f32.mrb[0].mxu0
  %v624 = vpop.f32.mrb[0].mxu0
  %v625 = vadd.f32 %v226, %v624
  %v626 = vpop.f32.mrb[0].mxu0
  %627 = vmatprep.mubr.bf16.mxu0 0
  %628 = vmatmul.mubr.bf16.gmra.mrb[0].mxu0 %v299
  %v629 = vpop.f32.mrb[0].mxu0
  %v630 = vadd.f32 %v226, %v629
  %v631 = vpop.f32.mrb[0].mxu0
  %v632 = vpop.f32.mrb[0].mxu0
  %v633 = vadd.f32 %v226, %v632
  %v634 = vpop.f32.mrb[0].mxu0
  %635 = vmatprep.mubr.bf16.mxu0 0
  %636 = vmatmul.mubr.bf16.gmra.mrb[0].mxu0 %v302
  %v637 = vpop.f32.mrb[0].mxu0
  %v638 = vadd.f32 %v226, %v637
  %v639 = vpop.f32.mrb[0].mxu0
  %v640 = vpop.f32.mrb[0].mxu0
  %v641 = vadd.f32 %v226, %v640
  %v642 = vpop.f32.mrb[0].mxu0
  %643 = vmatprep.mubr.bf16.mxu0 0
  %644 = vmatmul.mubr.bf16.gmra.mrb[0].mxu0 %v305
  %v645 = vpop.f32.mrb[0].mxu0
  %v646 = vadd.f32 %v226, %v645
  %v647 = vpop.f32.mrb[0].mxu0
  %v648 = vpop.f32.mrb[0].mxu0
  %v649 = vadd.f32 %v226, %v648
  %v650 = vpop.f32.mrb[0].mxu0
  %651 = vmatprep.mubr.bf16.mxu0 0
  %652 = vmatmul.mubr.bf16.gmra.mrb[0].mxu0 %v308
  %v653 = vpop.f32.mrb[0].mxu0
  %v654 = vadd.f32 %v226, %v653
  %v655 = vpop.f32.mrb[0].mxu0
  %v656 = vpop.f32.mrb[0].mxu0
  %v657 = vadd.f32 %v226, %v656
  %v658 = vpop.f32.mrb[0].mxu0
  %659 = vmatprep.mubr.bf16.mxu0 0
  %660 = vmatmul.mubr.bf16.gmra.mrb[0].mxu0 %v311
  %v661 = vpop.f32.mrb[0].mxu0
  %v662 = vadd.f32 %v226, %v661
  %v663 = vpop.f32.mrb[0].mxu0
  %v664 = vpop.f32.mrb[0].mxu0
  %v665 = vadd.f32 %v226, %v664
  %v666 = vpop.f32.mrb[0].mxu0
  %667 = vmatprep.mubr.bf16.mxu0 0
  %668 = vmatmul.mubr.bf16.gmra.mrb[0].mxu0 %v314
  %v669 = vpop.f32.mrb[0].mxu0
  %v670 = vadd.f32 %v226, %v669
  %v671 = vpop.f32.mrb[0].mxu0
  %v672 = vpop.f32.mrb[0].mxu0
  %v673 = vadd.f32 %v226, %v672
  %v674 = vpop.f32.mrb[0].mxu0
  %675 = vmatprep.mubr.bf16.mxu0 0
  %676 = vmatmul.mubr.bf16.gmra.mrb[0].mxu0 %v317
  %v677 = vpop.f32.mrb[0].mxu0
  %v678 = vadd.f32 %v226, %v677
  %v679 = vpop.f32.mrb[0].mxu0
  %v680 = vpop.f32.mrb[0].mxu0
  %v681 = vadd.f32 %v226, %v680
  %v682 = vpop.f32.mrb[0].mxu0
  %683 = vmatprep.mubr.bf16.mxu0 0
  %684 = vmatmul.mubr.bf16.gmra.mrb[0].mxu0 %v320
  %v685 = vpop.f32.mrb[0].mxu0
  %v686 = vadd.f32 %v226, %v685
  %v687 = vpop.f32.mrb[0].mxu0
  %v688 = vpop.f32.mrb[0].mxu0
  %v689 = vadd.f32 %v226, %v688
  %v690 = vpop.f32.mrb[0].mxu0
  %691 = vmatprep.mubr.bf16.mxu0 0
  %692 = vmatmul.mubr.bf16.gmra.mrb[0].mxu0 %v323
  %v693 = vpop.f32.mrb[0].mxu0
  %v694 = vadd.f32 %v226, %v693
  %v695 = vpop.f32.mrb[0].mxu0
  %v696 = vpop.f32.mrb[0].mxu0
  %v697 = vadd.f32 %v226, %v696
  %v698 = vpop.f32.mrb[0].mxu0
  %699 = vmatprep.mubr.bf16.mxu0 0
  %700 = vmatmul.mubr.bf16.gmra.mrb[0].mxu0 %v326
  %v701 = vpop.f32.mrb[0].mxu0
  %v702 = vadd.f32 %v226, %v701
  %v703 = vpop.f32.mrb[0].mxu0
  %v704 = vpop.f32.mrb[0].mxu0
  %v705 = vadd.f32 %v226, %v704
  %v706 = vpop.f32.mrb[0].mxu0
  %707 = vmatprep.mubr.bf16.mxu0 0
  %708 = vmatmul.mubr.bf16.gmra.mrb[0].mxu0 %v329
  %v709 = vpop.f32.mrb[0].mxu0
  %v710 = vadd.f32 %v226, %v709
  %v711 = vpop.f32.mrb[0].mxu0
  %v712 = vpop.f32.mrb[0].mxu0
  %v713 = vadd.f32 %v226, %v712
  %v714 = vpop.f32.mrb[0].mxu0
  %715 = vmatprep.mubr.bf16.mxu0 0
  %716 = vmatmul.mubr.bf16.gmra.mrb[0].mxu0 %v332
  %v717 = vpop.f32.mrb[0].mxu0
  %v718 = vadd.f32 %v226, %v717
  %v719 = vpop.f32.mrb[0].mxu0
  %v720 = vpop.f32.mrb[0].mxu0
  %v721 = vadd.f32 %v226, %v720
  %v722 = vpop.f32.mrb[0].mxu0
  %723 = vmatprep.mubr.bf16.mxu0 0
  %724 = vmatmul.mubr.bf16.gmra.mrb[0].mxu0 %v335
  %v725 = vpop.f32.mrb[0].mxu0
  %v726 = vadd.f32 %v226, %v725
  %v727 = vpop.f32.mrb[0].mxu0
  %v728 = vpop.f32.mrb[0].mxu0
  %v729 = vadd.f32 %v226, %v728
  %v730 = vpop.f32.mrb[0].mxu0
  %731 = vmatprep.mubr.bf16.mxu0 0
  %732 = vmatmul.mubr.bf16.gmra.mrb[0].mxu0 %v338
  %v733 = vpop.f32.mrb[0].mxu0
  %v734 = vadd.f32 %v226, %v733
  %v735 = vpop.f32.mrb[0].mxu0
  %v736 = vpop.f32.mrb[0].mxu0
  %v737 = vadd.f32 %v226, %v736
  %v738 = vpop.f32.mrb[0].mxu0
  %739 = vmatprep.mubr.bf16.mxu0 0
  %740 = vmatmul.mubr.bf16.gmra.mrb[0].mxu0 %v341
  %v741 = vpop.f32.mrb[0].mxu0
  %v742 = vadd.f32 %v226, %v741
  %v743 = vpop.f32.mrb[0].mxu0
  %v744 = vpop.f32.mrb[0].mxu0
  %v745 = vadd.f32 %v226, %v744
  %v746 = vpop.f32.mrb[0].mxu0
  %747 = vmatprep.mubr.bf16.mxu0 0
  %748 = vmatmul.mubr.bf16.gmra.mrb[0].mxu0 %v344
  %v749 = vpop.f32.mrb[0].mxu0
  %v750 = vadd.f32 %v226, %v749
  %v751 = vpop.f32.mrb[0].mxu0
  %v752 = vpop.f32.mrb[0].mxu0
  %v753 = vadd.f32 %v226, %v752
  %v754 = vpop.f32.mrb[0].mxu0
  %755 = vmatprep.mubr.bf16.mxu0 0
  %756 = vmatmul.mubr.bf16.gmra.mrb[0].mxu0 %v347
  %v757 = vpop.f32.mrb[0].mxu0
  %v758 = vadd.f32 %v226, %v757
  %v759 = vpop.f32.mrb[0].mxu0
  %v760 = vpop.f32.mrb[0].mxu0
  %v761 = vadd.f32 %v226, %v760
  %v762 = vpop.f32.mrb[0].mxu0
  %763 = vmatprep.mubr.bf16.mxu0 0
  %764 = vmatmul.mubr.bf16.gmra.mrb[0].mxu0 %v350
  %v765 = vpop.f32.mrb[0].mxu0
  %v766 = vadd.f32 %v226, %v765
  %v767 = vpop.f32.mrb[0].mxu0
  %v768 = vpop.f32.mrb[0].mxu0
  %v769 = vadd.f32 %v226, %v768
  %v770 = vpop.f32.mrb[0].mxu0
  %771 = vmatprep.mubr.bf16.mxu0 0
  %772 = vmatmul.mubr.bf16.gmra.mrb[0].mxu0 %v353
  %v773 = vpop.f32.mrb[0].mxu0
  %v774 = vadd.f32 %v226, %v773
  %v775 = vpop.f32.mrb[0].mxu0
  %v776 = vpop.f32.mrb[0].mxu0
  %v777 = vadd.f32 %v226, %v776
  %v778 = vpop.f32.mrb[0].mxu0
  %779 = vmatprep.mubr.bf16.mxu0 0
  %780 = vmatmul.mubr.bf16.gmra.mrb[0].mxu0 %v356
  %v781 = vpop.f32.mrb[0].mxu0
  %v782 = vadd.f32 %v226, %v781
  %v783 = vpop.f32.mrb[0].mxu0
  %v784 = vpop.f32.mrb[0].mxu0
  %v785 = vadd.f32 %v226, %v784
  %v786 = vpop.f32.mrb[0].mxu0
  %787 = vmatprep.mubr.bf16.mxu0 0
  %788 = vmatmul.mubr.bf16.gmra.mrb[0].mxu0 %v359
  %v789 = vpop.f32.mrb[0].mxu0
  %v790 = vadd.f32 %v226, %v789
  %v791 = vpop.f32.mrb[0].mxu0
  %v792 = vpop.f32.mrb[0].mxu0
  %v793 = vadd.f32 %v226, %v792
  %v794 = vpop.f32.mrb[0].mxu0
  %795 = vmatprep.mubr.bf16.mxu0 0
  %796 = vmatmul.mubr.bf16.gmra.mrb[0].mxu0 %v362
  %v797 = vpop.f32.mrb[0].mxu0
  %v798 = vadd.f32 %v226, %v797
  %v799 = vpop.f32.mrb[0].mxu0
  %v800 = vpop.f32.mrb[0].mxu0
  %v801 = vadd.f32 %v226, %v800
  %v802 = vpop.f32.mrb[0].mxu0
  %803 = vmatprep.mubr.bf16.mxu0 0
  %804 = vmatmul.mubr.bf16.gmra.mrb[0].mxu0 %v365
  %v805 = vpop.f32.mrb[0].mxu0
  %v806 = vadd.f32 %v226, %v805
  %v807 = vpop.f32.mrb[0].mxu0
  %v808 = vpop.f32.mrb[0].mxu0
  %v809 = vadd.f32 %v226, %v808
  %v810 = vpop.f32.mrb[0].mxu0
  %811 = vmatprep.mubr.bf16.mxu0 0
  %812 = vmatmul.mubr.bf16.gmra.mrb[0].mxu0 %v368
  %v813 = vpop.f32.mrb[0].mxu0
  %v814 = vadd.f32 %v226, %v813
  %v815 = vpop.f32.mrb[0].mxu0
  %v816 = vpop.f32.mrb[0].mxu0
  %v817 = vadd.f32 %v226, %v816
  %v818 = vpop.f32.mrb[0].mxu0
  %819 = vmatprep.mubr.bf16.mxu0 0
  %820 = vmatmul.mubr.bf16.gmra.mrb[0].mxu0 %v371
  %v821 = vpop.f32.mrb[0].mxu0
  %v822 = vadd.f32 %v226, %v821
  %v823 = vpop.f32.mrb[0].mxu0
  %v824 = vpop.f32.mrb[0].mxu0
  %v825 = vadd.f32 %v226, %v824
  %v826 = vpop.f32.mrb[0].mxu0
  %827 = vmatprep.mubr.bf16.mxu0 0
  %828 = vmatmul.mubr.bf16.gmra.mrb[0].mxu0 %v374
  %v829 = vpop.f32.mrb[0].mxu0
  %v830 = vadd.f32 %v226, %v829
  %v831 = vpop.f32.mrb[0].mxu0
  %v832 = vpop.f32.mrb[0].mxu0
  %v833 = vadd.f32 %v226, %v832
  %v834 = vpop.f32.mrb[0].mxu0
  %835 = vmatprep.mubr.bf16.mxu0 0
  %836 = vmatmul.mubr.bf16.gmra.mrb[0].mxu0 %v377
  %v837 = vpop.f32.mrb[0].mxu0
  %v838 = vadd.f32 %v226, %v837
  %v839 = vpop.f32.mrb[0].mxu0
  %v840 = vpop.f32.mrb[0].mxu0
  %v841 = vadd.f32 %v226, %v840
  %v842 = vpop.f32.mrb[0].mxu0
  %843 = vmatprep.mubr.bf16.mxu0 0
  %844 = vmatmul.mubr.bf16.gmra.mrb[0].mxu0 %v380
  %v845 = vpop.f32.mrb[0].mxu0
  %v846 = vadd.f32 %v226, %v845
  %v847 = vpop.f32.mrb[0].mxu0
  %v848 = vpop.f32.mrb[0].mxu0
  %v849 = vadd.f32 %v226, %v848
  %v850 = vpop.f32.mrb[0].mxu0
  %851 = vmatprep.mubr.bf16.mxu0 0
  %852 = vmatmul.mubr.bf16.gmra.mrb[0].mxu0 %v383
  %v853 = vpop.f32.mrb[0].mxu0
  %v854 = vadd.f32 %v226, %v853
  %v855 = vpop.f32.mrb[0].mxu0
  %v856 = vpop.f32.mrb[0].mxu0
  %v857 = vadd.f32 %v226, %v856
  %v858 = vpop.f32.mrb[0].mxu0
  %859 = vmatprep.mubr.bf16.mxu0 0
  %860 = vmatmul.mubr.bf16.gmra.mrb[0].mxu0 %v386
  %v861 = vpop.f32.mrb[0].mxu0
  %v862 = vadd.f32 %v226, %v861
  %v863 = vpop.f32.mrb[0].mxu0
  %v864 = vpop.f32.mrb[0].mxu0
  %v865 = vadd.f32 %v226, %v864
  %v866 = vpop.f32.mrb[0].mxu0
  %867 = vmatprep.mubr.bf16.mxu0 0
  %868 = vmatmul.mubr.bf16.gmra.mrb[0].mxu0 %v389
  %v869 = vpop.f32.mrb[0].mxu0
  %v870 = vadd.f32 %v226, %v869
  %v871 = vpop.f32.mrb[0].mxu0
  %v872 = vpop.f32.mrb[0].mxu0
  %v873 = vadd.f32 %v226, %v872
  %v874 = vpop.f32.mrb[0].mxu0
  %875 = vmatprep.mubr.bf16.mxu0 0
  %876 = vmatmul.mubr.bf16.gmra.mrb[0].mxu0 %v392
  %v877 = vpop.f32.mrb[0].mxu0
  %v878 = vadd.f32 %v226, %v877
  %v879 = vpop.f32.mrb[0].mxu0
  %v880 = vpop.f32.mrb[0].mxu0
  %v881 = vadd.f32 %v226, %v880
  %v882 = vpop.f32.mrb[0].mxu0
  %883 = vmatprep.mubr.bf16.mxu0 0
  %884 = vmatmul.mubr.bf16.gmra.mrb[0].mxu0 %v395
  %v885 = vpop.f32.mrb[0].mxu0
  %v886 = vadd.f32 %v226, %v885
  %v887 = vpop.f32.mrb[0].mxu0
  %v888 = vpop.f32.mrb[0].mxu0
  %v889 = vadd.f32 %v226, %v888
  %v890 = vpop.f32.mrb[0].mxu0
  %891 = vmatprep.mubr.bf16.mxu0 0
  %892 = vmatmul.mubr.bf16.gmra.mrb[0].mxu0 %v398
  %v893 = vpop.f32.mrb[0].mxu0
  %v894 = vadd.f32 %v226, %v893
  %v895 = vpop.f32.mrb[0].mxu0
  %v896 = vpop.f32.mrb[0].mxu0
  %v897 = vadd.f32 %v226, %v896
  %v898 = vpop.f32.mrb[0].mxu0
  %899 = vmatprep.mubr.bf16.mxu0 0
  %900 = vmatmul.mubr.bf16.gmra.mrb[0].mxu0 %v401
  %v901 = vpop.f32.mrb[0].mxu0
  %v902 = vadd.f32 %v226, %v901
  %v903 = vpop.f32.mrb[0].mxu0
  %v904 = vpop.f32.mrb[0].mxu0
  %v905 = vadd.f32 %v226, %v904
  %v906 = vpop.f32.mrb[0].mxu0
  %907 = vmatprep.mubr.bf16.mxu0 0
  %908 = vmatmul.mubr.bf16.gmra.mrb[0].mxu0 %v404
  %v909 = vpop.f32.mrb[0].mxu0
  %v910 = vadd.f32 %v226, %v909
  %v911 = vpop.f32.mrb[0].mxu0
  %v912 = vpop.f32.mrb[0].mxu0
  %v913 = vadd.f32 %v226, %v912
  %v914 = vpop.f32.mrb[0].mxu0
  %915 = vmatprep.mubr.bf16.mxu0 0
  %916 = vmatmul.mubr.bf16.gmra.mrb[0].mxu0 %v407
  %v917 = vpop.f32.mrb[0].mxu0
  %v918 = vadd.f32 %v226, %v917
  %v919 = vpop.f32.mrb[0].mxu0
  %v920 = vpop.f32.mrb[0].mxu0
  %v921 = vadd.f32 %v226, %v920
  %v922 = vpop.f32.mrb[0].mxu0
  %923 = vmatprep.mubr.bf16.mxu0 0
  %924 = vmatmul.mubr.bf16.gmra.mrb[0].mxu0 %v410
  %v925 = vpop.f32.mrb[0].mxu0
  %v926 = vadd.f32 %v226, %v925
  %v927 = vpop.f32.mrb[0].mxu0
  %v928 = vpop.f32.mrb[0].mxu0
  %v929 = vadd.f32 %v226, %v928
  %v930 = vpop.f32.mrb[0].mxu0
  %931 = vmatprep.mubr.bf16.mxu0 0
  %932 = vmatmul.mubr.bf16.gmra.mrb[0].mxu0 %v413
  %v933 = vpop.f32.mrb[0].mxu0
  %v934 = vadd.f32 %v226, %v933
  %v935 = vpop.f32.mrb[0].mxu0
  %v936 = vpop.f32.mrb[0].mxu0
  %v937 = vadd.f32 %v226, %v936
  %v938 = vpop.f32.mrb[0].mxu0
  %939 = vmatprep.mubr.bf16.mxu0 0
  %940 = vmatmul.mubr.bf16.gmra.mrb[0].mxu0 %v416
  %v941 = vpop.f32.mrb[0].mxu0
  %v942 = vadd.f32 %v226, %v941
  %v943 = vpop.f32.mrb[0].mxu0
  %v944 = vpop.f32.mrb[0].mxu0
  %v945 = vadd.f32 %v226, %v944
  %v946 = vpop.f32.mrb[0].mxu0
  %947 = vmatprep.mubr.bf16.mxu0 0
  %948 = vmatmul.mubr.bf16.gmra.mrb[0].mxu0 %v419
  %v949 = vpop.f32.mrb[0].mxu0
  %v950 = vadd.f32 %v226, %v949
  %v951 = vpop.f32.mrb[0].mxu0
  %v952 = vpop.f32.mrb[0].mxu0
  %v953 = vadd.f32 %v226, %v952
  %v954 = vpop.f32.mrb[0].mxu0
  %955 = vmatprep.mubr.bf16.mxu0 0
  %956 = vmatmul.mubr.bf16.gmra.mrb[0].mxu0 %v422
  %v957 = vpop.f32.mrb[0].mxu0
  %v958 = vadd.f32 %v226, %v957
  %v959 = vpop.f32.mrb[0].mxu0
  %v960 = vpop.f32.mrb[0].mxu0
  %v961 = vadd.f32 %v226, %v960
  %v962 = vpop.f32.mrb[0].mxu0
  %963 = vmatprep.mubr.bf16.mxu0 0
  %964 = vmatmul.mubr.bf16.gmra.mrb[0].mxu0 %v425
  %v965 = vpop.f32.mrb[0].mxu0
  %v966 = vadd.f32 %v226, %v965
  %v967 = vpop.f32.mrb[0].mxu0
  %v968 = vpop.f32.mrb[0].mxu0
  %v969 = vadd.f32 %v226, %v968
  %v970 = vpop.f32.mrb[0].mxu0
  %971 = vdwg.mxu0
  %v972 = vmax.f32 %v462, 0.0
  %v973 = vmax.f32 %v465, 0.0
  %v974 = vmax.f32 %v470, 0.0
  %v975 = vmax.f32 %v473, 0.0
  %v976 = vmax.f32 %v478, 0.0
  %v977 = vmax.f32 %v481, 0.0
  %v978 = vmax.f32 %v486, 0.0
  %v979 = vmax.f32 %v489, 0.0
  %v980 = vmax.f32 %v494, 0.0
  %v981 = vmax.f32 %v497, 0.0
  %v982 = vmax.f32 %v502, 0.0
  %v983 = vmax.f32 %v505, 0.0
  %v984 = vmax.f32 %v510, 0.0
  %v985 = vmax.f32 %v513, 0.0
  %v986 = vmax.f32 %v518, 0.0
  %v987 = vmax.f32 %v521, 0.0
  %v988 = vmax.f32 %v526, 0.0
  %v989 = vmax.f32 %v529, 0.0
  %v990 = vmax.f32 %v534, 0.0
  %v991 = vmax.f32 %v537, 0.0
  %v992 = vmax.f32 %v542, 0.0
  %v993 = vmax.f32 %v545, 0.0
  %v994 = vmax.f32 %v550, 0.0
  %v995 = vmax.f32 %v553, 0.0
  %v996 = vmax.f32 %v558, 0.0
  %v997 = vmax.f32 %v561, 0.0
  %v998 = vmax.f32 %v566, 0.0
  %v999 = vmax.f32 %v569, 0.0
  %v1000 = vmax.f32 %v574, 0.0
  %v1001 = vmax.f32 %v577, 0.0
  %v1002 = vmax.f32 %v582, 0.0
  %v1003 = vmax.f32 %v585, 0.0
  %v1004 = vmax.f32 %v590, 0.0
  %v1005 = vmax.f32 %v593, 0.0
  %v1006 = vmax.f32 %v598, 0.0
  %v1007 = vmax.f32 %v601, 0.0
  %v1008 = vmax.f32 %v606, 0.0
  %v1009 = vmax.f32 %v609, 0.0
  %v1010 = vmax.f32 %v614, 0.0
  %v1011 = vmax.f32 %v617, 0.0
  %v1012 = vmax.f32 %v622, 0.0
  %v1013 = vmax.f32 %v625, 0.0
  %v1014 = vmax.f32 %v630, 0.0
  %v1015 = vmax.f32 %v633, 0.0
  %v1016 = vmax.f32 %v638, 0.0
  %v1017 = vmax.f32 %v641, 0.0
  %v1018 = vmax.f32 %v646, 0.0
  %v1019 = vmax.f32 %v649, 0.0
  %v1020 = vmax.f32 %v654, 0.0
  %v1021 = vmax.f32 %v657, 0.0
  %v1022 = vmax.f32 %v662, 0.0
  %v1023 = vmax.f32 %v665, 0.0
  %v1024 = vmax.f32 %v670, 0.0
  %v1025 = vmax.f32 %v673, 0.0
  %v1026 = vmax.f32 %v678, 0.0
  %v1027 = vmax.f32 %v681, 0.0
  %v1028 = vmax.f32 %v686, 0.0
  %v1029 = vmax.f32 %v689, 0.0
  %v1030 = vmax.f32 %v694, 0.0
  %v1031 = vmax.f32 %v697, 0.0
  %v1032 = vmax.f32 %v702, 0.0
  %v1033 = vmax.f32 %v705, 0.0
  %v1034 = vmax.f32 %v710, 0.0
  %v1035 = vmax.f32 %v713, 0.0
  %v1036 = vmax.f32 %v718, 0.0
  %v1037 = vmax.f32 %v721, 0.0
  %v1038 = vmax.f32 %v726, 0.0
  %v1039 = vmax.f32 %v729, 0.0
  %v1040 = vmax.f32 %v734, 0.0
  %v1041 = vmax.f32 %v737, 0.0
  %v1042 = vmax.f32 %v742, 0.0
  %v1043 = vmax.f32 %v745, 0.0
  %v1044 = vmax.f32 %v750, 0.0
  %v1045 = vmax.f32 %v753, 0.0
  %v1046 = vmax.f32 %v758, 0.0
  %v1047 = vmax.f32 %v761, 0.0
  %v1048 = vmax.f32 %v766, 0.0
  %v1049 = vmax.f32 %v769, 0.0
  %v1050 = vmax.f32 %v774, 0.0
  %v1051 = vmax.f32 %v777, 0.0
  %v1052 = vmax.f32 %v782, 0.0
  %v1053 = vmax.f32 %v785, 0.0
  %v1054 = vmax.f32 %v790, 0.0
  %v1055 = vmax.f32 %v793, 0.0
  %v1056 = vmax.f32 %v798, 0.0
  %v1057 = vmax.f32 %v801, 0.0
  %v1058 = vmax.f32 %v806, 0.0
  %v1059 = vmax.f32 %v809, 0.0
  %v1060 = vmax.f32 %v814, 0.0
  %v1061 = vmax.f32 %v817, 0.0
  %v1062 = vmax.f32 %v822, 0.0
  %v1063 = vmax.f32 %v825, 0.0
  %v1064 = vmax.f32 %v830, 0.0
  %v1065 = vmax.f32 %v833, 0.0
  %v1066 = vmax.f32 %v838, 0.0
  %v1067 = vmax.f32 %v841, 0.0
  %v1068 = vmax.f32 %v846, 0.0
  %v1069 = vmax.f32 %v849, 0.0
  %v1070 = vmax.f32 %v854, 0.0
  %v1071 = vmax.f32 %v857, 0.0
  %v1072 = vmax.f32 %v862, 0.0
  %v1073 = vmax.f32 %v865, 0.0
  %v1074 = vmax.f32 %v870, 0.0
  %v1075 = vmax.f32 %v873, 0.0
  %v1076 = vmax.f32 %v878, 0.0
  %v1077 = vmax.f32 %v881, 0.0
  %v1078 = vmax.f32 %v886, 0.0
  %v1079 = vmax.f32 %v889, 0.0
  %v1080 = vmax.f32 %v894, 0.0
  %v1081 = vmax.f32 %v897, 0.0
  %v1082 = vmax.f32 %v902, 0.0
  %v1083 = vmax.f32 %v905, 0.0
  %v1084 = vmax.f32 %v910, 0.0
  %v1085 = vmax.f32 %v913, 0.0
  %v1086 = vmax.f32 %v918, 0.0
  %v1087 = vmax.f32 %v921, 0.0
  %v1088 = vmax.f32 %v926, 0.0
  %v1089 = vmax.f32 %v929, 0.0
  %v1090 = vmax.f32 %v934, 0.0
  %v1091 = vmax.f32 %v937, 0.0
  %v1092 = vmax.f32 %v942, 0.0
  %v1093 = vmax.f32 %v945, 0.0
  %v1094 = vmax.f32 %v950, 0.0
  %v1095 = vmax.f32 %v953, 0.0
  %v1096 = vmax.f32 %v958, 0.0
  %v1097 = vmax.f32 %v961, 0.0
  %v1098 = vmax.f32 %v966, 0.0
  %v1099 = vmax.f32 %v969, 0.0
  %v1100 = vpack.c.bf16 %v973, %v972
  %v1101 = vpack.c.bf16 %v975, %v974
  %v1102 = vpack.c.bf16 %v977, %v976
  %v1103 = vpack.c.bf16 %v979, %v978
  %v1104 = vpack.c.bf16 %v981, %v980
  %v1105 = vpack.c.bf16 %v983, %v982
  %v1106 = vpack.c.bf16 %v985, %v984
  %v1107 = vpack.c.bf16 %v987, %v986
  %v1108 = vpack.c.bf16 %v989, %v988
  %v1109 = vpack.c.bf16 %v991, %v990
  %v1110 = vpack.c.bf16 %v993, %v992
  %v1111 = vpack.c.bf16 %v995, %v994
  %v1112 = vpack.c.bf16 %v997, %v996
  %v1113 = vpack.c.bf16 %v999, %v998
  %v1114 = vpack.c.bf16 %v1001, %v1000
  %v1115 = vpack.c.bf16 %v1003, %v1002
  %v1116 = vpack.c.bf16 %v1005, %v1004
  %v1117 = vpack.c.bf16 %v1007, %v1006
  %v1118 = vpack.c.bf16 %v1009, %v1008
  %v1119 = vpack.c.bf16 %v1011, %v1010
  %v1120 = vpack.c.bf16 %v1013, %v1012
  %v1121 = vpack.c.bf16 %v1015, %v1014
  %v1122 = vpack.c.bf16 %v1017, %v1016
  %v1123 = vpack.c.bf16 %v1019, %v1018
  %v1124 = vpack.c.bf16 %v1021, %v1020
  %v1125 = vpack.c.bf16 %v1023, %v1022
  %v1126 = vpack.c.bf16 %v1025, %v1024
  %v1127 = vpack.c.bf16 %v1027, %v1026
  %v1128 = vpack.c.bf16 %v1029, %v1028
  %v1129 = vpack.c.bf16 %v1031, %v1030
  %v1130 = vpack.c.bf16 %v1033, %v1032
  %v1131 = vpack.c.bf16 %v1035, %v1034
  %v1132 = vpack.c.bf16 %v1037, %v1036
  %v1133 = vpack.c.bf16 %v1039, %v1038
  %v1134 = vpack.c.bf16 %v1041, %v1040
  %v1135 = vpack.c.bf16 %v1043, %v1042
  %v1136 = vpack.c.bf16 %v1045, %v1044
  %v1137 = vpack.c.bf16 %v1047, %v1046
  %v1138 = vpack.c.bf16 %v1049, %v1048
  %v1139 = vpack.c.bf16 %v1051, %v1050
  %v1140 = vpack.c.bf16 %v1053, %v1052
  %v1141 = vpack.c.bf16 %v1055, %v1054
  %v1142 = vpack.c.bf16 %v1057, %v1056
  %v1143 = vpack.c.bf16 %v1059, %v1058
  %v1144 = vpack.c.bf16 %v1061, %v1060
  %v1145 = vpack.c.bf16 %v1063, %v1062
  %v1146 = vpack.c.bf16 %v1065, %v1064
  %v1147 = vpack.c.bf16 %v1067, %v1066
  %v1148 = vpack.c.bf16 %v1069, %v1068
  %v1149 = vpack.c.bf16 %v1071, %v1070
  %v1150 = vpack.c.bf16 %v1073, %v1072
  %v1151 = vpack.c.bf16 %v1075, %v1074
  %v1152 = vpack.c.bf16 %v1077, %v1076
  %v1153 = vpack.c.bf16 %v1079, %v1078
  %v1154 = vpack.c.bf16 %v1081, %v1080
  %v1155 = vpack.c.bf16 %v1083, %v1082
  %v1156 = vpack.c.bf16 %v1085, %v1084
  %v1157 = vpack.c.bf16 %v1087, %v1086
  %v1158 = vpack.c.bf16 %v1089, %v1088
  %v1159 = vpack.c.bf16 %v1091, %v1090
  %v1160 = vpack.c.bf16 %v1093, %v1092
  %v1161 = vpack.c.bf16 %v1095, %v1094
  %v1162 = vpack.c.bf16 %v1097, %v1096
  %v1163 = vpack.c.bf16 %v1099, %v1098
  %v1164 = vld [vmem:[%s3] sm:$0xf]
  %v1165 = vld [vmem:[%s3 + $0x4] sm:$0xf]
  %v1166 = vld [vmem:[%s3 + $0x8] sm:$0xf]
  %v1167 = vld [vmem:[%s3 + $0xc] sm:$0xf]
  %v1168 = vld [vmem:[%s3 + $0x10] sm:$0xf]
  %v1169 = vld [vmem:[%s3 + $0x14] sm:$0xf]
  %v1170 = vld [vmem:[%s3 + $0x18] sm:$0xf]
  %v1171 = vld [vmem:[%s3 + $0x1c] sm:$0xf]
  %v1172 = vld [vmem:[%s3 + $0x20] sm:$0xf]
  %v1173 = vld [vmem:[%s3 + $0x24] sm:$0xf]
  %v1174 = vld [vmem:[%s3 + $0x28] sm:$0xf]
  %v1175 = vld [vmem:[%s3 + $0x2c] sm:$0xf]
  %v1176 = vld [vmem:[%s3 + $0x30] sm:$0xf]
  %v1177 = vld [vmem:[%s3 + $0x34] sm:$0xf]
  %v1178 = vld [vmem:[%s3 + $0x38] sm:$0xf]
  %v1179 = vld [vmem:[%s3 + $0x3c] sm:$0xf]
  %v1180 = vld [vmem:[%s4] sm:$0x1]
  %v1182 = vlaneseq
  %v1183 = vshrl.u32 %v1182, 7
  %v1184 = vsub.s32 0, %v1183
  %v1185 = vrot.slane %v1180, %v1184
  %v1203 = vunpack.c.l.b16 %v1164
  %v1204 = vunpack.c.l.b16 %v1165
  %v1205 = vunpack.c.l.b16 %v1166
  %v1206 = vunpack.c.l.b16 %v1167
  %v1207 = vunpack.c.l.b16 %v1168
  %v1208 = vunpack.c.l.b16 %v1169
  %v1209 = vunpack.c.l.b16 %v1170
  %v1210 = vunpack.c.l.b16 %v1171
  %v1211 = vunpack.c.l.b16 %v1172
  %v1212 = vunpack.c.l.b16 %v1173
  %v1213 = vunpack.c.l.b16 %v1174
  %v1214 = vunpack.c.l.b16 %v1175
  %v1215 = vunpack.c.l.b16 %v1176
  %v1216 = vunpack.c.l.b16 %v1177
  %v1217 = vunpack.c.l.b16 %v1178
  %v1218 = vunpack.c.l.b16 %v1179
  %v1219 = vpack.c.b16 %v1204, %v1203
  %v1220 = vpack.c.b16 %v1206, %v1205
  %v1221 = vpack.c.b16 %v1208, %v1207
  %v1222 = vpack.c.b16 %v1210, %v1209
  %v1223 = vpack.c.b16 %v1212, %v1211
  %v1224 = vpack.c.b16 %v1214, %v1213
  %v1225 = vpack.c.b16 %v1216, %v1215
  %v1226 = vpack.c.b16 %v1218, %v1217
  %1235 = vmatprep.subr.bf16.mxu0 0
  %1236 = vmatpush1.bf16.msra.mxu0 %v1219
  %1237 = vmatprep.subr.bf16.mxu0 0
  %1238 = vmatpush1.bf16.msra.mxu0 %v1220
  %1239 = vmatprep.subr.bf16.mxu0 0
  %1240 = vmatpush1.bf16.msra.mxu0 %v1221
  %1241 = vmatprep.subr.bf16.mxu0 0
  %1242 = vmatpush1.bf16.msra.mxu0 %v1222
  %1243 = vmatprep.subr.bf16.mxu0 0
  %1244 = vmatpush1.bf16.msra.mxu0 %v1223
  %1245 = vmatprep.subr.bf16.mxu0 0
  %1246 = vmatpush1.bf16.msra.mxu0 %v1224
  %1247 = vmatprep.subr.bf16.mxu0 0
  %1248 = vmatpush1.bf16.msra.mxu0 %v1225
  %1249 = vmatprep.subr.bf16.mxu0 0
  %1250 = vmatpush1.bf16.msra.mxu0 %v1226
  %1251 = vmatprep.subr.bf16.mxu0 0
  %1252 = vmatpush1.bf16.msra.mxu0 0
  %1253 = vmatprep.subr.bf16.mxu0 0
  %1254 = vmatpush1.bf16.msra.mxu0 0
  %1255 = vmatprep.subr.bf16.mxu0 0
  %1256 = vmatpush1.bf16.msra.mxu0 0
  %1257 = vmatprep.subr.bf16.mxu0 0
  %1258 = vmatpush1.bf16.msra.mxu0 0
  %1259 = vmatprep.subr.bf16.mxu0 0
  %1260 = vmatpush1.bf16.msra.mxu0 0
  %1261 = vmatprep.subr.bf16.mxu0 0
  %1262 = vmatpush1.bf16.msra.mxu0 0
  %1263 = vmatprep.subr.bf16.mxu0 0
  %1264 = vmatpush1.bf16.msra.mxu0 0
  %1265 = vmatprep.subr.bf16.mxu0 0
  %1266 = vmatpush1.bf16.msra.mxu0 0
  %1267 = vmatprep.mubr.bf16.mxu0 0
  %1268 = vmatmul.mubr.bf16.gmra.mrb[0].mxu0 %v1100
  %v1269 = vpop.f32.mrb[0].mxu0
  %v1270 = vadd.f32 %v1185, %v1269
  %v1271 = vpop.f32.mrb[0].mxu0
  %v1272 = vpop.f32.mrb[0].mxu0
  %v1273 = vadd.f32 %v1185, %v1272
  %v1274 = vpop.f32.mrb[0].mxu0
  %1275 = vmatprep.mubr.bf16.mxu0 0
  %1276 = vmatmul.mubr.bf16.gmra.mrb[0].mxu0 %v1101
  %v1277 = vpop.f32.mrb[0].mxu0
  %v1278 = vadd.f32 %v1185, %v1277
  %v1279 = vpop.f32.mrb[0].mxu0
  %v1280 = vpop.f32.mrb[0].mxu0
  %v1281 = vadd.f32 %v1185, %v1280
  %v1282 = vpop.f32.mrb[0].mxu0
  %1283 = vmatprep.mubr.bf16.mxu0 0
  %1284 = vmatmul.mubr.bf16.gmra.mrb[0].mxu0 %v1102
  %v1285 = vpop.f32.mrb[0].mxu0
  %v1286 = vadd.f32 %v1185, %v1285
  %v1287 = vpop.f32.mrb[0].mxu0
  %v1288 = vpop.f32.mrb[0].mxu0
  %v1289 = vadd.f32 %v1185, %v1288
  %v1290 = vpop.f32.mrb[0].mxu0
  %1291 = vmatprep.mubr.bf16.mxu0 0
  %1292 = vmatmul.mubr.bf16.gmra.mrb[0].mxu0 %v1103
  %v1293 = vpop.f32.mrb[0].mxu0
  %v1294 = vadd.f32 %v1185, %v1293
  %v1295 = vpop.f32.mrb[0].mxu0
  %v1296 = vpop.f32.mrb[0].mxu0
  %v1297 = vadd.f32 %v1185, %v1296
  %v1298 = vpop.f32.mrb[0].mxu0
  %1299 = vmatprep.mubr.bf16.mxu0 0
  %1300 = vmatmul.mubr.bf16.gmra.mrb[0].mxu0 %v1104
  %v1301 = vpop.f32.mrb[0].mxu0
  %v1302 = vadd.f32 %v1185, %v1301
  %v1303 = vpop.f32.mrb[0].mxu0
  %v1304 = vpop.f32.mrb[0].mxu0
  %v1305 = vadd.f32 %v1185, %v1304
  %v1306 = vpop.f32.mrb[0].mxu0
  %1307 = vmatprep.mubr.bf16.mxu0 0
  %1308 = vmatmul.mubr.bf16.gmra.mrb[0].mxu0 %v1105
  %v1309 = vpop.f32.mrb[0].mxu0
  %v1310 = vadd.f32 %v1185, %v1309
  %v1311 = vpop.f32.mrb[0].mxu0
  %v1312 = vpop.f32.mrb[0].mxu0
  %v1313 = vadd.f32 %v1185, %v1312
  %v1314 = vpop.f32.mrb[0].mxu0
  %1315 = vmatprep.mubr.bf16.mxu0 0
  %1316 = vmatmul.mubr.bf16.gmra.mrb[0].mxu0 %v1106
  %v1317 = vpop.f32.mrb[0].mxu0
  %v1318 = vadd.f32 %v1185, %v1317
  %v1319 = vpop.f32.mrb[0].mxu0
  %v1320 = vpop.f32.mrb[0].mxu0
  %v1321 = vadd.f32 %v1185, %v1320
  %v1322 = vpop.f32.mrb[0].mxu0
  %1323 = vmatprep.mubr.bf16.mxu0 0
  %1324 = vmatmul.mubr.bf16.gmra.mrb[0].mxu0 %v1107
  %v1325 = vpop.f32.mrb[0].mxu0
  %v1326 = vadd.f32 %v1185, %v1325
  %v1327 = vpop.f32.mrb[0].mxu0
  %v1328 = vpop.f32.mrb[0].mxu0
  %v1329 = vadd.f32 %v1185, %v1328
  %v1330 = vpop.f32.mrb[0].mxu0
  %1331 = vmatprep.mubr.bf16.mxu0 0
  %1332 = vmatmul.mubr.bf16.gmra.mrb[0].mxu0 %v1108
  %v1333 = vpop.f32.mrb[0].mxu0
  %v1334 = vadd.f32 %v1185, %v1333
  %v1335 = vpop.f32.mrb[0].mxu0
  %v1336 = vpop.f32.mrb[0].mxu0
  %v1337 = vadd.f32 %v1185, %v1336
  %v1338 = vpop.f32.mrb[0].mxu0
  %1339 = vmatprep.mubr.bf16.mxu0 0
  %1340 = vmatmul.mubr.bf16.gmra.mrb[0].mxu0 %v1109
  %v1341 = vpop.f32.mrb[0].mxu0
  %v1342 = vadd.f32 %v1185, %v1341
  %v1343 = vpop.f32.mrb[0].mxu0
  %v1344 = vpop.f32.mrb[0].mxu0
  %v1345 = vadd.f32 %v1185, %v1344
  %v1346 = vpop.f32.mrb[0].mxu0
  %1347 = vmatprep.mubr.bf16.mxu0 0
  %1348 = vmatmul.mubr.bf16.gmra.mrb[0].mxu0 %v1110
  %v1349 = vpop.f32.mrb[0].mxu0
  %v1350 = vadd.f32 %v1185, %v1349
  %v1351 = vpop.f32.mrb[0].mxu0
  %v1352 = vpop.f32.mrb[0].mxu0
  %v1353 = vadd.f32 %v1185, %v1352
  %v1354 = vpop.f32.mrb[0].mxu0
  %1355 = vmatprep.mubr.bf16.mxu0 0
  %1356 = vmatmul.mubr.bf16.gmra.mrb[0].mxu0 %v1111
  %v1357 = vpop.f32.mrb[0].mxu0
  %v1358 = vadd.f32 %v1185, %v1357
  %v1359 = vpop.f32.mrb[0].mxu0
  %v1360 = vpop.f32.mrb[0].mxu0
  %v1361 = vadd.f32 %v1185, %v1360
  %v1362 = vpop.f32.mrb[0].mxu0
  %1363 = vmatprep.mubr.bf16.mxu0 0
  %1364 = vmatmul.mubr.bf16.gmra.mrb[0].mxu0 %v1112
  %v1365 = vpop.f32.mrb[0].mxu0
  %v1366 = vadd.f32 %v1185, %v1365
  %v1367 = vpop.f32.mrb[0].mxu0
  %v1368 = vpop.f32.mrb[0].mxu0
  %v1369 = vadd.f32 %v1185, %v1368
  %v1370 = vpop.f32.mrb[0].mxu0
  %1371 = vmatprep.mubr.bf16.mxu0 0
  %1372 = vmatmul.mubr.bf16.gmra.mrb[0].mxu0 %v1113
  %v1373 = vpop.f32.mrb[0].mxu0
  %v1374 = vadd.f32 %v1185, %v1373
  %v1375 = vpop.f32.mrb[0].mxu0
  %v1376 = vpop.f32.mrb[0].mxu0
  %v1377 = vadd.f32 %v1185, %v1376
  %v1378 = vpop.f32.mrb[0].mxu0
  %1379 = vmatprep.mubr.bf16.mxu0 0
  %1380 = vmatmul.mubr.bf16.gmra.mrb[0].mxu0 %v1114
  %v1381 = vpop.f32.mrb[0].mxu0
  %v1382 = vadd.f32 %v1185, %v1381
  %v1383 = vpop.f32.mrb[0].mxu0
  %v1384 = vpop.f32.mrb[0].mxu0
  %v1385 = vadd.f32 %v1185, %v1384
  %v1386 = vpop.f32.mrb[0].mxu0
  %1387 = vmatprep.mubr.bf16.mxu0 0
  %1388 = vmatmul.mubr.bf16.gmra.mrb[0].mxu0 %v1115
  %v1389 = vpop.f32.mrb[0].mxu0
  %v1390 = vadd.f32 %v1185, %v1389
  %v1391 = vpop.f32.mrb[0].mxu0
  %v1392 = vpop.f32.mrb[0].mxu0
  %v1393 = vadd.f32 %v1185, %v1392
  %v1394 = vpop.f32.mrb[0].mxu0
  %1395 = vmatprep.mubr.bf16.mxu0 0
  %1396 = vmatmul.mubr.bf16.gmra.mrb[0].mxu0 %v1116
  %v1397 = vpop.f32.mrb[0].mxu0
  %v1398 = vadd.f32 %v1185, %v1397
  %v1399 = vpop.f32.mrb[0].mxu0
  %v1400 = vpop.f32.mrb[0].mxu0
  %v1401 = vadd.f32 %v1185, %v1400
  %v1402 = vpop.f32.mrb[0].mxu0
  %1403 = vmatprep.mubr.bf16.mxu0 0
  %1404 = vmatmul.mubr.bf16.gmra.mrb[0].mxu0 %v1117
  %v1405 = vpop.f32.mrb[0].mxu0
  %v1406 = vadd.f32 %v1185, %v1405
  %v1407 = vpop.f32.mrb[0].mxu0
  %v1408 = vpop.f32.mrb[0].mxu0
  %v1409 = vadd.f32 %v1185, %v1408
  %v1410 = vpop.f32.mrb[0].mxu0
  %1411 = vmatprep.mubr.bf16.mxu0 0
  %1412 = vmatmul.mubr.bf16.gmra.mrb[0].mxu0 %v1118
  %v1413 = vpop.f32.mrb[0].mxu0
  %v1414 = vadd.f32 %v1185, %v1413
  %v1415 = vpop.f32.mrb[0].mxu0
  %v1416 = vpop.f32.mrb[0].mxu0
  %v1417 = vadd.f32 %v1185, %v1416
  %v1418 = vpop.f32.mrb[0].mxu0
  %1419 = vmatprep.mubr.bf16.mxu0 0
  %1420 = vmatmul.mubr.bf16.gmra.mrb[0].mxu0 %v1119
  %v1421 = vpop.f32.mrb[0].mxu0
  %v1422 = vadd.f32 %v1185, %v1421
  %v1423 = vpop.f32.mrb[0].mxu0
  %v1424 = vpop.f32.mrb[0].mxu0
  %v1425 = vadd.f32 %v1185, %v1424
  %v1426 = vpop.f32.mrb[0].mxu0
  %1427 = vmatprep.mubr.bf16.mxu0 0
  %1428 = vmatmul.mubr.bf16.gmra.mrb[0].mxu0 %v1120
  %v1429 = vpop.f32.mrb[0].mxu0
  %v1430 = vadd.f32 %v1185, %v1429
  %v1431 = vpop.f32.mrb[0].mxu0
  %v1432 = vpop.f32.mrb[0].mxu0
  %v1433 = vadd.f32 %v1185, %v1432
  %v1434 = vpop.f32.mrb[0].mxu0
  %1435 = vmatprep.mubr.bf16.mxu0 0
  %1436 = vmatmul.mubr.bf16.gmra.mrb[0].mxu0 %v1121
  %v1437 = vpop.f32.mrb[0].mxu0
  %v1438 = vadd.f32 %v1185, %v1437
  %v1439 = vpop.f32.mrb[0].mxu0
  %v1440 = vpop.f32.mrb[0].mxu0
  %v1441 = vadd.f32 %v1185, %v1440
  %v1442 = vpop.f32.mrb[0].mxu0
  %1443 = vmatprep.mubr.bf16.mxu0 0
  %1444 = vmatmul.mubr.bf16.gmra.mrb[0].mxu0 %v1122
  %v1445 = vpop.f32.mrb[0].mxu0
  %v1446 = vadd.f32 %v1185, %v1445
  %v1447 = vpop.f32.mrb[0].mxu0
  %v1448 = vpop.f32.mrb[0].mxu0
  %v1449 = vadd.f32 %v1185, %v1448
  %v1450 = vpop.f32.mrb[0].mxu0
  %1451 = vmatprep.mubr.bf16.mxu0 0
  %1452 = vmatmul.mubr.bf16.gmra.mrb[0].mxu0 %v1123
  %v1453 = vpop.f32.mrb[0].mxu0
  %v1454 = vadd.f32 %v1185, %v1453
  %v1455 = vpop.f32.mrb[0].mxu0
  %v1456 = vpop.f32.mrb[0].mxu0
  %v1457 = vadd.f32 %v1185, %v1456
  %v1458 = vpop.f32.mrb[0].mxu0
  %1459 = vmatprep.mubr.bf16.mxu0 0
  %1460 = vmatmul.mubr.bf16.gmra.mrb[0].mxu0 %v1124
  %v1461 = vpop.f32.mrb[0].mxu0
  %v1462 = vadd.f32 %v1185, %v1461
  %v1463 = vpop.f32.mrb[0].mxu0
  %v1464 = vpop.f32.mrb[0].mxu0
  %v1465 = vadd.f32 %v1185, %v1464
  %v1466 = vpop.f32.mrb[0].mxu0
  %1467 = vmatprep.mubr.bf16.mxu0 0
  %1468 = vmatmul.mubr.bf16.gmra.mrb[0].mxu0 %v1125
  %v1469 = vpop.f32.mrb[0].mxu0
  %v1470 = vadd.f32 %v1185, %v1469
  %v1471 = vpop.f32.mrb[0].mxu0
  %v1472 = vpop.f32.mrb[0].mxu0
  %v1473 = vadd.f32 %v1185, %v1472
  %v1474 = vpop.f32.mrb[0].mxu0
  %1475 = vmatprep.mubr.bf16.mxu0 0
  %1476 = vmatmul.mubr.bf16.gmra.mrb[0].mxu0 %v1126
  %v1477 = vpop.f32.mrb[0].mxu0
  %v1478 = vadd.f32 %v1185, %v1477
  %v1479 = vpop.f32.mrb[0].mxu0
  %v1480 = vpop.f32.mrb[0].mxu0
  %v1481 = vadd.f32 %v1185, %v1480
  %v1482 = vpop.f32.mrb[0].mxu0
  %1483 = vmatprep.mubr.bf16.mxu0 0
  %1484 = vmatmul.mubr.bf16.gmra.mrb[0].mxu0 %v1127
  %v1485 = vpop.f32.mrb[0].mxu0
  %v1486 = vadd.f32 %v1185, %v1485
  %v1487 = vpop.f32.mrb[0].mxu0
  %v1488 = vpop.f32.mrb[0].mxu0
  %v1489 = vadd.f32 %v1185, %v1488
  %v1490 = vpop.f32.mrb[0].mxu0
  %1491 = vmatprep.mubr.bf16.mxu0 0
  %1492 = vmatmul.mubr.bf16.gmra.mrb[0].mxu0 %v1128
  %v1493 = vpop.f32.mrb[0].mxu0
  %v1494 = vadd.f32 %v1185, %v1493
  %v1495 = vpop.f32.mrb[0].mxu0
  %v1496 = vpop.f32.mrb[0].mxu0
  %v1497 = vadd.f32 %v1185, %v1496
  %v1498 = vpop.f32.mrb[0].mxu0
  %1499 = vmatprep.mubr.bf16.mxu0 0
  %1500 = vmatmul.mubr.bf16.gmra.mrb[0].mxu0 %v1129
  %v1501 = vpop.f32.mrb[0].mxu0
  %v1502 = vadd.f32 %v1185, %v1501
  %v1503 = vpop.f32.mrb[0].mxu0
  %v1504 = vpop.f32.mrb[0].mxu0
  %v1505 = vadd.f32 %v1185, %v1504
  %v1506 = vpop.f32.mrb[0].mxu0
  %1507 = vmatprep.mubr.bf16.mxu0 0
  %1508 = vmatmul.mubr.bf16.gmra.mrb[0].mxu0 %v1130
  %v1509 = vpop.f32.mrb[0].mxu0
  %v1510 = vadd.f32 %v1185, %v1509
  %v1511 = vpop.f32.mrb[0].mxu0
  %v1512 = vpop.f32.mrb[0].mxu0
  %v1513 = vadd.f32 %v1185, %v1512
  %v1514 = vpop.f32.mrb[0].mxu0
  %1515 = vmatprep.mubr.bf16.mxu0 0
  %1516 = vmatmul.mubr.bf16.gmra.mrb[0].mxu0 %v1131
  %v1517 = vpop.f32.mrb[0].mxu0
  %v1518 = vadd.f32 %v1185, %v1517
  %v1519 = vpop.f32.mrb[0].mxu0
  %v1520 = vpop.f32.mrb[0].mxu0
  %v1521 = vadd.f32 %v1185, %v1520
  %v1522 = vpop.f32.mrb[0].mxu0
  %1523 = vmatprep.mubr.bf16.mxu0 0
  %1524 = vmatmul.mubr.bf16.gmra.mrb[0].mxu0 %v1132
  %v1525 = vpop.f32.mrb[0].mxu0
  %v1526 = vadd.f32 %v1185, %v1525
  %v1527 = vpop.f32.mrb[0].mxu0
  %v1528 = vpop.f32.mrb[0].mxu0
  %v1529 = vadd.f32 %v1185, %v1528
  %v1530 = vpop.f32.mrb[0].mxu0
  %1531 = vmatprep.mubr.bf16.mxu0 0
  %1532 = vmatmul.mubr.bf16.gmra.mrb[0].mxu0 %v1133
  %v1533 = vpop.f32.mrb[0].mxu0
  %v1534 = vadd.f32 %v1185, %v1533
  %v1535 = vpop.f32.mrb[0].mxu0
  %v1536 = vpop.f32.mrb[0].mxu0
  %v1537 = vadd.f32 %v1185, %v1536
  %v1538 = vpop.f32.mrb[0].mxu0
  %1539 = vmatprep.mubr.bf16.mxu0 0
  %1540 = vmatmul.mubr.bf16.gmra.mrb[0].mxu0 %v1134
  %v1541 = vpop.f32.mrb[0].mxu0
  %v1542 = vadd.f32 %v1185, %v1541
  %v1543 = vpop.f32.mrb[0].mxu0
  %v1544 = vpop.f32.mrb[0].mxu0
  %v1545 = vadd.f32 %v1185, %v1544
  %v1546 = vpop.f32.mrb[0].mxu0
  %1547 = vmatprep.mubr.bf16.mxu0 0
  %1548 = vmatmul.mubr.bf16.gmra.mrb[0].mxu0 %v1135
  %v1549 = vpop.f32.mrb[0].mxu0
  %v1550 = vadd.f32 %v1185, %v1549
  %v1551 = vpop.f32.mrb[0].mxu0
  %v1552 = vpop.f32.mrb[0].mxu0
  %v1553 = vadd.f32 %v1185, %v1552
  %v1554 = vpop.f32.mrb[0].mxu0
  %1555 = vmatprep.mubr.bf16.mxu0 0
  %1556 = vmatmul.mubr.bf16.gmra.mrb[0].mxu0 %v1136
  %v1557 = vpop.f32.mrb[0].mxu0
  %v1558 = vadd.f32 %v1185, %v1557
  %v1559 = vpop.f32.mrb[0].mxu0
  %v1560 = vpop.f32.mrb[0].mxu0
  %v1561 = vadd.f32 %v1185, %v1560
  %v1562 = vpop.f32.mrb[0].mxu0
  %1563 = vmatprep.mubr.bf16.mxu0 0
  %1564 = vmatmul.mubr.bf16.gmra.mrb[0].mxu0 %v1137
  %v1565 = vpop.f32.mrb[0].mxu0
  %v1566 = vadd.f32 %v1185, %v1565
  %v1567 = vpop.f32.mrb[0].mxu0
  %v1568 = vpop.f32.mrb[0].mxu0
  %v1569 = vadd.f32 %v1185, %v1568
  %v1570 = vpop.f32.mrb[0].mxu0
  %1571 = vmatprep.mubr.bf16.mxu0 0
  %1572 = vmatmul.mubr.bf16.gmra.mrb[0].mxu0 %v1138
  %v1573 = vpop.f32.mrb[0].mxu0
  %v1574 = vadd.f32 %v1185, %v1573
  %v1575 = vpop.f32.mrb[0].mxu0
  %v1576 = vpop.f32.mrb[0].mxu0
  %v1577 = vadd.f32 %v1185, %v1576
  %v1578 = vpop.f32.mrb[0].mxu0
  %1579 = vmatprep.mubr.bf16.mxu0 0
  %1580 = vmatmul.mubr.bf16.gmra.mrb[0].mxu0 %v1139
  %v1581 = vpop.f32.mrb[0].mxu0
  %v1582 = vadd.f32 %v1185, %v1581
  %v1583 = vpop.f32.mrb[0].mxu0
  %v1584 = vpop.f32.mrb[0].mxu0
  %v1585 = vadd.f32 %v1185, %v1584
  %v1586 = vpop.f32.mrb[0].mxu0
  %1587 = vmatprep.mubr.bf16.mxu0 0
  %1588 = vmatmul.mubr.bf16.gmra.mrb[0].mxu0 %v1140
  %v1589 = vpop.f32.mrb[0].mxu0
  %v1590 = vadd.f32 %v1185, %v1589
  %v1591 = vpop.f32.mrb[0].mxu0
  %v1592 = vpop.f32.mrb[0].mxu0
  %v1593 = vadd.f32 %v1185, %v1592
  %v1594 = vpop.f32.mrb[0].mxu0
  %1595 = vmatprep.mubr.bf16.mxu0 0
  %1596 = vmatmul.mubr.bf16.gmra.mrb[0].mxu0 %v1141
  %v1597 = vpop.f32.mrb[0].mxu0
  %v1598 = vadd.f32 %v1185, %v1597
  %v1599 = vpop.f32.mrb[0].mxu0
  %v1600 = vpop.f32.mrb[0].mxu0
  %v1601 = vadd.f32 %v1185, %v1600
  %v1602 = vpop.f32.mrb[0].mxu0
  %1603 = vmatprep.mubr.bf16.mxu0 0
  %1604 = vmatmul.mubr.bf16.gmra.mrb[0].mxu0 %v1142
  %v1605 = vpop.f32.mrb[0].mxu0
  %v1606 = vadd.f32 %v1185, %v1605
  %v1607 = vpop.f32.mrb[0].mxu0
  %v1608 = vpop.f32.mrb[0].mxu0
  %v1609 = vadd.f32 %v1185, %v1608
  %v1610 = vpop.f32.mrb[0].mxu0
  %1611 = vmatprep.mubr.bf16.mxu0 0
  %1612 = vmatmul.mubr.bf16.gmra.mrb[0].mxu0 %v1143
  %v1613 = vpop.f32.mrb[0].mxu0
  %v1614 = vadd.f32 %v1185, %v1613
  %v1615 = vpop.f32.mrb[0].mxu0
  %v1616 = vpop.f32.mrb[0].mxu0
  %v1617 = vadd.f32 %v1185, %v1616
  %v1618 = vpop.f32.mrb[0].mxu0
  %1619 = vmatprep.mubr.bf16.mxu0 0
  %1620 = vmatmul.mubr.bf16.gmra.mrb[0].mxu0 %v1144
  %v1621 = vpop.f32.mrb[0].mxu0
  %v1622 = vadd.f32 %v1185, %v1621
  %v1623 = vpop.f32.mrb[0].mxu0
  %v1624 = vpop.f32.mrb[0].mxu0
  %v1625 = vadd.f32 %v1185, %v1624
  %v1626 = vpop.f32.mrb[0].mxu0
  %1627 = vmatprep.mubr.bf16.mxu0 0
  %1628 = vmatmul.mubr.bf16.gmra.mrb[0].mxu0 %v1145
  %v1629 = vpop.f32.mrb[0].mxu0
  %v1630 = vadd.f32 %v1185, %v1629
  %v1631 = vpop.f32.mrb[0].mxu0
  %v1632 = vpop.f32.mrb[0].mxu0
  %v1633 = vadd.f32 %v1185, %v1632
  %v1634 = vpop.f32.mrb[0].mxu0
  %1635 = vmatprep.mubr.bf16.mxu0 0
  %1636 = vmatmul.mubr.bf16.gmra.mrb[0].mxu0 %v1146
  %v1637 = vpop.f32.mrb[0].mxu0
  %v1638 = vadd.f32 %v1185, %v1637
  %v1639 = vpop.f32.mrb[0].mxu0
  %v1640 = vpop.f32.mrb[0].mxu0
  %v1641 = vadd.f32 %v1185, %v1640
  %v1642 = vpop.f32.mrb[0].mxu0
  %1643 = vmatprep.mubr.bf16.mxu0 0
  %1644 = vmatmul.mubr.bf16.gmra.mrb[0].mxu0 %v1147
  %v1645 = vpop.f32.mrb[0].mxu0
  %v1646 = vadd.f32 %v1185, %v1645
  %v1647 = vpop.f32.mrb[0].mxu0
  %v1648 = vpop.f32.mrb[0].mxu0
  %v1649 = vadd.f32 %v1185, %v1648
  %v1650 = vpop.f32.mrb[0].mxu0
  %1651 = vmatprep.mubr.bf16.mxu0 0
  %1652 = vmatmul.mubr.bf16.gmra.mrb[0].mxu0 %v1148
  %v1653 = vpop.f32.mrb[0].mxu0
  %v1654 = vadd.f32 %v1185, %v1653
  %v1655 = vpop.f32.mrb[0].mxu0
  %v1656 = vpop.f32.mrb[0].mxu0
  %v1657 = vadd.f32 %v1185, %v1656
  %v1658 = vpop.f32.mrb[0].mxu0
  %1659 = vmatprep.mubr.bf16.mxu0 0
  %1660 = vmatmul.mubr.bf16.gmra.mrb[0].mxu0 %v1149
  %v1661 = vpop.f32.mrb[0].mxu0
  %v1662 = vadd.f32 %v1185, %v1661
  %v1663 = vpop.f32.mrb[0].mxu0
  %v1664 = vpop.f32.mrb[0].mxu0
  %v1665 = vadd.f32 %v1185, %v1664
  %v1666 = vpop.f32.mrb[0].mxu0
  %1667 = vmatprep.mubr.bf16.mxu0 0
  %1668 = vmatmul.mubr.bf16.gmra.mrb[0].mxu0 %v1150
  %v1669 = vpop.f32.mrb[0].mxu0
  %v1670 = vadd.f32 %v1185, %v1669
  %v1671 = vpop.f32.mrb[0].mxu0
  %v1672 = vpop.f32.mrb[0].mxu0
  %v1673 = vadd.f32 %v1185, %v1672
  %v1674 = vpop.f32.mrb[0].mxu0
  %1675 = vmatprep.mubr.bf16.mxu0 0
  %1676 = vmatmul.mubr.bf16.gmra.mrb[0].mxu0 %v1151
  %v1677 = vpop.f32.mrb[0].mxu0
  %v1678 = vadd.f32 %v1185, %v1677
  %v1679 = vpop.f32.mrb[0].mxu0
  %v1680 = vpop.f32.mrb[0].mxu0
  %v1681 = vadd.f32 %v1185, %v1680
  %v1682 = vpop.f32.mrb[0].mxu0
  %1683 = vmatprep.mubr.bf16.mxu0 0
  %1684 = vmatmul.mubr.bf16.gmra.mrb[0].mxu0 %v1152
  %v1685 = vpop.f32.mrb[0].mxu0
  %v1686 = vadd.f32 %v1185, %v1685
  %v1687 = vpop.f32.mrb[0].mxu0
  %v1688 = vpop.f32.mrb[0].mxu0
  %v1689 = vadd.f32 %v1185, %v1688
  %v1690 = vpop.f32.mrb[0].mxu0
  %1691 = vmatprep.mubr.bf16.mxu0 0
  %1692 = vmatmul.mubr.bf16.gmra.mrb[0].mxu0 %v1153
  %v1693 = vpop.f32.mrb[0].mxu0
  %v1694 = vadd.f32 %v1185, %v1693
  %v1695 = vpop.f32.mrb[0].mxu0
  %v1696 = vpop.f32.mrb[0].mxu0
  %v1697 = vadd.f32 %v1185, %v1696
  %v1698 = vpop.f32.mrb[0].mxu0
  %1699 = vmatprep.mubr.bf16.mxu0 0
  %1700 = vmatmul.mubr.bf16.gmra.mrb[0].mxu0 %v1154
  %v1701 = vpop.f32.mrb[0].mxu0
  %v1702 = vadd.f32 %v1185, %v1701
  %v1703 = vpop.f32.mrb[0].mxu0
  %v1704 = vpop.f32.mrb[0].mxu0
  %v1705 = vadd.f32 %v1185, %v1704
  %v1706 = vpop.f32.mrb[0].mxu0
  %1707 = vmatprep.mubr.bf16.mxu0 0
  %1708 = vmatmul.mubr.bf16.gmra.mrb[0].mxu0 %v1155
  %v1709 = vpop.f32.mrb[0].mxu0
  %v1710 = vadd.f32 %v1185, %v1709
  %v1711 = vpop.f32.mrb[0].mxu0
  %v1712 = vpop.f32.mrb[0].mxu0
  %v1713 = vadd.f32 %v1185, %v1712
  %v1714 = vpop.f32.mrb[0].mxu0
  %1715 = vmatprep.mubr.bf16.mxu0 0
  %1716 = vmatmul.mubr.bf16.gmra.mrb[0].mxu0 %v1156
  %v1717 = vpop.f32.mrb[0].mxu0
  %v1718 = vadd.f32 %v1185, %v1717
  %v1719 = vpop.f32.mrb[0].mxu0
  %v1720 = vpop.f32.mrb[0].mxu0
  %v1721 = vadd.f32 %v1185, %v1720
  %v1722 = vpop.f32.mrb[0].mxu0
  %1723 = vmatprep.mubr.bf16.mxu0 0
  %1724 = vmatmul.mubr.bf16.gmra.mrb[0].mxu0 %v1157
  %v1725 = vpop.f32.mrb[0].mxu0
  %v1726 = vadd.f32 %v1185, %v1725
  %v1727 = vpop.f32.mrb[0].mxu0
  %v1728 = vpop.f32.mrb[0].mxu0
  %v1729 = vadd.f32 %v1185, %v1728
  %v1730 = vpop.f32.mrb[0].mxu0
  %1731 = vmatprep.mubr.bf16.mxu0 0
  %1732 = vmatmul.mubr.bf16.gmra.mrb[0].mxu0 %v1158
  %v1733 = vpop.f32.mrb[0].mxu0
  %v1734 = vadd.f32 %v1185, %v1733
  %v1735 = vpop.f32.mrb[0].mxu0
  %v1736 = vpop.f32.mrb[0].mxu0
  %v1737 = vadd.f32 %v1185, %v1736
  %v1738 = vpop.f32.mrb[0].mxu0
  %1739 = vmatprep.mubr.bf16.mxu0 0
  %1740 = vmatmul.mubr.bf16.gmra.mrb[0].mxu0 %v1159
  %v1741 = vpop.f32.mrb[0].mxu0
  %v1742 = vadd.f32 %v1185, %v1741
  %v1743 = vpop.f32.mrb[0].mxu0
  %v1744 = vpop.f32.mrb[0].mxu0
  %v1745 = vadd.f32 %v1185, %v1744
  %v1746 = vpop.f32.mrb[0].mxu0
  %1747 = vmatprep.mubr.bf16.mxu0 0
  %1748 = vmatmul.mubr.bf16.gmra.mrb[0].mxu0 %v1160
  %v1749 = vpop.f32.mrb[0].mxu0
  %v1750 = vadd.f32 %v1185, %v1749
  %v1751 = vpop.f32.mrb[0].mxu0
  %v1752 = vpop.f32.mrb[0].mxu0
  %v1753 = vadd.f32 %v1185, %v1752
  %v1754 = vpop.f32.mrb[0].mxu0
  %1755 = vmatprep.mubr.bf16.mxu0 0
  %1756 = vmatmul.mubr.bf16.gmra.mrb[0].mxu0 %v1161
  %v1757 = vpop.f32.mrb[0].mxu0
  %v1758 = vadd.f32 %v1185, %v1757
  %v1759 = vpop.f32.mrb[0].mxu0
  %v1760 = vpop.f32.mrb[0].mxu0
  %v1761 = vadd.f32 %v1185, %v1760
  %v1762 = vpop.f32.mrb[0].mxu0
  %1763 = vmatprep.mubr.bf16.mxu0 0
  %1764 = vmatmul.mubr.bf16.gmra.mrb[0].mxu0 %v1162
  %v1765 = vpop.f32.mrb[0].mxu0
  %v1766 = vadd.f32 %v1185, %v1765
  %v1767 = vpop.f32.mrb[0].mxu0
  %v1768 = vpop.f32.mrb[0].mxu0
  %v1769 = vadd.f32 %v1185, %v1768
  %v1770 = vpop.f32.mrb[0].mxu0
  %1771 = vmatprep.mubr.bf16.mxu0 0
  %1772 = vmatmul.mubr.bf16.gmra.mrb[0].mxu0 %v1163
  %v1773 = vpop.f32.mrb[0].mxu0
  %v1774 = vadd.f32 %v1185, %v1773
  %v1775 = vpop.f32.mrb[0].mxu0
  %v1776 = vpop.f32.mrb[0].mxu0
  %v1777 = vadd.f32 %v1185, %v1776
  %v1778 = vpop.f32.mrb[0].mxu0
  %1779 = vdwg.mxu0
  %v1780 = vmax.f32 %v1270, 0.0
  %v1781 = vmax.f32 %v1273, 0.0
  %v1782 = vmax.f32 %v1278, 0.0
  %v1783 = vmax.f32 %v1281, 0.0
  %v1784 = vmax.f32 %v1286, 0.0
  %v1785 = vmax.f32 %v1289, 0.0
  %v1786 = vmax.f32 %v1294, 0.0
  %v1787 = vmax.f32 %v1297, 0.0
  %v1788 = vmax.f32 %v1302, 0.0
  %v1789 = vmax.f32 %v1305, 0.0
  %v1790 = vmax.f32 %v1310, 0.0
  %v1791 = vmax.f32 %v1313, 0.0
  %v1792 = vmax.f32 %v1318, 0.0
  %v1793 = vmax.f32 %v1321, 0.0
  %v1794 = vmax.f32 %v1326, 0.0
  %v1795 = vmax.f32 %v1329, 0.0
  %v1796 = vmax.f32 %v1334, 0.0
  %v1797 = vmax.f32 %v1337, 0.0
  %v1798 = vmax.f32 %v1342, 0.0
  %v1799 = vmax.f32 %v1345, 0.0
  %v1800 = vmax.f32 %v1350, 0.0
  %v1801 = vmax.f32 %v1353, 0.0
  %v1802 = vmax.f32 %v1358, 0.0
  %v1803 = vmax.f32 %v1361, 0.0
  %v1804 = vmax.f32 %v1366, 0.0
  %v1805 = vmax.f32 %v1369, 0.0
  %v1806 = vmax.f32 %v1374, 0.0
  %v1807 = vmax.f32 %v1377, 0.0
  %v1808 = vmax.f32 %v1382, 0.0
  %v1809 = vmax.f32 %v1385, 0.0
  %v1810 = vmax.f32 %v1390, 0.0
  %v1811 = vmax.f32 %v1393, 0.0
  %v1812 = vmax.f32 %v1398, 0.0
  %v1813 = vmax.f32 %v1401, 0.0
  %v1814 = vmax.f32 %v1406, 0.0
  %v1815 = vmax.f32 %v1409, 0.0
  %v1816 = vmax.f32 %v1414, 0.0
  %v1817 = vmax.f32 %v1417, 0.0
  %v1818 = vmax.f32 %v1422, 0.0
  %v1819 = vmax.f32 %v1425, 0.0
  %v1820 = vmax.f32 %v1430, 0.0
  %v1821 = vmax.f32 %v1433, 0.0
  %v1822 = vmax.f32 %v1438, 0.0
  %v1823 = vmax.f32 %v1441, 0.0
  %v1824 = vmax.f32 %v1446, 0.0
  %v1825 = vmax.f32 %v1449, 0.0
  %v1826 = vmax.f32 %v1454, 0.0
  %v1827 = vmax.f32 %v1457, 0.0
  %v1828 = vmax.f32 %v1462, 0.0
  %v1829 = vmax.f32 %v1465, 0.0
  %v1830 = vmax.f32 %v1470, 0.0
  %v1831 = vmax.f32 %v1473, 0.0
  %v1832 = vmax.f32 %v1478, 0.0
  %v1833 = vmax.f32 %v1481, 0.0
  %v1834 = vmax.f32 %v1486, 0.0
  %v1835 = vmax.f32 %v1489, 0.0
  %v1836 = vmax.f32 %v1494, 0.0
  %v1837 = vmax.f32 %v1497, 0.0
  %v1838 = vmax.f32 %v1502, 0.0
  %v1839 = vmax.f32 %v1505, 0.0
  %v1840 = vmax.f32 %v1510, 0.0
  %v1841 = vmax.f32 %v1513, 0.0
  %v1842 = vmax.f32 %v1518, 0.0
  %v1843 = vmax.f32 %v1521, 0.0
  %v1844 = vmax.f32 %v1526, 0.0
  %v1845 = vmax.f32 %v1529, 0.0
  %v1846 = vmax.f32 %v1534, 0.0
  %v1847 = vmax.f32 %v1537, 0.0
  %v1848 = vmax.f32 %v1542, 0.0
  %v1849 = vmax.f32 %v1545, 0.0
  %v1850 = vmax.f32 %v1550, 0.0
  %v1851 = vmax.f32 %v1553, 0.0
  %v1852 = vmax.f32 %v1558, 0.0
  %v1853 = vmax.f32 %v1561, 0.0
  %v1854 = vmax.f32 %v1566, 0.0
  %v1855 = vmax.f32 %v1569, 0.0
  %v1856 = vmax.f32 %v1574, 0.0
  %v1857 = vmax.f32 %v1577, 0.0
  %v1858 = vmax.f32 %v1582, 0.0
  %v1859 = vmax.f32 %v1585, 0.0
  %v1860 = vmax.f32 %v1590, 0.0
  %v1861 = vmax.f32 %v1593, 0.0
  %v1862 = vmax.f32 %v1598, 0.0
  %v1863 = vmax.f32 %v1601, 0.0
  %v1864 = vmax.f32 %v1606, 0.0
  %v1865 = vmax.f32 %v1609, 0.0
  %v1866 = vmax.f32 %v1614, 0.0
  %v1867 = vmax.f32 %v1617, 0.0
  %v1868 = vmax.f32 %v1622, 0.0
  %v1869 = vmax.f32 %v1625, 0.0
  %v1870 = vmax.f32 %v1630, 0.0
  %v1871 = vmax.f32 %v1633, 0.0
  %v1872 = vmax.f32 %v1638, 0.0
  %v1873 = vmax.f32 %v1641, 0.0
  %v1874 = vmax.f32 %v1646, 0.0
  %v1875 = vmax.f32 %v1649, 0.0
  %v1876 = vmax.f32 %v1654, 0.0
  %v1877 = vmax.f32 %v1657, 0.0
  %v1878 = vmax.f32 %v1662, 0.0
  %v1879 = vmax.f32 %v1665, 0.0
  %v1880 = vmax.f32 %v1670, 0.0
  %v1881 = vmax.f32 %v1673, 0.0
  %v1882 = vmax.f32 %v1678, 0.0
  %v1883 = vmax.f32 %v1681, 0.0
  %v1884 = vmax.f32 %v1686, 0.0
  %v1885 = vmax.f32 %v1689, 0.0
  %v1886 = vmax.f32 %v1694, 0.0
  %v1887 = vmax.f32 %v1697, 0.0
  %v1888 = vmax.f32 %v1702, 0.0
  %v1889 = vmax.f32 %v1705, 0.0
  %v1890 = vmax.f32 %v1710, 0.0
  %v1891 = vmax.f32 %v1713, 0.0
  %v1892 = vmax.f32 %v1718, 0.0
  %v1893 = vmax.f32 %v1721, 0.0
  %v1894 = vmax.f32 %v1726, 0.0
  %v1895 = vmax.f32 %v1729, 0.0
  %v1896 = vmax.f32 %v1734, 0.0
  %v1897 = vmax.f32 %v1737, 0.0
  %v1898 = vmax.f32 %v1742, 0.0
  %v1899 = vmax.f32 %v1745, 0.0
  %v1900 = vmax.f32 %v1750, 0.0
  %v1901 = vmax.f32 %v1753, 0.0
  %v1902 = vmax.f32 %v1758, 0.0
  %v1903 = vmax.f32 %v1761, 0.0
  %v1904 = vmax.f32 %v1766, 0.0
  %v1905 = vmax.f32 %v1769, 0.0
  %v1906 = vmax.f32 %v1774, 0.0
  %v1907 = vmax.f32 %v1777, 0.0
  %v1908 = vpack.c.bf16 %v1781, %v1780
  %v1909 = vpack.c.bf16 %v1783, %v1782
  %v1910 = vpack.c.bf16 %v1785, %v1784
  %v1911 = vpack.c.bf16 %v1787, %v1786
  %v1912 = vpack.c.bf16 %v1789, %v1788
  %v1913 = vpack.c.bf16 %v1791, %v1790
  %v1914 = vpack.c.bf16 %v1793, %v1792
  %v1915 = vpack.c.bf16 %v1795, %v1794
  %v1916 = vpack.c.bf16 %v1797, %v1796
  %v1917 = vpack.c.bf16 %v1799, %v1798
  %v1918 = vpack.c.bf16 %v1801, %v1800
  %v1919 = vpack.c.bf16 %v1803, %v1802
  %v1920 = vpack.c.bf16 %v1805, %v1804
  %v1921 = vpack.c.bf16 %v1807, %v1806
  %v1922 = vpack.c.bf16 %v1809, %v1808
  %v1923 = vpack.c.bf16 %v1811, %v1810
  %v1924 = vpack.c.bf16 %v1813, %v1812
  %v1925 = vpack.c.bf16 %v1815, %v1814
  %v1926 = vpack.c.bf16 %v1817, %v1816
  %v1927 = vpack.c.bf16 %v1819, %v1818
  %v1928 = vpack.c.bf16 %v1821, %v1820
  %v1929 = vpack.c.bf16 %v1823, %v1822
  %v1930 = vpack.c.bf16 %v1825, %v1824
  %v1931 = vpack.c.bf16 %v1827, %v1826
  %v1932 = vpack.c.bf16 %v1829, %v1828
  %v1933 = vpack.c.bf16 %v1831, %v1830
  %v1934 = vpack.c.bf16 %v1833, %v1832
  %v1935 = vpack.c.bf16 %v1835, %v1834
  %v1936 = vpack.c.bf16 %v1837, %v1836
  %v1937 = vpack.c.bf16 %v1839, %v1838
  %v1938 = vpack.c.bf16 %v1841, %v1840
  %v1939 = vpack.c.bf16 %v1843, %v1842
  %v1940 = vpack.c.bf16 %v1845, %v1844
  %v1941 = vpack.c.bf16 %v1847, %v1846
  %v1942 = vpack.c.bf16 %v1849, %v1848
  %v1943 = vpack.c.bf16 %v1851, %v1850
  %v1944 = vpack.c.bf16 %v1853, %v1852
  %v1945 = vpack.c.bf16 %v1855, %v1854
  %v1946 = vpack.c.bf16 %v1857, %v1856
  %v1947 = vpack.c.bf16 %v1859, %v1858
  %v1948 = vpack.c.bf16 %v1861, %v1860
  %v1949 = vpack.c.bf16 %v1863, %v1862
  %v1950 = vpack.c.bf16 %v1865, %v1864
  %v1951 = vpack.c.bf16 %v1867, %v1866
  %v1952 = vpack.c.bf16 %v1869, %v1868
  %v1953 = vpack.c.bf16 %v1871, %v1870
  %v1954 = vpack.c.bf16 %v1873, %v1872
  %v1955 = vpack.c.bf16 %v1875, %v1874
  %v1956 = vpack.c.bf16 %v1877, %v1876
  %v1957 = vpack.c.bf16 %v1879, %v1878
  %v1958 = vpack.c.bf16 %v1881, %v1880
  %v1959 = vpack.c.bf16 %v1883, %v1882
  %v1960 = vpack.c.bf16 %v1885, %v1884
  %v1961 = vpack.c.bf16 %v1887, %v1886
  %v1962 = vpack.c.bf16 %v1889, %v1888
  %v1963 = vpack.c.bf16 %v1891, %v1890
  %v1964 = vpack.c.bf16 %v1893, %v1892
  %v1965 = vpack.c.bf16 %v1895, %v1894
  %v1966 = vpack.c.bf16 %v1897, %v1896
  %v1967 = vpack.c.bf16 %v1899, %v1898
  %v1968 = vpack.c.bf16 %v1901, %v1900
  %v1969 = vpack.c.bf16 %v1903, %v1902
  %v1970 = vpack.c.bf16 %v1905, %v1904
  %v1971 = vpack.c.bf16 %v1907, %v1906
  %s1972 = scalar_lea.vmem %s3, 64
  %v1973 = vld [vmem:[%s1972] sm:$0xf]
  %v1974 = vld [vmem:[%s1972 + $0x4] sm:$0xf]
  %v1975 = vld [vmem:[%s1972 + $0x8] sm:$0xf]
  %v1976 = vld [vmem:[%s1972 + $0xc] sm:$0xf]
  %v1977 = vld [vmem:[%s1972 + $0x10] sm:$0xf]
  %v1978 = vld [vmem:[%s1972 + $0x14] sm:$0xf]
  %v1979 = vld [vmem:[%s1972 + $0x18] sm:$0xf]
  %v1980 = vld [vmem:[%s1972 + $0x1c] sm:$0xf]
  %v1981 = vld [vmem:[%s1972 + $0x20] sm:$0xf]
  %v1982 = vld [vmem:[%s1972 + $0x24] sm:$0xf]
  %v1983 = vld [vmem:[%s1972 + $0x28] sm:$0xf]
  %v1984 = vld [vmem:[%s1972 + $0x2c] sm:$0xf]
  %v1985 = vld [vmem:[%s1972 + $0x30] sm:$0xf]
  %v1986 = vld [vmem:[%s1972 + $0x34] sm:$0xf]
  %v1987 = vld [vmem:[%s1972 + $0x38] sm:$0xf]
  %v1988 = vld [vmem:[%s1972 + $0x3c] sm:$0xf]
  %s1989 = scalar_lea.vmem %s4, 1
  %v1990 = vld [vmem:[%s1989] sm:$0x1]
  %v1992 = vlaneseq
  %v1993 = vshrl.u32 %v1992, 7
  %v1994 = vsub.s32 0, %v1993
  %v1995 = vrot.slane %v1990, %v1994
  %v2013 = vunpack.c.l.b16 %v1973
  %v2014 = vunpack.c.l.b16 %v1974
  %v2015 = vunpack.c.l.b16 %v1975
  %v2016 = vunpack.c.l.b16 %v1976
  %v2017 = vunpack.c.l.b16 %v1977
  %v2018 = vunpack.c.l.b16 %v1978
  %v2019 = vunpack.c.l.b16 %v1979
  %v2020 = vunpack.c.l.b16 %v1980
  %v2021 = vunpack.c.l.b16 %v1981
  %v2022 = vunpack.c.l.b16 %v1982
  %v2023 = vunpack.c.l.b16 %v1983
  %v2024 = vunpack.c.l.b16 %v1984
  %v2025 = vunpack.c.l.b16 %v1985
  %v2026 = vunpack.c.l.b16 %v1986
  %v2027 = vunpack.c.l.b16 %v1987
  %v2028 = vunpack.c.l.b16 %v1988
  %v2029 = vpack.c.b16 %v2014, %v2013
  %v2030 = vpack.c.b16 %v2016, %v2015
  %v2031 = vpack.c.b16 %v2018, %v2017
  %v2032 = vpack.c.b16 %v2020, %v2019
  %v2033 = vpack.c.b16 %v2022, %v2021
  %v2034 = vpack.c.b16 %v2024, %v2023
  %v2035 = vpack.c.b16 %v2026, %v2025
  %v2036 = vpack.c.b16 %v2028, %v2027
  %2045 = vmatprep.subr.bf16.mxu0 0
  %2046 = vmatpush1.bf16.msra.mxu0 %v2029
  %2047 = vmatprep.subr.bf16.mxu0 0
  %2048 = vmatpush1.bf16.msra.mxu0 %v2030
  %2049 = vmatprep.subr.bf16.mxu0 0
  %2050 = vmatpush1.bf16.msra.mxu0 %v2031
  %2051 = vmatprep.subr.bf16.mxu0 0
  %2052 = vmatpush1.bf16.msra.mxu0 %v2032
  %2053 = vmatprep.subr.bf16.mxu0 0
  %2054 = vmatpush1.bf16.msra.mxu0 %v2033
  %2055 = vmatprep.subr.bf16.mxu0 0
  %2056 = vmatpush1.bf16.msra.mxu0 %v2034
  %2057 = vmatprep.subr.bf16.mxu0 0
  %2058 = vmatpush1.bf16.msra.mxu0 %v2035
  %2059 = vmatprep.subr.bf16.mxu0 0
  %2060 = vmatpush1.bf16.msra.mxu0 %v2036
  %2061 = vmatprep.subr.bf16.mxu0 0
  %2062 = vmatpush1.bf16.msra.mxu0 0
  %2063 = vmatprep.subr.bf16.mxu0 0
  %2064 = vmatpush1.bf16.msra.mxu0 0
  %2065 = vmatprep.subr.bf16.mxu0 0
  %2066 = vmatpush1.bf16.msra.mxu0 0
  %2067 = vmatprep.subr.bf16.mxu0 0
  %2068 = vmatpush1.bf16.msra.mxu0 0
  %2069 = vmatprep.subr.bf16.mxu0 0
  %2070 = vmatpush1.bf16.msra.mxu0 0
  %2071 = vmatprep.subr.bf16.mxu0 0
  %2072 = vmatpush1.bf16.msra.mxu0 0
  %2073 = vmatprep.subr.bf16.mxu0 0
  %2074 = vmatpush1.bf16.msra.mxu0 0
  %2075 = vmatprep.subr.bf16.mxu0 0
  %2076 = vmatpush1.bf16.msra.mxu0 0
  %2077 = vmatprep.mubr.bf16.mxu0 0
  %2078 = vmatmul.mubr.bf16.gmra.mrb[0].mxu0 %v1908
  %v2079 = vpop.f32.mrb[0].mxu0
  %v2080 = vadd.f32 %v1995, %v2079
  %v2081 = vpop.f32.mrb[0].mxu0
  %v2082 = vpop.f32.mrb[0].mxu0
  %v2083 = vadd.f32 %v1995, %v2082
  %v2084 = vpop.f32.mrb[0].mxu0
  %2085 = vmatprep.mubr.bf16.mxu0 0
  %2086 = vmatmul.mubr.bf16.gmra.mrb[0].mxu0 %v1909
  %v2087 = vpop.f32.mrb[0].mxu0
  %v2088 = vadd.f32 %v1995, %v2087
  %v2089 = vpop.f32.mrb[0].mxu0
  %v2090 = vpop.f32.mrb[0].mxu0
  %v2091 = vadd.f32 %v1995, %v2090
  %v2092 = vpop.f32.mrb[0].mxu0
  %2093 = vmatprep.mubr.bf16.mxu0 0
  %2094 = vmatmul.mubr.bf16.gmra.mrb[0].mxu0 %v1910
  %v2095 = vpop.f32.mrb[0].mxu0
  %v2096 = vadd.f32 %v1995, %v2095
  %v2097 = vpop.f32.mrb[0].mxu0
  %v2098 = vpop.f32.mrb[0].mxu0
  %v2099 = vadd.f32 %v1995, %v2098
  %v2100 = vpop.f32.mrb[0].mxu0
  %2101 = vmatprep.mubr.bf16.mxu0 0
  %2102 = vmatmul.mubr.bf16.gmra.mrb[0].mxu0 %v1911
  %v2103 = vpop.f32.mrb[0].mxu0
  %v2104 = vadd.f32 %v1995, %v2103
  %v2105 = vpop.f32.mrb[0].mxu0
  %v2106 = vpop.f32.mrb[0].mxu0
  %v2107 = vadd.f32 %v1995, %v2106
  %v2108 = vpop.f32.mrb[0].mxu0
  %2109 = vmatprep.mubr.bf16.mxu0 0
  %2110 = vmatmul.mubr.bf16.gmra.mrb[0].mxu0 %v1912
  %v2111 = vpop.f32.mrb[0].mxu0
  %v2112 = vadd.f32 %v1995, %v2111
  %v2113 = vpop.f32.mrb[0].mxu0
  %v2114 = vpop.f32.mrb[0].mxu0
  %v2115 = vadd.f32 %v1995, %v2114
  %v2116 = vpop.f32.mrb[0].mxu0
  %2117 = vmatprep.mubr.bf16.mxu0 0
  %2118 = vmatmul.mubr.bf16.gmra.mrb[0].mxu0 %v1913
  %v2119 = vpop.f32.mrb[0].mxu0
  %v2120 = vadd.f32 %v1995, %v2119
  %v2121 = vpop.f32.mrb[0].mxu0
  %v2122 = vpop.f32.mrb[0].mxu0
  %v2123 = vadd.f32 %v1995, %v2122
  %v2124 = vpop.f32.mrb[0].mxu0
  %2125 = vmatprep.mubr.bf16.mxu0 0
  %2126 = vmatmul.mubr.bf16.gmra.mrb[0].mxu0 %v1914
  %v2127 = vpop.f32.mrb[0].mxu0
  %v2128 = vadd.f32 %v1995, %v2127
  %v2129 = vpop.f32.mrb[0].mxu0
  %v2130 = vpop.f32.mrb[0].mxu0
  %v2131 = vadd.f32 %v1995, %v2130
  %v2132 = vpop.f32.mrb[0].mxu0
  %2133 = vmatprep.mubr.bf16.mxu0 0
  %2134 = vmatmul.mubr.bf16.gmra.mrb[0].mxu0 %v1915
  %v2135 = vpop.f32.mrb[0].mxu0
  %v2136 = vadd.f32 %v1995, %v2135
  %v2137 = vpop.f32.mrb[0].mxu0
  %v2138 = vpop.f32.mrb[0].mxu0
  %v2139 = vadd.f32 %v1995, %v2138
  %v2140 = vpop.f32.mrb[0].mxu0
  %2141 = vmatprep.mubr.bf16.mxu0 0
  %2142 = vmatmul.mubr.bf16.gmra.mrb[0].mxu0 %v1916
  %v2143 = vpop.f32.mrb[0].mxu0
  %v2144 = vadd.f32 %v1995, %v2143
  %v2145 = vpop.f32.mrb[0].mxu0
  %v2146 = vpop.f32.mrb[0].mxu0
  %v2147 = vadd.f32 %v1995, %v2146
  %v2148 = vpop.f32.mrb[0].mxu0
  %2149 = vmatprep.mubr.bf16.mxu0 0
  %2150 = vmatmul.mubr.bf16.gmra.mrb[0].mxu0 %v1917
  %v2151 = vpop.f32.mrb[0].mxu0
  %v2152 = vadd.f32 %v1995, %v2151
  %v2153 = vpop.f32.mrb[0].mxu0
  %v2154 = vpop.f32.mrb[0].mxu0
  %v2155 = vadd.f32 %v1995, %v2154
  %v2156 = vpop.f32.mrb[0].mxu0
  %2157 = vmatprep.mubr.bf16.mxu0 0
  %2158 = vmatmul.mubr.bf16.gmra.mrb[0].mxu0 %v1918
  %v2159 = vpop.f32.mrb[0].mxu0
  %v2160 = vadd.f32 %v1995, %v2159
  %v2161 = vpop.f32.mrb[0].mxu0
  %v2162 = vpop.f32.mrb[0].mxu0
  %v2163 = vadd.f32 %v1995, %v2162
  %v2164 = vpop.f32.mrb[0].mxu0
  %2165 = vmatprep.mubr.bf16.mxu0 0
  %2166 = vmatmul.mubr.bf16.gmra.mrb[0].mxu0 %v1919
  %v2167 = vpop.f32.mrb[0].mxu0
  %v2168 = vadd.f32 %v1995, %v2167
  %v2169 = vpop.f32.mrb[0].mxu0
  %v2170 = vpop.f32.mrb[0].mxu0
  %v2171 = vadd.f32 %v1995, %v2170
  %v2172 = vpop.f32.mrb[0].mxu0
  %2173 = vmatprep.mubr.bf16.mxu0 0
  %2174 = vmatmul.mubr.bf16.gmra.mrb[0].mxu0 %v1920
  %v2175 = vpop.f32.mrb[0].mxu0
  %v2176 = vadd.f32 %v1995, %v2175
  %v2177 = vpop.f32.mrb[0].mxu0
  %v2178 = vpop.f32.mrb[0].mxu0
  %v2179 = vadd.f32 %v1995, %v2178
  %v2180 = vpop.f32.mrb[0].mxu0
  %2181 = vmatprep.mubr.bf16.mxu0 0
  %2182 = vmatmul.mubr.bf16.gmra.mrb[0].mxu0 %v1921
  %v2183 = vpop.f32.mrb[0].mxu0
  %v2184 = vadd.f32 %v1995, %v2183
  %v2185 = vpop.f32.mrb[0].mxu0
  %v2186 = vpop.f32.mrb[0].mxu0
  %v2187 = vadd.f32 %v1995, %v2186
  %v2188 = vpop.f32.mrb[0].mxu0
  %2189 = vmatprep.mubr.bf16.mxu0 0
  %2190 = vmatmul.mubr.bf16.gmra.mrb[0].mxu0 %v1922
  %v2191 = vpop.f32.mrb[0].mxu0
  %v2192 = vadd.f32 %v1995, %v2191
  %v2193 = vpop.f32.mrb[0].mxu0
  %v2194 = vpop.f32.mrb[0].mxu0
  %v2195 = vadd.f32 %v1995, %v2194
  %v2196 = vpop.f32.mrb[0].mxu0
  %2197 = vmatprep.mubr.bf16.mxu0 0
  %2198 = vmatmul.mubr.bf16.gmra.mrb[0].mxu0 %v1923
  %v2199 = vpop.f32.mrb[0].mxu0
  %v2200 = vadd.f32 %v1995, %v2199
  %v2201 = vpop.f32.mrb[0].mxu0
  %v2202 = vpop.f32.mrb[0].mxu0
  %v2203 = vadd.f32 %v1995, %v2202
  %v2204 = vpop.f32.mrb[0].mxu0
  %2205 = vmatprep.mubr.bf16.mxu0 0
  %2206 = vmatmul.mubr.bf16.gmra.mrb[0].mxu0 %v1924
  %v2207 = vpop.f32.mrb[0].mxu0
  %v2208 = vadd.f32 %v1995, %v2207
  %v2209 = vpop.f32.mrb[0].mxu0
  %v2210 = vpop.f32.mrb[0].mxu0
  %v2211 = vadd.f32 %v1995, %v2210
  %v2212 = vpop.f32.mrb[0].mxu0
  %2213 = vmatprep.mubr.bf16.mxu0 0
  %2214 = vmatmul.mubr.bf16.gmra.mrb[0].mxu0 %v1925
  %v2215 = vpop.f32.mrb[0].mxu0
  %v2216 = vadd.f32 %v1995, %v2215
  %v2217 = vpop.f32.mrb[0].mxu0
  %v2218 = vpop.f32.mrb[0].mxu0
  %v2219 = vadd.f32 %v1995, %v2218
  %v2220 = vpop.f32.mrb[0].mxu0
  %2221 = vmatprep.mubr.bf16.mxu0 0
  %2222 = vmatmul.mubr.bf16.gmra.mrb[0].mxu0 %v1926
  %v2223 = vpop.f32.mrb[0].mxu0
  %v2224 = vadd.f32 %v1995, %v2223
  %v2225 = vpop.f32.mrb[0].mxu0
  %v2226 = vpop.f32.mrb[0].mxu0
  %v2227 = vadd.f32 %v1995, %v2226
  %v2228 = vpop.f32.mrb[0].mxu0
  %2229 = vmatprep.mubr.bf16.mxu0 0
  %2230 = vmatmul.mubr.bf16.gmra.mrb[0].mxu0 %v1927
  %v2231 = vpop.f32.mrb[0].mxu0
  %v2232 = vadd.f32 %v1995, %v2231
  %v2233 = vpop.f32.mrb[0].mxu0
  %v2234 = vpop.f32.mrb[0].mxu0
  %v2235 = vadd.f32 %v1995, %v2234
  %v2236 = vpop.f32.mrb[0].mxu0
  %2237 = vmatprep.mubr.bf16.mxu0 0
  %2238 = vmatmul.mubr.bf16.gmra.mrb[0].mxu0 %v1928
  %v2239 = vpop.f32.mrb[0].mxu0
  %v2240 = vadd.f32 %v1995, %v2239
  %v2241 = vpop.f32.mrb[0].mxu0
  %v2242 = vpop.f32.mrb[0].mxu0
  %v2243 = vadd.f32 %v1995, %v2242
  %v2244 = vpop.f32.mrb[0].mxu0
  %2245 = vmatprep.mubr.bf16.mxu0 0
  %2246 = vmatmul.mubr.bf16.gmra.mrb[0].mxu0 %v1929
  %v2247 = vpop.f32.mrb[0].mxu0
  %v2248 = vadd.f32 %v1995, %v2247
  %v2249 = vpop.f32.mrb[0].mxu0
  %v2250 = vpop.f32.mrb[0].mxu0
  %v2251 = vadd.f32 %v1995, %v2250
  %v2252 = vpop.f32.mrb[0].mxu0
  %2253 = vmatprep.mubr.bf16.mxu0 0
  %2254 = vmatmul.mubr.bf16.gmra.mrb[0].mxu0 %v1930
  %v2255 = vpop.f32.mrb[0].mxu0
  %v2256 = vadd.f32 %v1995, %v2255
  %v2257 = vpop.f32.mrb[0].mxu0
  %v2258 = vpop.f32.mrb[0].mxu0
  %v2259 = vadd.f32 %v1995, %v2258
  %v2260 = vpop.f32.mrb[0].mxu0
  %2261 = vmatprep.mubr.bf16.mxu0 0
  %2262 = vmatmul.mubr.bf16.gmra.mrb[0].mxu0 %v1931
  %v2263 = vpop.f32.mrb[0].mxu0
  %v2264 = vadd.f32 %v1995, %v2263
  %v2265 = vpop.f32.mrb[0].mxu0
  %v2266 = vpop.f32.mrb[0].mxu0
  %v2267 = vadd.f32 %v1995, %v2266
  %v2268 = vpop.f32.mrb[0].mxu0
  %2269 = vmatprep.mubr.bf16.mxu0 0
  %2270 = vmatmul.mubr.bf16.gmra.mrb[0].mxu0 %v1932
  %v2271 = vpop.f32.mrb[0].mxu0
  %v2272 = vadd.f32 %v1995, %v2271
  %v2273 = vpop.f32.mrb[0].mxu0
  %v2274 = vpop.f32.mrb[0].mxu0
  %v2275 = vadd.f32 %v1995, %v2274
  %v2276 = vpop.f32.mrb[0].mxu0
  %2277 = vmatprep.mubr.bf16.mxu0 0
  %2278 = vmatmul.mubr.bf16.gmra.mrb[0].mxu0 %v1933
  %v2279 = vpop.f32.mrb[0].mxu0
  %v2280 = vadd.f32 %v1995, %v2279
  %v2281 = vpop.f32.mrb[0].mxu0
  %v2282 = vpop.f32.mrb[0].mxu0
  %v2283 = vadd.f32 %v1995, %v2282
  %v2284 = vpop.f32.mrb[0].mxu0
  %2285 = vmatprep.mubr.bf16.mxu0 0
  %2286 = vmatmul.mubr.bf16.gmra.mrb[0].mxu0 %v1934
  %v2287 = vpop.f32.mrb[0].mxu0
  %v2288 = vadd.f32 %v1995, %v2287
  %v2289 = vpop.f32.mrb[0].mxu0
  %v2290 = vpop.f32.mrb[0].mxu0
  %v2291 = vadd.f32 %v1995, %v2290
  %v2292 = vpop.f32.mrb[0].mxu0
  %2293 = vmatprep.mubr.bf16.mxu0 0
  %2294 = vmatmul.mubr.bf16.gmra.mrb[0].mxu0 %v1935
  %v2295 = vpop.f32.mrb[0].mxu0
  %v2296 = vadd.f32 %v1995, %v2295
  %v2297 = vpop.f32.mrb[0].mxu0
  %v2298 = vpop.f32.mrb[0].mxu0
  %v2299 = vadd.f32 %v1995, %v2298
  %v2300 = vpop.f32.mrb[0].mxu0
  %2301 = vmatprep.mubr.bf16.mxu0 0
  %2302 = vmatmul.mubr.bf16.gmra.mrb[0].mxu0 %v1936
  %v2303 = vpop.f32.mrb[0].mxu0
  %v2304 = vadd.f32 %v1995, %v2303
  %v2305 = vpop.f32.mrb[0].mxu0
  %v2306 = vpop.f32.mrb[0].mxu0
  %v2307 = vadd.f32 %v1995, %v2306
  %v2308 = vpop.f32.mrb[0].mxu0
  %2309 = vmatprep.mubr.bf16.mxu0 0
  %2310 = vmatmul.mubr.bf16.gmra.mrb[0].mxu0 %v1937
  %v2311 = vpop.f32.mrb[0].mxu0
  %v2312 = vadd.f32 %v1995, %v2311
  %v2313 = vpop.f32.mrb[0].mxu0
  %v2314 = vpop.f32.mrb[0].mxu0
  %v2315 = vadd.f32 %v1995, %v2314
  %v2316 = vpop.f32.mrb[0].mxu0
  %2317 = vmatprep.mubr.bf16.mxu0 0
  %2318 = vmatmul.mubr.bf16.gmra.mrb[0].mxu0 %v1938
  %v2319 = vpop.f32.mrb[0].mxu0
  %v2320 = vadd.f32 %v1995, %v2319
  %v2321 = vpop.f32.mrb[0].mxu0
  %v2322 = vpop.f32.mrb[0].mxu0
  %v2323 = vadd.f32 %v1995, %v2322
  %v2324 = vpop.f32.mrb[0].mxu0
  %2325 = vmatprep.mubr.bf16.mxu0 0
  %2326 = vmatmul.mubr.bf16.gmra.mrb[0].mxu0 %v1939
  %v2327 = vpop.f32.mrb[0].mxu0
  %v2328 = vadd.f32 %v1995, %v2327
  %v2329 = vpop.f32.mrb[0].mxu0
  %v2330 = vpop.f32.mrb[0].mxu0
  %v2331 = vadd.f32 %v1995, %v2330
  %v2332 = vpop.f32.mrb[0].mxu0
  %2333 = vmatprep.mubr.bf16.mxu0 0
  %2334 = vmatmul.mubr.bf16.gmra.mrb[0].mxu0 %v1940
  %v2335 = vpop.f32.mrb[0].mxu0
  %v2336 = vadd.f32 %v1995, %v2335
  %v2337 = vpop.f32.mrb[0].mxu0
  %v2338 = vpop.f32.mrb[0].mxu0
  %v2339 = vadd.f32 %v1995, %v2338
  %v2340 = vpop.f32.mrb[0].mxu0
  %2341 = vmatprep.mubr.bf16.mxu0 0
  %2342 = vmatmul.mubr.bf16.gmra.mrb[0].mxu0 %v1941
  %v2343 = vpop.f32.mrb[0].mxu0
  %v2344 = vadd.f32 %v1995, %v2343
  %v2345 = vpop.f32.mrb[0].mxu0
  %v2346 = vpop.f32.mrb[0].mxu0
  %v2347 = vadd.f32 %v1995, %v2346
  %v2348 = vpop.f32.mrb[0].mxu0
  %2349 = vmatprep.mubr.bf16.mxu0 0
  %2350 = vmatmul.mubr.bf16.gmra.mrb[0].mxu0 %v1942
  %v2351 = vpop.f32.mrb[0].mxu0
  %v2352 = vadd.f32 %v1995, %v2351
  %v2353 = vpop.f32.mrb[0].mxu0
  %v2354 = vpop.f32.mrb[0].mxu0
  %v2355 = vadd.f32 %v1995, %v2354
  %v2356 = vpop.f32.mrb[0].mxu0
  %2357 = vmatprep.mubr.bf16.mxu0 0
  %2358 = vmatmul.mubr.bf16.gmra.mrb[0].mxu0 %v1943
  %v2359 = vpop.f32.mrb[0].mxu0
  %v2360 = vadd.f32 %v1995, %v2359
  %v2361 = vpop.f32.mrb[0].mxu0
  %v2362 = vpop.f32.mrb[0].mxu0
  %v2363 = vadd.f32 %v1995, %v2362
  %v2364 = vpop.f32.mrb[0].mxu0
  %2365 = vmatprep.mubr.bf16.mxu0 0
  %2366 = vmatmul.mubr.bf16.gmra.mrb[0].mxu0 %v1944
  %v2367 = vpop.f32.mrb[0].mxu0
  %v2368 = vadd.f32 %v1995, %v2367
  %v2369 = vpop.f32.mrb[0].mxu0
  %v2370 = vpop.f32.mrb[0].mxu0
  %v2371 = vadd.f32 %v1995, %v2370
  %v2372 = vpop.f32.mrb[0].mxu0
  %2373 = vmatprep.mubr.bf16.mxu0 0
  %2374 = vmatmul.mubr.bf16.gmra.mrb[0].mxu0 %v1945
  %v2375 = vpop.f32.mrb[0].mxu0
  %v2376 = vadd.f32 %v1995, %v2375
  %v2377 = vpop.f32.mrb[0].mxu0
  %v2378 = vpop.f32.mrb[0].mxu0
  %v2379 = vadd.f32 %v1995, %v2378
  %v2380 = vpop.f32.mrb[0].mxu0
  %2381 = vmatprep.mubr.bf16.mxu0 0
  %2382 = vmatmul.mubr.bf16.gmra.mrb[0].mxu0 %v1946
  %v2383 = vpop.f32.mrb[0].mxu0
  %v2384 = vadd.f32 %v1995, %v2383
  %v2385 = vpop.f32.mrb[0].mxu0
  %v2386 = vpop.f32.mrb[0].mxu0
  %v2387 = vadd.f32 %v1995, %v2386
  %v2388 = vpop.f32.mrb[0].mxu0
  %2389 = vmatprep.mubr.bf16.mxu0 0
  %2390 = vmatmul.mubr.bf16.gmra.mrb[0].mxu0 %v1947
  %v2391 = vpop.f32.mrb[0].mxu0
  %v2392 = vadd.f32 %v1995, %v2391
  %v2393 = vpop.f32.mrb[0].mxu0
  %v2394 = vpop.f32.mrb[0].mxu0
  %v2395 = vadd.f32 %v1995, %v2394
  %v2396 = vpop.f32.mrb[0].mxu0
  %2397 = vmatprep.mubr.bf16.mxu0 0
  %2398 = vmatmul.mubr.bf16.gmra.mrb[0].mxu0 %v1948
  %v2399 = vpop.f32.mrb[0].mxu0
  %v2400 = vadd.f32 %v1995, %v2399
  %v2401 = vpop.f32.mrb[0].mxu0
  %v2402 = vpop.f32.mrb[0].mxu0
  %v2403 = vadd.f32 %v1995, %v2402
  %v2404 = vpop.f32.mrb[0].mxu0
  %2405 = vmatprep.mubr.bf16.mxu0 0
  %2406 = vmatmul.mubr.bf16.gmra.mrb[0].mxu0 %v1949
  %v2407 = vpop.f32.mrb[0].mxu0
  %v2408 = vadd.f32 %v1995, %v2407
  %v2409 = vpop.f32.mrb[0].mxu0
  %v2410 = vpop.f32.mrb[0].mxu0
  %v2411 = vadd.f32 %v1995, %v2410
  %v2412 = vpop.f32.mrb[0].mxu0
  %2413 = vmatprep.mubr.bf16.mxu0 0
  %2414 = vmatmul.mubr.bf16.gmra.mrb[0].mxu0 %v1950
  %v2415 = vpop.f32.mrb[0].mxu0
  %v2416 = vadd.f32 %v1995, %v2415
  %v2417 = vpop.f32.mrb[0].mxu0
  %v2418 = vpop.f32.mrb[0].mxu0
  %v2419 = vadd.f32 %v1995, %v2418
  %v2420 = vpop.f32.mrb[0].mxu0
  %2421 = vmatprep.mubr.bf16.mxu0 0
  %2422 = vmatmul.mubr.bf16.gmra.mrb[0].mxu0 %v1951
  %v2423 = vpop.f32.mrb[0].mxu0
  %v2424 = vadd.f32 %v1995, %v2423
  %v2425 = vpop.f32.mrb[0].mxu0
  %v2426 = vpop.f32.mrb[0].mxu0
  %v2427 = vadd.f32 %v1995, %v2426
  %v2428 = vpop.f32.mrb[0].mxu0
  %2429 = vmatprep.mubr.bf16.mxu0 0
  %2430 = vmatmul.mubr.bf16.gmra.mrb[0].mxu0 %v1952
  %v2431 = vpop.f32.mrb[0].mxu0
  %v2432 = vadd.f32 %v1995, %v2431
  %v2433 = vpop.f32.mrb[0].mxu0
  %v2434 = vpop.f32.mrb[0].mxu0
  %v2435 = vadd.f32 %v1995, %v2434
  %v2436 = vpop.f32.mrb[0].mxu0
  %2437 = vmatprep.mubr.bf16.mxu0 0
  %2438 = vmatmul.mubr.bf16.gmra.mrb[0].mxu0 %v1953
  %v2439 = vpop.f32.mrb[0].mxu0
  %v2440 = vadd.f32 %v1995, %v2439
  %v2441 = vpop.f32.mrb[0].mxu0
  %v2442 = vpop.f32.mrb[0].mxu0
  %v2443 = vadd.f32 %v1995, %v2442
  %v2444 = vpop.f32.mrb[0].mxu0
  %2445 = vmatprep.mubr.bf16.mxu0 0
  %2446 = vmatmul.mubr.bf16.gmra.mrb[0].mxu0 %v1954
  %v2447 = vpop.f32.mrb[0].mxu0
  %v2448 = vadd.f32 %v1995, %v2447
  %v2449 = vpop.f32.mrb[0].mxu0
  %v2450 = vpop.f32.mrb[0].mxu0
  %v2451 = vadd.f32 %v1995, %v2450
  %v2452 = vpop.f32.mrb[0].mxu0
  %2453 = vmatprep.mubr.bf16.mxu0 0
  %2454 = vmatmul.mubr.bf16.gmra.mrb[0].mxu0 %v1955
  %v2455 = vpop.f32.mrb[0].mxu0
  %v2456 = vadd.f32 %v1995, %v2455
  %v2457 = vpop.f32.mrb[0].mxu0
  %v2458 = vpop.f32.mrb[0].mxu0
  %v2459 = vadd.f32 %v1995, %v2458
  %v2460 = vpop.f32.mrb[0].mxu0
  %2461 = vmatprep.mubr.bf16.mxu0 0
  %2462 = vmatmul.mubr.bf16.gmra.mrb[0].mxu0 %v1956
  %v2463 = vpop.f32.mrb[0].mxu0
  %v2464 = vadd.f32 %v1995, %v2463
  %v2465 = vpop.f32.mrb[0].mxu0
  %v2466 = vpop.f32.mrb[0].mxu0
  %v2467 = vadd.f32 %v1995, %v2466
  %v2468 = vpop.f32.mrb[0].mxu0
  %2469 = vmatprep.mubr.bf16.mxu0 0
  %2470 = vmatmul.mubr.bf16.gmra.mrb[0].mxu0 %v1957
  %v2471 = vpop.f32.mrb[0].mxu0
  %v2472 = vadd.f32 %v1995, %v2471
  %v2473 = vpop.f32.mrb[0].mxu0
  %v2474 = vpop.f32.mrb[0].mxu0
  %v2475 = vadd.f32 %v1995, %v2474
  %v2476 = vpop.f32.mrb[0].mxu0
  %2477 = vmatprep.mubr.bf16.mxu0 0
  %2478 = vmatmul.mubr.bf16.gmra.mrb[0].mxu0 %v1958
  %v2479 = vpop.f32.mrb[0].mxu0
  %v2480 = vadd.f32 %v1995, %v2479
  %v2481 = vpop.f32.mrb[0].mxu0
  %v2482 = vpop.f32.mrb[0].mxu0
  %v2483 = vadd.f32 %v1995, %v2482
  %v2484 = vpop.f32.mrb[0].mxu0
  %2485 = vmatprep.mubr.bf16.mxu0 0
  %2486 = vmatmul.mubr.bf16.gmra.mrb[0].mxu0 %v1959
  %v2487 = vpop.f32.mrb[0].mxu0
  %v2488 = vadd.f32 %v1995, %v2487
  %v2489 = vpop.f32.mrb[0].mxu0
  %v2490 = vpop.f32.mrb[0].mxu0
  %v2491 = vadd.f32 %v1995, %v2490
  %v2492 = vpop.f32.mrb[0].mxu0
  %2493 = vmatprep.mubr.bf16.mxu0 0
  %2494 = vmatmul.mubr.bf16.gmra.mrb[0].mxu0 %v1960
  %v2495 = vpop.f32.mrb[0].mxu0
  %v2496 = vadd.f32 %v1995, %v2495
  %v2497 = vpop.f32.mrb[0].mxu0
  %v2498 = vpop.f32.mrb[0].mxu0
  %v2499 = vadd.f32 %v1995, %v2498
  %v2500 = vpop.f32.mrb[0].mxu0
  %2501 = vmatprep.mubr.bf16.mxu0 0
  %2502 = vmatmul.mubr.bf16.gmra.mrb[0].mxu0 %v1961
  %v2503 = vpop.f32.mrb[0].mxu0
  %v2504 = vadd.f32 %v1995, %v2503
  %v2505 = vpop.f32.mrb[0].mxu0
  %v2506 = vpop.f32.mrb[0].mxu0
  %v2507 = vadd.f32 %v1995, %v2506
  %v2508 = vpop.f32.mrb[0].mxu0
  %2509 = vmatprep.mubr.bf16.mxu0 0
  %2510 = vmatmul.mubr.bf16.gmra.mrb[0].mxu0 %v1962
  %v2511 = vpop.f32.mrb[0].mxu0
  %v2512 = vadd.f32 %v1995, %v2511
  %v2513 = vpop.f32.mrb[0].mxu0
  %v2514 = vpop.f32.mrb[0].mxu0
  %v2515 = vadd.f32 %v1995, %v2514
  %v2516 = vpop.f32.mrb[0].mxu0
  %2517 = vmatprep.mubr.bf16.mxu0 0
  %2518 = vmatmul.mubr.bf16.gmra.mrb[0].mxu0 %v1963
  %v2519 = vpop.f32.mrb[0].mxu0
  %v2520 = vadd.f32 %v1995, %v2519
  %v2521 = vpop.f32.mrb[0].mxu0
  %v2522 = vpop.f32.mrb[0].mxu0
  %v2523 = vadd.f32 %v1995, %v2522
  %v2524 = vpop.f32.mrb[0].mxu0
  %2525 = vmatprep.mubr.bf16.mxu0 0
  %2526 = vmatmul.mubr.bf16.gmra.mrb[0].mxu0 %v1964
  %v2527 = vpop.f32.mrb[0].mxu0
  %v2528 = vadd.f32 %v1995, %v2527
  %v2529 = vpop.f32.mrb[0].mxu0
  %v2530 = vpop.f32.mrb[0].mxu0
  %v2531 = vadd.f32 %v1995, %v2530
  %v2532 = vpop.f32.mrb[0].mxu0
  %2533 = vmatprep.mubr.bf16.mxu0 0
  %2534 = vmatmul.mubr.bf16.gmra.mrb[0].mxu0 %v1965
  %v2535 = vpop.f32.mrb[0].mxu0
  %v2536 = vadd.f32 %v1995, %v2535
  %v2537 = vpop.f32.mrb[0].mxu0
  %v2538 = vpop.f32.mrb[0].mxu0
  %v2539 = vadd.f32 %v1995, %v2538
  %v2540 = vpop.f32.mrb[0].mxu0
  %2541 = vmatprep.mubr.bf16.mxu0 0
  %2542 = vmatmul.mubr.bf16.gmra.mrb[0].mxu0 %v1966
  %v2543 = vpop.f32.mrb[0].mxu0
  %v2544 = vadd.f32 %v1995, %v2543
  %v2545 = vpop.f32.mrb[0].mxu0
  %v2546 = vpop.f32.mrb[0].mxu0
  %v2547 = vadd.f32 %v1995, %v2546
  %v2548 = vpop.f32.mrb[0].mxu0
  %2549 = vmatprep.mubr.bf16.mxu0 0
  %2550 = vmatmul.mubr.bf16.gmra.mrb[0].mxu0 %v1967
  %v2551 = vpop.f32.mrb[0].mxu0
  %v2552 = vadd.f32 %v1995, %v2551
  %v2553 = vpop.f32.mrb[0].mxu0
  %v2554 = vpop.f32.mrb[0].mxu0
  %v2555 = vadd.f32 %v1995, %v2554
  %v2556 = vpop.f32.mrb[0].mxu0
  %2557 = vmatprep.mubr.bf16.mxu0 0
  %2558 = vmatmul.mubr.bf16.gmra.mrb[0].mxu0 %v1968
  %v2559 = vpop.f32.mrb[0].mxu0
  %v2560 = vadd.f32 %v1995, %v2559
  %v2561 = vpop.f32.mrb[0].mxu0
  %v2562 = vpop.f32.mrb[0].mxu0
  %v2563 = vadd.f32 %v1995, %v2562
  %v2564 = vpop.f32.mrb[0].mxu0
  %2565 = vmatprep.mubr.bf16.mxu0 0
  %2566 = vmatmul.mubr.bf16.gmra.mrb[0].mxu0 %v1969
  %v2567 = vpop.f32.mrb[0].mxu0
  %v2568 = vadd.f32 %v1995, %v2567
  %v2569 = vpop.f32.mrb[0].mxu0
  %v2570 = vpop.f32.mrb[0].mxu0
  %v2571 = vadd.f32 %v1995, %v2570
  %v2572 = vpop.f32.mrb[0].mxu0
  %2573 = vmatprep.mubr.bf16.mxu0 0
  %2574 = vmatmul.mubr.bf16.gmra.mrb[0].mxu0 %v1970
  %v2575 = vpop.f32.mrb[0].mxu0
  %v2576 = vadd.f32 %v1995, %v2575
  %v2577 = vpop.f32.mrb[0].mxu0
  %v2578 = vpop.f32.mrb[0].mxu0
  %v2579 = vadd.f32 %v1995, %v2578
  %v2580 = vpop.f32.mrb[0].mxu0
  %2581 = vmatprep.mubr.bf16.mxu0 0
  %2582 = vmatmul.mubr.bf16.gmra.mrb[0].mxu0 %v1971
  %v2583 = vpop.f32.mrb[0].mxu0
  %v2584 = vadd.f32 %v1995, %v2583
  %v2585 = vpop.f32.mrb[0].mxu0
  %v2586 = vpop.f32.mrb[0].mxu0
  %v2587 = vadd.f32 %v1995, %v2586
  %v2588 = vpop.f32.mrb[0].mxu0
  %2589 = vdwg.mxu0
  %v2590 = vmax.f32 %v2080, 0.0
  %v2591 = vmax.f32 %v2083, 0.0
  %v2592 = vmax.f32 %v2088, 0.0
  %v2593 = vmax.f32 %v2091, 0.0
  %v2594 = vmax.f32 %v2096, 0.0
  %v2595 = vmax.f32 %v2099, 0.0
  %v2596 = vmax.f32 %v2104, 0.0
  %v2597 = vmax.f32 %v2107, 0.0
  %v2598 = vmax.f32 %v2112, 0.0
  %v2599 = vmax.f32 %v2115, 0.0
  %v2600 = vmax.f32 %v2120, 0.0
  %v2601 = vmax.f32 %v2123, 0.0
  %v2602 = vmax.f32 %v2128, 0.0
  %v2603 = vmax.f32 %v2131, 0.0
  %v2604 = vmax.f32 %v2136, 0.0
  %v2605 = vmax.f32 %v2139, 0.0
  %v2606 = vmax.f32 %v2144, 0.0
  %v2607 = vmax.f32 %v2147, 0.0
  %v2608 = vmax.f32 %v2152, 0.0
  %v2609 = vmax.f32 %v2155, 0.0
  %v2610 = vmax.f32 %v2160, 0.0
  %v2611 = vmax.f32 %v2163, 0.0
  %v2612 = vmax.f32 %v2168, 0.0
  %v2613 = vmax.f32 %v2171, 0.0
  %v2614 = vmax.f32 %v2176, 0.0
  %v2615 = vmax.f32 %v2179, 0.0
  %v2616 = vmax.f32 %v2184, 0.0
  %v2617 = vmax.f32 %v2187, 0.0
  %v2618 = vmax.f32 %v2192, 0.0
  %v2619 = vmax.f32 %v2195, 0.0
  %v2620 = vmax.f32 %v2200, 0.0
  %v2621 = vmax.f32 %v2203, 0.0
  %v2622 = vmax.f32 %v2208, 0.0
  %v2623 = vmax.f32 %v2211, 0.0
  %v2624 = vmax.f32 %v2216, 0.0
  %v2625 = vmax.f32 %v2219, 0.0
  %v2626 = vmax.f32 %v2224, 0.0
  %v2627 = vmax.f32 %v2227, 0.0
  %v2628 = vmax.f32 %v2232, 0.0
  %v2629 = vmax.f32 %v2235, 0.0
  %v2630 = vmax.f32 %v2240, 0.0
  %v2631 = vmax.f32 %v2243, 0.0
  %v2632 = vmax.f32 %v2248, 0.0
  %v2633 = vmax.f32 %v2251, 0.0
  %v2634 = vmax.f32 %v2256, 0.0
  %v2635 = vmax.f32 %v2259, 0.0
  %v2636 = vmax.f32 %v2264, 0.0
  %v2637 = vmax.f32 %v2267, 0.0
  %v2638 = vmax.f32 %v2272, 0.0
  %v2639 = vmax.f32 %v2275, 0.0
  %v2640 = vmax.f32 %v2280, 0.0
  %v2641 = vmax.f32 %v2283, 0.0
  %v2642 = vmax.f32 %v2288, 0.0
  %v2643 = vmax.f32 %v2291, 0.0
  %v2644 = vmax.f32 %v2296, 0.0
  %v2645 = vmax.f32 %v2299, 0.0
  %v2646 = vmax.f32 %v2304, 0.0
  %v2647 = vmax.f32 %v2307, 0.0
  %v2648 = vmax.f32 %v2312, 0.0
  %v2649 = vmax.f32 %v2315, 0.0
  %v2650 = vmax.f32 %v2320, 0.0
  %v2651 = vmax.f32 %v2323, 0.0
  %v2652 = vmax.f32 %v2328, 0.0
  %v2653 = vmax.f32 %v2331, 0.0
  %v2654 = vmax.f32 %v2336, 0.0
  %v2655 = vmax.f32 %v2339, 0.0
  %v2656 = vmax.f32 %v2344, 0.0
  %v2657 = vmax.f32 %v2347, 0.0
  %v2658 = vmax.f32 %v2352, 0.0
  %v2659 = vmax.f32 %v2355, 0.0
  %v2660 = vmax.f32 %v2360, 0.0
  %v2661 = vmax.f32 %v2363, 0.0
  %v2662 = vmax.f32 %v2368, 0.0
  %v2663 = vmax.f32 %v2371, 0.0
  %v2664 = vmax.f32 %v2376, 0.0
  %v2665 = vmax.f32 %v2379, 0.0
  %v2666 = vmax.f32 %v2384, 0.0
  %v2667 = vmax.f32 %v2387, 0.0
  %v2668 = vmax.f32 %v2392, 0.0
  %v2669 = vmax.f32 %v2395, 0.0
  %v2670 = vmax.f32 %v2400, 0.0
  %v2671 = vmax.f32 %v2403, 0.0
  %v2672 = vmax.f32 %v2408, 0.0
  %v2673 = vmax.f32 %v2411, 0.0
  %v2674 = vmax.f32 %v2416, 0.0
  %v2675 = vmax.f32 %v2419, 0.0
  %v2676 = vmax.f32 %v2424, 0.0
  %v2677 = vmax.f32 %v2427, 0.0
  %v2678 = vmax.f32 %v2432, 0.0
  %v2679 = vmax.f32 %v2435, 0.0
  %v2680 = vmax.f32 %v2440, 0.0
  %v2681 = vmax.f32 %v2443, 0.0
  %v2682 = vmax.f32 %v2448, 0.0
  %v2683 = vmax.f32 %v2451, 0.0
  %v2684 = vmax.f32 %v2456, 0.0
  %v2685 = vmax.f32 %v2459, 0.0
  %v2686 = vmax.f32 %v2464, 0.0
  %v2687 = vmax.f32 %v2467, 0.0
  %v2688 = vmax.f32 %v2472, 0.0
  %v2689 = vmax.f32 %v2475, 0.0
  %v2690 = vmax.f32 %v2480, 0.0
  %v2691 = vmax.f32 %v2483, 0.0
  %v2692 = vmax.f32 %v2488, 0.0
  %v2693 = vmax.f32 %v2491, 0.0
  %v2694 = vmax.f32 %v2496, 0.0
  %v2695 = vmax.f32 %v2499, 0.0
  %v2696 = vmax.f32 %v2504, 0.0
  %v2697 = vmax.f32 %v2507, 0.0
  %v2698 = vmax.f32 %v2512, 0.0
  %v2699 = vmax.f32 %v2515, 0.0
  %v2700 = vmax.f32 %v2520, 0.0
  %v2701 = vmax.f32 %v2523, 0.0
  %v2702 = vmax.f32 %v2528, 0.0
  %v2703 = vmax.f32 %v2531, 0.0
  %v2704 = vmax.f32 %v2536, 0.0
  %v2705 = vmax.f32 %v2539, 0.0
  %v2706 = vmax.f32 %v2544, 0.0
  %v2707 = vmax.f32 %v2547, 0.0
  %v2708 = vmax.f32 %v2552, 0.0
  %v2709 = vmax.f32 %v2555, 0.0
  %v2710 = vmax.f32 %v2560, 0.0
  %v2711 = vmax.f32 %v2563, 0.0
  %v2712 = vmax.f32 %v2568, 0.0
  %v2713 = vmax.f32 %v2571, 0.0
  %v2714 = vmax.f32 %v2576, 0.0
  %v2715 = vmax.f32 %v2579, 0.0
  %v2716 = vmax.f32 %v2584, 0.0
  %v2717 = vmax.f32 %v2587, 0.0
  %v2718 = vpack.c.bf16 %v2591, %v2590
  %v2719 = vpack.c.bf16 %v2593, %v2592
  %v2720 = vpack.c.bf16 %v2595, %v2594
  %v2721 = vpack.c.bf16 %v2597, %v2596
  %v2722 = vpack.c.bf16 %v2599, %v2598
  %v2723 = vpack.c.bf16 %v2601, %v2600
  %v2724 = vpack.c.bf16 %v2603, %v2602
  %v2725 = vpack.c.bf16 %v2605, %v2604
  %v2726 = vpack.c.bf16 %v2607, %v2606
  %v2727 = vpack.c.bf16 %v2609, %v2608
  %v2728 = vpack.c.bf16 %v2611, %v2610
  %v2729 = vpack.c.bf16 %v2613, %v2612
  %v2730 = vpack.c.bf16 %v2615, %v2614
  %v2731 = vpack.c.bf16 %v2617, %v2616
  %v2732 = vpack.c.bf16 %v2619, %v2618
  %v2733 = vpack.c.bf16 %v2621, %v2620
  %v2734 = vpack.c.bf16 %v2623, %v2622
  %v2735 = vpack.c.bf16 %v2625, %v2624
  %v2736 = vpack.c.bf16 %v2627, %v2626
  %v2737 = vpack.c.bf16 %v2629, %v2628
  %v2738 = vpack.c.bf16 %v2631, %v2630
  %v2739 = vpack.c.bf16 %v2633, %v2632
  %v2740 = vpack.c.bf16 %v2635, %v2634
  %v2741 = vpack.c.bf16 %v2637, %v2636
  %v2742 = vpack.c.bf16 %v2639, %v2638
  %v2743 = vpack.c.bf16 %v2641, %v2640
  %v2744 = vpack.c.bf16 %v2643, %v2642
  %v2745 = vpack.c.bf16 %v2645, %v2644
  %v2746 = vpack.c.bf16 %v2647, %v2646
  %v2747 = vpack.c.bf16 %v2649, %v2648
  %v2748 = vpack.c.bf16 %v2651, %v2650
  %v2749 = vpack.c.bf16 %v2653, %v2652
  %v2750 = vpack.c.bf16 %v2655, %v2654
  %v2751 = vpack.c.bf16 %v2657, %v2656
  %v2752 = vpack.c.bf16 %v2659, %v2658
  %v2753 = vpack.c.bf16 %v2661, %v2660
  %v2754 = vpack.c.bf16 %v2663, %v2662
  %v2755 = vpack.c.bf16 %v2665, %v2664
  %v2756 = vpack.c.bf16 %v2667, %v2666
  %v2757 = vpack.c.bf16 %v2669, %v2668
  %v2758 = vpack.c.bf16 %v2671, %v2670
  %v2759 = vpack.c.bf16 %v2673, %v2672
  %v2760 = vpack.c.bf16 %v2675, %v2674
  %v2761 = vpack.c.bf16 %v2677, %v2676
  %v2762 = vpack.c.bf16 %v2679, %v2678
  %v2763 = vpack.c.bf16 %v2681, %v2680
  %v2764 = vpack.c.bf16 %v2683, %v2682
  %v2765 = vpack.c.bf16 %v2685, %v2684
  %v2766 = vpack.c.bf16 %v2687, %v2686
  %v2767 = vpack.c.bf16 %v2689, %v2688
  %v2768 = vpack.c.bf16 %v2691, %v2690
  %v2769 = vpack.c.bf16 %v2693, %v2692
  %v2770 = vpack.c.bf16 %v2695, %v2694
  %v2771 = vpack.c.bf16 %v2697, %v2696
  %v2772 = vpack.c.bf16 %v2699, %v2698
  %v2773 = vpack.c.bf16 %v2701, %v2700
  %v2774 = vpack.c.bf16 %v2703, %v2702
  %v2775 = vpack.c.bf16 %v2705, %v2704
  %v2776 = vpack.c.bf16 %v2707, %v2706
  %v2777 = vpack.c.bf16 %v2709, %v2708
  %v2778 = vpack.c.bf16 %v2711, %v2710
  %v2779 = vpack.c.bf16 %v2713, %v2712
  %v2780 = vpack.c.bf16 %v2715, %v2714
  %v2781 = vpack.c.bf16 %v2717, %v2716
  %s2782 = scalar_lea.vmem %s3, 128
  %v2783 = vld [vmem:[%s2782] sm:$0xf]
  %v2784 = vld [vmem:[%s2782 + $0x4] sm:$0xf]
  %v2785 = vld [vmem:[%s2782 + $0x8] sm:$0xf]
  %v2786 = vld [vmem:[%s2782 + $0xc] sm:$0xf]
  %v2787 = vld [vmem:[%s2782 + $0x10] sm:$0xf]
  %v2788 = vld [vmem:[%s2782 + $0x14] sm:$0xf]
  %v2789 = vld [vmem:[%s2782 + $0x18] sm:$0xf]
  %v2790 = vld [vmem:[%s2782 + $0x1c] sm:$0xf]
  %v2791 = vld [vmem:[%s2782 + $0x20] sm:$0xf]
  %v2792 = vld [vmem:[%s2782 + $0x24] sm:$0xf]
  %v2793 = vld [vmem:[%s2782 + $0x28] sm:$0xf]
  %v2794 = vld [vmem:[%s2782 + $0x2c] sm:$0xf]
  %v2795 = vld [vmem:[%s2782 + $0x30] sm:$0xf]
  %v2796 = vld [vmem:[%s2782 + $0x34] sm:$0xf]
  %v2797 = vld [vmem:[%s2782 + $0x38] sm:$0xf]
  %v2798 = vld [vmem:[%s2782 + $0x3c] sm:$0xf]
  %s2799 = scalar_lea.vmem %s4, 2
  %v2800 = vld [vmem:[%s2799] sm:$0x1]
  %v2802 = vlaneseq
  %v2803 = vshrl.u32 %v2802, 7
  %v2804 = vsub.s32 0, %v2803
  %v2805 = vrot.slane %v2800, %v2804
  %v2823 = vunpack.c.l.b16 %v2783
  %v2824 = vunpack.c.l.b16 %v2784
  %v2825 = vunpack.c.l.b16 %v2785
  %v2826 = vunpack.c.l.b16 %v2786
  %v2827 = vunpack.c.l.b16 %v2787
  %v2828 = vunpack.c.l.b16 %v2788
  %v2829 = vunpack.c.l.b16 %v2789
  %v2830 = vunpack.c.l.b16 %v2790
  %v2831 = vunpack.c.l.b16 %v2791
  %v2832 = vunpack.c.l.b16 %v2792
  %v2833 = vunpack.c.l.b16 %v2793
  %v2834 = vunpack.c.l.b16 %v2794
  %v2835 = vunpack.c.l.b16 %v2795
  %v2836 = vunpack.c.l.b16 %v2796
  %v2837 = vunpack.c.l.b16 %v2797
  %v2838 = vunpack.c.l.b16 %v2798
  %v2839 = vpack.c.b16 %v2824, %v2823
  %v2840 = vpack.c.b16 %v2826, %v2825
  %v2841 = vpack.c.b16 %v2828, %v2827
  %v2842 = vpack.c.b16 %v2830, %v2829
  %v2843 = vpack.c.b16 %v2832, %v2831
  %v2844 = vpack.c.b16 %v2834, %v2833
  %v2845 = vpack.c.b16 %v2836, %v2835
  %v2846 = vpack.c.b16 %v2838, %v2837
  %2855 = vmatprep.subr.bf16.mxu0 0
  %2856 = vmatpush1.bf16.msra.mxu0 %v2839
  %2857 = vmatprep.subr.bf16.mxu0 0
  %2858 = vmatpush1.bf16.msra.mxu0 %v2840
  %2859 = vmatprep.subr.bf16.mxu0 0
  %2860 = vmatpush1.bf16.msra.mxu0 %v2841
  %2861 = vmatprep.subr.bf16.mxu0 0
  %2862 = vmatpush1.bf16.msra.mxu0 %v2842
  %2863 = vmatprep.subr.bf16.mxu0 0
  %2864 = vmatpush1.bf16.msra.mxu0 %v2843
  %2865 = vmatprep.subr.bf16.mxu0 0
  %2866 = vmatpush1.bf16.msra.mxu0 %v2844
  %2867 = vmatprep.subr.bf16.mxu0 0
  %2868 = vmatpush1.bf16.msra.mxu0 %v2845
  %2869 = vmatprep.subr.bf16.mxu0 0
  %2870 = vmatpush1.bf16.msra.mxu0 %v2846
  %2871 = vmatprep.subr.bf16.mxu0 0
  %2872 = vmatpush1.bf16.msra.mxu0 0
  %2873 = vmatprep.subr.bf16.mxu0 0
  %2874 = vmatpush1.bf16.msra.mxu0 0
  %2875 = vmatprep.subr.bf16.mxu0 0
  %2876 = vmatpush1.bf16.msra.mxu0 0
  %2877 = vmatprep.subr.bf16.mxu0 0
  %2878 = vmatpush1.bf16.msra.mxu0 0
  %2879 = vmatprep.subr.bf16.mxu0 0
  %2880 = vmatpush1.bf16.msra.mxu0 0
  %2881 = vmatprep.subr.bf16.mxu0 0
  %2882 = vmatpush1.bf16.msra.mxu0 0
  %2883 = vmatprep.subr.bf16.mxu0 0
  %2884 = vmatpush1.bf16.msra.mxu0 0
  %2885 = vmatprep.subr.bf16.mxu0 0
  %2886 = vmatpush1.bf16.msra.mxu0 0
  %2887 = vmatprep.mubr.bf16.mxu0 0
  %2888 = vmatmul.mubr.bf16.gmra.mrb[0].mxu0 %v2718
  %v2889 = vpop.f32.mrb[0].mxu0
  %v2890 = vadd.f32 %v2805, %v2889
  %v2891 = vpop.f32.mrb[0].mxu0
  %v2892 = vpop.f32.mrb[0].mxu0
  %v2893 = vadd.f32 %v2805, %v2892
  %v2894 = vpop.f32.mrb[0].mxu0
  %2895 = vmatprep.mubr.bf16.mxu0 0
  %2896 = vmatmul.mubr.bf16.gmra.mrb[0].mxu0 %v2719
  %v2897 = vpop.f32.mrb[0].mxu0
  %v2898 = vadd.f32 %v2805, %v2897
  %v2899 = vpop.f32.mrb[0].mxu0
  %v2900 = vpop.f32.mrb[0].mxu0
  %v2901 = vadd.f32 %v2805, %v2900
  %v2902 = vpop.f32.mrb[0].mxu0
  %2903 = vmatprep.mubr.bf16.mxu0 0
  %2904 = vmatmul.mubr.bf16.gmra.mrb[0].mxu0 %v2720
  %v2905 = vpop.f32.mrb[0].mxu0
  %v2906 = vadd.f32 %v2805, %v2905
  %v2907 = vpop.f32.mrb[0].mxu0
  %v2908 = vpop.f32.mrb[0].mxu0
  %v2909 = vadd.f32 %v2805, %v2908
  %v2910 = vpop.f32.mrb[0].mxu0
  %2911 = vmatprep.mubr.bf16.mxu0 0
  %2912 = vmatmul.mubr.bf16.gmra.mrb[0].mxu0 %v2721
  %v2913 = vpop.f32.mrb[0].mxu0
  %v2914 = vadd.f32 %v2805, %v2913
  %v2915 = vpop.f32.mrb[0].mxu0
  %v2916 = vpop.f32.mrb[0].mxu0
  %v2917 = vadd.f32 %v2805, %v2916
  %v2918 = vpop.f32.mrb[0].mxu0
  %2919 = vmatprep.mubr.bf16.mxu0 0
  %2920 = vmatmul.mubr.bf16.gmra.mrb[0].mxu0 %v2722
  %v2921 = vpop.f32.mrb[0].mxu0
  %v2922 = vadd.f32 %v2805, %v2921
  %v2923 = vpop.f32.mrb[0].mxu0
  %v2924 = vpop.f32.mrb[0].mxu0
  %v2925 = vadd.f32 %v2805, %v2924
  %v2926 = vpop.f32.mrb[0].mxu0
  %2927 = vmatprep.mubr.bf16.mxu0 0
  %2928 = vmatmul.mubr.bf16.gmra.mrb[0].mxu0 %v2723
  %v2929 = vpop.f32.mrb[0].mxu0
  %v2930 = vadd.f32 %v2805, %v2929
  %v2931 = vpop.f32.mrb[0].mxu0
  %v2932 = vpop.f32.mrb[0].mxu0
  %v2933 = vadd.f32 %v2805, %v2932
  %v2934 = vpop.f32.mrb[0].mxu0
  %2935 = vmatprep.mubr.bf16.mxu0 0
  %2936 = vmatmul.mubr.bf16.gmra.mrb[0].mxu0 %v2724
  %v2937 = vpop.f32.mrb[0].mxu0
  %v2938 = vadd.f32 %v2805, %v2937
  %v2939 = vpop.f32.mrb[0].mxu0
  %v2940 = vpop.f32.mrb[0].mxu0
  %v2941 = vadd.f32 %v2805, %v2940
  %v2942 = vpop.f32.mrb[0].mxu0
  %2943 = vmatprep.mubr.bf16.mxu0 0
  %2944 = vmatmul.mubr.bf16.gmra.mrb[0].mxu0 %v2725
  %v2945 = vpop.f32.mrb[0].mxu0
  %v2946 = vadd.f32 %v2805, %v2945
  %v2947 = vpop.f32.mrb[0].mxu0
  %v2948 = vpop.f32.mrb[0].mxu0
  %v2949 = vadd.f32 %v2805, %v2948
  %v2950 = vpop.f32.mrb[0].mxu0
  %2951 = vmatprep.mubr.bf16.mxu0 0
  %2952 = vmatmul.mubr.bf16.gmra.mrb[0].mxu0 %v2726
  %v2953 = vpop.f32.mrb[0].mxu0
  %v2954 = vadd.f32 %v2805, %v2953
  %v2955 = vpop.f32.mrb[0].mxu0
  %v2956 = vpop.f32.mrb[0].mxu0
  %v2957 = vadd.f32 %v2805, %v2956
  %v2958 = vpop.f32.mrb[0].mxu0
  %2959 = vmatprep.mubr.bf16.mxu0 0
  %2960 = vmatmul.mubr.bf16.gmra.mrb[0].mxu0 %v2727
  %v2961 = vpop.f32.mrb[0].mxu0
  %v2962 = vadd.f32 %v2805, %v2961
  %v2963 = vpop.f32.mrb[0].mxu0
  %v2964 = vpop.f32.mrb[0].mxu0
  %v2965 = vadd.f32 %v2805, %v2964
  %v2966 = vpop.f32.mrb[0].mxu0
  %2967 = vmatprep.mubr.bf16.mxu0 0
  %2968 = vmatmul.mubr.bf16.gmra.mrb[0].mxu0 %v2728
  %v2969 = vpop.f32.mrb[0].mxu0
  %v2970 = vadd.f32 %v2805, %v2969
  %v2971 = vpop.f32.mrb[0].mxu0
  %v2972 = vpop.f32.mrb[0].mxu0
  %v2973 = vadd.f32 %v2805, %v2972
  %v2974 = vpop.f32.mrb[0].mxu0
  %2975 = vmatprep.mubr.bf16.mxu0 0
  %2976 = vmatmul.mubr.bf16.gmra.mrb[0].mxu0 %v2729
  %v2977 = vpop.f32.mrb[0].mxu0
  %v2978 = vadd.f32 %v2805, %v2977
  %v2979 = vpop.f32.mrb[0].mxu0
  %v2980 = vpop.f32.mrb[0].mxu0
  %v2981 = vadd.f32 %v2805, %v2980
  %v2982 = vpop.f32.mrb[0].mxu0
  %2983 = vmatprep.mubr.bf16.mxu0 0
  %2984 = vmatmul.mubr.bf16.gmra.mrb[0].mxu0 %v2730
  %v2985 = vpop.f32.mrb[0].mxu0
  %v2986 = vadd.f32 %v2805, %v2985
  %v2987 = vpop.f32.mrb[0].mxu0
  %v2988 = vpop.f32.mrb[0].mxu0
  %v2989 = vadd.f32 %v2805, %v2988
  %v2990 = vpop.f32.mrb[0].mxu0
  %2991 = vmatprep.mubr.bf16.mxu0 0
  %2992 = vmatmul.mubr.bf16.gmra.mrb[0].mxu0 %v2731
  %v2993 = vpop.f32.mrb[0].mxu0
  %v2994 = vadd.f32 %v2805, %v2993
  %v2995 = vpop.f32.mrb[0].mxu0
  %v2996 = vpop.f32.mrb[0].mxu0
  %v2997 = vadd.f32 %v2805, %v2996
  %v2998 = vpop.f32.mrb[0].mxu0
  %2999 = vmatprep.mubr.bf16.mxu0 0
  %3000 = vmatmul.mubr.bf16.gmra.mrb[0].mxu0 %v2732
  %v3001 = vpop.f32.mrb[0].mxu0
  %v3002 = vadd.f32 %v2805, %v3001
  %v3003 = vpop.f32.mrb[0].mxu0
  %v3004 = vpop.f32.mrb[0].mxu0
  %v3005 = vadd.f32 %v2805, %v3004
  %v3006 = vpop.f32.mrb[0].mxu0
  %3007 = vmatprep.mubr.bf16.mxu0 0
  %3008 = vmatmul.mubr.bf16.gmra.mrb[0].mxu0 %v2733
  %v3009 = vpop.f32.mrb[0].mxu0
  %v3010 = vadd.f32 %v2805, %v3009
  %v3011 = vpop.f32.mrb[0].mxu0
  %v3012 = vpop.f32.mrb[0].mxu0
  %v3013 = vadd.f32 %v2805, %v3012
  %v3014 = vpop.f32.mrb[0].mxu0
  %3015 = vmatprep.mubr.bf16.mxu0 0
  %3016 = vmatmul.mubr.bf16.gmra.mrb[0].mxu0 %v2734
  %v3017 = vpop.f32.mrb[0].mxu0
  %v3018 = vadd.f32 %v2805, %v3017
  %v3019 = vpop.f32.mrb[0].mxu0
  %v3020 = vpop.f32.mrb[0].mxu0
  %v3021 = vadd.f32 %v2805, %v3020
  %v3022 = vpop.f32.mrb[0].mxu0
  %3023 = vmatprep.mubr.bf16.mxu0 0
  %3024 = vmatmul.mubr.bf16.gmra.mrb[0].mxu0 %v2735
  %v3025 = vpop.f32.mrb[0].mxu0
  %v3026 = vadd.f32 %v2805, %v3025
  %v3027 = vpop.f32.mrb[0].mxu0
  %v3028 = vpop.f32.mrb[0].mxu0
  %v3029 = vadd.f32 %v2805, %v3028
  %v3030 = vpop.f32.mrb[0].mxu0
  %3031 = vmatprep.mubr.bf16.mxu0 0
  %3032 = vmatmul.mubr.bf16.gmra.mrb[0].mxu0 %v2736
  %v3033 = vpop.f32.mrb[0].mxu0
  %v3034 = vadd.f32 %v2805, %v3033
  %v3035 = vpop.f32.mrb[0].mxu0
  %v3036 = vpop.f32.mrb[0].mxu0
  %v3037 = vadd.f32 %v2805, %v3036
  %v3038 = vpop.f32.mrb[0].mxu0
  %3039 = vmatprep.mubr.bf16.mxu0 0
  %3040 = vmatmul.mubr.bf16.gmra.mrb[0].mxu0 %v2737
  %v3041 = vpop.f32.mrb[0].mxu0
  %v3042 = vadd.f32 %v2805, %v3041
  %v3043 = vpop.f32.mrb[0].mxu0
  %v3044 = vpop.f32.mrb[0].mxu0
  %v3045 = vadd.f32 %v2805, %v3044
  %v3046 = vpop.f32.mrb[0].mxu0
  %3047 = vmatprep.mubr.bf16.mxu0 0
  %3048 = vmatmul.mubr.bf16.gmra.mrb[0].mxu0 %v2738
  %v3049 = vpop.f32.mrb[0].mxu0
  %v3050 = vadd.f32 %v2805, %v3049
  %v3051 = vpop.f32.mrb[0].mxu0
  %v3052 = vpop.f32.mrb[0].mxu0
  %v3053 = vadd.f32 %v2805, %v3052
  %v3054 = vpop.f32.mrb[0].mxu0
  %3055 = vmatprep.mubr.bf16.mxu0 0
  %3056 = vmatmul.mubr.bf16.gmra.mrb[0].mxu0 %v2739
  %v3057 = vpop.f32.mrb[0].mxu0
  %v3058 = vadd.f32 %v2805, %v3057
  %v3059 = vpop.f32.mrb[0].mxu0
  %v3060 = vpop.f32.mrb[0].mxu0
  %v3061 = vadd.f32 %v2805, %v3060
  %v3062 = vpop.f32.mrb[0].mxu0
  %3063 = vmatprep.mubr.bf16.mxu0 0
  %3064 = vmatmul.mubr.bf16.gmra.mrb[0].mxu0 %v2740
  %v3065 = vpop.f32.mrb[0].mxu0
  %v3066 = vadd.f32 %v2805, %v3065
  %v3067 = vpop.f32.mrb[0].mxu0
  %v3068 = vpop.f32.mrb[0].mxu0
  %v3069 = vadd.f32 %v2805, %v3068
  %v3070 = vpop.f32.mrb[0].mxu0
  %3071 = vmatprep.mubr.bf16.mxu0 0
  %3072 = vmatmul.mubr.bf16.gmra.mrb[0].mxu0 %v2741
  %v3073 = vpop.f32.mrb[0].mxu0
  %v3074 = vadd.f32 %v2805, %v3073
  %v3075 = vpop.f32.mrb[0].mxu0
  %v3076 = vpop.f32.mrb[0].mxu0
  %v3077 = vadd.f32 %v2805, %v3076
  %v3078 = vpop.f32.mrb[0].mxu0
  %3079 = vmatprep.mubr.bf16.mxu0 0
  %3080 = vmatmul.mubr.bf16.gmra.mrb[0].mxu0 %v2742
  %v3081 = vpop.f32.mrb[0].mxu0
  %v3082 = vadd.f32 %v2805, %v3081
  %v3083 = vpop.f32.mrb[0].mxu0
  %v3084 = vpop.f32.mrb[0].mxu0
  %v3085 = vadd.f32 %v2805, %v3084
  %v3086 = vpop.f32.mrb[0].mxu0
  %3087 = vmatprep.mubr.bf16.mxu0 0
  %3088 = vmatmul.mubr.bf16.gmra.mrb[0].mxu0 %v2743
  %v3089 = vpop.f32.mrb[0].mxu0
  %v3090 = vadd.f32 %v2805, %v3089
  %v3091 = vpop.f32.mrb[0].mxu0
  %v3092 = vpop.f32.mrb[0].mxu0
  %v3093 = vadd.f32 %v2805, %v3092
  %v3094 = vpop.f32.mrb[0].mxu0
  %3095 = vmatprep.mubr.bf16.mxu0 0
  %3096 = vmatmul.mubr.bf16.gmra.mrb[0].mxu0 %v2744
  %v3097 = vpop.f32.mrb[0].mxu0
  %v3098 = vadd.f32 %v2805, %v3097
  %v3099 = vpop.f32.mrb[0].mxu0
  %v3100 = vpop.f32.mrb[0].mxu0
  %v3101 = vadd.f32 %v2805, %v3100
  %v3102 = vpop.f32.mrb[0].mxu0
  %3103 = vmatprep.mubr.bf16.mxu0 0
  %3104 = vmatmul.mubr.bf16.gmra.mrb[0].mxu0 %v2745
  %v3105 = vpop.f32.mrb[0].mxu0
  %v3106 = vadd.f32 %v2805, %v3105
  %v3107 = vpop.f32.mrb[0].mxu0
  %v3108 = vpop.f32.mrb[0].mxu0
  %v3109 = vadd.f32 %v2805, %v3108
  %v3110 = vpop.f32.mrb[0].mxu0
  %3111 = vmatprep.mubr.bf16.mxu0 0
  %3112 = vmatmul.mubr.bf16.gmra.mrb[0].mxu0 %v2746
  %v3113 = vpop.f32.mrb[0].mxu0
  %v3114 = vadd.f32 %v2805, %v3113
  %v3115 = vpop.f32.mrb[0].mxu0
  %v3116 = vpop.f32.mrb[0].mxu0
  %v3117 = vadd.f32 %v2805, %v3116
  %v3118 = vpop.f32.mrb[0].mxu0
  %3119 = vmatprep.mubr.bf16.mxu0 0
  %3120 = vmatmul.mubr.bf16.gmra.mrb[0].mxu0 %v2747
  %v3121 = vpop.f32.mrb[0].mxu0
  %v3122 = vadd.f32 %v2805, %v3121
  %v3123 = vpop.f32.mrb[0].mxu0
  %v3124 = vpop.f32.mrb[0].mxu0
  %v3125 = vadd.f32 %v2805, %v3124
  %v3126 = vpop.f32.mrb[0].mxu0
  %3127 = vmatprep.mubr.bf16.mxu0 0
  %3128 = vmatmul.mubr.bf16.gmra.mrb[0].mxu0 %v2748
  %v3129 = vpop.f32.mrb[0].mxu0
  %v3130 = vadd.f32 %v2805, %v3129
  %v3131 = vpop.f32.mrb[0].mxu0
  %v3132 = vpop.f32.mrb[0].mxu0
  %v3133 = vadd.f32 %v2805, %v3132
  %v3134 = vpop.f32.mrb[0].mxu0
  %3135 = vmatprep.mubr.bf16.mxu0 0
  %3136 = vmatmul.mubr.bf16.gmra.mrb[0].mxu0 %v2749
  %v3137 = vpop.f32.mrb[0].mxu0
  %v3138 = vadd.f32 %v2805, %v3137
  %v3139 = vpop.f32.mrb[0].mxu0
  %v3140 = vpop.f32.mrb[0].mxu0
  %v3141 = vadd.f32 %v2805, %v3140
  %v3142 = vpop.f32.mrb[0].mxu0
  %3143 = vmatprep.mubr.bf16.mxu0 0
  %3144 = vmatmul.mubr.bf16.gmra.mrb[0].mxu0 %v2750
  %v3145 = vpop.f32.mrb[0].mxu0
  %v3146 = vadd.f32 %v2805, %v3145
  %v3147 = vpop.f32.mrb[0].mxu0
  %v3148 = vpop.f32.mrb[0].mxu0
  %v3149 = vadd.f32 %v2805, %v3148
  %v3150 = vpop.f32.mrb[0].mxu0
  %3151 = vmatprep.mubr.bf16.mxu0 0
  %3152 = vmatmul.mubr.bf16.gmra.mrb[0].mxu0 %v2751
  %v3153 = vpop.f32.mrb[0].mxu0
  %v3154 = vadd.f32 %v2805, %v3153
  %v3155 = vpop.f32.mrb[0].mxu0
  %v3156 = vpop.f32.mrb[0].mxu0
  %v3157 = vadd.f32 %v2805, %v3156
  %v3158 = vpop.f32.mrb[0].mxu0
  %3159 = vmatprep.mubr.bf16.mxu0 0
  %3160 = vmatmul.mubr.bf16.gmra.mrb[0].mxu0 %v2752
  %v3161 = vpop.f32.mrb[0].mxu0
  %v3162 = vadd.f32 %v2805, %v3161
  %v3163 = vpop.f32.mrb[0].mxu0
  %v3164 = vpop.f32.mrb[0].mxu0
  %v3165 = vadd.f32 %v2805, %v3164
  %v3166 = vpop.f32.mrb[0].mxu0
  %3167 = vmatprep.mubr.bf16.mxu0 0
  %3168 = vmatmul.mubr.bf16.gmra.mrb[0].mxu0 %v2753
  %v3169 = vpop.f32.mrb[0].mxu0
  %v3170 = vadd.f32 %v2805, %v3169
  %v3171 = vpop.f32.mrb[0].mxu0
  %v3172 = vpop.f32.mrb[0].mxu0
  %v3173 = vadd.f32 %v2805, %v3172
  %v3174 = vpop.f32.mrb[0].mxu0
  %3175 = vmatprep.mubr.bf16.mxu0 0
  %3176 = vmatmul.mubr.bf16.gmra.mrb[0].mxu0 %v2754
  %v3177 = vpop.f32.mrb[0].mxu0
  %v3178 = vadd.f32 %v2805, %v3177
  %v3179 = vpop.f32.mrb[0].mxu0
  %v3180 = vpop.f32.mrb[0].mxu0
  %v3181 = vadd.f32 %v2805, %v3180
  %v3182 = vpop.f32.mrb[0].mxu0
  %3183 = vmatprep.mubr.bf16.mxu0 0
  %3184 = vmatmul.mubr.bf16.gmra.mrb[0].mxu0 %v2755
  %v3185 = vpop.f32.mrb[0].mxu0
  %v3186 = vadd.f32 %v2805, %v3185
  %v3187 = vpop.f32.mrb[0].mxu0
  %v3188 = vpop.f32.mrb[0].mxu0
  %v3189 = vadd.f32 %v2805, %v3188
  %v3190 = vpop.f32.mrb[0].mxu0
  %3191 = vmatprep.mubr.bf16.mxu0 0
  %3192 = vmatmul.mubr.bf16.gmra.mrb[0].mxu0 %v2756
  %v3193 = vpop.f32.mrb[0].mxu0
  %v3194 = vadd.f32 %v2805, %v3193
  %v3195 = vpop.f32.mrb[0].mxu0
  %v3196 = vpop.f32.mrb[0].mxu0
  %v3197 = vadd.f32 %v2805, %v3196
  %v3198 = vpop.f32.mrb[0].mxu0
  %3199 = vmatprep.mubr.bf16.mxu0 0
  %3200 = vmatmul.mubr.bf16.gmra.mrb[0].mxu0 %v2757
  %v3201 = vpop.f32.mrb[0].mxu0
  %v3202 = vadd.f32 %v2805, %v3201
  %v3203 = vpop.f32.mrb[0].mxu0
  %v3204 = vpop.f32.mrb[0].mxu0
  %v3205 = vadd.f32 %v2805, %v3204
  %v3206 = vpop.f32.mrb[0].mxu0
  %3207 = vmatprep.mubr.bf16.mxu0 0
  %3208 = vmatmul.mubr.bf16.gmra.mrb[0].mxu0 %v2758
  %v3209 = vpop.f32.mrb[0].mxu0
  %v3210 = vadd.f32 %v2805, %v3209
  %v3211 = vpop.f32.mrb[0].mxu0
  %v3212 = vpop.f32.mrb[0].mxu0
  %v3213 = vadd.f32 %v2805, %v3212
  %v3214 = vpop.f32.mrb[0].mxu0
  %3215 = vmatprep.mubr.bf16.mxu0 0
  %3216 = vmatmul.mubr.bf16.gmra.mrb[0].mxu0 %v2759
  %v3217 = vpop.f32.mrb[0].mxu0
  %v3218 = vadd.f32 %v2805, %v3217
  %v3219 = vpop.f32.mrb[0].mxu0
  %v3220 = vpop.f32.mrb[0].mxu0
  %v3221 = vadd.f32 %v2805, %v3220
  %v3222 = vpop.f32.mrb[0].mxu0
  %3223 = vmatprep.mubr.bf16.mxu0 0
  %3224 = vmatmul.mubr.bf16.gmra.mrb[0].mxu0 %v2760
  %v3225 = vpop.f32.mrb[0].mxu0
  %v3226 = vadd.f32 %v2805, %v3225
  %v3227 = vpop.f32.mrb[0].mxu0
  %v3228 = vpop.f32.mrb[0].mxu0
  %v3229 = vadd.f32 %v2805, %v3228
  %v3230 = vpop.f32.mrb[0].mxu0
  %3231 = vmatprep.mubr.bf16.mxu0 0
  %3232 = vmatmul.mubr.bf16.gmra.mrb[0].mxu0 %v2761
  %v3233 = vpop.f32.mrb[0].mxu0
  %v3234 = vadd.f32 %v2805, %v3233
  %v3235 = vpop.f32.mrb[0].mxu0
  %v3236 = vpop.f32.mrb[0].mxu0
  %v3237 = vadd.f32 %v2805, %v3236
  %v3238 = vpop.f32.mrb[0].mxu0
  %3239 = vmatprep.mubr.bf16.mxu0 0
  %3240 = vmatmul.mubr.bf16.gmra.mrb[0].mxu0 %v2762
  %v3241 = vpop.f32.mrb[0].mxu0
  %v3242 = vadd.f32 %v2805, %v3241
  %v3243 = vpop.f32.mrb[0].mxu0
  %v3244 = vpop.f32.mrb[0].mxu0
  %v3245 = vadd.f32 %v2805, %v3244
  %v3246 = vpop.f32.mrb[0].mxu0
  %3247 = vmatprep.mubr.bf16.mxu0 0
  %3248 = vmatmul.mubr.bf16.gmra.mrb[0].mxu0 %v2763
  %v3249 = vpop.f32.mrb[0].mxu0
  %v3250 = vadd.f32 %v2805, %v3249
  %v3251 = vpop.f32.mrb[0].mxu0
  %v3252 = vpop.f32.mrb[0].mxu0
  %v3253 = vadd.f32 %v2805, %v3252
  %v3254 = vpop.f32.mrb[0].mxu0
  %3255 = vmatprep.mubr.bf16.mxu0 0
  %3256 = vmatmul.mubr.bf16.gmra.mrb[0].mxu0 %v2764
  %v3257 = vpop.f32.mrb[0].mxu0
  %v3258 = vadd.f32 %v2805, %v3257
  %v3259 = vpop.f32.mrb[0].mxu0
  %v3260 = vpop.f32.mrb[0].mxu0
  %v3261 = vadd.f32 %v2805, %v3260
  %v3262 = vpop.f32.mrb[0].mxu0
  %3263 = vmatprep.mubr.bf16.mxu0 0
  %3264 = vmatmul.mubr.bf16.gmra.mrb[0].mxu0 %v2765
  %v3265 = vpop.f32.mrb[0].mxu0
  %v3266 = vadd.f32 %v2805, %v3265
  %v3267 = vpop.f32.mrb[0].mxu0
  %v3268 = vpop.f32.mrb[0].mxu0
  %v3269 = vadd.f32 %v2805, %v3268
  %v3270 = vpop.f32.mrb[0].mxu0
  %3271 = vmatprep.mubr.bf16.mxu0 0
  %3272 = vmatmul.mubr.bf16.gmra.mrb[0].mxu0 %v2766
  %v3273 = vpop.f32.mrb[0].mxu0
  %v3274 = vadd.f32 %v2805, %v3273
  %v3275 = vpop.f32.mrb[0].mxu0
  %v3276 = vpop.f32.mrb[0].mxu0
  %v3277 = vadd.f32 %v2805, %v3276
  %v3278 = vpop.f32.mrb[0].mxu0
  %3279 = vmatprep.mubr.bf16.mxu0 0
  %3280 = vmatmul.mubr.bf16.gmra.mrb[0].mxu0 %v2767
  %v3281 = vpop.f32.mrb[0].mxu0
  %v3282 = vadd.f32 %v2805, %v3281
  %v3283 = vpop.f32.mrb[0].mxu0
  %v3284 = vpop.f32.mrb[0].mxu0
  %v3285 = vadd.f32 %v2805, %v3284
  %v3286 = vpop.f32.mrb[0].mxu0
  %3287 = vmatprep.mubr.bf16.mxu0 0
  %3288 = vmatmul.mubr.bf16.gmra.mrb[0].mxu0 %v2768
  %v3289 = vpop.f32.mrb[0].mxu0
  %v3290 = vadd.f32 %v2805, %v3289
  %v3291 = vpop.f32.mrb[0].mxu0
  %v3292 = vpop.f32.mrb[0].mxu0
  %v3293 = vadd.f32 %v2805, %v3292
  %v3294 = vpop.f32.mrb[0].mxu0
  %3295 = vmatprep.mubr.bf16.mxu0 0
  %3296 = vmatmul.mubr.bf16.gmra.mrb[0].mxu0 %v2769
  %v3297 = vpop.f32.mrb[0].mxu0
  %v3298 = vadd.f32 %v2805, %v3297
  %v3299 = vpop.f32.mrb[0].mxu0
  %v3300 = vpop.f32.mrb[0].mxu0
  %v3301 = vadd.f32 %v2805, %v3300
  %v3302 = vpop.f32.mrb[0].mxu0
  %3303 = vmatprep.mubr.bf16.mxu0 0
  %3304 = vmatmul.mubr.bf16.gmra.mrb[0].mxu0 %v2770
  %v3305 = vpop.f32.mrb[0].mxu0
  %v3306 = vadd.f32 %v2805, %v3305
  %v3307 = vpop.f32.mrb[0].mxu0
  %v3308 = vpop.f32.mrb[0].mxu0
  %v3309 = vadd.f32 %v2805, %v3308
  %v3310 = vpop.f32.mrb[0].mxu0
  %3311 = vmatprep.mubr.bf16.mxu0 0
  %3312 = vmatmul.mubr.bf16.gmra.mrb[0].mxu0 %v2771
  %v3313 = vpop.f32.mrb[0].mxu0
  %v3314 = vadd.f32 %v2805, %v3313
  %v3315 = vpop.f32.mrb[0].mxu0
  %v3316 = vpop.f32.mrb[0].mxu0
  %v3317 = vadd.f32 %v2805, %v3316
  %v3318 = vpop.f32.mrb[0].mxu0
  %3319 = vmatprep.mubr.bf16.mxu0 0
  %3320 = vmatmul.mubr.bf16.gmra.mrb[0].mxu0 %v2772
  %v3321 = vpop.f32.mrb[0].mxu0
  %v3322 = vadd.f32 %v2805, %v3321
  %v3323 = vpop.f32.mrb[0].mxu0
  %v3324 = vpop.f32.mrb[0].mxu0
  %v3325 = vadd.f32 %v2805, %v3324
  %v3326 = vpop.f32.mrb[0].mxu0
  %3327 = vmatprep.mubr.bf16.mxu0 0
  %3328 = vmatmul.mubr.bf16.gmra.mrb[0].mxu0 %v2773
  %v3329 = vpop.f32.mrb[0].mxu0
  %v3330 = vadd.f32 %v2805, %v3329
  %v3331 = vpop.f32.mrb[0].mxu0
  %v3332 = vpop.f32.mrb[0].mxu0
  %v3333 = vadd.f32 %v2805, %v3332
  %v3334 = vpop.f32.mrb[0].mxu0
  %3335 = vmatprep.mubr.bf16.mxu0 0
  %3336 = vmatmul.mubr.bf16.gmra.mrb[0].mxu0 %v2774
  %v3337 = vpop.f32.mrb[0].mxu0
  %v3338 = vadd.f32 %v2805, %v3337
  %v3339 = vpop.f32.mrb[0].mxu0
  %v3340 = vpop.f32.mrb[0].mxu0
  %v3341 = vadd.f32 %v2805, %v3340
  %v3342 = vpop.f32.mrb[0].mxu0
  %3343 = vmatprep.mubr.bf16.mxu0 0
  %3344 = vmatmul.mubr.bf16.gmra.mrb[0].mxu0 %v2775
  %v3345 = vpop.f32.mrb[0].mxu0
  %v3346 = vadd.f32 %v2805, %v3345
  %v3347 = vpop.f32.mrb[0].mxu0
  %v3348 = vpop.f32.mrb[0].mxu0
  %v3349 = vadd.f32 %v2805, %v3348
  %v3350 = vpop.f32.mrb[0].mxu0
  %3351 = vmatprep.mubr.bf16.mxu0 0
  %3352 = vmatmul.mubr.bf16.gmra.mrb[0].mxu0 %v2776
  %v3353 = vpop.f32.mrb[0].mxu0
  %v3354 = vadd.f32 %v2805, %v3353
  %v3355 = vpop.f32.mrb[0].mxu0
  %v3356 = vpop.f32.mrb[0].mxu0
  %v3357 = vadd.f32 %v2805, %v3356
  %v3358 = vpop.f32.mrb[0].mxu0
  %3359 = vmatprep.mubr.bf16.mxu0 0
  %3360 = vmatmul.mubr.bf16.gmra.mrb[0].mxu0 %v2777
  %v3361 = vpop.f32.mrb[0].mxu0
  %v3362 = vadd.f32 %v2805, %v3361
  %v3363 = vpop.f32.mrb[0].mxu0
  %v3364 = vpop.f32.mrb[0].mxu0
  %v3365 = vadd.f32 %v2805, %v3364
  %v3366 = vpop.f32.mrb[0].mxu0
  %3367 = vmatprep.mubr.bf16.mxu0 0
  %3368 = vmatmul.mubr.bf16.gmra.mrb[0].mxu0 %v2778
  %v3369 = vpop.f32.mrb[0].mxu0
  %v3370 = vadd.f32 %v2805, %v3369
  %v3371 = vpop.f32.mrb[0].mxu0
  %v3372 = vpop.f32.mrb[0].mxu0
  %v3373 = vadd.f32 %v2805, %v3372
  %v3374 = vpop.f32.mrb[0].mxu0
  %3375 = vmatprep.mubr.bf16.mxu0 0
  %3376 = vmatmul.mubr.bf16.gmra.mrb[0].mxu0 %v2779
  %v3377 = vpop.f32.mrb[0].mxu0
  %v3378 = vadd.f32 %v2805, %v3377
  %v3379 = vpop.f32.mrb[0].mxu0
  %v3380 = vpop.f32.mrb[0].mxu0
  %v3381 = vadd.f32 %v2805, %v3380
  %v3382 = vpop.f32.mrb[0].mxu0
  %3383 = vmatprep.mubr.bf16.mxu0 0
  %3384 = vmatmul.mubr.bf16.gmra.mrb[0].mxu0 %v2780
  %v3385 = vpop.f32.mrb[0].mxu0
  %v3386 = vadd.f32 %v2805, %v3385
  %v3387 = vpop.f32.mrb[0].mxu0
  %v3388 = vpop.f32.mrb[0].mxu0
  %v3389 = vadd.f32 %v2805, %v3388
  %v3390 = vpop.f32.mrb[0].mxu0
  %3391 = vmatprep.mubr.bf16.mxu0 0
  %3392 = vmatmul.mubr.bf16.gmra.mrb[0].mxu0 %v2781
  %v3393 = vpop.f32.mrb[0].mxu0
  %v3394 = vadd.f32 %v2805, %v3393
  %v3395 = vpop.f32.mrb[0].mxu0
  %v3396 = vpop.f32.mrb[0].mxu0
  %v3397 = vadd.f32 %v2805, %v3396
  %v3398 = vpop.f32.mrb[0].mxu0
  %3399 = vdwg.mxu0
  %v3400 = vmax.f32 %v2890, 0.0
  %v3401 = vmax.f32 %v2893, 0.0
  %v3402 = vmax.f32 %v2898, 0.0
  %v3403 = vmax.f32 %v2901, 0.0
  %v3404 = vmax.f32 %v2906, 0.0
  %v3405 = vmax.f32 %v2909, 0.0
  %v3406 = vmax.f32 %v2914, 0.0
  %v3407 = vmax.f32 %v2917, 0.0
  %v3408 = vmax.f32 %v2922, 0.0
  %v3409 = vmax.f32 %v2925, 0.0
  %v3410 = vmax.f32 %v2930, 0.0
  %v3411 = vmax.f32 %v2933, 0.0
  %v3412 = vmax.f32 %v2938, 0.0
  %v3413 = vmax.f32 %v2941, 0.0
  %v3414 = vmax.f32 %v2946, 0.0
  %v3415 = vmax.f32 %v2949, 0.0
  %v3416 = vmax.f32 %v2954, 0.0
  %v3417 = vmax.f32 %v2957, 0.0
  %v3418 = vmax.f32 %v2962, 0.0
  %v3419 = vmax.f32 %v2965, 0.0
  %v3420 = vmax.f32 %v2970, 0.0
  %v3421 = vmax.f32 %v2973, 0.0
  %v3422 = vmax.f32 %v2978, 0.0
  %v3423 = vmax.f32 %v2981, 0.0
  %v3424 = vmax.f32 %v2986, 0.0
  %v3425 = vmax.f32 %v2989, 0.0
  %v3426 = vmax.f32 %v2994, 0.0
  %v3427 = vmax.f32 %v2997, 0.0
  %v3428 = vmax.f32 %v3002, 0.0
  %v3429 = vmax.f32 %v3005, 0.0
  %v3430 = vmax.f32 %v3010, 0.0
  %v3431 = vmax.f32 %v3013, 0.0
  %v3432 = vmax.f32 %v3018, 0.0
  %v3433 = vmax.f32 %v3021, 0.0
  %v3434 = vmax.f32 %v3026, 0.0
  %v3435 = vmax.f32 %v3029, 0.0
  %v3436 = vmax.f32 %v3034, 0.0
  %v3437 = vmax.f32 %v3037, 0.0
  %v3438 = vmax.f32 %v3042, 0.0
  %v3439 = vmax.f32 %v3045, 0.0
  %v3440 = vmax.f32 %v3050, 0.0
  %v3441 = vmax.f32 %v3053, 0.0
  %v3442 = vmax.f32 %v3058, 0.0
  %v3443 = vmax.f32 %v3061, 0.0
  %v3444 = vmax.f32 %v3066, 0.0
  %v3445 = vmax.f32 %v3069, 0.0
  %v3446 = vmax.f32 %v3074, 0.0
  %v3447 = vmax.f32 %v3077, 0.0
  %v3448 = vmax.f32 %v3082, 0.0
  %v3449 = vmax.f32 %v3085, 0.0
  %v3450 = vmax.f32 %v3090, 0.0
  %v3451 = vmax.f32 %v3093, 0.0
  %v3452 = vmax.f32 %v3098, 0.0
  %v3453 = vmax.f32 %v3101, 0.0
  %v3454 = vmax.f32 %v3106, 0.0
  %v3455 = vmax.f32 %v3109, 0.0
  %v3456 = vmax.f32 %v3114, 0.0
  %v3457 = vmax.f32 %v3117, 0.0
  %v3458 = vmax.f32 %v3122, 0.0
  %v3459 = vmax.f32 %v3125, 0.0
  %v3460 = vmax.f32 %v3130, 0.0
  %v3461 = vmax.f32 %v3133, 0.0
  %v3462 = vmax.f32 %v3138, 0.0
  %v3463 = vmax.f32 %v3141, 0.0
  %v3464 = vmax.f32 %v3146, 0.0
  %v3465 = vmax.f32 %v3149, 0.0
  %v3466 = vmax.f32 %v3154, 0.0
  %v3467 = vmax.f32 %v3157, 0.0
  %v3468 = vmax.f32 %v3162, 0.0
  %v3469 = vmax.f32 %v3165, 0.0
  %v3470 = vmax.f32 %v3170, 0.0
  %v3471 = vmax.f32 %v3173, 0.0
  %v3472 = vmax.f32 %v3178, 0.0
  %v3473 = vmax.f32 %v3181, 0.0
  %v3474 = vmax.f32 %v3186, 0.0
  %v3475 = vmax.f32 %v3189, 0.0
  %v3476 = vmax.f32 %v3194, 0.0
  %v3477 = vmax.f32 %v3197, 0.0
  %v3478 = vmax.f32 %v3202, 0.0
  %v3479 = vmax.f32 %v3205, 0.0
  %v3480 = vmax.f32 %v3210, 0.0
  %v3481 = vmax.f32 %v3213, 0.0
  %v3482 = vmax.f32 %v3218, 0.0
  %v3483 = vmax.f32 %v3221, 0.0
  %v3484 = vmax.f32 %v3226, 0.0
  %v3485 = vmax.f32 %v3229, 0.0
  %v3486 = vmax.f32 %v3234, 0.0
  %v3487 = vmax.f32 %v3237, 0.0
  %v3488 = vmax.f32 %v3242, 0.0
  %v3489 = vmax.f32 %v3245, 0.0
  %v3490 = vmax.f32 %v3250, 0.0
  %v3491 = vmax.f32 %v3253, 0.0
  %v3492 = vmax.f32 %v3258, 0.0
  %v3493 = vmax.f32 %v3261, 0.0
  %v3494 = vmax.f32 %v3266, 0.0
  %v3495 = vmax.f32 %v3269, 0.0
  %v3496 = vmax.f32 %v3274, 0.0
  %v3497 = vmax.f32 %v3277, 0.0
  %v3498 = vmax.f32 %v3282, 0.0
  %v3499 = vmax.f32 %v3285, 0.0
  %v3500 = vmax.f32 %v3290, 0.0
  %v3501 = vmax.f32 %v3293, 0.0
  %v3502 = vmax.f32 %v3298, 0.0
  %v3503 = vmax.f32 %v3301, 0.0
  %v3504 = vmax.f32 %v3306, 0.0
  %v3505 = vmax.f32 %v3309, 0.0
  %v3506 = vmax.f32 %v3314, 0.0
  %v3507 = vmax.f32 %v3317, 0.0
  %v3508 = vmax.f32 %v3322, 0.0
  %v3509 = vmax.f32 %v3325, 0.0
  %v3510 = vmax.f32 %v3330, 0.0
  %v3511 = vmax.f32 %v3333, 0.0
  %v3512 = vmax.f32 %v3338, 0.0
  %v3513 = vmax.f32 %v3341, 0.0
  %v3514 = vmax.f32 %v3346, 0.0
  %v3515 = vmax.f32 %v3349, 0.0
  %v3516 = vmax.f32 %v3354, 0.0
  %v3517 = vmax.f32 %v3357, 0.0
  %v3518 = vmax.f32 %v3362, 0.0
  %v3519 = vmax.f32 %v3365, 0.0
  %v3520 = vmax.f32 %v3370, 0.0
  %v3521 = vmax.f32 %v3373, 0.0
  %v3522 = vmax.f32 %v3378, 0.0
  %v3523 = vmax.f32 %v3381, 0.0
  %v3524 = vmax.f32 %v3386, 0.0
  %v3525 = vmax.f32 %v3389, 0.0
  %v3526 = vmax.f32 %v3394, 0.0
  %v3527 = vmax.f32 %v3397, 0.0
  %v3528 = vpack.c.bf16 %v3401, %v3400
  %v3529 = vpack.c.bf16 %v3403, %v3402
  %v3530 = vpack.c.bf16 %v3405, %v3404
  %v3531 = vpack.c.bf16 %v3407, %v3406
  %v3532 = vpack.c.bf16 %v3409, %v3408
  %v3533 = vpack.c.bf16 %v3411, %v3410
  %v3534 = vpack.c.bf16 %v3413, %v3412
  %v3535 = vpack.c.bf16 %v3415, %v3414
  %v3536 = vpack.c.bf16 %v3417, %v3416
  %v3537 = vpack.c.bf16 %v3419, %v3418
  %v3538 = vpack.c.bf16 %v3421, %v3420
  %v3539 = vpack.c.bf16 %v3423, %v3422
  %v3540 = vpack.c.bf16 %v3425, %v3424
  %v3541 = vpack.c.bf16 %v3427, %v3426
  %v3542 = vpack.c.bf16 %v3429, %v3428
  %v3543 = vpack.c.bf16 %v3431, %v3430
  %v3544 = vpack.c.bf16 %v3433, %v3432
  %v3545 = vpack.c.bf16 %v3435, %v3434
  %v3546 = vpack.c.bf16 %v3437, %v3436
  %v3547 = vpack.c.bf16 %v3439, %v3438
  %v3548 = vpack.c.bf16 %v3441, %v3440
  %v3549 = vpack.c.bf16 %v3443, %v3442
  %v3550 = vpack.c.bf16 %v3445, %v3444
  %v3551 = vpack.c.bf16 %v3447, %v3446
  %v3552 = vpack.c.bf16 %v3449, %v3448
  %v3553 = vpack.c.bf16 %v3451, %v3450
  %v3554 = vpack.c.bf16 %v3453, %v3452
  %v3555 = vpack.c.bf16 %v3455, %v3454
  %v3556 = vpack.c.bf16 %v3457, %v3456
  %v3557 = vpack.c.bf16 %v3459, %v3458
  %v3558 = vpack.c.bf16 %v3461, %v3460
  %v3559 = vpack.c.bf16 %v3463, %v3462
  %v3560 = vpack.c.bf16 %v3465, %v3464
  %v3561 = vpack.c.bf16 %v3467, %v3466
  %v3562 = vpack.c.bf16 %v3469, %v3468
  %v3563 = vpack.c.bf16 %v3471, %v3470
  %v3564 = vpack.c.bf16 %v3473, %v3472
  %v3565 = vpack.c.bf16 %v3475, %v3474
  %v3566 = vpack.c.bf16 %v3477, %v3476
  %v3567 = vpack.c.bf16 %v3479, %v3478
  %v3568 = vpack.c.bf16 %v3481, %v3480
  %v3569 = vpack.c.bf16 %v3483, %v3482
  %v3570 = vpack.c.bf16 %v3485, %v3484
  %v3571 = vpack.c.bf16 %v3487, %v3486
  %v3572 = vpack.c.bf16 %v3489, %v3488
  %v3573 = vpack.c.bf16 %v3491, %v3490
  %v3574 = vpack.c.bf16 %v3493, %v3492
  %v3575 = vpack.c.bf16 %v3495, %v3494
  %v3576 = vpack.c.bf16 %v3497, %v3496
  %v3577 = vpack.c.bf16 %v3499, %v3498
  %v3578 = vpack.c.bf16 %v3501, %v3500
  %v3579 = vpack.c.bf16 %v3503, %v3502
  %v3580 = vpack.c.bf16 %v3505, %v3504
  %v3581 = vpack.c.bf16 %v3507, %v3506
  %v3582 = vpack.c.bf16 %v3509, %v3508
  %v3583 = vpack.c.bf16 %v3511, %v3510
  %v3584 = vpack.c.bf16 %v3513, %v3512
  %v3585 = vpack.c.bf16 %v3515, %v3514
  %v3586 = vpack.c.bf16 %v3517, %v3516
  %v3587 = vpack.c.bf16 %v3519, %v3518
  %v3588 = vpack.c.bf16 %v3521, %v3520
  %v3589 = vpack.c.bf16 %v3523, %v3522
  %v3590 = vpack.c.bf16 %v3525, %v3524
  %v3591 = vpack.c.bf16 %v3527, %v3526
  %s3592 = scalar_lea.vmem %s3, 192
  %v3593 = vld [vmem:[%s3592] sm:$0xf]
  %v3594 = vld [vmem:[%s3592 + $0x4] sm:$0xf]
  %v3595 = vld [vmem:[%s3592 + $0x8] sm:$0xf]
  %v3596 = vld [vmem:[%s3592 + $0xc] sm:$0xf]
  %v3597 = vld [vmem:[%s3592 + $0x10] sm:$0xf]
  %v3598 = vld [vmem:[%s3592 + $0x14] sm:$0xf]
  %v3599 = vld [vmem:[%s3592 + $0x18] sm:$0xf]
  %v3600 = vld [vmem:[%s3592 + $0x1c] sm:$0xf]
  %v3601 = vld [vmem:[%s3592 + $0x20] sm:$0xf]
  %v3602 = vld [vmem:[%s3592 + $0x24] sm:$0xf]
  %v3603 = vld [vmem:[%s3592 + $0x28] sm:$0xf]
  %v3604 = vld [vmem:[%s3592 + $0x2c] sm:$0xf]
  %v3605 = vld [vmem:[%s3592 + $0x30] sm:$0xf]
  %v3606 = vld [vmem:[%s3592 + $0x34] sm:$0xf]
  %v3607 = vld [vmem:[%s3592 + $0x38] sm:$0xf]
  %v3608 = vld [vmem:[%s3592 + $0x3c] sm:$0xf]
  %s3609 = scalar_lea.vmem %s4, 3
  %v3610 = vld [vmem:[%s3609] sm:$0x1]
  %v3612 = vlaneseq
  %v3613 = vshrl.u32 %v3612, 7
  %v3614 = vsub.s32 0, %v3613
  %v3615 = vrot.slane %v3610, %v3614
  %v3633 = vunpack.c.l.b16 %v3593
  %v3634 = vunpack.c.l.b16 %v3594
  %v3635 = vunpack.c.l.b16 %v3595
  %v3636 = vunpack.c.l.b16 %v3596
  %v3637 = vunpack.c.l.b16 %v3597
  %v3638 = vunpack.c.l.b16 %v3598
  %v3639 = vunpack.c.l.b16 %v3599
  %v3640 = vunpack.c.l.b16 %v3600
  %v3641 = vunpack.c.l.b16 %v3601
  %v3642 = vunpack.c.l.b16 %v3602
  %v3643 = vunpack.c.l.b16 %v3603
  %v3644 = vunpack.c.l.b16 %v3604
  %v3645 = vunpack.c.l.b16 %v3605
  %v3646 = vunpack.c.l.b16 %v3606
  %v3647 = vunpack.c.l.b16 %v3607
  %v3648 = vunpack.c.l.b16 %v3608
  %v3649 = vpack.c.b16 %v3634, %v3633
  %v3650 = vpack.c.b16 %v3636, %v3635
  %v3651 = vpack.c.b16 %v3638, %v3637
  %v3652 = vpack.c.b16 %v3640, %v3639
  %v3653 = vpack.c.b16 %v3642, %v3641
  %v3654 = vpack.c.b16 %v3644, %v3643
  %v3655 = vpack.c.b16 %v3646, %v3645
  %v3656 = vpack.c.b16 %v3648, %v3647
  %3665 = vmatprep.subr.bf16.mxu0 0
  %3666 = vmatpush1.bf16.msra.mxu0 %v3649
  %3667 = vmatprep.subr.bf16.mxu0 0
  %3668 = vmatpush1.bf16.msra.mxu0 %v3650
  %3669 = vmatprep.subr.bf16.mxu0 0
  %3670 = vmatpush1.bf16.msra.mxu0 %v3651
  %3671 = vmatprep.subr.bf16.mxu0 0
  %3672 = vmatpush1.bf16.msra.mxu0 %v3652
  %3673 = vmatprep.subr.bf16.mxu0 0
  %3674 = vmatpush1.bf16.msra.mxu0 %v3653
  %3675 = vmatprep.subr.bf16.mxu0 0
  %3676 = vmatpush1.bf16.msra.mxu0 %v3654
  %3677 = vmatprep.subr.bf16.mxu0 0
  %3678 = vmatpush1.bf16.msra.mxu0 %v3655
  %3679 = vmatprep.subr.bf16.mxu0 0
  %3680 = vmatpush1.bf16.msra.mxu0 %v3656
  %3681 = vmatprep.subr.bf16.mxu0 0
  %3682 = vmatpush1.bf16.msra.mxu0 0
  %3683 = vmatprep.subr.bf16.mxu0 0
  %3684 = vmatpush1.bf16.msra.mxu0 0
  %3685 = vmatprep.subr.bf16.mxu0 0
  %3686 = vmatpush1.bf16.msra.mxu0 0
  %3687 = vmatprep.subr.bf16.mxu0 0
  %3688 = vmatpush1.bf16.msra.mxu0 0
  %3689 = vmatprep.subr.bf16.mxu0 0
  %3690 = vmatpush1.bf16.msra.mxu0 0
  %3691 = vmatprep.subr.bf16.mxu0 0
  %3692 = vmatpush1.bf16.msra.mxu0 0
  %3693 = vmatprep.subr.bf16.mxu0 0
  %3694 = vmatpush1.bf16.msra.mxu0 0
  %3695 = vmatprep.subr.bf16.mxu0 0
  %3696 = vmatpush1.bf16.msra.mxu0 0
  %3697 = vmatprep.mubr.bf16.mxu0 0
  %3698 = vmatmul.mubr.bf16.gmra.mrb[0].mxu0 %v3528
  %v3699 = vpop.f32.mrb[0].mxu0
  %v3700 = vadd.f32 %v3615, %v3699
  %v3701 = vpop.f32.mrb[0].mxu0
  %v3702 = vpop.f32.mrb[0].mxu0
  %v3703 = vadd.f32 %v3615, %v3702
  %v3704 = vpop.f32.mrb[0].mxu0
  %3705 = vmatprep.mubr.bf16.mxu0 0
  %3706 = vmatmul.mubr.bf16.gmra.mrb[0].mxu0 %v3529
  %v3707 = vpop.f32.mrb[0].mxu0
  %v3708 = vadd.f32 %v3615, %v3707
  %v3709 = vpop.f32.mrb[0].mxu0
  %v3710 = vpop.f32.mrb[0].mxu0
  %v3711 = vadd.f32 %v3615, %v3710
  %v3712 = vpop.f32.mrb[0].mxu0
  %3713 = vmatprep.mubr.bf16.mxu0 0
  %3714 = vmatmul.mubr.bf16.gmra.mrb[0].mxu0 %v3530
  %v3715 = vpop.f32.mrb[0].mxu0
  %v3716 = vadd.f32 %v3615, %v3715
  %v3717 = vpop.f32.mrb[0].mxu0
  %v3718 = vpop.f32.mrb[0].mxu0
  %v3719 = vadd.f32 %v3615, %v3718
  %v3720 = vpop.f32.mrb[0].mxu0
  %3721 = vmatprep.mubr.bf16.mxu0 0
  %3722 = vmatmul.mubr.bf16.gmra.mrb[0].mxu0 %v3531
  %v3723 = vpop.f32.mrb[0].mxu0
  %v3724 = vadd.f32 %v3615, %v3723
  %v3725 = vpop.f32.mrb[0].mxu0
  %v3726 = vpop.f32.mrb[0].mxu0
  %v3727 = vadd.f32 %v3615, %v3726
  %v3728 = vpop.f32.mrb[0].mxu0
  %3729 = vmatprep.mubr.bf16.mxu0 0
  %3730 = vmatmul.mubr.bf16.gmra.mrb[0].mxu0 %v3532
  %v3731 = vpop.f32.mrb[0].mxu0
  %v3732 = vadd.f32 %v3615, %v3731
  %v3733 = vpop.f32.mrb[0].mxu0
  %v3734 = vpop.f32.mrb[0].mxu0
  %v3735 = vadd.f32 %v3615, %v3734
  %v3736 = vpop.f32.mrb[0].mxu0
  %3737 = vmatprep.mubr.bf16.mxu0 0
  %3738 = vmatmul.mubr.bf16.gmra.mrb[0].mxu0 %v3533
  %v3739 = vpop.f32.mrb[0].mxu0
  %v3740 = vadd.f32 %v3615, %v3739
  %v3741 = vpop.f32.mrb[0].mxu0
  %v3742 = vpop.f32.mrb[0].mxu0
  %v3743 = vadd.f32 %v3615, %v3742
  %v3744 = vpop.f32.mrb[0].mxu0
  %3745 = vmatprep.mubr.bf16.mxu0 0
  %3746 = vmatmul.mubr.bf16.gmra.mrb[0].mxu0 %v3534
  %v3747 = vpop.f32.mrb[0].mxu0
  %v3748 = vadd.f32 %v3615, %v3747
  %v3749 = vpop.f32.mrb[0].mxu0
  %v3750 = vpop.f32.mrb[0].mxu0
  %v3751 = vadd.f32 %v3615, %v3750
  %v3752 = vpop.f32.mrb[0].mxu0
  %3753 = vmatprep.mubr.bf16.mxu0 0
  %3754 = vmatmul.mubr.bf16.gmra.mrb[0].mxu0 %v3535
  %v3755 = vpop.f32.mrb[0].mxu0
  %v3756 = vadd.f32 %v3615, %v3755
  %v3757 = vpop.f32.mrb[0].mxu0
  %v3758 = vpop.f32.mrb[0].mxu0
  %v3759 = vadd.f32 %v3615, %v3758
  %v3760 = vpop.f32.mrb[0].mxu0
  %3761 = vmatprep.mubr.bf16.mxu0 0
  %3762 = vmatmul.mubr.bf16.gmra.mrb[0].mxu0 %v3536
  %v3763 = vpop.f32.mrb[0].mxu0
  %v3764 = vadd.f32 %v3615, %v3763
  %v3765 = vpop.f32.mrb[0].mxu0
  %v3766 = vpop.f32.mrb[0].mxu0
  %v3767 = vadd.f32 %v3615, %v3766
  %v3768 = vpop.f32.mrb[0].mxu0
  %3769 = vmatprep.mubr.bf16.mxu0 0
  %3770 = vmatmul.mubr.bf16.gmra.mrb[0].mxu0 %v3537
  %v3771 = vpop.f32.mrb[0].mxu0
  %v3772 = vadd.f32 %v3615, %v3771
  %v3773 = vpop.f32.mrb[0].mxu0
  %v3774 = vpop.f32.mrb[0].mxu0
  %v3775 = vadd.f32 %v3615, %v3774
  %v3776 = vpop.f32.mrb[0].mxu0
  %3777 = vmatprep.mubr.bf16.mxu0 0
  %3778 = vmatmul.mubr.bf16.gmra.mrb[0].mxu0 %v3538
  %v3779 = vpop.f32.mrb[0].mxu0
  %v3780 = vadd.f32 %v3615, %v3779
  %v3781 = vpop.f32.mrb[0].mxu0
  %v3782 = vpop.f32.mrb[0].mxu0
  %v3783 = vadd.f32 %v3615, %v3782
  %v3784 = vpop.f32.mrb[0].mxu0
  %3785 = vmatprep.mubr.bf16.mxu0 0
  %3786 = vmatmul.mubr.bf16.gmra.mrb[0].mxu0 %v3539
  %v3787 = vpop.f32.mrb[0].mxu0
  %v3788 = vadd.f32 %v3615, %v3787
  %v3789 = vpop.f32.mrb[0].mxu0
  %v3790 = vpop.f32.mrb[0].mxu0
  %v3791 = vadd.f32 %v3615, %v3790
  %v3792 = vpop.f32.mrb[0].mxu0
  %3793 = vmatprep.mubr.bf16.mxu0 0
  %3794 = vmatmul.mubr.bf16.gmra.mrb[0].mxu0 %v3540
  %v3795 = vpop.f32.mrb[0].mxu0
  %v3796 = vadd.f32 %v3615, %v3795
  %v3797 = vpop.f32.mrb[0].mxu0
  %v3798 = vpop.f32.mrb[0].mxu0
  %v3799 = vadd.f32 %v3615, %v3798
  %v3800 = vpop.f32.mrb[0].mxu0
  %3801 = vmatprep.mubr.bf16.mxu0 0
  %3802 = vmatmul.mubr.bf16.gmra.mrb[0].mxu0 %v3541
  %v3803 = vpop.f32.mrb[0].mxu0
  %v3804 = vadd.f32 %v3615, %v3803
  %v3805 = vpop.f32.mrb[0].mxu0
  %v3806 = vpop.f32.mrb[0].mxu0
  %v3807 = vadd.f32 %v3615, %v3806
  %v3808 = vpop.f32.mrb[0].mxu0
  %3809 = vmatprep.mubr.bf16.mxu0 0
  %3810 = vmatmul.mubr.bf16.gmra.mrb[0].mxu0 %v3542
  %v3811 = vpop.f32.mrb[0].mxu0
  %v3812 = vadd.f32 %v3615, %v3811
  %v3813 = vpop.f32.mrb[0].mxu0
  %v3814 = vpop.f32.mrb[0].mxu0
  %v3815 = vadd.f32 %v3615, %v3814
  %v3816 = vpop.f32.mrb[0].mxu0
  %3817 = vmatprep.mubr.bf16.mxu0 0
  %3818 = vmatmul.mubr.bf16.gmra.mrb[0].mxu0 %v3543
  %v3819 = vpop.f32.mrb[0].mxu0
  %v3820 = vadd.f32 %v3615, %v3819
  %v3821 = vpop.f32.mrb[0].mxu0
  %v3822 = vpop.f32.mrb[0].mxu0
  %v3823 = vadd.f32 %v3615, %v3822
  %v3824 = vpop.f32.mrb[0].mxu0
  %3825 = vmatprep.mubr.bf16.mxu0 0
  %3826 = vmatmul.mubr.bf16.gmra.mrb[0].mxu0 %v3544
  %v3827 = vpop.f32.mrb[0].mxu0
  %v3828 = vadd.f32 %v3615, %v3827
  %v3829 = vpop.f32.mrb[0].mxu0
  %v3830 = vpop.f32.mrb[0].mxu0
  %v3831 = vadd.f32 %v3615, %v3830
  %v3832 = vpop.f32.mrb[0].mxu0
  %3833 = vmatprep.mubr.bf16.mxu0 0
  %3834 = vmatmul.mubr.bf16.gmra.mrb[0].mxu0 %v3545
  %v3835 = vpop.f32.mrb[0].mxu0
  %v3836 = vadd.f32 %v3615, %v3835
  %v3837 = vpop.f32.mrb[0].mxu0
  %v3838 = vpop.f32.mrb[0].mxu0
  %v3839 = vadd.f32 %v3615, %v3838
  %v3840 = vpop.f32.mrb[0].mxu0
  %3841 = vmatprep.mubr.bf16.mxu0 0
  %3842 = vmatmul.mubr.bf16.gmra.mrb[0].mxu0 %v3546
  %v3843 = vpop.f32.mrb[0].mxu0
  %v3844 = vadd.f32 %v3615, %v3843
  %v3845 = vpop.f32.mrb[0].mxu0
  %v3846 = vpop.f32.mrb[0].mxu0
  %v3847 = vadd.f32 %v3615, %v3846
  %v3848 = vpop.f32.mrb[0].mxu0
  %3849 = vmatprep.mubr.bf16.mxu0 0
  %3850 = vmatmul.mubr.bf16.gmra.mrb[0].mxu0 %v3547
  %v3851 = vpop.f32.mrb[0].mxu0
  %v3852 = vadd.f32 %v3615, %v3851
  %v3853 = vpop.f32.mrb[0].mxu0
  %v3854 = vpop.f32.mrb[0].mxu0
  %v3855 = vadd.f32 %v3615, %v3854
  %v3856 = vpop.f32.mrb[0].mxu0
  %3857 = vmatprep.mubr.bf16.mxu0 0
  %3858 = vmatmul.mubr.bf16.gmra.mrb[0].mxu0 %v3548
  %v3859 = vpop.f32.mrb[0].mxu0
  %v3860 = vadd.f32 %v3615, %v3859
  %v3861 = vpop.f32.mrb[0].mxu0
  %v3862 = vpop.f32.mrb[0].mxu0
  %v3863 = vadd.f32 %v3615, %v3862
  %v3864 = vpop.f32.mrb[0].mxu0
  %3865 = vmatprep.mubr.bf16.mxu0 0
  %3866 = vmatmul.mubr.bf16.gmra.mrb[0].mxu0 %v3549
  %v3867 = vpop.f32.mrb[0].mxu0
  %v3868 = vadd.f32 %v3615, %v3867
  %v3869 = vpop.f32.mrb[0].mxu0
  %v3870 = vpop.f32.mrb[0].mxu0
  %v3871 = vadd.f32 %v3615, %v3870
  %v3872 = vpop.f32.mrb[0].mxu0
  %3873 = vmatprep.mubr.bf16.mxu0 0
  %3874 = vmatmul.mubr.bf16.gmra.mrb[0].mxu0 %v3550
  %v3875 = vpop.f32.mrb[0].mxu0
  %v3876 = vadd.f32 %v3615, %v3875
  %v3877 = vpop.f32.mrb[0].mxu0
  %v3878 = vpop.f32.mrb[0].mxu0
  %v3879 = vadd.f32 %v3615, %v3878
  %v3880 = vpop.f32.mrb[0].mxu0
  %3881 = vmatprep.mubr.bf16.mxu0 0
  %3882 = vmatmul.mubr.bf16.gmra.mrb[0].mxu0 %v3551
  %v3883 = vpop.f32.mrb[0].mxu0
  %v3884 = vadd.f32 %v3615, %v3883
  %v3885 = vpop.f32.mrb[0].mxu0
  %v3886 = vpop.f32.mrb[0].mxu0
  %v3887 = vadd.f32 %v3615, %v3886
  %v3888 = vpop.f32.mrb[0].mxu0
  %3889 = vmatprep.mubr.bf16.mxu0 0
  %3890 = vmatmul.mubr.bf16.gmra.mrb[0].mxu0 %v3552
  %v3891 = vpop.f32.mrb[0].mxu0
  %v3892 = vadd.f32 %v3615, %v3891
  %v3893 = vpop.f32.mrb[0].mxu0
  %v3894 = vpop.f32.mrb[0].mxu0
  %v3895 = vadd.f32 %v3615, %v3894
  %v3896 = vpop.f32.mrb[0].mxu0
  %3897 = vmatprep.mubr.bf16.mxu0 0
  %3898 = vmatmul.mubr.bf16.gmra.mrb[0].mxu0 %v3553
  %v3899 = vpop.f32.mrb[0].mxu0
  %v3900 = vadd.f32 %v3615, %v3899
  %v3901 = vpop.f32.mrb[0].mxu0
  %v3902 = vpop.f32.mrb[0].mxu0
  %v3903 = vadd.f32 %v3615, %v3902
  %v3904 = vpop.f32.mrb[0].mxu0
  %3905 = vmatprep.mubr.bf16.mxu0 0
  %3906 = vmatmul.mubr.bf16.gmra.mrb[0].mxu0 %v3554
  %v3907 = vpop.f32.mrb[0].mxu0
  %v3908 = vadd.f32 %v3615, %v3907
  %v3909 = vpop.f32.mrb[0].mxu0
  %v3910 = vpop.f32.mrb[0].mxu0
  %v3911 = vadd.f32 %v3615, %v3910
  %v3912 = vpop.f32.mrb[0].mxu0
  %3913 = vmatprep.mubr.bf16.mxu0 0
  %3914 = vmatmul.mubr.bf16.gmra.mrb[0].mxu0 %v3555
  %v3915 = vpop.f32.mrb[0].mxu0
  %v3916 = vadd.f32 %v3615, %v3915
  %v3917 = vpop.f32.mrb[0].mxu0
  %v3918 = vpop.f32.mrb[0].mxu0
  %v3919 = vadd.f32 %v3615, %v3918
  %v3920 = vpop.f32.mrb[0].mxu0
  %3921 = vmatprep.mubr.bf16.mxu0 0
  %3922 = vmatmul.mubr.bf16.gmra.mrb[0].mxu0 %v3556
  %v3923 = vpop.f32.mrb[0].mxu0
  %v3924 = vadd.f32 %v3615, %v3923
  %v3925 = vpop.f32.mrb[0].mxu0
  %v3926 = vpop.f32.mrb[0].mxu0
  %v3927 = vadd.f32 %v3615, %v3926
  %v3928 = vpop.f32.mrb[0].mxu0
  %3929 = vmatprep.mubr.bf16.mxu0 0
  %3930 = vmatmul.mubr.bf16.gmra.mrb[0].mxu0 %v3557
  %v3931 = vpop.f32.mrb[0].mxu0
  %v3932 = vadd.f32 %v3615, %v3931
  %v3933 = vpop.f32.mrb[0].mxu0
  %v3934 = vpop.f32.mrb[0].mxu0
  %v3935 = vadd.f32 %v3615, %v3934
  %v3936 = vpop.f32.mrb[0].mxu0
  %3937 = vmatprep.mubr.bf16.mxu0 0
  %3938 = vmatmul.mubr.bf16.gmra.mrb[0].mxu0 %v3558
  %v3939 = vpop.f32.mrb[0].mxu0
  %v3940 = vadd.f32 %v3615, %v3939
  %v3941 = vpop.f32.mrb[0].mxu0
  %v3942 = vpop.f32.mrb[0].mxu0
  %v3943 = vadd.f32 %v3615, %v3942
  %v3944 = vpop.f32.mrb[0].mxu0
  %3945 = vmatprep.mubr.bf16.mxu0 0
  %3946 = vmatmul.mubr.bf16.gmra.mrb[0].mxu0 %v3559
  %v3947 = vpop.f32.mrb[0].mxu0
  %v3948 = vadd.f32 %v3615, %v3947
  %v3949 = vpop.f32.mrb[0].mxu0
  %v3950 = vpop.f32.mrb[0].mxu0
  %v3951 = vadd.f32 %v3615, %v3950
  %v3952 = vpop.f32.mrb[0].mxu0
  %3953 = vmatprep.mubr.bf16.mxu0 0
  %3954 = vmatmul.mubr.bf16.gmra.mrb[0].mxu0 %v3560
  %v3955 = vpop.f32.mrb[0].mxu0
  %v3956 = vadd.f32 %v3615, %v3955
  %v3957 = vpop.f32.mrb[0].mxu0
  %v3958 = vpop.f32.mrb[0].mxu0
  %v3959 = vadd.f32 %v3615, %v3958
  %v3960 = vpop.f32.mrb[0].mxu0
  %3961 = vmatprep.mubr.bf16.mxu0 0
  %3962 = vmatmul.mubr.bf16.gmra.mrb[0].mxu0 %v3561
  %v3963 = vpop.f32.mrb[0].mxu0
  %v3964 = vadd.f32 %v3615, %v3963
  %v3965 = vpop.f32.mrb[0].mxu0
  %v3966 = vpop.f32.mrb[0].mxu0
  %v3967 = vadd.f32 %v3615, %v3966
  %v3968 = vpop.f32.mrb[0].mxu0
  %3969 = vmatprep.mubr.bf16.mxu0 0
  %3970 = vmatmul.mubr.bf16.gmra.mrb[0].mxu0 %v3562
  %v3971 = vpop.f32.mrb[0].mxu0
  %v3972 = vadd.f32 %v3615, %v3971
  %v3973 = vpop.f32.mrb[0].mxu0
  %v3974 = vpop.f32.mrb[0].mxu0
  %v3975 = vadd.f32 %v3615, %v3974
  %v3976 = vpop.f32.mrb[0].mxu0
  %3977 = vmatprep.mubr.bf16.mxu0 0
  %3978 = vmatmul.mubr.bf16.gmra.mrb[0].mxu0 %v3563
  %v3979 = vpop.f32.mrb[0].mxu0
  %v3980 = vadd.f32 %v3615, %v3979
  %v3981 = vpop.f32.mrb[0].mxu0
  %v3982 = vpop.f32.mrb[0].mxu0
  %v3983 = vadd.f32 %v3615, %v3982
  %v3984 = vpop.f32.mrb[0].mxu0
  %3985 = vmatprep.mubr.bf16.mxu0 0
  %3986 = vmatmul.mubr.bf16.gmra.mrb[0].mxu0 %v3564
  %v3987 = vpop.f32.mrb[0].mxu0
  %v3988 = vadd.f32 %v3615, %v3987
  %v3989 = vpop.f32.mrb[0].mxu0
  %v3990 = vpop.f32.mrb[0].mxu0
  %v3991 = vadd.f32 %v3615, %v3990
  %v3992 = vpop.f32.mrb[0].mxu0
  %3993 = vmatprep.mubr.bf16.mxu0 0
  %3994 = vmatmul.mubr.bf16.gmra.mrb[0].mxu0 %v3565
  %v3995 = vpop.f32.mrb[0].mxu0
  %v3996 = vadd.f32 %v3615, %v3995
  %v3997 = vpop.f32.mrb[0].mxu0
  %v3998 = vpop.f32.mrb[0].mxu0
  %v3999 = vadd.f32 %v3615, %v3998
  %v4000 = vpop.f32.mrb[0].mxu0
  %4001 = vmatprep.mubr.bf16.mxu0 0
  %4002 = vmatmul.mubr.bf16.gmra.mrb[0].mxu0 %v3566
  %v4003 = vpop.f32.mrb[0].mxu0
  %v4004 = vadd.f32 %v3615, %v4003
  %v4005 = vpop.f32.mrb[0].mxu0
  %v4006 = vpop.f32.mrb[0].mxu0
  %v4007 = vadd.f32 %v3615, %v4006
  %v4008 = vpop.f32.mrb[0].mxu0
  %4009 = vmatprep.mubr.bf16.mxu0 0
  %4010 = vmatmul.mubr.bf16.gmra.mrb[0].mxu0 %v3567
  %v4011 = vpop.f32.mrb[0].mxu0
  %v4012 = vadd.f32 %v3615, %v4011
  %v4013 = vpop.f32.mrb[0].mxu0
  %v4014 = vpop.f32.mrb[0].mxu0
  %v4015 = vadd.f32 %v3615, %v4014
  %v4016 = vpop.f32.mrb[0].mxu0
  %4017 = vmatprep.mubr.bf16.mxu0 0
  %4018 = vmatmul.mubr.bf16.gmra.mrb[0].mxu0 %v3568
  %v4019 = vpop.f32.mrb[0].mxu0
  %v4020 = vadd.f32 %v3615, %v4019
  %v4021 = vpop.f32.mrb[0].mxu0
  %v4022 = vpop.f32.mrb[0].mxu0
  %v4023 = vadd.f32 %v3615, %v4022
  %v4024 = vpop.f32.mrb[0].mxu0
  %4025 = vmatprep.mubr.bf16.mxu0 0
  %4026 = vmatmul.mubr.bf16.gmra.mrb[0].mxu0 %v3569
  %v4027 = vpop.f32.mrb[0].mxu0
  %v4028 = vadd.f32 %v3615, %v4027
  %v4029 = vpop.f32.mrb[0].mxu0
  %v4030 = vpop.f32.mrb[0].mxu0
  %v4031 = vadd.f32 %v3615, %v4030
  %v4032 = vpop.f32.mrb[0].mxu0
  %4033 = vmatprep.mubr.bf16.mxu0 0
  %4034 = vmatmul.mubr.bf16.gmra.mrb[0].mxu0 %v3570
  %v4035 = vpop.f32.mrb[0].mxu0
  %v4036 = vadd.f32 %v3615, %v4035
  %v4037 = vpop.f32.mrb[0].mxu0
  %v4038 = vpop.f32.mrb[0].mxu0
  %v4039 = vadd.f32 %v3615, %v4038
  %v4040 = vpop.f32.mrb[0].mxu0
  %4041 = vmatprep.mubr.bf16.mxu0 0
  %4042 = vmatmul.mubr.bf16.gmra.mrb[0].mxu0 %v3571
  %v4043 = vpop.f32.mrb[0].mxu0
  %v4044 = vadd.f32 %v3615, %v4043
  %v4045 = vpop.f32.mrb[0].mxu0
  %v4046 = vpop.f32.mrb[0].mxu0
  %v4047 = vadd.f32 %v3615, %v4046
  %v4048 = vpop.f32.mrb[0].mxu0
  %4049 = vmatprep.mubr.bf16.mxu0 0
  %4050 = vmatmul.mubr.bf16.gmra.mrb[0].mxu0 %v3572
  %v4051 = vpop.f32.mrb[0].mxu0
  %v4052 = vadd.f32 %v3615, %v4051
  %v4053 = vpop.f32.mrb[0].mxu0
  %v4054 = vpop.f32.mrb[0].mxu0
  %v4055 = vadd.f32 %v3615, %v4054
  %v4056 = vpop.f32.mrb[0].mxu0
  %4057 = vmatprep.mubr.bf16.mxu0 0
  %4058 = vmatmul.mubr.bf16.gmra.mrb[0].mxu0 %v3573
  %v4059 = vpop.f32.mrb[0].mxu0
  %v4060 = vadd.f32 %v3615, %v4059
  %v4061 = vpop.f32.mrb[0].mxu0
  %v4062 = vpop.f32.mrb[0].mxu0
  %v4063 = vadd.f32 %v3615, %v4062
  %v4064 = vpop.f32.mrb[0].mxu0
  %4065 = vmatprep.mubr.bf16.mxu0 0
  %4066 = vmatmul.mubr.bf16.gmra.mrb[0].mxu0 %v3574
  %v4067 = vpop.f32.mrb[0].mxu0
  %v4068 = vadd.f32 %v3615, %v4067
  %v4069 = vpop.f32.mrb[0].mxu0
  %v4070 = vpop.f32.mrb[0].mxu0
  %v4071 = vadd.f32 %v3615, %v4070
  %v4072 = vpop.f32.mrb[0].mxu0
  %4073 = vmatprep.mubr.bf16.mxu0 0
  %4074 = vmatmul.mubr.bf16.gmra.mrb[0].mxu0 %v3575
  %v4075 = vpop.f32.mrb[0].mxu0
  %v4076 = vadd.f32 %v3615, %v4075
  %v4077 = vpop.f32.mrb[0].mxu0
  %v4078 = vpop.f32.mrb[0].mxu0
  %v4079 = vadd.f32 %v3615, %v4078
  %v4080 = vpop.f32.mrb[0].mxu0
  %4081 = vmatprep.mubr.bf16.mxu0 0
  %4082 = vmatmul.mubr.bf16.gmra.mrb[0].mxu0 %v3576
  %v4083 = vpop.f32.mrb[0].mxu0
  %v4084 = vadd.f32 %v3615, %v4083
  %v4085 = vpop.f32.mrb[0].mxu0
  %v4086 = vpop.f32.mrb[0].mxu0
  %v4087 = vadd.f32 %v3615, %v4086
  %v4088 = vpop.f32.mrb[0].mxu0
  %4089 = vmatprep.mubr.bf16.mxu0 0
  %4090 = vmatmul.mubr.bf16.gmra.mrb[0].mxu0 %v3577
  %v4091 = vpop.f32.mrb[0].mxu0
  %v4092 = vadd.f32 %v3615, %v4091
  %v4093 = vpop.f32.mrb[0].mxu0
  %v4094 = vpop.f32.mrb[0].mxu0
  %v4095 = vadd.f32 %v3615, %v4094
  %v4096 = vpop.f32.mrb[0].mxu0
  %4097 = vmatprep.mubr.bf16.mxu0 0
  %4098 = vmatmul.mubr.bf16.gmra.mrb[0].mxu0 %v3578
  %v4099 = vpop.f32.mrb[0].mxu0
  %v4100 = vadd.f32 %v3615, %v4099
  %v4101 = vpop.f32.mrb[0].mxu0
  %v4102 = vpop.f32.mrb[0].mxu0
  %v4103 = vadd.f32 %v3615, %v4102
  %v4104 = vpop.f32.mrb[0].mxu0
  %4105 = vmatprep.mubr.bf16.mxu0 0
  %4106 = vmatmul.mubr.bf16.gmra.mrb[0].mxu0 %v3579
  %v4107 = vpop.f32.mrb[0].mxu0
  %v4108 = vadd.f32 %v3615, %v4107
  %v4109 = vpop.f32.mrb[0].mxu0
  %v4110 = vpop.f32.mrb[0].mxu0
  %v4111 = vadd.f32 %v3615, %v4110
  %v4112 = vpop.f32.mrb[0].mxu0
  %4113 = vmatprep.mubr.bf16.mxu0 0
  %4114 = vmatmul.mubr.bf16.gmra.mrb[0].mxu0 %v3580
  %v4115 = vpop.f32.mrb[0].mxu0
  %v4116 = vadd.f32 %v3615, %v4115
  %v4117 = vpop.f32.mrb[0].mxu0
  %v4118 = vpop.f32.mrb[0].mxu0
  %v4119 = vadd.f32 %v3615, %v4118
  %v4120 = vpop.f32.mrb[0].mxu0
  %4121 = vmatprep.mubr.bf16.mxu0 0
  %4122 = vmatmul.mubr.bf16.gmra.mrb[0].mxu0 %v3581
  %v4123 = vpop.f32.mrb[0].mxu0
  %v4124 = vadd.f32 %v3615, %v4123
  %v4125 = vpop.f32.mrb[0].mxu0
  %v4126 = vpop.f32.mrb[0].mxu0
  %v4127 = vadd.f32 %v3615, %v4126
  %v4128 = vpop.f32.mrb[0].mxu0
  %4129 = vmatprep.mubr.bf16.mxu0 0
  %4130 = vmatmul.mubr.bf16.gmra.mrb[0].mxu0 %v3582
  %v4131 = vpop.f32.mrb[0].mxu0
  %v4132 = vadd.f32 %v3615, %v4131
  %v4133 = vpop.f32.mrb[0].mxu0
  %v4134 = vpop.f32.mrb[0].mxu0
  %v4135 = vadd.f32 %v3615, %v4134
  %v4136 = vpop.f32.mrb[0].mxu0
  %4137 = vmatprep.mubr.bf16.mxu0 0
  %4138 = vmatmul.mubr.bf16.gmra.mrb[0].mxu0 %v3583
  %v4139 = vpop.f32.mrb[0].mxu0
  %v4140 = vadd.f32 %v3615, %v4139
  %v4141 = vpop.f32.mrb[0].mxu0
  %v4142 = vpop.f32.mrb[0].mxu0
  %v4143 = vadd.f32 %v3615, %v4142
  %v4144 = vpop.f32.mrb[0].mxu0
  %4145 = vmatprep.mubr.bf16.mxu0 0
  %4146 = vmatmul.mubr.bf16.gmra.mrb[0].mxu0 %v3584
  %v4147 = vpop.f32.mrb[0].mxu0
  %v4148 = vadd.f32 %v3615, %v4147
  %v4149 = vpop.f32.mrb[0].mxu0
  %v4150 = vpop.f32.mrb[0].mxu0
  %v4151 = vadd.f32 %v3615, %v4150
  %v4152 = vpop.f32.mrb[0].mxu0
  %4153 = vmatprep.mubr.bf16.mxu0 0
  %4154 = vmatmul.mubr.bf16.gmra.mrb[0].mxu0 %v3585
  %v4155 = vpop.f32.mrb[0].mxu0
  %v4156 = vadd.f32 %v3615, %v4155
  %v4157 = vpop.f32.mrb[0].mxu0
  %v4158 = vpop.f32.mrb[0].mxu0
  %v4159 = vadd.f32 %v3615, %v4158
  %v4160 = vpop.f32.mrb[0].mxu0
  %4161 = vmatprep.mubr.bf16.mxu0 0
  %4162 = vmatmul.mubr.bf16.gmra.mrb[0].mxu0 %v3586
  %v4163 = vpop.f32.mrb[0].mxu0
  %v4164 = vadd.f32 %v3615, %v4163
  %v4165 = vpop.f32.mrb[0].mxu0
  %v4166 = vpop.f32.mrb[0].mxu0
  %v4167 = vadd.f32 %v3615, %v4166
  %v4168 = vpop.f32.mrb[0].mxu0
  %4169 = vmatprep.mubr.bf16.mxu0 0
  %4170 = vmatmul.mubr.bf16.gmra.mrb[0].mxu0 %v3587
  %v4171 = vpop.f32.mrb[0].mxu0
  %v4172 = vadd.f32 %v3615, %v4171
  %v4173 = vpop.f32.mrb[0].mxu0
  %v4174 = vpop.f32.mrb[0].mxu0
  %v4175 = vadd.f32 %v3615, %v4174
  %v4176 = vpop.f32.mrb[0].mxu0
  %4177 = vmatprep.mubr.bf16.mxu0 0
  %4178 = vmatmul.mubr.bf16.gmra.mrb[0].mxu0 %v3588
  %v4179 = vpop.f32.mrb[0].mxu0
  %v4180 = vadd.f32 %v3615, %v4179
  %v4181 = vpop.f32.mrb[0].mxu0
  %v4182 = vpop.f32.mrb[0].mxu0
  %v4183 = vadd.f32 %v3615, %v4182
  %v4184 = vpop.f32.mrb[0].mxu0
  %4185 = vmatprep.mubr.bf16.mxu0 0
  %4186 = vmatmul.mubr.bf16.gmra.mrb[0].mxu0 %v3589
  %v4187 = vpop.f32.mrb[0].mxu0
  %v4188 = vadd.f32 %v3615, %v4187
  %v4189 = vpop.f32.mrb[0].mxu0
  %v4190 = vpop.f32.mrb[0].mxu0
  %v4191 = vadd.f32 %v3615, %v4190
  %v4192 = vpop.f32.mrb[0].mxu0
  %4193 = vmatprep.mubr.bf16.mxu0 0
  %4194 = vmatmul.mubr.bf16.gmra.mrb[0].mxu0 %v3590
  %v4195 = vpop.f32.mrb[0].mxu0
  %v4196 = vadd.f32 %v3615, %v4195
  %v4197 = vpop.f32.mrb[0].mxu0
  %v4198 = vpop.f32.mrb[0].mxu0
  %v4199 = vadd.f32 %v3615, %v4198
  %v4200 = vpop.f32.mrb[0].mxu0
  %4201 = vmatprep.mubr.bf16.mxu0 0
  %4202 = vmatmul.mubr.bf16.gmra.mrb[0].mxu0 %v3591
  %v4203 = vpop.f32.mrb[0].mxu0
  %v4204 = vadd.f32 %v3615, %v4203
  %v4205 = vpop.f32.mrb[0].mxu0
  %v4206 = vpop.f32.mrb[0].mxu0
  %v4207 = vadd.f32 %v3615, %v4206
  %v4208 = vpop.f32.mrb[0].mxu0
  %4209 = vdwg.mxu0
  %v4210 = vmax.f32 %v3700, 0.0
  %v4211 = vmax.f32 %v3703, 0.0
  %v4212 = vmax.f32 %v3708, 0.0
  %v4213 = vmax.f32 %v3711, 0.0
  %v4214 = vmax.f32 %v3716, 0.0
  %v4215 = vmax.f32 %v3719, 0.0
  %v4216 = vmax.f32 %v3724, 0.0
  %v4217 = vmax.f32 %v3727, 0.0
  %v4218 = vmax.f32 %v3732, 0.0
  %v4219 = vmax.f32 %v3735, 0.0
  %v4220 = vmax.f32 %v3740, 0.0
  %v4221 = vmax.f32 %v3743, 0.0
  %v4222 = vmax.f32 %v3748, 0.0
  %v4223 = vmax.f32 %v3751, 0.0
  %v4224 = vmax.f32 %v3756, 0.0
  %v4225 = vmax.f32 %v3759, 0.0
  %v4226 = vmax.f32 %v3764, 0.0
  %v4227 = vmax.f32 %v3767, 0.0
  %v4228 = vmax.f32 %v3772, 0.0
  %v4229 = vmax.f32 %v3775, 0.0
  %v4230 = vmax.f32 %v3780, 0.0
  %v4231 = vmax.f32 %v3783, 0.0
  %v4232 = vmax.f32 %v3788, 0.0
  %v4233 = vmax.f32 %v3791, 0.0
  %v4234 = vmax.f32 %v3796, 0.0
  %v4235 = vmax.f32 %v3799, 0.0
  %v4236 = vmax.f32 %v3804, 0.0
  %v4237 = vmax.f32 %v3807, 0.0
  %v4238 = vmax.f32 %v3812, 0.0
  %v4239 = vmax.f32 %v3815, 0.0
  %v4240 = vmax.f32 %v3820, 0.0
  %v4241 = vmax.f32 %v3823, 0.0
  %v4242 = vmax.f32 %v3828, 0.0
  %v4243 = vmax.f32 %v3831, 0.0
  %v4244 = vmax.f32 %v3836, 0.0
  %v4245 = vmax.f32 %v3839, 0.0
  %v4246 = vmax.f32 %v3844, 0.0
  %v4247 = vmax.f32 %v3847, 0.0
  %v4248 = vmax.f32 %v3852, 0.0
  %v4249 = vmax.f32 %v3855, 0.0
  %v4250 = vmax.f32 %v3860, 0.0
  %v4251 = vmax.f32 %v3863, 0.0
  %v4252 = vmax.f32 %v3868, 0.0
  %v4253 = vmax.f32 %v3871, 0.0
  %v4254 = vmax.f32 %v3876, 0.0
  %v4255 = vmax.f32 %v3879, 0.0
  %v4256 = vmax.f32 %v3884, 0.0
  %v4257 = vmax.f32 %v3887, 0.0
  %v4258 = vmax.f32 %v3892, 0.0
  %v4259 = vmax.f32 %v3895, 0.0
  %v4260 = vmax.f32 %v3900, 0.0
  %v4261 = vmax.f32 %v3903, 0.0
  %v4262 = vmax.f32 %v3908, 0.0
  %v4263 = vmax.f32 %v3911, 0.0
  %v4264 = vmax.f32 %v3916, 0.0
  %v4265 = vmax.f32 %v3919, 0.0
  %v4266 = vmax.f32 %v3924, 0.0
  %v4267 = vmax.f32 %v3927, 0.0
  %v4268 = vmax.f32 %v3932, 0.0
  %v4269 = vmax.f32 %v3935, 0.0
  %v4270 = vmax.f32 %v3940, 0.0
  %v4271 = vmax.f32 %v3943, 0.0
  %v4272 = vmax.f32 %v3948, 0.0
  %v4273 = vmax.f32 %v3951, 0.0
  %v4274 = vmax.f32 %v3956, 0.0
  %v4275 = vmax.f32 %v3959, 0.0
  %v4276 = vmax.f32 %v3964, 0.0
  %v4277 = vmax.f32 %v3967, 0.0
  %v4278 = vmax.f32 %v3972, 0.0
  %v4279 = vmax.f32 %v3975, 0.0
  %v4280 = vmax.f32 %v3980, 0.0
  %v4281 = vmax.f32 %v3983, 0.0
  %v4282 = vmax.f32 %v3988, 0.0
  %v4283 = vmax.f32 %v3991, 0.0
  %v4284 = vmax.f32 %v3996, 0.0
  %v4285 = vmax.f32 %v3999, 0.0
  %v4286 = vmax.f32 %v4004, 0.0
  %v4287 = vmax.f32 %v4007, 0.0
  %v4288 = vmax.f32 %v4012, 0.0
  %v4289 = vmax.f32 %v4015, 0.0
  %v4290 = vmax.f32 %v4020, 0.0
  %v4291 = vmax.f32 %v4023, 0.0
  %v4292 = vmax.f32 %v4028, 0.0
  %v4293 = vmax.f32 %v4031, 0.0
  %v4294 = vmax.f32 %v4036, 0.0
  %v4295 = vmax.f32 %v4039, 0.0
  %v4296 = vmax.f32 %v4044, 0.0
  %v4297 = vmax.f32 %v4047, 0.0
  %v4298 = vmax.f32 %v4052, 0.0
  %v4299 = vmax.f32 %v4055, 0.0
  %v4300 = vmax.f32 %v4060, 0.0
  %v4301 = vmax.f32 %v4063, 0.0
  %v4302 = vmax.f32 %v4068, 0.0
  %v4303 = vmax.f32 %v4071, 0.0
  %v4304 = vmax.f32 %v4076, 0.0
  %v4305 = vmax.f32 %v4079, 0.0
  %v4306 = vmax.f32 %v4084, 0.0
  %v4307 = vmax.f32 %v4087, 0.0
  %v4308 = vmax.f32 %v4092, 0.0
  %v4309 = vmax.f32 %v4095, 0.0
  %v4310 = vmax.f32 %v4100, 0.0
  %v4311 = vmax.f32 %v4103, 0.0
  %v4312 = vmax.f32 %v4108, 0.0
  %v4313 = vmax.f32 %v4111, 0.0
  %v4314 = vmax.f32 %v4116, 0.0
  %v4315 = vmax.f32 %v4119, 0.0
  %v4316 = vmax.f32 %v4124, 0.0
  %v4317 = vmax.f32 %v4127, 0.0
  %v4318 = vmax.f32 %v4132, 0.0
  %v4319 = vmax.f32 %v4135, 0.0
  %v4320 = vmax.f32 %v4140, 0.0
  %v4321 = vmax.f32 %v4143, 0.0
  %v4322 = vmax.f32 %v4148, 0.0
  %v4323 = vmax.f32 %v4151, 0.0
  %v4324 = vmax.f32 %v4156, 0.0
  %v4325 = vmax.f32 %v4159, 0.0
  %v4326 = vmax.f32 %v4164, 0.0
  %v4327 = vmax.f32 %v4167, 0.0
  %v4328 = vmax.f32 %v4172, 0.0
  %v4329 = vmax.f32 %v4175, 0.0
  %v4330 = vmax.f32 %v4180, 0.0
  %v4331 = vmax.f32 %v4183, 0.0
  %v4332 = vmax.f32 %v4188, 0.0
  %v4333 = vmax.f32 %v4191, 0.0
  %v4334 = vmax.f32 %v4196, 0.0
  %v4335 = vmax.f32 %v4199, 0.0
  %v4336 = vmax.f32 %v4204, 0.0
  %v4337 = vmax.f32 %v4207, 0.0
  %v4338 = vpack.c.bf16 %v4211, %v4210
  %v4339 = vpack.c.bf16 %v4213, %v4212
  %v4340 = vpack.c.bf16 %v4215, %v4214
  %v4341 = vpack.c.bf16 %v4217, %v4216
  %v4342 = vpack.c.bf16 %v4219, %v4218
  %v4343 = vpack.c.bf16 %v4221, %v4220
  %v4344 = vpack.c.bf16 %v4223, %v4222
  %v4345 = vpack.c.bf16 %v4225, %v4224
  %v4346 = vpack.c.bf16 %v4227, %v4226
  %v4347 = vpack.c.bf16 %v4229, %v4228
  %v4348 = vpack.c.bf16 %v4231, %v4230
  %v4349 = vpack.c.bf16 %v4233, %v4232
  %v4350 = vpack.c.bf16 %v4235, %v4234
  %v4351 = vpack.c.bf16 %v4237, %v4236
  %v4352 = vpack.c.bf16 %v4239, %v4238
  %v4353 = vpack.c.bf16 %v4241, %v4240
  %v4354 = vpack.c.bf16 %v4243, %v4242
  %v4355 = vpack.c.bf16 %v4245, %v4244
  %v4356 = vpack.c.bf16 %v4247, %v4246
  %v4357 = vpack.c.bf16 %v4249, %v4248
  %v4358 = vpack.c.bf16 %v4251, %v4250
  %v4359 = vpack.c.bf16 %v4253, %v4252
  %v4360 = vpack.c.bf16 %v4255, %v4254
  %v4361 = vpack.c.bf16 %v4257, %v4256
  %v4362 = vpack.c.bf16 %v4259, %v4258
  %v4363 = vpack.c.bf16 %v4261, %v4260
  %v4364 = vpack.c.bf16 %v4263, %v4262
  %v4365 = vpack.c.bf16 %v4265, %v4264
  %v4366 = vpack.c.bf16 %v4267, %v4266
  %v4367 = vpack.c.bf16 %v4269, %v4268
  %v4368 = vpack.c.bf16 %v4271, %v4270
  %v4369 = vpack.c.bf16 %v4273, %v4272
  %v4370 = vpack.c.bf16 %v4275, %v4274
  %v4371 = vpack.c.bf16 %v4277, %v4276
  %v4372 = vpack.c.bf16 %v4279, %v4278
  %v4373 = vpack.c.bf16 %v4281, %v4280
  %v4374 = vpack.c.bf16 %v4283, %v4282
  %v4375 = vpack.c.bf16 %v4285, %v4284
  %v4376 = vpack.c.bf16 %v4287, %v4286
  %v4377 = vpack.c.bf16 %v4289, %v4288
  %v4378 = vpack.c.bf16 %v4291, %v4290
  %v4379 = vpack.c.bf16 %v4293, %v4292
  %v4380 = vpack.c.bf16 %v4295, %v4294
  %v4381 = vpack.c.bf16 %v4297, %v4296
  %v4382 = vpack.c.bf16 %v4299, %v4298
  %v4383 = vpack.c.bf16 %v4301, %v4300
  %v4384 = vpack.c.bf16 %v4303, %v4302
  %v4385 = vpack.c.bf16 %v4305, %v4304
  %v4386 = vpack.c.bf16 %v4307, %v4306
  %v4387 = vpack.c.bf16 %v4309, %v4308
  %v4388 = vpack.c.bf16 %v4311, %v4310
  %v4389 = vpack.c.bf16 %v4313, %v4312
  %v4390 = vpack.c.bf16 %v4315, %v4314
  %v4391 = vpack.c.bf16 %v4317, %v4316
  %v4392 = vpack.c.bf16 %v4319, %v4318
  %v4393 = vpack.c.bf16 %v4321, %v4320
  %v4394 = vpack.c.bf16 %v4323, %v4322
  %v4395 = vpack.c.bf16 %v4325, %v4324
  %v4396 = vpack.c.bf16 %v4327, %v4326
  %v4397 = vpack.c.bf16 %v4329, %v4328
  %v4398 = vpack.c.bf16 %v4331, %v4330
  %v4399 = vpack.c.bf16 %v4333, %v4332
  %v4400 = vpack.c.bf16 %v4335, %v4334
  %v4401 = vpack.c.bf16 %v4337, %v4336
  %s4402 = scalar_lea.vmem %s3, 256
  %v4403 = vld [vmem:[%s4402] sm:$0xf]
  %v4404 = vld [vmem:[%s4402 + $0x4] sm:$0xf]
  %v4405 = vld [vmem:[%s4402 + $0x8] sm:$0xf]
  %v4406 = vld [vmem:[%s4402 + $0xc] sm:$0xf]
  %v4407 = vld [vmem:[%s4402 + $0x10] sm:$0xf]
  %v4408 = vld [vmem:[%s4402 + $0x14] sm:$0xf]
  %v4409 = vld [vmem:[%s4402 + $0x18] sm:$0xf]
  %v4410 = vld [vmem:[%s4402 + $0x1c] sm:$0xf]
  %v4411 = vld [vmem:[%s4402 + $0x20] sm:$0xf]
  %v4412 = vld [vmem:[%s4402 + $0x24] sm:$0xf]
  %v4413 = vld [vmem:[%s4402 + $0x28] sm:$0xf]
  %v4414 = vld [vmem:[%s4402 + $0x2c] sm:$0xf]
  %v4415 = vld [vmem:[%s4402 + $0x30] sm:$0xf]
  %v4416 = vld [vmem:[%s4402 + $0x34] sm:$0xf]
  %v4417 = vld [vmem:[%s4402 + $0x38] sm:$0xf]
  %v4418 = vld [vmem:[%s4402 + $0x3c] sm:$0xf]
  %s4419 = scalar_lea.vmem %s4, 4
  %v4420 = vld [vmem:[%s4419] sm:$0x1]
  %v4422 = vlaneseq
  %v4423 = vshrl.u32 %v4422, 7
  %v4424 = vsub.s32 0, %v4423
  %v4425 = vrot.slane %v4420, %v4424
  %v4443 = vunpack.c.l.b16 %v4403
  %v4444 = vunpack.c.l.b16 %v4404
  %v4445 = vunpack.c.l.b16 %v4405
  %v4446 = vunpack.c.l.b16 %v4406
  %v4447 = vunpack.c.l.b16 %v4407
  %v4448 = vunpack.c.l.b16 %v4408
  %v4449 = vunpack.c.l.b16 %v4409
  %v4450 = vunpack.c.l.b16 %v4410
  %v4451 = vunpack.c.l.b16 %v4411
  %v4452 = vunpack.c.l.b16 %v4412
  %v4453 = vunpack.c.l.b16 %v4413
  %v4454 = vunpack.c.l.b16 %v4414
  %v4455 = vunpack.c.l.b16 %v4415
  %v4456 = vunpack.c.l.b16 %v4416
  %v4457 = vunpack.c.l.b16 %v4417
  %v4458 = vunpack.c.l.b16 %v4418
  %v4459 = vpack.c.b16 %v4444, %v4443
  %v4460 = vpack.c.b16 %v4446, %v4445
  %v4461 = vpack.c.b16 %v4448, %v4447
  %v4462 = vpack.c.b16 %v4450, %v4449
  %v4463 = vpack.c.b16 %v4452, %v4451
  %v4464 = vpack.c.b16 %v4454, %v4453
  %v4465 = vpack.c.b16 %v4456, %v4455
  %v4466 = vpack.c.b16 %v4458, %v4457
  %4475 = vmatprep.subr.bf16.mxu0 0
  %4476 = vmatpush1.bf16.msra.mxu0 %v4459
  %4477 = vmatprep.subr.bf16.mxu0 0
  %4478 = vmatpush1.bf16.msra.mxu0 %v4460
  %4479 = vmatprep.subr.bf16.mxu0 0
  %4480 = vmatpush1.bf16.msra.mxu0 %v4461
  %4481 = vmatprep.subr.bf16.mxu0 0
  %4482 = vmatpush1.bf16.msra.mxu0 %v4462
  %4483 = vmatprep.subr.bf16.mxu0 0
  %4484 = vmatpush1.bf16.msra.mxu0 %v4463
  %4485 = vmatprep.subr.bf16.mxu0 0
  %4486 = vmatpush1.bf16.msra.mxu0 %v4464
  %4487 = vmatprep.subr.bf16.mxu0 0
  %4488 = vmatpush1.bf16.msra.mxu0 %v4465
  %4489 = vmatprep.subr.bf16.mxu0 0
  %4490 = vmatpush1.bf16.msra.mxu0 %v4466
  %4491 = vmatprep.subr.bf16.mxu0 0
  %4492 = vmatpush1.bf16.msra.mxu0 0
  %4493 = vmatprep.subr.bf16.mxu0 0
  %4494 = vmatpush1.bf16.msra.mxu0 0
  %4495 = vmatprep.subr.bf16.mxu0 0
  %4496 = vmatpush1.bf16.msra.mxu0 0
  %4497 = vmatprep.subr.bf16.mxu0 0
  %4498 = vmatpush1.bf16.msra.mxu0 0
  %4499 = vmatprep.subr.bf16.mxu0 0
  %4500 = vmatpush1.bf16.msra.mxu0 0
  %4501 = vmatprep.subr.bf16.mxu0 0
  %4502 = vmatpush1.bf16.msra.mxu0 0
  %4503 = vmatprep.subr.bf16.mxu0 0
  %4504 = vmatpush1.bf16.msra.mxu0 0
  %4505 = vmatprep.subr.bf16.mxu0 0
  %4506 = vmatpush1.bf16.msra.mxu0 0
  %4507 = vmatprep.mubr.bf16.mxu0 0
  %4508 = vmatmul.mubr.bf16.gmra.mrb[0].mxu0 %v4338
  %v4509 = vpop.f32.mrb[0].mxu0
  %v4510 = vadd.f32 %v4425, %v4509
  %v4511 = vpop.f32.mrb[0].mxu0
  %v4512 = vpop.f32.mrb[0].mxu0
  %v4513 = vadd.f32 %v4425, %v4512
  %v4514 = vpop.f32.mrb[0].mxu0
  %4515 = vmatprep.mubr.bf16.mxu0 0
  %4516 = vmatmul.mubr.bf16.gmra.mrb[0].mxu0 %v4339
  %v4517 = vpop.f32.mrb[0].mxu0
  %v4518 = vadd.f32 %v4425, %v4517
  %v4519 = vpop.f32.mrb[0].mxu0
  %v4520 = vpop.f32.mrb[0].mxu0
  %v4521 = vadd.f32 %v4425, %v4520
  %v4522 = vpop.f32.mrb[0].mxu0
  %4523 = vmatprep.mubr.bf16.mxu0 0
  %4524 = vmatmul.mubr.bf16.gmra.mrb[0].mxu0 %v4340
  %v4525 = vpop.f32.mrb[0].mxu0
  %v4526 = vadd.f32 %v4425, %v4525
  %v4527 = vpop.f32.mrb[0].mxu0
  %v4528 = vpop.f32.mrb[0].mxu0
  %v4529 = vadd.f32 %v4425, %v4528
  %v4530 = vpop.f32.mrb[0].mxu0
  %4531 = vmatprep.mubr.bf16.mxu0 0
  %4532 = vmatmul.mubr.bf16.gmra.mrb[0].mxu0 %v4341
  %v4533 = vpop.f32.mrb[0].mxu0
  %v4534 = vadd.f32 %v4425, %v4533
  %v4535 = vpop.f32.mrb[0].mxu0
  %v4536 = vpop.f32.mrb[0].mxu0
  %v4537 = vadd.f32 %v4425, %v4536
  %v4538 = vpop.f32.mrb[0].mxu0
  %4539 = vmatprep.mubr.bf16.mxu0 0
  %4540 = vmatmul.mubr.bf16.gmra.mrb[0].mxu0 %v4342
  %v4541 = vpop.f32.mrb[0].mxu0
  %v4542 = vadd.f32 %v4425, %v4541
  %v4543 = vpop.f32.mrb[0].mxu0
  %v4544 = vpop.f32.mrb[0].mxu0
  %v4545 = vadd.f32 %v4425, %v4544
  %v4546 = vpop.f32.mrb[0].mxu0
  %4547 = vmatprep.mubr.bf16.mxu0 0
  %4548 = vmatmul.mubr.bf16.gmra.mrb[0].mxu0 %v4343
  %v4549 = vpop.f32.mrb[0].mxu0
  %v4550 = vadd.f32 %v4425, %v4549
  %v4551 = vpop.f32.mrb[0].mxu0
  %v4552 = vpop.f32.mrb[0].mxu0
  %v4553 = vadd.f32 %v4425, %v4552
  %v4554 = vpop.f32.mrb[0].mxu0
  %4555 = vmatprep.mubr.bf16.mxu0 0
  %4556 = vmatmul.mubr.bf16.gmra.mrb[0].mxu0 %v4344
  %v4557 = vpop.f32.mrb[0].mxu0
  %v4558 = vadd.f32 %v4425, %v4557
  %v4559 = vpop.f32.mrb[0].mxu0
  %v4560 = vpop.f32.mrb[0].mxu0
  %v4561 = vadd.f32 %v4425, %v4560
  %v4562 = vpop.f32.mrb[0].mxu0
  %4563 = vmatprep.mubr.bf16.mxu0 0
  %4564 = vmatmul.mubr.bf16.gmra.mrb[0].mxu0 %v4345
  %v4565 = vpop.f32.mrb[0].mxu0
  %v4566 = vadd.f32 %v4425, %v4565
  %v4567 = vpop.f32.mrb[0].mxu0
  %v4568 = vpop.f32.mrb[0].mxu0
  %v4569 = vadd.f32 %v4425, %v4568
  %v4570 = vpop.f32.mrb[0].mxu0
  %4571 = vmatprep.mubr.bf16.mxu0 0
  %4572 = vmatmul.mubr.bf16.gmra.mrb[0].mxu0 %v4346
  %v4573 = vpop.f32.mrb[0].mxu0
  %v4574 = vadd.f32 %v4425, %v4573
  %v4575 = vpop.f32.mrb[0].mxu0
  %v4576 = vpop.f32.mrb[0].mxu0
  %v4577 = vadd.f32 %v4425, %v4576
  %v4578 = vpop.f32.mrb[0].mxu0
  %4579 = vmatprep.mubr.bf16.mxu0 0
  %4580 = vmatmul.mubr.bf16.gmra.mrb[0].mxu0 %v4347
  %v4581 = vpop.f32.mrb[0].mxu0
  %v4582 = vadd.f32 %v4425, %v4581
  %v4583 = vpop.f32.mrb[0].mxu0
  %v4584 = vpop.f32.mrb[0].mxu0
  %v4585 = vadd.f32 %v4425, %v4584
  %v4586 = vpop.f32.mrb[0].mxu0
  %4587 = vmatprep.mubr.bf16.mxu0 0
  %4588 = vmatmul.mubr.bf16.gmra.mrb[0].mxu0 %v4348
  %v4589 = vpop.f32.mrb[0].mxu0
  %v4590 = vadd.f32 %v4425, %v4589
  %v4591 = vpop.f32.mrb[0].mxu0
  %v4592 = vpop.f32.mrb[0].mxu0
  %v4593 = vadd.f32 %v4425, %v4592
  %v4594 = vpop.f32.mrb[0].mxu0
  %4595 = vmatprep.mubr.bf16.mxu0 0
  %4596 = vmatmul.mubr.bf16.gmra.mrb[0].mxu0 %v4349
  %v4597 = vpop.f32.mrb[0].mxu0
  %v4598 = vadd.f32 %v4425, %v4597
  %v4599 = vpop.f32.mrb[0].mxu0
  %v4600 = vpop.f32.mrb[0].mxu0
  %v4601 = vadd.f32 %v4425, %v4600
  %v4602 = vpop.f32.mrb[0].mxu0
  %4603 = vmatprep.mubr.bf16.mxu0 0
  %4604 = vmatmul.mubr.bf16.gmra.mrb[0].mxu0 %v4350
  %v4605 = vpop.f32.mrb[0].mxu0
  %v4606 = vadd.f32 %v4425, %v4605
  %v4607 = vpop.f32.mrb[0].mxu0
  %v4608 = vpop.f32.mrb[0].mxu0
  %v4609 = vadd.f32 %v4425, %v4608
  %v4610 = vpop.f32.mrb[0].mxu0
  %4611 = vmatprep.mubr.bf16.mxu0 0
  %4612 = vmatmul.mubr.bf16.gmra.mrb[0].mxu0 %v4351
  %v4613 = vpop.f32.mrb[0].mxu0
  %v4614 = vadd.f32 %v4425, %v4613
  %v4615 = vpop.f32.mrb[0].mxu0
  %v4616 = vpop.f32.mrb[0].mxu0
  %v4617 = vadd.f32 %v4425, %v4616
  %v4618 = vpop.f32.mrb[0].mxu0
  %4619 = vmatprep.mubr.bf16.mxu0 0
  %4620 = vmatmul.mubr.bf16.gmra.mrb[0].mxu0 %v4352
  %v4621 = vpop.f32.mrb[0].mxu0
  %v4622 = vadd.f32 %v4425, %v4621
  %v4623 = vpop.f32.mrb[0].mxu0
  %v4624 = vpop.f32.mrb[0].mxu0
  %v4625 = vadd.f32 %v4425, %v4624
  %v4626 = vpop.f32.mrb[0].mxu0
  %4627 = vmatprep.mubr.bf16.mxu0 0
  %4628 = vmatmul.mubr.bf16.gmra.mrb[0].mxu0 %v4353
  %v4629 = vpop.f32.mrb[0].mxu0
  %v4630 = vadd.f32 %v4425, %v4629
  %v4631 = vpop.f32.mrb[0].mxu0
  %v4632 = vpop.f32.mrb[0].mxu0
  %v4633 = vadd.f32 %v4425, %v4632
  %v4634 = vpop.f32.mrb[0].mxu0
  %4635 = vmatprep.mubr.bf16.mxu0 0
  %4636 = vmatmul.mubr.bf16.gmra.mrb[0].mxu0 %v4354
  %v4637 = vpop.f32.mrb[0].mxu0
  %v4638 = vadd.f32 %v4425, %v4637
  %v4639 = vpop.f32.mrb[0].mxu0
  %v4640 = vpop.f32.mrb[0].mxu0
  %v4641 = vadd.f32 %v4425, %v4640
  %v4642 = vpop.f32.mrb[0].mxu0
  %4643 = vmatprep.mubr.bf16.mxu0 0
  %4644 = vmatmul.mubr.bf16.gmra.mrb[0].mxu0 %v4355
  %v4645 = vpop.f32.mrb[0].mxu0
  %v4646 = vadd.f32 %v4425, %v4645
  %v4647 = vpop.f32.mrb[0].mxu0
  %v4648 = vpop.f32.mrb[0].mxu0
  %v4649 = vadd.f32 %v4425, %v4648
  %v4650 = vpop.f32.mrb[0].mxu0
  %4651 = vmatprep.mubr.bf16.mxu0 0
  %4652 = vmatmul.mubr.bf16.gmra.mrb[0].mxu0 %v4356
  %v4653 = vpop.f32.mrb[0].mxu0
  %v4654 = vadd.f32 %v4425, %v4653
  %v4655 = vpop.f32.mrb[0].mxu0
  %v4656 = vpop.f32.mrb[0].mxu0
  %v4657 = vadd.f32 %v4425, %v4656
  %v4658 = vpop.f32.mrb[0].mxu0
  %4659 = vmatprep.mubr.bf16.mxu0 0
  %4660 = vmatmul.mubr.bf16.gmra.mrb[0].mxu0 %v4357
  %v4661 = vpop.f32.mrb[0].mxu0
  %v4662 = vadd.f32 %v4425, %v4661
  %v4663 = vpop.f32.mrb[0].mxu0
  %v4664 = vpop.f32.mrb[0].mxu0
  %v4665 = vadd.f32 %v4425, %v4664
  %v4666 = vpop.f32.mrb[0].mxu0
  %4667 = vmatprep.mubr.bf16.mxu0 0
  %4668 = vmatmul.mubr.bf16.gmra.mrb[0].mxu0 %v4358
  %v4669 = vpop.f32.mrb[0].mxu0
  %v4670 = vadd.f32 %v4425, %v4669
  %v4671 = vpop.f32.mrb[0].mxu0
  %v4672 = vpop.f32.mrb[0].mxu0
  %v4673 = vadd.f32 %v4425, %v4672
  %v4674 = vpop.f32.mrb[0].mxu0
  %4675 = vmatprep.mubr.bf16.mxu0 0
  %4676 = vmatmul.mubr.bf16.gmra.mrb[0].mxu0 %v4359
  %v4677 = vpop.f32.mrb[0].mxu0
  %v4678 = vadd.f32 %v4425, %v4677
  %v4679 = vpop.f32.mrb[0].mxu0
  %v4680 = vpop.f32.mrb[0].mxu0
  %v4681 = vadd.f32 %v4425, %v4680
  %v4682 = vpop.f32.mrb[0].mxu0
  %4683 = vmatprep.mubr.bf16.mxu0 0
  %4684 = vmatmul.mubr.bf16.gmra.mrb[0].mxu0 %v4360
  %v4685 = vpop.f32.mrb[0].mxu0
  %v4686 = vadd.f32 %v4425, %v4685
  %v4687 = vpop.f32.mrb[0].mxu0
  %v4688 = vpop.f32.mrb[0].mxu0
  %v4689 = vadd.f32 %v4425, %v4688
  %v4690 = vpop.f32.mrb[0].mxu0
  %4691 = vmatprep.mubr.bf16.mxu0 0
  %4692 = vmatmul.mubr.bf16.gmra.mrb[0].mxu0 %v4361
  %v4693 = vpop.f32.mrb[0].mxu0
  %v4694 = vadd.f32 %v4425, %v4693
  %v4695 = vpop.f32.mrb[0].mxu0
  %v4696 = vpop.f32.mrb[0].mxu0
  %v4697 = vadd.f32 %v4425, %v4696
  %v4698 = vpop.f32.mrb[0].mxu0
  %4699 = vmatprep.mubr.bf16.mxu0 0
  %4700 = vmatmul.mubr.bf16.gmra.mrb[0].mxu0 %v4362
  %v4701 = vpop.f32.mrb[0].mxu0
  %v4702 = vadd.f32 %v4425, %v4701
  %v4703 = vpop.f32.mrb[0].mxu0
  %v4704 = vpop.f32.mrb[0].mxu0
  %v4705 = vadd.f32 %v4425, %v4704
  %v4706 = vpop.f32.mrb[0].mxu0
  %4707 = vmatprep.mubr.bf16.mxu0 0
  %4708 = vmatmul.mubr.bf16.gmra.mrb[0].mxu0 %v4363
  %v4709 = vpop.f32.mrb[0].mxu0
  %v4710 = vadd.f32 %v4425, %v4709
  %v4711 = vpop.f32.mrb[0].mxu0
  %v4712 = vpop.f32.mrb[0].mxu0
  %v4713 = vadd.f32 %v4425, %v4712
  %v4714 = vpop.f32.mrb[0].mxu0
  %4715 = vmatprep.mubr.bf16.mxu0 0
  %4716 = vmatmul.mubr.bf16.gmra.mrb[0].mxu0 %v4364
  %v4717 = vpop.f32.mrb[0].mxu0
  %v4718 = vadd.f32 %v4425, %v4717
  %v4719 = vpop.f32.mrb[0].mxu0
  %v4720 = vpop.f32.mrb[0].mxu0
  %v4721 = vadd.f32 %v4425, %v4720
  %v4722 = vpop.f32.mrb[0].mxu0
  %4723 = vmatprep.mubr.bf16.mxu0 0
  %4724 = vmatmul.mubr.bf16.gmra.mrb[0].mxu0 %v4365
  %v4725 = vpop.f32.mrb[0].mxu0
  %v4726 = vadd.f32 %v4425, %v4725
  %v4727 = vpop.f32.mrb[0].mxu0
  %v4728 = vpop.f32.mrb[0].mxu0
  %v4729 = vadd.f32 %v4425, %v4728
  %v4730 = vpop.f32.mrb[0].mxu0
  %4731 = vmatprep.mubr.bf16.mxu0 0
  %4732 = vmatmul.mubr.bf16.gmra.mrb[0].mxu0 %v4366
  %v4733 = vpop.f32.mrb[0].mxu0
  %v4734 = vadd.f32 %v4425, %v4733
  %v4735 = vpop.f32.mrb[0].mxu0
  %v4736 = vpop.f32.mrb[0].mxu0
  %v4737 = vadd.f32 %v4425, %v4736
  %v4738 = vpop.f32.mrb[0].mxu0
  %4739 = vmatprep.mubr.bf16.mxu0 0
  %4740 = vmatmul.mubr.bf16.gmra.mrb[0].mxu0 %v4367
  %v4741 = vpop.f32.mrb[0].mxu0
  %v4742 = vadd.f32 %v4425, %v4741
  %v4743 = vpop.f32.mrb[0].mxu0
  %v4744 = vpop.f32.mrb[0].mxu0
  %v4745 = vadd.f32 %v4425, %v4744
  %v4746 = vpop.f32.mrb[0].mxu0
  %4747 = vmatprep.mubr.bf16.mxu0 0
  %4748 = vmatmul.mubr.bf16.gmra.mrb[0].mxu0 %v4368
  %v4749 = vpop.f32.mrb[0].mxu0
  %v4750 = vadd.f32 %v4425, %v4749
  %v4751 = vpop.f32.mrb[0].mxu0
  %v4752 = vpop.f32.mrb[0].mxu0
  %v4753 = vadd.f32 %v4425, %v4752
  %v4754 = vpop.f32.mrb[0].mxu0
  %4755 = vmatprep.mubr.bf16.mxu0 0
  %4756 = vmatmul.mubr.bf16.gmra.mrb[0].mxu0 %v4369
  %v4757 = vpop.f32.mrb[0].mxu0
  %v4758 = vadd.f32 %v4425, %v4757
  %v4759 = vpop.f32.mrb[0].mxu0
  %v4760 = vpop.f32.mrb[0].mxu0
  %v4761 = vadd.f32 %v4425, %v4760
  %v4762 = vpop.f32.mrb[0].mxu0
  %4763 = vmatprep.mubr.bf16.mxu0 0
  %4764 = vmatmul.mubr.bf16.gmra.mrb[0].mxu0 %v4370
  %v4765 = vpop.f32.mrb[0].mxu0
  %v4766 = vadd.f32 %v4425, %v4765
  %v4767 = vpop.f32.mrb[0].mxu0
  %v4768 = vpop.f32.mrb[0].mxu0
  %v4769 = vadd.f32 %v4425, %v4768
  %v4770 = vpop.f32.mrb[0].mxu0
  %4771 = vmatprep.mubr.bf16.mxu0 0
  %4772 = vmatmul.mubr.bf16.gmra.mrb[0].mxu0 %v4371
  %v4773 = vpop.f32.mrb[0].mxu0
  %v4774 = vadd.f32 %v4425, %v4773
  %v4775 = vpop.f32.mrb[0].mxu0
  %v4776 = vpop.f32.mrb[0].mxu0
  %v4777 = vadd.f32 %v4425, %v4776
  %v4778 = vpop.f32.mrb[0].mxu0
  %4779 = vmatprep.mubr.bf16.mxu0 0
  %4780 = vmatmul.mubr.bf16.gmra.mrb[0].mxu0 %v4372
  %v4781 = vpop.f32.mrb[0].mxu0
  %v4782 = vadd.f32 %v4425, %v4781
  %v4783 = vpop.f32.mrb[0].mxu0
  %v4784 = vpop.f32.mrb[0].mxu0
  %v4785 = vadd.f32 %v4425, %v4784
  %v4786 = vpop.f32.mrb[0].mxu0
  %4787 = vmatprep.mubr.bf16.mxu0 0
  %4788 = vmatmul.mubr.bf16.gmra.mrb[0].mxu0 %v4373
  %v4789 = vpop.f32.mrb[0].mxu0
  %v4790 = vadd.f32 %v4425, %v4789
  %v4791 = vpop.f32.mrb[0].mxu0
  %v4792 = vpop.f32.mrb[0].mxu0
  %v4793 = vadd.f32 %v4425, %v4792
  %v4794 = vpop.f32.mrb[0].mxu0
  %4795 = vmatprep.mubr.bf16.mxu0 0
  %4796 = vmatmul.mubr.bf16.gmra.mrb[0].mxu0 %v4374
  %v4797 = vpop.f32.mrb[0].mxu0
  %v4798 = vadd.f32 %v4425, %v4797
  %v4799 = vpop.f32.mrb[0].mxu0
  %v4800 = vpop.f32.mrb[0].mxu0
  %v4801 = vadd.f32 %v4425, %v4800
  %v4802 = vpop.f32.mrb[0].mxu0
  %4803 = vmatprep.mubr.bf16.mxu0 0
  %4804 = vmatmul.mubr.bf16.gmra.mrb[0].mxu0 %v4375
  %v4805 = vpop.f32.mrb[0].mxu0
  %v4806 = vadd.f32 %v4425, %v4805
  %v4807 = vpop.f32.mrb[0].mxu0
  %v4808 = vpop.f32.mrb[0].mxu0
  %v4809 = vadd.f32 %v4425, %v4808
  %v4810 = vpop.f32.mrb[0].mxu0
  %4811 = vmatprep.mubr.bf16.mxu0 0
  %4812 = vmatmul.mubr.bf16.gmra.mrb[0].mxu0 %v4376
  %v4813 = vpop.f32.mrb[0].mxu0
  %v4814 = vadd.f32 %v4425, %v4813
  %v4815 = vpop.f32.mrb[0].mxu0
  %v4816 = vpop.f32.mrb[0].mxu0
  %v4817 = vadd.f32 %v4425, %v4816
  %v4818 = vpop.f32.mrb[0].mxu0
  %4819 = vmatprep.mubr.bf16.mxu0 0
  %4820 = vmatmul.mubr.bf16.gmra.mrb[0].mxu0 %v4377
  %v4821 = vpop.f32.mrb[0].mxu0
  %v4822 = vadd.f32 %v4425, %v4821
  %v4823 = vpop.f32.mrb[0].mxu0
  %v4824 = vpop.f32.mrb[0].mxu0
  %v4825 = vadd.f32 %v4425, %v4824
  %v4826 = vpop.f32.mrb[0].mxu0
  %4827 = vmatprep.mubr.bf16.mxu0 0
  %4828 = vmatmul.mubr.bf16.gmra.mrb[0].mxu0 %v4378
  %v4829 = vpop.f32.mrb[0].mxu0
  %v4830 = vadd.f32 %v4425, %v4829
  %v4831 = vpop.f32.mrb[0].mxu0
  %v4832 = vpop.f32.mrb[0].mxu0
  %v4833 = vadd.f32 %v4425, %v4832
  %v4834 = vpop.f32.mrb[0].mxu0
  %4835 = vmatprep.mubr.bf16.mxu0 0
  %4836 = vmatmul.mubr.bf16.gmra.mrb[0].mxu0 %v4379
  %v4837 = vpop.f32.mrb[0].mxu0
  %v4838 = vadd.f32 %v4425, %v4837
  %v4839 = vpop.f32.mrb[0].mxu0
  %v4840 = vpop.f32.mrb[0].mxu0
  %v4841 = vadd.f32 %v4425, %v4840
  %v4842 = vpop.f32.mrb[0].mxu0
  %4843 = vmatprep.mubr.bf16.mxu0 0
  %4844 = vmatmul.mubr.bf16.gmra.mrb[0].mxu0 %v4380
  %v4845 = vpop.f32.mrb[0].mxu0
  %v4846 = vadd.f32 %v4425, %v4845
  %v4847 = vpop.f32.mrb[0].mxu0
  %v4848 = vpop.f32.mrb[0].mxu0
  %v4849 = vadd.f32 %v4425, %v4848
  %v4850 = vpop.f32.mrb[0].mxu0
  %4851 = vmatprep.mubr.bf16.mxu0 0
  %4852 = vmatmul.mubr.bf16.gmra.mrb[0].mxu0 %v4381
  %v4853 = vpop.f32.mrb[0].mxu0
  %v4854 = vadd.f32 %v4425, %v4853
  %v4855 = vpop.f32.mrb[0].mxu0
  %v4856 = vpop.f32.mrb[0].mxu0
  %v4857 = vadd.f32 %v4425, %v4856
  %v4858 = vpop.f32.mrb[0].mxu0
  %4859 = vmatprep.mubr.bf16.mxu0 0
  %4860 = vmatmul.mubr.bf16.gmra.mrb[0].mxu0 %v4382
  %v4861 = vpop.f32.mrb[0].mxu0
  %v4862 = vadd.f32 %v4425, %v4861
  %v4863 = vpop.f32.mrb[0].mxu0
  %v4864 = vpop.f32.mrb[0].mxu0
  %v4865 = vadd.f32 %v4425, %v4864
  %v4866 = vpop.f32.mrb[0].mxu0
  %4867 = vmatprep.mubr.bf16.mxu0 0
  %4868 = vmatmul.mubr.bf16.gmra.mrb[0].mxu0 %v4383
  %v4869 = vpop.f32.mrb[0].mxu0
  %v4870 = vadd.f32 %v4425, %v4869
  %v4871 = vpop.f32.mrb[0].mxu0
  %v4872 = vpop.f32.mrb[0].mxu0
  %v4873 = vadd.f32 %v4425, %v4872
  %v4874 = vpop.f32.mrb[0].mxu0
  %4875 = vmatprep.mubr.bf16.mxu0 0
  %4876 = vmatmul.mubr.bf16.gmra.mrb[0].mxu0 %v4384
  %v4877 = vpop.f32.mrb[0].mxu0
  %v4878 = vadd.f32 %v4425, %v4877
  %v4879 = vpop.f32.mrb[0].mxu0
  %v4880 = vpop.f32.mrb[0].mxu0
  %v4881 = vadd.f32 %v4425, %v4880
  %v4882 = vpop.f32.mrb[0].mxu0
  %4883 = vmatprep.mubr.bf16.mxu0 0
  %4884 = vmatmul.mubr.bf16.gmra.mrb[0].mxu0 %v4385
  %v4885 = vpop.f32.mrb[0].mxu0
  %v4886 = vadd.f32 %v4425, %v4885
  %v4887 = vpop.f32.mrb[0].mxu0
  %v4888 = vpop.f32.mrb[0].mxu0
  %v4889 = vadd.f32 %v4425, %v4888
  %v4890 = vpop.f32.mrb[0].mxu0
  %4891 = vmatprep.mubr.bf16.mxu0 0
  %4892 = vmatmul.mubr.bf16.gmra.mrb[0].mxu0 %v4386
  %v4893 = vpop.f32.mrb[0].mxu0
  %v4894 = vadd.f32 %v4425, %v4893
  %v4895 = vpop.f32.mrb[0].mxu0
  %v4896 = vpop.f32.mrb[0].mxu0
  %v4897 = vadd.f32 %v4425, %v4896
  %v4898 = vpop.f32.mrb[0].mxu0
  %4899 = vmatprep.mubr.bf16.mxu0 0
  %4900 = vmatmul.mubr.bf16.gmra.mrb[0].mxu0 %v4387
  %v4901 = vpop.f32.mrb[0].mxu0
  %v4902 = vadd.f32 %v4425, %v4901
  %v4903 = vpop.f32.mrb[0].mxu0
  %v4904 = vpop.f32.mrb[0].mxu0
  %v4905 = vadd.f32 %v4425, %v4904
  %v4906 = vpop.f32.mrb[0].mxu0
  %4907 = vmatprep.mubr.bf16.mxu0 0
  %4908 = vmatmul.mubr.bf16.gmra.mrb[0].mxu0 %v4388
  %v4909 = vpop.f32.mrb[0].mxu0
  %v4910 = vadd.f32 %v4425, %v4909
  %v4911 = vpop.f32.mrb[0].mxu0
  %v4912 = vpop.f32.mrb[0].mxu0
  %v4913 = vadd.f32 %v4425, %v4912
  %v4914 = vpop.f32.mrb[0].mxu0
  %4915 = vmatprep.mubr.bf16.mxu0 0
  %4916 = vmatmul.mubr.bf16.gmra.mrb[0].mxu0 %v4389
  %v4917 = vpop.f32.mrb[0].mxu0
  %v4918 = vadd.f32 %v4425, %v4917
  %v4919 = vpop.f32.mrb[0].mxu0
  %v4920 = vpop.f32.mrb[0].mxu0
  %v4921 = vadd.f32 %v4425, %v4920
  %v4922 = vpop.f32.mrb[0].mxu0
  %4923 = vmatprep.mubr.bf16.mxu0 0
  %4924 = vmatmul.mubr.bf16.gmra.mrb[0].mxu0 %v4390
  %v4925 = vpop.f32.mrb[0].mxu0
  %v4926 = vadd.f32 %v4425, %v4925
  %v4927 = vpop.f32.mrb[0].mxu0
  %v4928 = vpop.f32.mrb[0].mxu0
  %v4929 = vadd.f32 %v4425, %v4928
  %v4930 = vpop.f32.mrb[0].mxu0
  %4931 = vmatprep.mubr.bf16.mxu0 0
  %4932 = vmatmul.mubr.bf16.gmra.mrb[0].mxu0 %v4391
  %v4933 = vpop.f32.mrb[0].mxu0
  %v4934 = vadd.f32 %v4425, %v4933
  %v4935 = vpop.f32.mrb[0].mxu0
  %v4936 = vpop.f32.mrb[0].mxu0
  %v4937 = vadd.f32 %v4425, %v4936
  %v4938 = vpop.f32.mrb[0].mxu0
  %4939 = vmatprep.mubr.bf16.mxu0 0
  %4940 = vmatmul.mubr.bf16.gmra.mrb[0].mxu0 %v4392
  %v4941 = vpop.f32.mrb[0].mxu0
  %v4942 = vadd.f32 %v4425, %v4941
  %v4943 = vpop.f32.mrb[0].mxu0
  %v4944 = vpop.f32.mrb[0].mxu0
  %v4945 = vadd.f32 %v4425, %v4944
  %v4946 = vpop.f32.mrb[0].mxu0
  %4947 = vmatprep.mubr.bf16.mxu0 0
  %4948 = vmatmul.mubr.bf16.gmra.mrb[0].mxu0 %v4393
  %v4949 = vpop.f32.mrb[0].mxu0
  %v4950 = vadd.f32 %v4425, %v4949
  %v4951 = vpop.f32.mrb[0].mxu0
  %v4952 = vpop.f32.mrb[0].mxu0
  %v4953 = vadd.f32 %v4425, %v4952
  %v4954 = vpop.f32.mrb[0].mxu0
  %4955 = vmatprep.mubr.bf16.mxu0 0
  %4956 = vmatmul.mubr.bf16.gmra.mrb[0].mxu0 %v4394
  %v4957 = vpop.f32.mrb[0].mxu0
  %v4958 = vadd.f32 %v4425, %v4957
  %v4959 = vpop.f32.mrb[0].mxu0
  %v4960 = vpop.f32.mrb[0].mxu0
  %v4961 = vadd.f32 %v4425, %v4960
  %v4962 = vpop.f32.mrb[0].mxu0
  %4963 = vmatprep.mubr.bf16.mxu0 0
  %4964 = vmatmul.mubr.bf16.gmra.mrb[0].mxu0 %v4395
  %v4965 = vpop.f32.mrb[0].mxu0
  %v4966 = vadd.f32 %v4425, %v4965
  %v4967 = vpop.f32.mrb[0].mxu0
  %v4968 = vpop.f32.mrb[0].mxu0
  %v4969 = vadd.f32 %v4425, %v4968
  %v4970 = vpop.f32.mrb[0].mxu0
  %4971 = vmatprep.mubr.bf16.mxu0 0
  %4972 = vmatmul.mubr.bf16.gmra.mrb[0].mxu0 %v4396
  %v4973 = vpop.f32.mrb[0].mxu0
  %v4974 = vadd.f32 %v4425, %v4973
  %v4975 = vpop.f32.mrb[0].mxu0
  %v4976 = vpop.f32.mrb[0].mxu0
  %v4977 = vadd.f32 %v4425, %v4976
  %v4978 = vpop.f32.mrb[0].mxu0
  %4979 = vmatprep.mubr.bf16.mxu0 0
  %4980 = vmatmul.mubr.bf16.gmra.mrb[0].mxu0 %v4397
  %v4981 = vpop.f32.mrb[0].mxu0
  %v4982 = vadd.f32 %v4425, %v4981
  %v4983 = vpop.f32.mrb[0].mxu0
  %v4984 = vpop.f32.mrb[0].mxu0
  %v4985 = vadd.f32 %v4425, %v4984
  %v4986 = vpop.f32.mrb[0].mxu0
  %4987 = vmatprep.mubr.bf16.mxu0 0
  %4988 = vmatmul.mubr.bf16.gmra.mrb[0].mxu0 %v4398
  %v4989 = vpop.f32.mrb[0].mxu0
  %v4990 = vadd.f32 %v4425, %v4989
  %v4991 = vpop.f32.mrb[0].mxu0
  %v4992 = vpop.f32.mrb[0].mxu0
  %v4993 = vadd.f32 %v4425, %v4992
  %v4994 = vpop.f32.mrb[0].mxu0
  %4995 = vmatprep.mubr.bf16.mxu0 0
  %4996 = vmatmul.mubr.bf16.gmra.mrb[0].mxu0 %v4399
  %v4997 = vpop.f32.mrb[0].mxu0
  %v4998 = vadd.f32 %v4425, %v4997
  %v4999 = vpop.f32.mrb[0].mxu0
  %v5000 = vpop.f32.mrb[0].mxu0
  %v5001 = vadd.f32 %v4425, %v5000
  %v5002 = vpop.f32.mrb[0].mxu0
  %5003 = vmatprep.mubr.bf16.mxu0 0
  %5004 = vmatmul.mubr.bf16.gmra.mrb[0].mxu0 %v4400
  %v5005 = vpop.f32.mrb[0].mxu0
  %v5006 = vadd.f32 %v4425, %v5005
  %v5007 = vpop.f32.mrb[0].mxu0
  %v5008 = vpop.f32.mrb[0].mxu0
  %v5009 = vadd.f32 %v4425, %v5008
  %v5010 = vpop.f32.mrb[0].mxu0
  %5011 = vmatprep.mubr.bf16.mxu0 0
  %5012 = vmatmul.mubr.bf16.gmra.mrb[0].mxu0 %v4401
  %v5013 = vpop.f32.mrb[0].mxu0
  %v5014 = vadd.f32 %v4425, %v5013
  %v5015 = vpop.f32.mrb[0].mxu0
  %v5016 = vpop.f32.mrb[0].mxu0
  %v5017 = vadd.f32 %v4425, %v5016
  %v5018 = vpop.f32.mrb[0].mxu0
  %5019 = vdwg.mxu0
  %v5020 = vmax.f32 %v4510, 0.0
  %v5021 = vmax.f32 %v4513, 0.0
  %v5022 = vmax.f32 %v4518, 0.0
  %v5023 = vmax.f32 %v4521, 0.0
  %v5024 = vmax.f32 %v4526, 0.0
  %v5025 = vmax.f32 %v4529, 0.0
  %v5026 = vmax.f32 %v4534, 0.0
  %v5027 = vmax.f32 %v4537, 0.0
  %v5028 = vmax.f32 %v4542, 0.0
  %v5029 = vmax.f32 %v4545, 0.0
  %v5030 = vmax.f32 %v4550, 0.0
  %v5031 = vmax.f32 %v4553, 0.0
  %v5032 = vmax.f32 %v4558, 0.0
  %v5033 = vmax.f32 %v4561, 0.0
  %v5034 = vmax.f32 %v4566, 0.0
  %v5035 = vmax.f32 %v4569, 0.0
  %v5036 = vmax.f32 %v4574, 0.0
  %v5037 = vmax.f32 %v4577, 0.0
  %v5038 = vmax.f32 %v4582, 0.0
  %v5039 = vmax.f32 %v4585, 0.0
  %v5040 = vmax.f32 %v4590, 0.0
  %v5041 = vmax.f32 %v4593, 0.0
  %v5042 = vmax.f32 %v4598, 0.0
  %v5043 = vmax.f32 %v4601, 0.0
  %v5044 = vmax.f32 %v4606, 0.0
  %v5045 = vmax.f32 %v4609, 0.0
  %v5046 = vmax.f32 %v4614, 0.0
  %v5047 = vmax.f32 %v4617, 0.0
  %v5048 = vmax.f32 %v4622, 0.0
  %v5049 = vmax.f32 %v4625, 0.0
  %v5050 = vmax.f32 %v4630, 0.0
  %v5051 = vmax.f32 %v4633, 0.0
  %v5052 = vmax.f32 %v4638, 0.0
  %v5053 = vmax.f32 %v4641, 0.0
  %v5054 = vmax.f32 %v4646, 0.0
  %v5055 = vmax.f32 %v4649, 0.0
  %v5056 = vmax.f32 %v4654, 0.0
  %v5057 = vmax.f32 %v4657, 0.0
  %v5058 = vmax.f32 %v4662, 0.0
  %v5059 = vmax.f32 %v4665, 0.0
  %v5060 = vmax.f32 %v4670, 0.0
  %v5061 = vmax.f32 %v4673, 0.0
  %v5062 = vmax.f32 %v4678, 0.0
  %v5063 = vmax.f32 %v4681, 0.0
  %v5064 = vmax.f32 %v4686, 0.0
  %v5065 = vmax.f32 %v4689, 0.0
  %v5066 = vmax.f32 %v4694, 0.0
  %v5067 = vmax.f32 %v4697, 0.0
  %v5068 = vmax.f32 %v4702, 0.0
  %v5069 = vmax.f32 %v4705, 0.0
  %v5070 = vmax.f32 %v4710, 0.0
  %v5071 = vmax.f32 %v4713, 0.0
  %v5072 = vmax.f32 %v4718, 0.0
  %v5073 = vmax.f32 %v4721, 0.0
  %v5074 = vmax.f32 %v4726, 0.0
  %v5075 = vmax.f32 %v4729, 0.0
  %v5076 = vmax.f32 %v4734, 0.0
  %v5077 = vmax.f32 %v4737, 0.0
  %v5078 = vmax.f32 %v4742, 0.0
  %v5079 = vmax.f32 %v4745, 0.0
  %v5080 = vmax.f32 %v4750, 0.0
  %v5081 = vmax.f32 %v4753, 0.0
  %v5082 = vmax.f32 %v4758, 0.0
  %v5083 = vmax.f32 %v4761, 0.0
  %v5084 = vmax.f32 %v4766, 0.0
  %v5085 = vmax.f32 %v4769, 0.0
  %v5086 = vmax.f32 %v4774, 0.0
  %v5087 = vmax.f32 %v4777, 0.0
  %v5088 = vmax.f32 %v4782, 0.0
  %v5089 = vmax.f32 %v4785, 0.0
  %v5090 = vmax.f32 %v4790, 0.0
  %v5091 = vmax.f32 %v4793, 0.0
  %v5092 = vmax.f32 %v4798, 0.0
  %v5093 = vmax.f32 %v4801, 0.0
  %v5094 = vmax.f32 %v4806, 0.0
  %v5095 = vmax.f32 %v4809, 0.0
  %v5096 = vmax.f32 %v4814, 0.0
  %v5097 = vmax.f32 %v4817, 0.0
  %v5098 = vmax.f32 %v4822, 0.0
  %v5099 = vmax.f32 %v4825, 0.0
  %v5100 = vmax.f32 %v4830, 0.0
  %v5101 = vmax.f32 %v4833, 0.0
  %v5102 = vmax.f32 %v4838, 0.0
  %v5103 = vmax.f32 %v4841, 0.0
  %v5104 = vmax.f32 %v4846, 0.0
  %v5105 = vmax.f32 %v4849, 0.0
  %v5106 = vmax.f32 %v4854, 0.0
  %v5107 = vmax.f32 %v4857, 0.0
  %v5108 = vmax.f32 %v4862, 0.0
  %v5109 = vmax.f32 %v4865, 0.0
  %v5110 = vmax.f32 %v4870, 0.0
  %v5111 = vmax.f32 %v4873, 0.0
  %v5112 = vmax.f32 %v4878, 0.0
  %v5113 = vmax.f32 %v4881, 0.0
  %v5114 = vmax.f32 %v4886, 0.0
  %v5115 = vmax.f32 %v4889, 0.0
  %v5116 = vmax.f32 %v4894, 0.0
  %v5117 = vmax.f32 %v4897, 0.0
  %v5118 = vmax.f32 %v4902, 0.0
  %v5119 = vmax.f32 %v4905, 0.0
  %v5120 = vmax.f32 %v4910, 0.0
  %v5121 = vmax.f32 %v4913, 0.0
  %v5122 = vmax.f32 %v4918, 0.0
  %v5123 = vmax.f32 %v4921, 0.0
  %v5124 = vmax.f32 %v4926, 0.0
  %v5125 = vmax.f32 %v4929, 0.0
  %v5126 = vmax.f32 %v4934, 0.0
  %v5127 = vmax.f32 %v4937, 0.0
  %v5128 = vmax.f32 %v4942, 0.0
  %v5129 = vmax.f32 %v4945, 0.0
  %v5130 = vmax.f32 %v4950, 0.0
  %v5131 = vmax.f32 %v4953, 0.0
  %v5132 = vmax.f32 %v4958, 0.0
  %v5133 = vmax.f32 %v4961, 0.0
  %v5134 = vmax.f32 %v4966, 0.0
  %v5135 = vmax.f32 %v4969, 0.0
  %v5136 = vmax.f32 %v4974, 0.0
  %v5137 = vmax.f32 %v4977, 0.0
  %v5138 = vmax.f32 %v4982, 0.0
  %v5139 = vmax.f32 %v4985, 0.0
  %v5140 = vmax.f32 %v4990, 0.0
  %v5141 = vmax.f32 %v4993, 0.0
  %v5142 = vmax.f32 %v4998, 0.0
  %v5143 = vmax.f32 %v5001, 0.0
  %v5144 = vmax.f32 %v5006, 0.0
  %v5145 = vmax.f32 %v5009, 0.0
  %v5146 = vmax.f32 %v5014, 0.0
  %v5147 = vmax.f32 %v5017, 0.0
  %v5148 = vpack.c.bf16 %v5021, %v5020
  %v5149 = vpack.c.bf16 %v5023, %v5022
  %v5150 = vpack.c.bf16 %v5025, %v5024
  %v5151 = vpack.c.bf16 %v5027, %v5026
  %v5152 = vpack.c.bf16 %v5029, %v5028
  %v5153 = vpack.c.bf16 %v5031, %v5030
  %v5154 = vpack.c.bf16 %v5033, %v5032
  %v5155 = vpack.c.bf16 %v5035, %v5034
  %v5156 = vpack.c.bf16 %v5037, %v5036
  %v5157 = vpack.c.bf16 %v5039, %v5038
  %v5158 = vpack.c.bf16 %v5041, %v5040
  %v5159 = vpack.c.bf16 %v5043, %v5042
  %v5160 = vpack.c.bf16 %v5045, %v5044
  %v5161 = vpack.c.bf16 %v5047, %v5046
  %v5162 = vpack.c.bf16 %v5049, %v5048
  %v5163 = vpack.c.bf16 %v5051, %v5050
  %v5164 = vpack.c.bf16 %v5053, %v5052
  %v5165 = vpack.c.bf16 %v5055, %v5054
  %v5166 = vpack.c.bf16 %v5057, %v5056
  %v5167 = vpack.c.bf16 %v5059, %v5058
  %v5168 = vpack.c.bf16 %v5061, %v5060
  %v5169 = vpack.c.bf16 %v5063, %v5062
  %v5170 = vpack.c.bf16 %v5065, %v5064
  %v5171 = vpack.c.bf16 %v5067, %v5066
  %v5172 = vpack.c.bf16 %v5069, %v5068
  %v5173 = vpack.c.bf16 %v5071, %v5070
  %v5174 = vpack.c.bf16 %v5073, %v5072
  %v5175 = vpack.c.bf16 %v5075, %v5074
  %v5176 = vpack.c.bf16 %v5077, %v5076
  %v5177 = vpack.c.bf16 %v5079, %v5078
  %v5178 = vpack.c.bf16 %v5081, %v5080
  %v5179 = vpack.c.bf16 %v5083, %v5082
  %v5180 = vpack.c.bf16 %v5085, %v5084
  %v5181 = vpack.c.bf16 %v5087, %v5086
  %v5182 = vpack.c.bf16 %v5089, %v5088
  %v5183 = vpack.c.bf16 %v5091, %v5090
  %v5184 = vpack.c.bf16 %v5093, %v5092
  %v5185 = vpack.c.bf16 %v5095, %v5094
  %v5186 = vpack.c.bf16 %v5097, %v5096
  %v5187 = vpack.c.bf16 %v5099, %v5098
  %v5188 = vpack.c.bf16 %v5101, %v5100
  %v5189 = vpack.c.bf16 %v5103, %v5102
  %v5190 = vpack.c.bf16 %v5105, %v5104
  %v5191 = vpack.c.bf16 %v5107, %v5106
  %v5192 = vpack.c.bf16 %v5109, %v5108
  %v5193 = vpack.c.bf16 %v5111, %v5110
  %v5194 = vpack.c.bf16 %v5113, %v5112
  %v5195 = vpack.c.bf16 %v5115, %v5114
  %v5196 = vpack.c.bf16 %v5117, %v5116
  %v5197 = vpack.c.bf16 %v5119, %v5118
  %v5198 = vpack.c.bf16 %v5121, %v5120
  %v5199 = vpack.c.bf16 %v5123, %v5122
  %v5200 = vpack.c.bf16 %v5125, %v5124
  %v5201 = vpack.c.bf16 %v5127, %v5126
  %v5202 = vpack.c.bf16 %v5129, %v5128
  %v5203 = vpack.c.bf16 %v5131, %v5130
  %v5204 = vpack.c.bf16 %v5133, %v5132
  %v5205 = vpack.c.bf16 %v5135, %v5134
  %v5206 = vpack.c.bf16 %v5137, %v5136
  %v5207 = vpack.c.bf16 %v5139, %v5138
  %v5208 = vpack.c.bf16 %v5141, %v5140
  %v5209 = vpack.c.bf16 %v5143, %v5142
  %v5210 = vpack.c.bf16 %v5145, %v5144
  %v5211 = vpack.c.bf16 %v5147, %v5146
  %v5212 = vld [vmem:[%s5] sm:$0xf]
  %v5213 = vld [vmem:[%s5 + $0x4] sm:$0xf]
  %v5214 = vld [vmem:[%s5 + $0x8] sm:$0xf]
  %v5215 = vld [vmem:[%s5 + $0xc] sm:$0xf]
  %v5216 = vld [vmem:[%s5 + $0x10] sm:$0xf]
  %v5217 = vld [vmem:[%s5 + $0x14] sm:$0xf]
  %v5218 = vld [vmem:[%s5 + $0x18] sm:$0xf]
  %v5219 = vld [vmem:[%s5 + $0x1c] sm:$0xf]
  %v5220 = vld [vmem:[%s5 + $0x20] sm:$0xf]
  %v5221 = vld [vmem:[%s5 + $0x24] sm:$0xf]
  %v5222 = vld [vmem:[%s5 + $0x28] sm:$0xf]
  %v5223 = vld [vmem:[%s5 + $0x2c] sm:$0xf]
  %v5224 = vld [vmem:[%s5 + $0x30] sm:$0xf]
  %v5225 = vld [vmem:[%s5 + $0x34] sm:$0xf]
  %v5226 = vld [vmem:[%s5 + $0x38] sm:$0xf]
  %v5227 = vld [vmem:[%s5 + $0x3c] sm:$0xf]
  %v5228 = vld [vmem:[%s6] sm:$0x1]
  %v5230 = vlaneseq
  %v5231 = vshrl.u32 %v5230, 7
  %v5232 = vsub.s32 0, %v5231
  %v5233 = vrot.slane %v5228, %v5232
  %v5251 = vunpack.c.l.b16 %v5212
  %v5252 = vunpack.c.l.b16 %v5213
  %v5253 = vunpack.c.l.b16 %v5214
  %v5254 = vunpack.c.l.b16 %v5215
  %v5255 = vunpack.c.l.b16 %v5216
  %v5256 = vunpack.c.l.b16 %v5217
  %v5257 = vunpack.c.l.b16 %v5218
  %v5258 = vunpack.c.l.b16 %v5219
  %v5259 = vunpack.c.l.b16 %v5220
  %v5260 = vunpack.c.l.b16 %v5221
  %v5261 = vunpack.c.l.b16 %v5222
  %v5262 = vunpack.c.l.b16 %v5223
  %v5263 = vunpack.c.l.b16 %v5224
  %v5264 = vunpack.c.l.b16 %v5225
  %v5265 = vunpack.c.l.b16 %v5226
  %v5266 = vunpack.c.l.b16 %v5227
  %v5267 = vpack.c.b16 %v5252, %v5251
  %v5268 = vpack.c.b16 %v5254, %v5253
  %v5269 = vpack.c.b16 %v5256, %v5255
  %v5270 = vpack.c.b16 %v5258, %v5257
  %v5271 = vpack.c.b16 %v5260, %v5259
  %v5272 = vpack.c.b16 %v5262, %v5261
  %v5273 = vpack.c.b16 %v5264, %v5263
  %v5274 = vpack.c.b16 %v5266, %v5265
  %5283 = vmatprep.subr.bf16.mxu0 0
  %5284 = vmatpush1.bf16.msra.mxu0 %v5267
  %5285 = vmatprep.subr.bf16.mxu0 0
  %5286 = vmatpush1.bf16.msra.mxu0 %v5268
  %5287 = vmatprep.subr.bf16.mxu0 0
  %5288 = vmatpush1.bf16.msra.mxu0 %v5269
  %5289 = vmatprep.subr.bf16.mxu0 0
  %5290 = vmatpush1.bf16.msra.mxu0 %v5270
  %5291 = vmatprep.subr.bf16.mxu0 0
  %5292 = vmatpush1.bf16.msra.mxu0 %v5271
  %5293 = vmatprep.subr.bf16.mxu0 0
  %5294 = vmatpush1.bf16.msra.mxu0 %v5272
  %5295 = vmatprep.subr.bf16.mxu0 0
  %5296 = vmatpush1.bf16.msra.mxu0 %v5273
  %5297 = vmatprep.subr.bf16.mxu0 0
  %5298 = vmatpush1.bf16.msra.mxu0 %v5274
  %5299 = vmatprep.subr.bf16.mxu0 0
  %5300 = vmatpush1.bf16.msra.mxu0 0
  %5301 = vmatprep.subr.bf16.mxu0 0
  %5302 = vmatpush1.bf16.msra.mxu0 0
  %5303 = vmatprep.subr.bf16.mxu0 0
  %5304 = vmatpush1.bf16.msra.mxu0 0
  %5305 = vmatprep.subr.bf16.mxu0 0
  %5306 = vmatpush1.bf16.msra.mxu0 0
  %5307 = vmatprep.subr.bf16.mxu0 0
  %5308 = vmatpush1.bf16.msra.mxu0 0
  %5309 = vmatprep.subr.bf16.mxu0 0
  %5310 = vmatpush1.bf16.msra.mxu0 0
  %5311 = vmatprep.subr.bf16.mxu0 0
  %5312 = vmatpush1.bf16.msra.mxu0 0
  %5313 = vmatprep.subr.bf16.mxu0 0
  %5314 = vmatpush1.bf16.msra.mxu0 0
  %5315 = vmatprep.mubr.bf16.mxu0 0
  %5316 = vmatmul.mubr.bf16.gmra.mrb[0].mxu0 %v5148
  %v5317 = vpop.f32.mrb[0].mxu0
  %v5318 = vadd.f32 %v5233, %v5317
  %v5319 = vpop.f32.mrb[0].mxu0
  %v5320 = vpop.f32.mrb[0].mxu0
  %v5321 = vadd.f32 %v5233, %v5320
  %v5322 = vpop.f32.mrb[0].mxu0
  %5323 = vmatprep.mubr.bf16.mxu0 0
  %5324 = vmatmul.mubr.bf16.gmra.mrb[0].mxu0 %v5149
  %v5325 = vpop.f32.mrb[0].mxu0
  %v5326 = vadd.f32 %v5233, %v5325
  %v5327 = vpop.f32.mrb[0].mxu0
  %v5328 = vpop.f32.mrb[0].mxu0
  %v5329 = vadd.f32 %v5233, %v5328
  %v5330 = vpop.f32.mrb[0].mxu0
  %5331 = vmatprep.mubr.bf16.mxu0 0
  %5332 = vmatmul.mubr.bf16.gmra.mrb[0].mxu0 %v5150
  %v5333 = vpop.f32.mrb[0].mxu0
  %v5334 = vadd.f32 %v5233, %v5333
  %v5335 = vpop.f32.mrb[0].mxu0
  %v5336 = vpop.f32.mrb[0].mxu0
  %v5337 = vadd.f32 %v5233, %v5336
  %v5338 = vpop.f32.mrb[0].mxu0
  %5339 = vmatprep.mubr.bf16.mxu0 0
  %5340 = vmatmul.mubr.bf16.gmra.mrb[0].mxu0 %v5151
  %v5341 = vpop.f32.mrb[0].mxu0
  %v5342 = vadd.f32 %v5233, %v5341
  %v5343 = vpop.f32.mrb[0].mxu0
  %v5344 = vpop.f32.mrb[0].mxu0
  %v5345 = vadd.f32 %v5233, %v5344
  %v5346 = vpop.f32.mrb[0].mxu0
  %5347 = vmatprep.mubr.bf16.mxu0 0
  %5348 = vmatmul.mubr.bf16.gmra.mrb[0].mxu0 %v5152
  %v5349 = vpop.f32.mrb[0].mxu0
  %v5350 = vadd.f32 %v5233, %v5349
  %v5351 = vpop.f32.mrb[0].mxu0
  %v5352 = vpop.f32.mrb[0].mxu0
  %v5353 = vadd.f32 %v5233, %v5352
  %v5354 = vpop.f32.mrb[0].mxu0
  %5355 = vmatprep.mubr.bf16.mxu0 0
  %5356 = vmatmul.mubr.bf16.gmra.mrb[0].mxu0 %v5153
  %v5357 = vpop.f32.mrb[0].mxu0
  %v5358 = vadd.f32 %v5233, %v5357
  %v5359 = vpop.f32.mrb[0].mxu0
  %v5360 = vpop.f32.mrb[0].mxu0
  %v5361 = vadd.f32 %v5233, %v5360
  %v5362 = vpop.f32.mrb[0].mxu0
  %5363 = vmatprep.mubr.bf16.mxu0 0
  %5364 = vmatmul.mubr.bf16.gmra.mrb[0].mxu0 %v5154
  %v5365 = vpop.f32.mrb[0].mxu0
  %v5366 = vadd.f32 %v5233, %v5365
  %v5367 = vpop.f32.mrb[0].mxu0
  %v5368 = vpop.f32.mrb[0].mxu0
  %v5369 = vadd.f32 %v5233, %v5368
  %v5370 = vpop.f32.mrb[0].mxu0
  %5371 = vmatprep.mubr.bf16.mxu0 0
  %5372 = vmatmul.mubr.bf16.gmra.mrb[0].mxu0 %v5155
  %v5373 = vpop.f32.mrb[0].mxu0
  %v5374 = vadd.f32 %v5233, %v5373
  %v5375 = vpop.f32.mrb[0].mxu0
  %v5376 = vpop.f32.mrb[0].mxu0
  %v5377 = vadd.f32 %v5233, %v5376
  %v5378 = vpop.f32.mrb[0].mxu0
  %5379 = vmatprep.mubr.bf16.mxu0 0
  %5380 = vmatmul.mubr.bf16.gmra.mrb[0].mxu0 %v5156
  %v5381 = vpop.f32.mrb[0].mxu0
  %v5382 = vadd.f32 %v5233, %v5381
  %v5383 = vpop.f32.mrb[0].mxu0
  %v5384 = vpop.f32.mrb[0].mxu0
  %v5385 = vadd.f32 %v5233, %v5384
  %v5386 = vpop.f32.mrb[0].mxu0
  %5387 = vmatprep.mubr.bf16.mxu0 0
  %5388 = vmatmul.mubr.bf16.gmra.mrb[0].mxu0 %v5157
  %v5389 = vpop.f32.mrb[0].mxu0
  %v5390 = vadd.f32 %v5233, %v5389
  %v5391 = vpop.f32.mrb[0].mxu0
  %v5392 = vpop.f32.mrb[0].mxu0
  %v5393 = vadd.f32 %v5233, %v5392
  %v5394 = vpop.f32.mrb[0].mxu0
  %5395 = vmatprep.mubr.bf16.mxu0 0
  %5396 = vmatmul.mubr.bf16.gmra.mrb[0].mxu0 %v5158
  %v5397 = vpop.f32.mrb[0].mxu0
  %v5398 = vadd.f32 %v5233, %v5397
  %v5399 = vpop.f32.mrb[0].mxu0
  %v5400 = vpop.f32.mrb[0].mxu0
  %v5401 = vadd.f32 %v5233, %v5400
  %v5402 = vpop.f32.mrb[0].mxu0
  %5403 = vmatprep.mubr.bf16.mxu0 0
  %5404 = vmatmul.mubr.bf16.gmra.mrb[0].mxu0 %v5159
  %v5405 = vpop.f32.mrb[0].mxu0
  %v5406 = vadd.f32 %v5233, %v5405
  %v5407 = vpop.f32.mrb[0].mxu0
  %v5408 = vpop.f32.mrb[0].mxu0
  %v5409 = vadd.f32 %v5233, %v5408
  %v5410 = vpop.f32.mrb[0].mxu0
  %5411 = vmatprep.mubr.bf16.mxu0 0
  %5412 = vmatmul.mubr.bf16.gmra.mrb[0].mxu0 %v5160
  %v5413 = vpop.f32.mrb[0].mxu0
  %v5414 = vadd.f32 %v5233, %v5413
  %v5415 = vpop.f32.mrb[0].mxu0
  %v5416 = vpop.f32.mrb[0].mxu0
  %v5417 = vadd.f32 %v5233, %v5416
  %v5418 = vpop.f32.mrb[0].mxu0
  %5419 = vmatprep.mubr.bf16.mxu0 0
  %5420 = vmatmul.mubr.bf16.gmra.mrb[0].mxu0 %v5161
  %v5421 = vpop.f32.mrb[0].mxu0
  %v5422 = vadd.f32 %v5233, %v5421
  %v5423 = vpop.f32.mrb[0].mxu0
  %v5424 = vpop.f32.mrb[0].mxu0
  %v5425 = vadd.f32 %v5233, %v5424
  %v5426 = vpop.f32.mrb[0].mxu0
  %5427 = vmatprep.mubr.bf16.mxu0 0
  %5428 = vmatmul.mubr.bf16.gmra.mrb[0].mxu0 %v5162
  %v5429 = vpop.f32.mrb[0].mxu0
  %v5430 = vadd.f32 %v5233, %v5429
  %v5431 = vpop.f32.mrb[0].mxu0
  %v5432 = vpop.f32.mrb[0].mxu0
  %v5433 = vadd.f32 %v5233, %v5432
  %v5434 = vpop.f32.mrb[0].mxu0
  %5435 = vmatprep.mubr.bf16.mxu0 0
  %5436 = vmatmul.mubr.bf16.gmra.mrb[0].mxu0 %v5163
  %v5437 = vpop.f32.mrb[0].mxu0
  %v5438 = vadd.f32 %v5233, %v5437
  %v5439 = vpop.f32.mrb[0].mxu0
  %v5440 = vpop.f32.mrb[0].mxu0
  %v5441 = vadd.f32 %v5233, %v5440
  %v5442 = vpop.f32.mrb[0].mxu0
  %5443 = vmatprep.mubr.bf16.mxu0 0
  %5444 = vmatmul.mubr.bf16.gmra.mrb[0].mxu0 %v5164
  %v5445 = vpop.f32.mrb[0].mxu0
  %v5446 = vadd.f32 %v5233, %v5445
  %v5447 = vpop.f32.mrb[0].mxu0
  %v5448 = vpop.f32.mrb[0].mxu0
  %v5449 = vadd.f32 %v5233, %v5448
  %v5450 = vpop.f32.mrb[0].mxu0
  %5451 = vmatprep.mubr.bf16.mxu0 0
  %5452 = vmatmul.mubr.bf16.gmra.mrb[0].mxu0 %v5165
  %v5453 = vpop.f32.mrb[0].mxu0
  %v5454 = vadd.f32 %v5233, %v5453
  %v5455 = vpop.f32.mrb[0].mxu0
  %v5456 = vpop.f32.mrb[0].mxu0
  %v5457 = vadd.f32 %v5233, %v5456
  %v5458 = vpop.f32.mrb[0].mxu0
  %5459 = vmatprep.mubr.bf16.mxu0 0
  %5460 = vmatmul.mubr.bf16.gmra.mrb[0].mxu0 %v5166
  %v5461 = vpop.f32.mrb[0].mxu0
  %v5462 = vadd.f32 %v5233, %v5461
  %v5463 = vpop.f32.mrb[0].mxu0
  %v5464 = vpop.f32.mrb[0].mxu0
  %v5465 = vadd.f32 %v5233, %v5464
  %v5466 = vpop.f32.mrb[0].mxu0
  %5467 = vmatprep.mubr.bf16.mxu0 0
  %5468 = vmatmul.mubr.bf16.gmra.mrb[0].mxu0 %v5167
  %v5469 = vpop.f32.mrb[0].mxu0
  %v5470 = vadd.f32 %v5233, %v5469
  %v5471 = vpop.f32.mrb[0].mxu0
  %v5472 = vpop.f32.mrb[0].mxu0
  %v5473 = vadd.f32 %v5233, %v5472
  %v5474 = vpop.f32.mrb[0].mxu0
  %5475 = vmatprep.mubr.bf16.mxu0 0
  %5476 = vmatmul.mubr.bf16.gmra.mrb[0].mxu0 %v5168
  %v5477 = vpop.f32.mrb[0].mxu0
  %v5478 = vadd.f32 %v5233, %v5477
  %v5479 = vpop.f32.mrb[0].mxu0
  %v5480 = vpop.f32.mrb[0].mxu0
  %v5481 = vadd.f32 %v5233, %v5480
  %v5482 = vpop.f32.mrb[0].mxu0
  %5483 = vmatprep.mubr.bf16.mxu0 0
  %5484 = vmatmul.mubr.bf16.gmra.mrb[0].mxu0 %v5169
  %v5485 = vpop.f32.mrb[0].mxu0
  %v5486 = vadd.f32 %v5233, %v5485
  %v5487 = vpop.f32.mrb[0].mxu0
  %v5488 = vpop.f32.mrb[0].mxu0
  %v5489 = vadd.f32 %v5233, %v5488
  %v5490 = vpop.f32.mrb[0].mxu0
  %5491 = vmatprep.mubr.bf16.mxu0 0
  %5492 = vmatmul.mubr.bf16.gmra.mrb[0].mxu0 %v5170
  %v5493 = vpop.f32.mrb[0].mxu0
  %v5494 = vadd.f32 %v5233, %v5493
  %v5495 = vpop.f32.mrb[0].mxu0
  %v5496 = vpop.f32.mrb[0].mxu0
  %v5497 = vadd.f32 %v5233, %v5496
  %v5498 = vpop.f32.mrb[0].mxu0
  %5499 = vmatprep.mubr.bf16.mxu0 0
  %5500 = vmatmul.mubr.bf16.gmra.mrb[0].mxu0 %v5171
  %v5501 = vpop.f32.mrb[0].mxu0
  %v5502 = vadd.f32 %v5233, %v5501
  %v5503 = vpop.f32.mrb[0].mxu0
  %v5504 = vpop.f32.mrb[0].mxu0
  %v5505 = vadd.f32 %v5233, %v5504
  %v5506 = vpop.f32.mrb[0].mxu0
  %5507 = vmatprep.mubr.bf16.mxu0 0
  %5508 = vmatmul.mubr.bf16.gmra.mrb[0].mxu0 %v5172
  %v5509 = vpop.f32.mrb[0].mxu0
  %v5510 = vadd.f32 %v5233, %v5509
  %v5511 = vpop.f32.mrb[0].mxu0
  %v5512 = vpop.f32.mrb[0].mxu0
  %v5513 = vadd.f32 %v5233, %v5512
  %v5514 = vpop.f32.mrb[0].mxu0
  %5515 = vmatprep.mubr.bf16.mxu0 0
  %5516 = vmatmul.mubr.bf16.gmra.mrb[0].mxu0 %v5173
  %v5517 = vpop.f32.mrb[0].mxu0
  %v5518 = vadd.f32 %v5233, %v5517
  %v5519 = vpop.f32.mrb[0].mxu0
  %v5520 = vpop.f32.mrb[0].mxu0
  %v5521 = vadd.f32 %v5233, %v5520
  %v5522 = vpop.f32.mrb[0].mxu0
  %5523 = vmatprep.mubr.bf16.mxu0 0
  %5524 = vmatmul.mubr.bf16.gmra.mrb[0].mxu0 %v5174
  %v5525 = vpop.f32.mrb[0].mxu0
  %v5526 = vadd.f32 %v5233, %v5525
  %v5527 = vpop.f32.mrb[0].mxu0
  %v5528 = vpop.f32.mrb[0].mxu0
  %v5529 = vadd.f32 %v5233, %v5528
  %v5530 = vpop.f32.mrb[0].mxu0
  %5531 = vmatprep.mubr.bf16.mxu0 0
  %5532 = vmatmul.mubr.bf16.gmra.mrb[0].mxu0 %v5175
  %v5533 = vpop.f32.mrb[0].mxu0
  %v5534 = vadd.f32 %v5233, %v5533
  %v5535 = vpop.f32.mrb[0].mxu0
  %v5536 = vpop.f32.mrb[0].mxu0
  %v5537 = vadd.f32 %v5233, %v5536
  %v5538 = vpop.f32.mrb[0].mxu0
  %5539 = vmatprep.mubr.bf16.mxu0 0
  %5540 = vmatmul.mubr.bf16.gmra.mrb[0].mxu0 %v5176
  %v5541 = vpop.f32.mrb[0].mxu0
  %v5542 = vadd.f32 %v5233, %v5541
  %v5543 = vpop.f32.mrb[0].mxu0
  %v5544 = vpop.f32.mrb[0].mxu0
  %v5545 = vadd.f32 %v5233, %v5544
  %v5546 = vpop.f32.mrb[0].mxu0
  %5547 = vmatprep.mubr.bf16.mxu0 0
  %5548 = vmatmul.mubr.bf16.gmra.mrb[0].mxu0 %v5177
  %v5549 = vpop.f32.mrb[0].mxu0
  %v5550 = vadd.f32 %v5233, %v5549
  %v5551 = vpop.f32.mrb[0].mxu0
  %v5552 = vpop.f32.mrb[0].mxu0
  %v5553 = vadd.f32 %v5233, %v5552
  %v5554 = vpop.f32.mrb[0].mxu0
  %5555 = vmatprep.mubr.bf16.mxu0 0
  %5556 = vmatmul.mubr.bf16.gmra.mrb[0].mxu0 %v5178
  %v5557 = vpop.f32.mrb[0].mxu0
  %v5558 = vadd.f32 %v5233, %v5557
  %v5559 = vpop.f32.mrb[0].mxu0
  %v5560 = vpop.f32.mrb[0].mxu0
  %v5561 = vadd.f32 %v5233, %v5560
  %v5562 = vpop.f32.mrb[0].mxu0
  %5563 = vmatprep.mubr.bf16.mxu0 0
  %5564 = vmatmul.mubr.bf16.gmra.mrb[0].mxu0 %v5179
  %v5565 = vpop.f32.mrb[0].mxu0
  %v5566 = vadd.f32 %v5233, %v5565
  %v5567 = vpop.f32.mrb[0].mxu0
  %v5568 = vpop.f32.mrb[0].mxu0
  %v5569 = vadd.f32 %v5233, %v5568
  %v5570 = vpop.f32.mrb[0].mxu0
  %5571 = vmatprep.mubr.bf16.mxu0 0
  %5572 = vmatmul.mubr.bf16.gmra.mrb[0].mxu0 %v5180
  %v5573 = vpop.f32.mrb[0].mxu0
  %v5574 = vadd.f32 %v5233, %v5573
  %v5575 = vpop.f32.mrb[0].mxu0
  %v5576 = vpop.f32.mrb[0].mxu0
  %v5577 = vadd.f32 %v5233, %v5576
  %v5578 = vpop.f32.mrb[0].mxu0
  %5579 = vmatprep.mubr.bf16.mxu0 0
  %5580 = vmatmul.mubr.bf16.gmra.mrb[0].mxu0 %v5181
  %v5581 = vpop.f32.mrb[0].mxu0
  %v5582 = vadd.f32 %v5233, %v5581
  %v5583 = vpop.f32.mrb[0].mxu0
  %v5584 = vpop.f32.mrb[0].mxu0
  %v5585 = vadd.f32 %v5233, %v5584
  %v5586 = vpop.f32.mrb[0].mxu0
  %5587 = vmatprep.mubr.bf16.mxu0 0
  %5588 = vmatmul.mubr.bf16.gmra.mrb[0].mxu0 %v5182
  %v5589 = vpop.f32.mrb[0].mxu0
  %v5590 = vadd.f32 %v5233, %v5589
  %v5591 = vpop.f32.mrb[0].mxu0
  %v5592 = vpop.f32.mrb[0].mxu0
  %v5593 = vadd.f32 %v5233, %v5592
  %v5594 = vpop.f32.mrb[0].mxu0
  %5595 = vmatprep.mubr.bf16.mxu0 0
  %5596 = vmatmul.mubr.bf16.gmra.mrb[0].mxu0 %v5183
  %v5597 = vpop.f32.mrb[0].mxu0
  %v5598 = vadd.f32 %v5233, %v5597
  %v5599 = vpop.f32.mrb[0].mxu0
  %v5600 = vpop.f32.mrb[0].mxu0
  %v5601 = vadd.f32 %v5233, %v5600
  %v5602 = vpop.f32.mrb[0].mxu0
  %5603 = vmatprep.mubr.bf16.mxu0 0
  %5604 = vmatmul.mubr.bf16.gmra.mrb[0].mxu0 %v5184
  %v5605 = vpop.f32.mrb[0].mxu0
  %v5606 = vadd.f32 %v5233, %v5605
  %v5607 = vpop.f32.mrb[0].mxu0
  %v5608 = vpop.f32.mrb[0].mxu0
  %v5609 = vadd.f32 %v5233, %v5608
  %v5610 = vpop.f32.mrb[0].mxu0
  %5611 = vmatprep.mubr.bf16.mxu0 0
  %5612 = vmatmul.mubr.bf16.gmra.mrb[0].mxu0 %v5185
  %v5613 = vpop.f32.mrb[0].mxu0
  %v5614 = vadd.f32 %v5233, %v5613
  %v5615 = vpop.f32.mrb[0].mxu0
  %v5616 = vpop.f32.mrb[0].mxu0
  %v5617 = vadd.f32 %v5233, %v5616
  %v5618 = vpop.f32.mrb[0].mxu0
  %5619 = vmatprep.mubr.bf16.mxu0 0
  %5620 = vmatmul.mubr.bf16.gmra.mrb[0].mxu0 %v5186
  %v5621 = vpop.f32.mrb[0].mxu0
  %v5622 = vadd.f32 %v5233, %v5621
  %v5623 = vpop.f32.mrb[0].mxu0
  %v5624 = vpop.f32.mrb[0].mxu0
  %v5625 = vadd.f32 %v5233, %v5624
  %v5626 = vpop.f32.mrb[0].mxu0
  %5627 = vmatprep.mubr.bf16.mxu0 0
  %5628 = vmatmul.mubr.bf16.gmra.mrb[0].mxu0 %v5187
  %v5629 = vpop.f32.mrb[0].mxu0
  %v5630 = vadd.f32 %v5233, %v5629
  %v5631 = vpop.f32.mrb[0].mxu0
  %v5632 = vpop.f32.mrb[0].mxu0
  %v5633 = vadd.f32 %v5233, %v5632
  %v5634 = vpop.f32.mrb[0].mxu0
  %5635 = vmatprep.mubr.bf16.mxu0 0
  %5636 = vmatmul.mubr.bf16.gmra.mrb[0].mxu0 %v5188
  %v5637 = vpop.f32.mrb[0].mxu0
  %v5638 = vadd.f32 %v5233, %v5637
  %v5639 = vpop.f32.mrb[0].mxu0
  %v5640 = vpop.f32.mrb[0].mxu0
  %v5641 = vadd.f32 %v5233, %v5640
  %v5642 = vpop.f32.mrb[0].mxu0
  %5643 = vmatprep.mubr.bf16.mxu0 0
  %5644 = vmatmul.mubr.bf16.gmra.mrb[0].mxu0 %v5189
  %v5645 = vpop.f32.mrb[0].mxu0
  %v5646 = vadd.f32 %v5233, %v5645
  %v5647 = vpop.f32.mrb[0].mxu0
  %v5648 = vpop.f32.mrb[0].mxu0
  %v5649 = vadd.f32 %v5233, %v5648
  %v5650 = vpop.f32.mrb[0].mxu0
  %5651 = vmatprep.mubr.bf16.mxu0 0
  %5652 = vmatmul.mubr.bf16.gmra.mrb[0].mxu0 %v5190
  %v5653 = vpop.f32.mrb[0].mxu0
  %v5654 = vadd.f32 %v5233, %v5653
  %v5655 = vpop.f32.mrb[0].mxu0
  %v5656 = vpop.f32.mrb[0].mxu0
  %v5657 = vadd.f32 %v5233, %v5656
  %v5658 = vpop.f32.mrb[0].mxu0
  %5659 = vmatprep.mubr.bf16.mxu0 0
  %5660 = vmatmul.mubr.bf16.gmra.mrb[0].mxu0 %v5191
  %v5661 = vpop.f32.mrb[0].mxu0
  %v5662 = vadd.f32 %v5233, %v5661
  %v5663 = vpop.f32.mrb[0].mxu0
  %v5664 = vpop.f32.mrb[0].mxu0
  %v5665 = vadd.f32 %v5233, %v5664
  %v5666 = vpop.f32.mrb[0].mxu0
  %5667 = vmatprep.mubr.bf16.mxu0 0
  %5668 = vmatmul.mubr.bf16.gmra.mrb[0].mxu0 %v5192
  %v5669 = vpop.f32.mrb[0].mxu0
  %v5670 = vadd.f32 %v5233, %v5669
  %v5671 = vpop.f32.mrb[0].mxu0
  %v5672 = vpop.f32.mrb[0].mxu0
  %v5673 = vadd.f32 %v5233, %v5672
  %v5674 = vpop.f32.mrb[0].mxu0
  %5675 = vmatprep.mubr.bf16.mxu0 0
  %5676 = vmatmul.mubr.bf16.gmra.mrb[0].mxu0 %v5193
  %v5677 = vpop.f32.mrb[0].mxu0
  %v5678 = vadd.f32 %v5233, %v5677
  %v5679 = vpop.f32.mrb[0].mxu0
  %v5680 = vpop.f32.mrb[0].mxu0
  %v5681 = vadd.f32 %v5233, %v5680
  %v5682 = vpop.f32.mrb[0].mxu0
  %5683 = vmatprep.mubr.bf16.mxu0 0
  %5684 = vmatmul.mubr.bf16.gmra.mrb[0].mxu0 %v5194
  %v5685 = vpop.f32.mrb[0].mxu0
  %v5686 = vadd.f32 %v5233, %v5685
  %v5687 = vpop.f32.mrb[0].mxu0
  %v5688 = vpop.f32.mrb[0].mxu0
  %v5689 = vadd.f32 %v5233, %v5688
  %v5690 = vpop.f32.mrb[0].mxu0
  %5691 = vmatprep.mubr.bf16.mxu0 0
  %5692 = vmatmul.mubr.bf16.gmra.mrb[0].mxu0 %v5195
  %v5693 = vpop.f32.mrb[0].mxu0
  %v5694 = vadd.f32 %v5233, %v5693
  %v5695 = vpop.f32.mrb[0].mxu0
  %v5696 = vpop.f32.mrb[0].mxu0
  %v5697 = vadd.f32 %v5233, %v5696
  %v5698 = vpop.f32.mrb[0].mxu0
  %5699 = vmatprep.mubr.bf16.mxu0 0
  %5700 = vmatmul.mubr.bf16.gmra.mrb[0].mxu0 %v5196
  %v5701 = vpop.f32.mrb[0].mxu0
  %v5702 = vadd.f32 %v5233, %v5701
  %v5703 = vpop.f32.mrb[0].mxu0
  %v5704 = vpop.f32.mrb[0].mxu0
  %v5705 = vadd.f32 %v5233, %v5704
  %v5706 = vpop.f32.mrb[0].mxu0
  %5707 = vmatprep.mubr.bf16.mxu0 0
  %5708 = vmatmul.mubr.bf16.gmra.mrb[0].mxu0 %v5197
  %v5709 = vpop.f32.mrb[0].mxu0
  %v5710 = vadd.f32 %v5233, %v5709
  %v5711 = vpop.f32.mrb[0].mxu0
  %v5712 = vpop.f32.mrb[0].mxu0
  %v5713 = vadd.f32 %v5233, %v5712
  %v5714 = vpop.f32.mrb[0].mxu0
  %5715 = vmatprep.mubr.bf16.mxu0 0
  %5716 = vmatmul.mubr.bf16.gmra.mrb[0].mxu0 %v5198
  %v5717 = vpop.f32.mrb[0].mxu0
  %v5718 = vadd.f32 %v5233, %v5717
  %v5719 = vpop.f32.mrb[0].mxu0
  %v5720 = vpop.f32.mrb[0].mxu0
  %v5721 = vadd.f32 %v5233, %v5720
  %v5722 = vpop.f32.mrb[0].mxu0
  %5723 = vmatprep.mubr.bf16.mxu0 0
  %5724 = vmatmul.mubr.bf16.gmra.mrb[0].mxu0 %v5199
  %v5725 = vpop.f32.mrb[0].mxu0
  %v5726 = vadd.f32 %v5233, %v5725
  %v5727 = vpop.f32.mrb[0].mxu0
  %v5728 = vpop.f32.mrb[0].mxu0
  %v5729 = vadd.f32 %v5233, %v5728
  %v5730 = vpop.f32.mrb[0].mxu0
  %5731 = vmatprep.mubr.bf16.mxu0 0
  %5732 = vmatmul.mubr.bf16.gmra.mrb[0].mxu0 %v5200
  %v5733 = vpop.f32.mrb[0].mxu0
  %v5734 = vadd.f32 %v5233, %v5733
  %v5735 = vpop.f32.mrb[0].mxu0
  %v5736 = vpop.f32.mrb[0].mxu0
  %v5737 = vadd.f32 %v5233, %v5736
  %v5738 = vpop.f32.mrb[0].mxu0
  %5739 = vmatprep.mubr.bf16.mxu0 0
  %5740 = vmatmul.mubr.bf16.gmra.mrb[0].mxu0 %v5201
  %v5741 = vpop.f32.mrb[0].mxu0
  %v5742 = vadd.f32 %v5233, %v5741
  %v5743 = vpop.f32.mrb[0].mxu0
  %v5744 = vpop.f32.mrb[0].mxu0
  %v5745 = vadd.f32 %v5233, %v5744
  %v5746 = vpop.f32.mrb[0].mxu0
  %5747 = vmatprep.mubr.bf16.mxu0 0
  %5748 = vmatmul.mubr.bf16.gmra.mrb[0].mxu0 %v5202
  %v5749 = vpop.f32.mrb[0].mxu0
  %v5750 = vadd.f32 %v5233, %v5749
  %v5751 = vpop.f32.mrb[0].mxu0
  %v5752 = vpop.f32.mrb[0].mxu0
  %v5753 = vadd.f32 %v5233, %v5752
  %v5754 = vpop.f32.mrb[0].mxu0
  %5755 = vmatprep.mubr.bf16.mxu0 0
  %5756 = vmatmul.mubr.bf16.gmra.mrb[0].mxu0 %v5203
  %v5757 = vpop.f32.mrb[0].mxu0
  %v5758 = vadd.f32 %v5233, %v5757
  %v5759 = vpop.f32.mrb[0].mxu0
  %v5760 = vpop.f32.mrb[0].mxu0
  %v5761 = vadd.f32 %v5233, %v5760
  %v5762 = vpop.f32.mrb[0].mxu0
  %5763 = vmatprep.mubr.bf16.mxu0 0
  %5764 = vmatmul.mubr.bf16.gmra.mrb[0].mxu0 %v5204
  %v5765 = vpop.f32.mrb[0].mxu0
  %v5766 = vadd.f32 %v5233, %v5765
  %v5767 = vpop.f32.mrb[0].mxu0
  %v5768 = vpop.f32.mrb[0].mxu0
  %v5769 = vadd.f32 %v5233, %v5768
  %v5770 = vpop.f32.mrb[0].mxu0
  %5771 = vmatprep.mubr.bf16.mxu0 0
  %5772 = vmatmul.mubr.bf16.gmra.mrb[0].mxu0 %v5205
  %v5773 = vpop.f32.mrb[0].mxu0
  %v5774 = vadd.f32 %v5233, %v5773
  %v5775 = vpop.f32.mrb[0].mxu0
  %v5776 = vpop.f32.mrb[0].mxu0
  %v5777 = vadd.f32 %v5233, %v5776
  %v5778 = vpop.f32.mrb[0].mxu0
  %5779 = vmatprep.mubr.bf16.mxu0 0
  %5780 = vmatmul.mubr.bf16.gmra.mrb[0].mxu0 %v5206
  %v5781 = vpop.f32.mrb[0].mxu0
  %v5782 = vadd.f32 %v5233, %v5781
  %v5783 = vpop.f32.mrb[0].mxu0
  %v5784 = vpop.f32.mrb[0].mxu0
  %v5785 = vadd.f32 %v5233, %v5784
  %v5786 = vpop.f32.mrb[0].mxu0
  %5787 = vmatprep.mubr.bf16.mxu0 0
  %5788 = vmatmul.mubr.bf16.gmra.mrb[0].mxu0 %v5207
  %v5789 = vpop.f32.mrb[0].mxu0
  %v5790 = vadd.f32 %v5233, %v5789
  %v5791 = vpop.f32.mrb[0].mxu0
  %v5792 = vpop.f32.mrb[0].mxu0
  %v5793 = vadd.f32 %v5233, %v5792
  %v5794 = vpop.f32.mrb[0].mxu0
  %5795 = vmatprep.mubr.bf16.mxu0 0
  %5796 = vmatmul.mubr.bf16.gmra.mrb[0].mxu0 %v5208
  %v5797 = vpop.f32.mrb[0].mxu0
  %v5798 = vadd.f32 %v5233, %v5797
  %v5799 = vpop.f32.mrb[0].mxu0
  %v5800 = vpop.f32.mrb[0].mxu0
  %v5801 = vadd.f32 %v5233, %v5800
  %v5802 = vpop.f32.mrb[0].mxu0
  %5803 = vmatprep.mubr.bf16.mxu0 0
  %5804 = vmatmul.mubr.bf16.gmra.mrb[0].mxu0 %v5209
  %v5805 = vpop.f32.mrb[0].mxu0
  %v5806 = vadd.f32 %v5233, %v5805
  %v5807 = vpop.f32.mrb[0].mxu0
  %v5808 = vpop.f32.mrb[0].mxu0
  %v5809 = vadd.f32 %v5233, %v5808
  %v5810 = vpop.f32.mrb[0].mxu0
  %5811 = vmatprep.mubr.bf16.mxu0 0
  %5812 = vmatmul.mubr.bf16.gmra.mrb[0].mxu0 %v5210
  %v5813 = vpop.f32.mrb[0].mxu0
  %v5814 = vadd.f32 %v5233, %v5813
  %v5815 = vpop.f32.mrb[0].mxu0
  %v5816 = vpop.f32.mrb[0].mxu0
  %v5817 = vadd.f32 %v5233, %v5816
  %v5818 = vpop.f32.mrb[0].mxu0
  %5819 = vmatprep.mubr.bf16.mxu0 0
  %5820 = vmatmul.mubr.bf16.gmra.mrb[0].mxu0 %v5211
  %v5821 = vpop.f32.mrb[0].mxu0
  %v5822 = vadd.f32 %v5233, %v5821
  %v5823 = vpop.f32.mrb[0].mxu0
  %v5824 = vpop.f32.mrb[0].mxu0
  %v5825 = vadd.f32 %v5233, %v5824
  %v5826 = vpop.f32.mrb[0].mxu0
  %5827 = vdwg.mxu0
  %5828 = vmax.xlane.f32.xlu0 %v5318
  %v5829 = vpop.xlane.xlu0 %5828
  %5830 = vmax.xlane.f32.xlu0 %v5321
  %v5831 = vpop.xlane.xlu0 %5830
  %5832 = vmax.xlane.f32.xlu0 %v5326
  %v5833 = vpop.xlane.xlu0 %5832
  %5834 = vmax.xlane.f32.xlu0 %v5329
  %v5835 = vpop.xlane.xlu0 %5834
  %5836 = vmax.xlane.f32.xlu0 %v5334
  %v5837 = vpop.xlane.xlu0 %5836
  %5838 = vmax.xlane.f32.xlu0 %v5337
  %v5839 = vpop.xlane.xlu0 %5838
  %5840 = vmax.xlane.f32.xlu0 %v5342
  %v5841 = vpop.xlane.xlu0 %5840
  %5842 = vmax.xlane.f32.xlu0 %v5345
  %v5843 = vpop.xlane.xlu0 %5842
  %5844 = vmax.xlane.f32.xlu0 %v5350
  %v5845 = vpop.xlane.xlu0 %5844
  %5846 = vmax.xlane.f32.xlu0 %v5353
  %v5847 = vpop.xlane.xlu0 %5846
  %5848 = vmax.xlane.f32.xlu0 %v5358
  %v5849 = vpop.xlane.xlu0 %5848
  %5850 = vmax.xlane.f32.xlu0 %v5361
  %v5851 = vpop.xlane.xlu0 %5850
  %5852 = vmax.xlane.f32.xlu0 %v5366
  %v5853 = vpop.xlane.xlu0 %5852
  %5854 = vmax.xlane.f32.xlu0 %v5369
  %v5855 = vpop.xlane.xlu0 %5854
  %5856 = vmax.xlane.f32.xlu0 %v5374
  %v5857 = vpop.xlane.xlu0 %5856
  %5858 = vmax.xlane.f32.xlu0 %v5377
  %v5859 = vpop.xlane.xlu0 %5858
  %5860 = vmax.xlane.f32.xlu0 %v5382
  %v5861 = vpop.xlane.xlu0 %5860
  %5862 = vmax.xlane.f32.xlu0 %v5385
  %v5863 = vpop.xlane.xlu0 %5862
  %5864 = vmax.xlane.f32.xlu0 %v5390
  %v5865 = vpop.xlane.xlu0 %5864
  %5866 = vmax.xlane.f32.xlu0 %v5393
  %v5867 = vpop.xlane.xlu0 %5866
  %5868 = vmax.xlane.f32.xlu0 %v5398
  %v5869 = vpop.xlane.xlu0 %5868
  %5870 = vmax.xlane.f32.xlu0 %v5401
  %v5871 = vpop.xlane.xlu0 %5870
  %5872 = vmax.xlane.f32.xlu0 %v5406
  %v5873 = vpop.xlane.xlu0 %5872
  %5874 = vmax.xlane.f32.xlu0 %v5409
  %v5875 = vpop.xlane.xlu0 %5874
  %5876 = vmax.xlane.f32.xlu0 %v5414
  %v5877 = vpop.xlane.xlu0 %5876
  %5878 = vmax.xlane.f32.xlu0 %v5417
  %v5879 = vpop.xlane.xlu0 %5878
  %5880 = vmax.xlane.f32.xlu0 %v5422
  %v5881 = vpop.xlane.xlu0 %5880
  %5882 = vmax.xlane.f32.xlu0 %v5425
  %v5883 = vpop.xlane.xlu0 %5882
  %5884 = vmax.xlane.f32.xlu0 %v5430
  %v5885 = vpop.xlane.xlu0 %5884
  %5886 = vmax.xlane.f32.xlu0 %v5433
  %v5887 = vpop.xlane.xlu0 %5886
  %5888 = vmax.xlane.f32.xlu0 %v5438
  %v5889 = vpop.xlane.xlu0 %5888
  %5890 = vmax.xlane.f32.xlu0 %v5441
  %v5891 = vpop.xlane.xlu0 %5890
  %5892 = vmax.xlane.f32.xlu0 %v5446
  %v5893 = vpop.xlane.xlu0 %5892
  %5894 = vmax.xlane.f32.xlu0 %v5449
  %v5895 = vpop.xlane.xlu0 %5894
  %5896 = vmax.xlane.f32.xlu0 %v5454
  %v5897 = vpop.xlane.xlu0 %5896
  %5898 = vmax.xlane.f32.xlu0 %v5457
  %v5899 = vpop.xlane.xlu0 %5898
  %5900 = vmax.xlane.f32.xlu0 %v5462
  %v5901 = vpop.xlane.xlu0 %5900
  %5902 = vmax.xlane.f32.xlu0 %v5465
  %v5903 = vpop.xlane.xlu0 %5902
  %5904 = vmax.xlane.f32.xlu0 %v5470
  %v5905 = vpop.xlane.xlu0 %5904
  %5906 = vmax.xlane.f32.xlu0 %v5473
  %v5907 = vpop.xlane.xlu0 %5906
  %5908 = vmax.xlane.f32.xlu0 %v5478
  %v5909 = vpop.xlane.xlu0 %5908
  %5910 = vmax.xlane.f32.xlu0 %v5481
  %v5911 = vpop.xlane.xlu0 %5910
  %5912 = vmax.xlane.f32.xlu0 %v5486
  %v5913 = vpop.xlane.xlu0 %5912
  %5914 = vmax.xlane.f32.xlu0 %v5489
  %v5915 = vpop.xlane.xlu0 %5914
  %5916 = vmax.xlane.f32.xlu0 %v5494
  %v5917 = vpop.xlane.xlu0 %5916
  %5918 = vmax.xlane.f32.xlu0 %v5497
  %v5919 = vpop.xlane.xlu0 %5918
  %5920 = vmax.xlane.f32.xlu0 %v5502
  %v5921 = vpop.xlane.xlu0 %5920
  %5922 = vmax.xlane.f32.xlu0 %v5505
  %v5923 = vpop.xlane.xlu0 %5922
  %5924 = vmax.xlane.f32.xlu0 %v5510
  %v5925 = vpop.xlane.xlu0 %5924
  %5926 = vmax.xlane.f32.xlu0 %v5513
  %v5927 = vpop.xlane.xlu0 %5926
  %5928 = vmax.xlane.f32.xlu0 %v5518
  %v5929 = vpop.xlane.xlu0 %5928
  %5930 = vmax.xlane.f32.xlu0 %v5521
  %v5931 = vpop.xlane.xlu0 %5930
  %5932 = vmax.xlane.f32.xlu0 %v5526
  %v5933 = vpop.xlane.xlu0 %5932
  %5934 = vmax.xlane.f32.xlu0 %v5529
  %v5935 = vpop.xlane.xlu0 %5934
  %5936 = vmax.xlane.f32.xlu0 %v5534
  %v5937 = vpop.xlane.xlu0 %5936
  %5938 = vmax.xlane.f32.xlu0 %v5537
  %v5939 = vpop.xlane.xlu0 %5938
  %5940 = vmax.xlane.f32.xlu0 %v5542
  %v5941 = vpop.xlane.xlu0 %5940
  %5942 = vmax.xlane.f32.xlu0 %v5545
  %v5943 = vpop.xlane.xlu0 %5942
  %5944 = vmax.xlane.f32.xlu0 %v5550
  %v5945 = vpop.xlane.xlu0 %5944
  %5946 = vmax.xlane.f32.xlu0 %v5553
  %v5947 = vpop.xlane.xlu0 %5946
  %5948 = vmax.xlane.f32.xlu0 %v5558
  %v5949 = vpop.xlane.xlu0 %5948
  %5950 = vmax.xlane.f32.xlu0 %v5561
  %v5951 = vpop.xlane.xlu0 %5950
  %5952 = vmax.xlane.f32.xlu0 %v5566
  %v5953 = vpop.xlane.xlu0 %5952
  %5954 = vmax.xlane.f32.xlu0 %v5569
  %v5955 = vpop.xlane.xlu0 %5954
  %5956 = vmax.xlane.f32.xlu0 %v5574
  %v5957 = vpop.xlane.xlu0 %5956
  %5958 = vmax.xlane.f32.xlu0 %v5577
  %v5959 = vpop.xlane.xlu0 %5958
  %5960 = vmax.xlane.f32.xlu0 %v5582
  %v5961 = vpop.xlane.xlu0 %5960
  %5962 = vmax.xlane.f32.xlu0 %v5585
  %v5963 = vpop.xlane.xlu0 %5962
  %5964 = vmax.xlane.f32.xlu0 %v5590
  %v5965 = vpop.xlane.xlu0 %5964
  %5966 = vmax.xlane.f32.xlu0 %v5593
  %v5967 = vpop.xlane.xlu0 %5966
  %5968 = vmax.xlane.f32.xlu0 %v5598
  %v5969 = vpop.xlane.xlu0 %5968
  %5970 = vmax.xlane.f32.xlu0 %v5601
  %v5971 = vpop.xlane.xlu0 %5970
  %5972 = vmax.xlane.f32.xlu0 %v5606
  %v5973 = vpop.xlane.xlu0 %5972
  %5974 = vmax.xlane.f32.xlu0 %v5609
  %v5975 = vpop.xlane.xlu0 %5974
  %5976 = vmax.xlane.f32.xlu0 %v5614
  %v5977 = vpop.xlane.xlu0 %5976
  %5978 = vmax.xlane.f32.xlu0 %v5617
  %v5979 = vpop.xlane.xlu0 %5978
  %5980 = vmax.xlane.f32.xlu0 %v5622
  %v5981 = vpop.xlane.xlu0 %5980
  %5982 = vmax.xlane.f32.xlu0 %v5625
  %v5983 = vpop.xlane.xlu0 %5982
  %5984 = vmax.xlane.f32.xlu0 %v5630
  %v5985 = vpop.xlane.xlu0 %5984
  %5986 = vmax.xlane.f32.xlu0 %v5633
  %v5987 = vpop.xlane.xlu0 %5986
  %5988 = vmax.xlane.f32.xlu0 %v5638
  %v5989 = vpop.xlane.xlu0 %5988
  %5990 = vmax.xlane.f32.xlu0 %v5641
  %v5991 = vpop.xlane.xlu0 %5990
  %5992 = vmax.xlane.f32.xlu0 %v5646
  %v5993 = vpop.xlane.xlu0 %5992
  %5994 = vmax.xlane.f32.xlu0 %v5649
  %v5995 = vpop.xlane.xlu0 %5994
  %5996 = vmax.xlane.f32.xlu0 %v5654
  %v5997 = vpop.xlane.xlu0 %5996
  %5998 = vmax.xlane.f32.xlu0 %v5657
  %v5999 = vpop.xlane.xlu0 %5998
  %6000 = vmax.xlane.f32.xlu0 %v5662
  %v6001 = vpop.xlane.xlu0 %6000
  %6002 = vmax.xlane.f32.xlu0 %v5665
  %v6003 = vpop.xlane.xlu0 %6002
  %6004 = vmax.xlane.f32.xlu0 %v5670
  %v6005 = vpop.xlane.xlu0 %6004
  %6006 = vmax.xlane.f32.xlu0 %v5673
  %v6007 = vpop.xlane.xlu0 %6006
  %6008 = vmax.xlane.f32.xlu0 %v5678
  %v6009 = vpop.xlane.xlu0 %6008
  %6010 = vmax.xlane.f32.xlu0 %v5681
  %v6011 = vpop.xlane.xlu0 %6010
  %6012 = vmax.xlane.f32.xlu0 %v5686
  %v6013 = vpop.xlane.xlu0 %6012
  %6014 = vmax.xlane.f32.xlu0 %v5689
  %v6015 = vpop.xlane.xlu0 %6014
  %6016 = vmax.xlane.f32.xlu0 %v5694
  %v6017 = vpop.xlane.xlu0 %6016
  %6018 = vmax.xlane.f32.xlu0 %v5697
  %v6019 = vpop.xlane.xlu0 %6018
  %6020 = vmax.xlane.f32.xlu0 %v5702
  %v6021 = vpop.xlane.xlu0 %6020
  %6022 = vmax.xlane.f32.xlu0 %v5705
  %v6023 = vpop.xlane.xlu0 %6022
  %6024 = vmax.xlane.f32.xlu0 %v5710
  %v6025 = vpop.xlane.xlu0 %6024
  %6026 = vmax.xlane.f32.xlu0 %v5713
  %v6027 = vpop.xlane.xlu0 %6026
  %6028 = vmax.xlane.f32.xlu0 %v5718
  %v6029 = vpop.xlane.xlu0 %6028
  %6030 = vmax.xlane.f32.xlu0 %v5721
  %v6031 = vpop.xlane.xlu0 %6030
  %6032 = vmax.xlane.f32.xlu0 %v5726
  %v6033 = vpop.xlane.xlu0 %6032
  %6034 = vmax.xlane.f32.xlu0 %v5729
  %v6035 = vpop.xlane.xlu0 %6034
  %6036 = vmax.xlane.f32.xlu0 %v5734
  %v6037 = vpop.xlane.xlu0 %6036
  %6038 = vmax.xlane.f32.xlu0 %v5737
  %v6039 = vpop.xlane.xlu0 %6038
  %6040 = vmax.xlane.f32.xlu0 %v5742
  %v6041 = vpop.xlane.xlu0 %6040
  %6042 = vmax.xlane.f32.xlu0 %v5745
  %v6043 = vpop.xlane.xlu0 %6042
  %6044 = vmax.xlane.f32.xlu0 %v5750
  %v6045 = vpop.xlane.xlu0 %6044
  %6046 = vmax.xlane.f32.xlu0 %v5753
  %v6047 = vpop.xlane.xlu0 %6046
  %6048 = vmax.xlane.f32.xlu0 %v5758
  %v6049 = vpop.xlane.xlu0 %6048
  %6050 = vmax.xlane.f32.xlu0 %v5761
  %v6051 = vpop.xlane.xlu0 %6050
  %6052 = vmax.xlane.f32.xlu0 %v5766
  %v6053 = vpop.xlane.xlu0 %6052
  %6054 = vmax.xlane.f32.xlu0 %v5769
  %v6055 = vpop.xlane.xlu0 %6054
  %6056 = vmax.xlane.f32.xlu0 %v5774
  %v6057 = vpop.xlane.xlu0 %6056
  %6058 = vmax.xlane.f32.xlu0 %v5777
  %v6059 = vpop.xlane.xlu0 %6058
  %6060 = vmax.xlane.f32.xlu0 %v5782
  %v6061 = vpop.xlane.xlu0 %6060
  %6062 = vmax.xlane.f32.xlu0 %v5785
  %v6063 = vpop.xlane.xlu0 %6062
  %6064 = vmax.xlane.f32.xlu0 %v5790
  %v6065 = vpop.xlane.xlu0 %6064
  %6066 = vmax.xlane.f32.xlu0 %v5793
  %v6067 = vpop.xlane.xlu0 %6066
  %6068 = vmax.xlane.f32.xlu0 %v5798
  %v6069 = vpop.xlane.xlu0 %6068
  %6070 = vmax.xlane.f32.xlu0 %v5801
  %v6071 = vpop.xlane.xlu0 %6070
  %6072 = vmax.xlane.f32.xlu0 %v5806
  %v6073 = vpop.xlane.xlu0 %6072
  %6074 = vmax.xlane.f32.xlu0 %v5809
  %v6075 = vpop.xlane.xlu0 %6074
  %6076 = vmax.xlane.f32.xlu0 %v5814
  %v6077 = vpop.xlane.xlu0 %6076
  %6078 = vmax.xlane.f32.xlu0 %v5817
  %v6079 = vpop.xlane.xlu0 %6078
  %6080 = vmax.xlane.f32.xlu0 %v5822
  %v6081 = vpop.xlane.xlu0 %6080
  %6082 = vmax.xlane.f32.xlu0 %v5825
  %v6083 = vpop.xlane.xlu0 %6082
  %v6084 = vsub.f32 %v5318, %v5829
  %v6085 = vsub.f32 %v5321, %v5831
  %v6086 = vsub.f32 %v5326, %v5833
  %v6087 = vsub.f32 %v5329, %v5835
  %v6088 = vsub.f32 %v5334, %v5837
  %v6089 = vsub.f32 %v5337, %v5839
  %v6090 = vsub.f32 %v5342, %v5841
  %v6091 = vsub.f32 %v5345, %v5843
  %v6092 = vsub.f32 %v5350, %v5845
  %v6093 = vsub.f32 %v5353, %v5847
  %v6094 = vsub.f32 %v5358, %v5849
  %v6095 = vsub.f32 %v5361, %v5851
  %v6096 = vsub.f32 %v5366, %v5853
  %v6097 = vsub.f32 %v5369, %v5855
  %v6098 = vsub.f32 %v5374, %v5857
  %v6099 = vsub.f32 %v5377, %v5859
  %v6100 = vsub.f32 %v5382, %v5861
  %v6101 = vsub.f32 %v5385, %v5863
  %v6102 = vsub.f32 %v5390, %v5865
  %v6103 = vsub.f32 %v5393, %v5867
  %v6104 = vsub.f32 %v5398, %v5869
  %v6105 = vsub.f32 %v5401, %v5871
  %v6106 = vsub.f32 %v5406, %v5873
  %v6107 = vsub.f32 %v5409, %v5875
  %v6108 = vsub.f32 %v5414, %v5877
  %v6109 = vsub.f32 %v5417, %v5879
  %v6110 = vsub.f32 %v5422, %v5881
  %v6111 = vsub.f32 %v5425, %v5883
  %v6112 = vsub.f32 %v5430, %v5885
  %v6113 = vsub.f32 %v5433, %v5887
  %v6114 = vsub.f32 %v5438, %v5889
  %v6115 = vsub.f32 %v5441, %v5891
  %v6116 = vsub.f32 %v5446, %v5893
  %v6117 = vsub.f32 %v5449, %v5895
  %v6118 = vsub.f32 %v5454, %v5897
  %v6119 = vsub.f32 %v5457, %v5899
  %v6120 = vsub.f32 %v5462, %v5901
  %v6121 = vsub.f32 %v5465, %v5903
  %v6122 = vsub.f32 %v5470, %v5905
  %v6123 = vsub.f32 %v5473, %v5907
  %v6124 = vsub.f32 %v5478, %v5909
  %v6125 = vsub.f32 %v5481, %v5911
  %v6126 = vsub.f32 %v5486, %v5913
  %v6127 = vsub.f32 %v5489, %v5915
  %v6128 = vsub.f32 %v5494, %v5917
  %v6129 = vsub.f32 %v5497, %v5919
  %v6130 = vsub.f32 %v5502, %v5921
  %v6131 = vsub.f32 %v5505, %v5923
  %v6132 = vsub.f32 %v5510, %v5925
  %v6133 = vsub.f32 %v5513, %v5927
  %v6134 = vsub.f32 %v5518, %v5929
  %v6135 = vsub.f32 %v5521, %v5931
  %v6136 = vsub.f32 %v5526, %v5933
  %v6137 = vsub.f32 %v5529, %v5935
  %v6138 = vsub.f32 %v5534, %v5937
  %v6139 = vsub.f32 %v5537, %v5939
  %v6140 = vsub.f32 %v5542, %v5941
  %v6141 = vsub.f32 %v5545, %v5943
  %v6142 = vsub.f32 %v5550, %v5945
  %v6143 = vsub.f32 %v5553, %v5947
  %v6144 = vsub.f32 %v5558, %v5949
  %v6145 = vsub.f32 %v5561, %v5951
  %v6146 = vsub.f32 %v5566, %v5953
  %v6147 = vsub.f32 %v5569, %v5955
  %v6148 = vsub.f32 %v5574, %v5957
  %v6149 = vsub.f32 %v5577, %v5959
  %v6150 = vsub.f32 %v5582, %v5961
  %v6151 = vsub.f32 %v5585, %v5963
  %v6152 = vsub.f32 %v5590, %v5965
  %v6153 = vsub.f32 %v5593, %v5967
  %v6154 = vsub.f32 %v5598, %v5969
  %v6155 = vsub.f32 %v5601, %v5971
  %v6156 = vsub.f32 %v5606, %v5973
  %v6157 = vsub.f32 %v5609, %v5975
  %v6158 = vsub.f32 %v5614, %v5977
  %v6159 = vsub.f32 %v5617, %v5979
  %v6160 = vsub.f32 %v5622, %v5981
  %v6161 = vsub.f32 %v5625, %v5983
  %v6162 = vsub.f32 %v5630, %v5985
  %v6163 = vsub.f32 %v5633, %v5987
  %v6164 = vsub.f32 %v5638, %v5989
  %v6165 = vsub.f32 %v5641, %v5991
  %v6166 = vsub.f32 %v5646, %v5993
  %v6167 = vsub.f32 %v5649, %v5995
  %v6168 = vsub.f32 %v5654, %v5997
  %v6169 = vsub.f32 %v5657, %v5999
  %v6170 = vsub.f32 %v5662, %v6001
  %v6171 = vsub.f32 %v5665, %v6003
  %v6172 = vsub.f32 %v5670, %v6005
  %v6173 = vsub.f32 %v5673, %v6007
  %v6174 = vsub.f32 %v5678, %v6009
  %v6175 = vsub.f32 %v5681, %v6011
  %v6176 = vsub.f32 %v5686, %v6013
  %v6177 = vsub.f32 %v5689, %v6015
  %v6178 = vsub.f32 %v5694, %v6017
  %v6179 = vsub.f32 %v5697, %v6019
  %v6180 = vsub.f32 %v5702, %v6021
  %v6181 = vsub.f32 %v5705, %v6023
  %v6182 = vsub.f32 %v5710, %v6025
  %v6183 = vsub.f32 %v5713, %v6027
  %v6184 = vsub.f32 %v5718, %v6029
  %v6185 = vsub.f32 %v5721, %v6031
  %v6186 = vsub.f32 %v5726, %v6033
  %v6187 = vsub.f32 %v5729, %v6035
  %v6188 = vsub.f32 %v5734, %v6037
  %v6189 = vsub.f32 %v5737, %v6039
  %v6190 = vsub.f32 %v5742, %v6041
  %v6191 = vsub.f32 %v5745, %v6043
  %v6192 = vsub.f32 %v5750, %v6045
  %v6193 = vsub.f32 %v5753, %v6047
  %v6194 = vsub.f32 %v5758, %v6049
  %v6195 = vsub.f32 %v5761, %v6051
  %v6196 = vsub.f32 %v5766, %v6053
  %v6197 = vsub.f32 %v5769, %v6055
  %v6198 = vsub.f32 %v5774, %v6057
  %v6199 = vsub.f32 %v5777, %v6059
  %v6200 = vsub.f32 %v5782, %v6061
  %v6201 = vsub.f32 %v5785, %v6063
  %v6202 = vsub.f32 %v5790, %v6065
  %v6203 = vsub.f32 %v5793, %v6067
  %v6204 = vsub.f32 %v5798, %v6069
  %v6205 = vsub.f32 %v5801, %v6071
  %v6206 = vsub.f32 %v5806, %v6073
  %v6207 = vsub.f32 %v5809, %v6075
  %v6208 = vsub.f32 %v5814, %v6077
  %v6209 = vsub.f32 %v5817, %v6079
  %v6210 = vsub.f32 %v5822, %v6081
  %v6211 = vsub.f32 %v5825, %v6083
  %v6212 = vmul.f32 %v6084, 1.442695
  %v6213 = vpow.pop %v6212
  %v6214 = vmul.f32 %v6085, 1.442695
  %v6215 = vpow.pop %v6214
  %v6216 = vmul.f32 %v6086, 1.442695
  %v6217 = vpow.pop %v6216
  %v6218 = vmul.f32 %v6087, 1.442695
  %v6219 = vpow.pop %v6218
  %v6220 = vmul.f32 %v6088, 1.442695
  %v6221 = vpow.pop %v6220
  %v6222 = vmul.f32 %v6089, 1.442695
  %v6223 = vpow.pop %v6222
  %v6224 = vmul.f32 %v6090, 1.442695
  %v6225 = vpow.pop %v6224
  %v6226 = vmul.f32 %v6091, 1.442695
  %v6227 = vpow.pop %v6226
  %v6228 = vmul.f32 %v6092, 1.442695
  %v6229 = vpow.pop %v6228
  %v6230 = vmul.f32 %v6093, 1.442695
  %v6231 = vpow.pop %v6230
  %v6232 = vmul.f32 %v6094, 1.442695
  %v6233 = vpow.pop %v6232
  %v6234 = vmul.f32 %v6095, 1.442695
  %v6235 = vpow.pop %v6234
  %v6236 = vmul.f32 %v6096, 1.442695
  %v6237 = vpow.pop %v6236
  %v6238 = vmul.f32 %v6097, 1.442695
  %v6239 = vpow.pop %v6238
  %v6240 = vmul.f32 %v6098, 1.442695
  %v6241 = vpow.pop %v6240
  %v6242 = vmul.f32 %v6099, 1.442695
  %v6243 = vpow.pop %v6242
  %v6244 = vmul.f32 %v6100, 1.442695
  %v6245 = vpow.pop %v6244
  %v6246 = vmul.f32 %v6101, 1.442695
  %v6247 = vpow.pop %v6246
  %v6248 = vmul.f32 %v6102, 1.442695
  %v6249 = vpow.pop %v6248
  %v6250 = vmul.f32 %v6103, 1.442695
  %v6251 = vpow.pop %v6250
  %v6252 = vmul.f32 %v6104, 1.442695
  %v6253 = vpow.pop %v6252
  %v6254 = vmul.f32 %v6105, 1.442695
  %v6255 = vpow.pop %v6254
  %v6256 = vmul.f32 %v6106, 1.442695
  %v6257 = vpow.pop %v6256
  %v6258 = vmul.f32 %v6107, 1.442695
  %v6259 = vpow.pop %v6258
  %v6260 = vmul.f32 %v6108, 1.442695
  %v6261 = vpow.pop %v6260
  %v6262 = vmul.f32 %v6109, 1.442695
  %v6263 = vpow.pop %v6262
  %v6264 = vmul.f32 %v6110, 1.442695
  %v6265 = vpow.pop %v6264
  %v6266 = vmul.f32 %v6111, 1.442695
  %v6267 = vpow.pop %v6266
  %v6268 = vmul.f32 %v6112, 1.442695
  %v6269 = vpow.pop %v6268
  %v6270 = vmul.f32 %v6113, 1.442695
  %v6271 = vpow.pop %v6270
  %v6272 = vmul.f32 %v6114, 1.442695
  %v6273 = vpow.pop %v6272
  %v6274 = vmul.f32 %v6115, 1.442695
  %v6275 = vpow.pop %v6274
  %v6276 = vmul.f32 %v6116, 1.442695
  %v6277 = vpow.pop %v6276
  %v6278 = vmul.f32 %v6117, 1.442695
  %v6279 = vpow.pop %v6278
  %v6280 = vmul.f32 %v6118, 1.442695
  %v6281 = vpow.pop %v6280
  %v6282 = vmul.f32 %v6119, 1.442695
  %v6283 = vpow.pop %v6282
  %v6284 = vmul.f32 %v6120, 1.442695
  %v6285 = vpow.pop %v6284
  %v6286 = vmul.f32 %v6121, 1.442695
  %v6287 = vpow.pop %v6286
  %v6288 = vmul.f32 %v6122, 1.442695
  %v6289 = vpow.pop %v6288
  %v6290 = vmul.f32 %v6123, 1.442695
  %v6291 = vpow.pop %v6290
  %v6292 = vmul.f32 %v6124, 1.442695
  %v6293 = vpow.pop %v6292
  %v6294 = vmul.f32 %v6125, 1.442695
  %v6295 = vpow.pop %v6294
  %v6296 = vmul.f32 %v6126, 1.442695
  %v6297 = vpow.pop %v6296
  %v6298 = vmul.f32 %v6127, 1.442695
  %v6299 = vpow.pop %v6298
  %v6300 = vmul.f32 %v6128, 1.442695
  %v6301 = vpow.pop %v6300
  %v6302 = vmul.f32 %v6129, 1.442695
  %v6303 = vpow.pop %v6302
  %v6304 = vmul.f32 %v6130, 1.442695
  %v6305 = vpow.pop %v6304
  %v6306 = vmul.f32 %v6131, 1.442695
  %v6307 = vpow.pop %v6306
  %v6308 = vmul.f32 %v6132, 1.442695
  %v6309 = vpow.pop %v6308
  %v6310 = vmul.f32 %v6133, 1.442695
  %v6311 = vpow.pop %v6310
  %v6312 = vmul.f32 %v6134, 1.442695
  %v6313 = vpow.pop %v6312
  %v6314 = vmul.f32 %v6135, 1.442695
  %v6315 = vpow.pop %v6314
  %v6316 = vmul.f32 %v6136, 1.442695
  %v6317 = vpow.pop %v6316
  %v6318 = vmul.f32 %v6137, 1.442695
  %v6319 = vpow.pop %v6318
  %v6320 = vmul.f32 %v6138, 1.442695
  %v6321 = vpow.pop %v6320
  %v6322 = vmul.f32 %v6139, 1.442695
  %v6323 = vpow.pop %v6322
  %v6324 = vmul.f32 %v6140, 1.442695
  %v6325 = vpow.pop %v6324
  %v6326 = vmul.f32 %v6141, 1.442695
  %v6327 = vpow.pop %v6326
  %v6328 = vmul.f32 %v6142, 1.442695
  %v6329 = vpow.pop %v6328
  %v6330 = vmul.f32 %v6143, 1.442695
  %v6331 = vpow.pop %v6330
  %v6332 = vmul.f32 %v6144, 1.442695
  %v6333 = vpow.pop %v6332
  %v6334 = vmul.f32 %v6145, 1.442695
  %v6335 = vpow.pop %v6334
  %v6336 = vmul.f32 %v6146, 1.442695
  %v6337 = vpow.pop %v6336
  %v6338 = vmul.f32 %v6147, 1.442695
  %v6339 = vpow.pop %v6338
  %v6340 = vmul.f32 %v6148, 1.442695
  %v6341 = vpow.pop %v6340
  %v6342 = vmul.f32 %v6149, 1.442695
  %v6343 = vpow.pop %v6342
  %v6344 = vmul.f32 %v6150, 1.442695
  %v6345 = vpow.pop %v6344
  %v6346 = vmul.f32 %v6151, 1.442695
  %v6347 = vpow.pop %v6346
  %v6348 = vmul.f32 %v6152, 1.442695
  %v6349 = vpow.pop %v6348
  %v6350 = vmul.f32 %v6153, 1.442695
  %v6351 = vpow.pop %v6350
  %v6352 = vmul.f32 %v6154, 1.442695
  %v6353 = vpow.pop %v6352
  %v6354 = vmul.f32 %v6155, 1.442695
  %v6355 = vpow.pop %v6354
  %v6356 = vmul.f32 %v6156, 1.442695
  %v6357 = vpow.pop %v6356
  %v6358 = vmul.f32 %v6157, 1.442695
  %v6359 = vpow.pop %v6358
  %v6360 = vmul.f32 %v6158, 1.442695
  %v6361 = vpow.pop %v6360
  %v6362 = vmul.f32 %v6159, 1.442695
  %v6363 = vpow.pop %v6362
  %v6364 = vmul.f32 %v6160, 1.442695
  %v6365 = vpow.pop %v6364
  %v6366 = vmul.f32 %v6161, 1.442695
  %v6367 = vpow.pop %v6366
  %v6368 = vmul.f32 %v6162, 1.442695
  %v6369 = vpow.pop %v6368
  %v6370 = vmul.f32 %v6163, 1.442695
  %v6371 = vpow.pop %v6370
  %v6372 = vmul.f32 %v6164, 1.442695
  %v6373 = vpow.pop %v6372
  %v6374 = vmul.f32 %v6165, 1.442695
  %v6375 = vpow.pop %v6374
  %v6376 = vmul.f32 %v6166, 1.442695
  %v6377 = vpow.pop %v6376
  %v6378 = vmul.f32 %v6167, 1.442695
  %v6379 = vpow.pop %v6378
  %v6380 = vmul.f32 %v6168, 1.442695
  %v6381 = vpow.pop %v6380
  %v6382 = vmul.f32 %v6169, 1.442695
  %v6383 = vpow.pop %v6382
  %v6384 = vmul.f32 %v6170, 1.442695
  %v6385 = vpow.pop %v6384
  %v6386 = vmul.f32 %v6171, 1.442695
  %v6387 = vpow.pop %v6386
  %v6388 = vmul.f32 %v6172, 1.442695
  %v6389 = vpow.pop %v6388
  %v6390 = vmul.f32 %v6173, 1.442695
  %v6391 = vpow.pop %v6390
  %v6392 = vmul.f32 %v6174, 1.442695
  %v6393 = vpow.pop %v6392
  %v6394 = vmul.f32 %v6175, 1.442695
  %v6395 = vpow.pop %v6394
  %v6396 = vmul.f32 %v6176, 1.442695
  %v6397 = vpow.pop %v6396
  %v6398 = vmul.f32 %v6177, 1.442695
  %v6399 = vpow.pop %v6398
  %v6400 = vmul.f32 %v6178, 1.442695
  %v6401 = vpow.pop %v6400
  %v6402 = vmul.f32 %v6179, 1.442695
  %v6403 = vpow.pop %v6402
  %v6404 = vmul.f32 %v6180, 1.442695
  %v6405 = vpow.pop %v6404
  %v6406 = vmul.f32 %v6181, 1.442695
  %v6407 = vpow.pop %v6406
  %v6408 = vmul.f32 %v6182, 1.442695
  %v6409 = vpow.pop %v6408
  %v6410 = vmul.f32 %v6183, 1.442695
  %v6411 = vpow.pop %v6410
  %v6412 = vmul.f32 %v6184, 1.442695
  %v6413 = vpow.pop %v6412
  %v6414 = vmul.f32 %v6185, 1.442695
  %v6415 = vpow.pop %v6414
  %v6416 = vmul.f32 %v6186, 1.442695
  %v6417 = vpow.pop %v6416
  %v6418 = vmul.f32 %v6187, 1.442695
  %v6419 = vpow.pop %v6418
  %v6420 = vmul.f32 %v6188, 1.442695
  %v6421 = vpow.pop %v6420
  %v6422 = vmul.f32 %v6189, 1.442695
  %v6423 = vpow.pop %v6422
  %v6424 = vmul.f32 %v6190, 1.442695
  %v6425 = vpow.pop %v6424
  %v6426 = vmul.f32 %v6191, 1.442695
  %v6427 = vpow.pop %v6426
  %v6428 = vmul.f32 %v6192, 1.442695
  %v6429 = vpow.pop %v6428
  %v6430 = vmul.f32 %v6193, 1.442695
  %v6431 = vpow.pop %v6430
  %v6432 = vmul.f32 %v6194, 1.442695
  %v6433 = vpow.pop %v6432
  %v6434 = vmul.f32 %v6195, 1.442695
  %v6435 = vpow.pop %v6434
  %v6436 = vmul.f32 %v6196, 1.442695
  %v6437 = vpow.pop %v6436
  %v6438 = vmul.f32 %v6197, 1.442695
  %v6439 = vpow.pop %v6438
  %v6440 = vmul.f32 %v6198, 1.442695
  %v6441 = vpow.pop %v6440
  %v6442 = vmul.f32 %v6199, 1.442695
  %v6443 = vpow.pop %v6442
  %v6444 = vmul.f32 %v6200, 1.442695
  %v6445 = vpow.pop %v6444
  %v6446 = vmul.f32 %v6201, 1.442695
  %v6447 = vpow.pop %v6446
  %v6448 = vmul.f32 %v6202, 1.442695
  %v6449 = vpow.pop %v6448
  %v6450 = vmul.f32 %v6203, 1.442695
  %v6451 = vpow.pop %v6450
  %v6452 = vmul.f32 %v6204, 1.442695
  %v6453 = vpow.pop %v6452
  %v6454 = vmul.f32 %v6205, 1.442695
  %v6455 = vpow.pop %v6454
  %v6456 = vmul.f32 %v6206, 1.442695
  %v6457 = vpow.pop %v6456
  %v6458 = vmul.f32 %v6207, 1.442695
  %v6459 = vpow.pop %v6458
  %v6460 = vmul.f32 %v6208, 1.442695
  %v6461 = vpow.pop %v6460
  %v6462 = vmul.f32 %v6209, 1.442695
  %v6463 = vpow.pop %v6462
  %v6464 = vmul.f32 %v6210, 1.442695
  %v6465 = vpow.pop %v6464
  %v6466 = vmul.f32 %v6211, 1.442695
  %v6467 = vpow.pop %v6466
  %6468 = vadd.xlane.f32.xlu0 %v6213
  %v6469 = vpop.xlane.xlu0 %6468
  %6470 = vadd.xlane.f32.xlu0 %v6215
  %v6471 = vpop.xlane.xlu0 %6470
  %6472 = vadd.xlane.f32.xlu0 %v6217
  %v6473 = vpop.xlane.xlu0 %6472
  %6474 = vadd.xlane.f32.xlu0 %v6219
  %v6475 = vpop.xlane.xlu0 %6474
  %6476 = vadd.xlane.f32.xlu0 %v6221
  %v6477 = vpop.xlane.xlu0 %6476
  %6478 = vadd.xlane.f32.xlu0 %v6223
  %v6479 = vpop.xlane.xlu0 %6478
  %6480 = vadd.xlane.f32.xlu0 %v6225
  %v6481 = vpop.xlane.xlu0 %6480
  %6482 = vadd.xlane.f32.xlu0 %v6227
  %v6483 = vpop.xlane.xlu0 %6482
  %6484 = vadd.xlane.f32.xlu0 %v6229
  %v6485 = vpop.xlane.xlu0 %6484
  %6486 = vadd.xlane.f32.xlu0 %v6231
  %v6487 = vpop.xlane.xlu0 %6486
  %6488 = vadd.xlane.f32.xlu0 %v6233
  %v6489 = vpop.xlane.xlu0 %6488
  %6490 = vadd.xlane.f32.xlu0 %v6235
  %v6491 = vpop.xlane.xlu0 %6490
  %6492 = vadd.xlane.f32.xlu0 %v6237
  %v6493 = vpop.xlane.xlu0 %6492
  %6494 = vadd.xlane.f32.xlu0 %v6239
  %v6495 = vpop.xlane.xlu0 %6494
  %6496 = vadd.xlane.f32.xlu0 %v6241
  %v6497 = vpop.xlane.xlu0 %6496
  %6498 = vadd.xlane.f32.xlu0 %v6243
  %v6499 = vpop.xlane.xlu0 %6498
  %6500 = vadd.xlane.f32.xlu0 %v6245
  %v6501 = vpop.xlane.xlu0 %6500
  %6502 = vadd.xlane.f32.xlu0 %v6247
  %v6503 = vpop.xlane.xlu0 %6502
  %6504 = vadd.xlane.f32.xlu0 %v6249
  %v6505 = vpop.xlane.xlu0 %6504
  %6506 = vadd.xlane.f32.xlu0 %v6251
  %v6507 = vpop.xlane.xlu0 %6506
  %6508 = vadd.xlane.f32.xlu0 %v6253
  %v6509 = vpop.xlane.xlu0 %6508
  %6510 = vadd.xlane.f32.xlu0 %v6255
  %v6511 = vpop.xlane.xlu0 %6510
  %6512 = vadd.xlane.f32.xlu0 %v6257
  %v6513 = vpop.xlane.xlu0 %6512
  %6514 = vadd.xlane.f32.xlu0 %v6259
  %v6515 = vpop.xlane.xlu0 %6514
  %6516 = vadd.xlane.f32.xlu0 %v6261
  %v6517 = vpop.xlane.xlu0 %6516
  %6518 = vadd.xlane.f32.xlu0 %v6263
  %v6519 = vpop.xlane.xlu0 %6518
  %6520 = vadd.xlane.f32.xlu0 %v6265
  %v6521 = vpop.xlane.xlu0 %6520
  %6522 = vadd.xlane.f32.xlu0 %v6267
  %v6523 = vpop.xlane.xlu0 %6522
  %6524 = vadd.xlane.f32.xlu0 %v6269
  %v6525 = vpop.xlane.xlu0 %6524
  %6526 = vadd.xlane.f32.xlu0 %v6271
  %v6527 = vpop.xlane.xlu0 %6526
  %6528 = vadd.xlane.f32.xlu0 %v6273
  %v6529 = vpop.xlane.xlu0 %6528
  %6530 = vadd.xlane.f32.xlu0 %v6275
  %v6531 = vpop.xlane.xlu0 %6530
  %6532 = vadd.xlane.f32.xlu0 %v6277
  %v6533 = vpop.xlane.xlu0 %6532
  %6534 = vadd.xlane.f32.xlu0 %v6279
  %v6535 = vpop.xlane.xlu0 %6534
  %6536 = vadd.xlane.f32.xlu0 %v6281
  %v6537 = vpop.xlane.xlu0 %6536
  %6538 = vadd.xlane.f32.xlu0 %v6283
  %v6539 = vpop.xlane.xlu0 %6538
  %6540 = vadd.xlane.f32.xlu0 %v6285
  %v6541 = vpop.xlane.xlu0 %6540
  %6542 = vadd.xlane.f32.xlu0 %v6287
  %v6543 = vpop.xlane.xlu0 %6542
  %6544 = vadd.xlane.f32.xlu0 %v6289
  %v6545 = vpop.xlane.xlu0 %6544
  %6546 = vadd.xlane.f32.xlu0 %v6291
  %v6547 = vpop.xlane.xlu0 %6546
  %6548 = vadd.xlane.f32.xlu0 %v6293
  %v6549 = vpop.xlane.xlu0 %6548
  %6550 = vadd.xlane.f32.xlu0 %v6295
  %v6551 = vpop.xlane.xlu0 %6550
  %6552 = vadd.xlane.f32.xlu0 %v6297
  %v6553 = vpop.xlane.xlu0 %6552
  %6554 = vadd.xlane.f32.xlu0 %v6299
  %v6555 = vpop.xlane.xlu0 %6554
  %6556 = vadd.xlane.f32.xlu0 %v6301
  %v6557 = vpop.xlane.xlu0 %6556
  %6558 = vadd.xlane.f32.xlu0 %v6303
  %v6559 = vpop.xlane.xlu0 %6558
  %6560 = vadd.xlane.f32.xlu0 %v6305
  %v6561 = vpop.xlane.xlu0 %6560
  %6562 = vadd.xlane.f32.xlu0 %v6307
  %v6563 = vpop.xlane.xlu0 %6562
  %6564 = vadd.xlane.f32.xlu0 %v6309
  %v6565 = vpop.xlane.xlu0 %6564
  %6566 = vadd.xlane.f32.xlu0 %v6311
  %v6567 = vpop.xlane.xlu0 %6566
  %6568 = vadd.xlane.f32.xlu0 %v6313
  %v6569 = vpop.xlane.xlu0 %6568
  %6570 = vadd.xlane.f32.xlu0 %v6315
  %v6571 = vpop.xlane.xlu0 %6570
  %6572 = vadd.xlane.f32.xlu0 %v6317
  %v6573 = vpop.xlane.xlu0 %6572
  %6574 = vadd.xlane.f32.xlu0 %v6319
  %v6575 = vpop.xlane.xlu0 %6574
  %6576 = vadd.xlane.f32.xlu0 %v6321
  %v6577 = vpop.xlane.xlu0 %6576
  %6578 = vadd.xlane.f32.xlu0 %v6323
  %v6579 = vpop.xlane.xlu0 %6578
  %6580 = vadd.xlane.f32.xlu0 %v6325
  %v6581 = vpop.xlane.xlu0 %6580
  %6582 = vadd.xlane.f32.xlu0 %v6327
  %v6583 = vpop.xlane.xlu0 %6582
  %6584 = vadd.xlane.f32.xlu0 %v6329
  %v6585 = vpop.xlane.xlu0 %6584
  %6586 = vadd.xlane.f32.xlu0 %v6331
  %v6587 = vpop.xlane.xlu0 %6586
  %6588 = vadd.xlane.f32.xlu0 %v6333
  %v6589 = vpop.xlane.xlu0 %6588
  %6590 = vadd.xlane.f32.xlu0 %v6335
  %v6591 = vpop.xlane.xlu0 %6590
  %6592 = vadd.xlane.f32.xlu0 %v6337
  %v6593 = vpop.xlane.xlu0 %6592
  %6594 = vadd.xlane.f32.xlu0 %v6339
  %v6595 = vpop.xlane.xlu0 %6594
  %6596 = vadd.xlane.f32.xlu0 %v6341
  %v6597 = vpop.xlane.xlu0 %6596
  %6598 = vadd.xlane.f32.xlu0 %v6343
  %v6599 = vpop.xlane.xlu0 %6598
  %6600 = vadd.xlane.f32.xlu0 %v6345
  %v6601 = vpop.xlane.xlu0 %6600
  %6602 = vadd.xlane.f32.xlu0 %v6347
  %v6603 = vpop.xlane.xlu0 %6602
  %6604 = vadd.xlane.f32.xlu0 %v6349
  %v6605 = vpop.xlane.xlu0 %6604
  %6606 = vadd.xlane.f32.xlu0 %v6351
  %v6607 = vpop.xlane.xlu0 %6606
  %6608 = vadd.xlane.f32.xlu0 %v6353
  %v6609 = vpop.xlane.xlu0 %6608
  %6610 = vadd.xlane.f32.xlu0 %v6355
  %v6611 = vpop.xlane.xlu0 %6610
  %6612 = vadd.xlane.f32.xlu0 %v6357
  %v6613 = vpop.xlane.xlu0 %6612
  %6614 = vadd.xlane.f32.xlu0 %v6359
  %v6615 = vpop.xlane.xlu0 %6614
  %6616 = vadd.xlane.f32.xlu0 %v6361
  %v6617 = vpop.xlane.xlu0 %6616
  %6618 = vadd.xlane.f32.xlu0 %v6363
  %v6619 = vpop.xlane.xlu0 %6618
  %6620 = vadd.xlane.f32.xlu0 %v6365
  %v6621 = vpop.xlane.xlu0 %6620
  %6622 = vadd.xlane.f32.xlu0 %v6367
  %v6623 = vpop.xlane.xlu0 %6622
  %6624 = vadd.xlane.f32.xlu0 %v6369
  %v6625 = vpop.xlane.xlu0 %6624
  %6626 = vadd.xlane.f32.xlu0 %v6371
  %v6627 = vpop.xlane.xlu0 %6626
  %6628 = vadd.xlane.f32.xlu0 %v6373
  %v6629 = vpop.xlane.xlu0 %6628
  %6630 = vadd.xlane.f32.xlu0 %v6375
  %v6631 = vpop.xlane.xlu0 %6630
  %6632 = vadd.xlane.f32.xlu0 %v6377
  %v6633 = vpop.xlane.xlu0 %6632
  %6634 = vadd.xlane.f32.xlu0 %v6379
  %v6635 = vpop.xlane.xlu0 %6634
  %6636 = vadd.xlane.f32.xlu0 %v6381
  %v6637 = vpop.xlane.xlu0 %6636
  %6638 = vadd.xlane.f32.xlu0 %v6383
  %v6639 = vpop.xlane.xlu0 %6638
  %6640 = vadd.xlane.f32.xlu0 %v6385
  %v6641 = vpop.xlane.xlu0 %6640
  %6642 = vadd.xlane.f32.xlu0 %v6387
  %v6643 = vpop.xlane.xlu0 %6642
  %6644 = vadd.xlane.f32.xlu0 %v6389
  %v6645 = vpop.xlane.xlu0 %6644
  %6646 = vadd.xlane.f32.xlu0 %v6391
  %v6647 = vpop.xlane.xlu0 %6646
  %6648 = vadd.xlane.f32.xlu0 %v6393
  %v6649 = vpop.xlane.xlu0 %6648
  %6650 = vadd.xlane.f32.xlu0 %v6395
  %v6651 = vpop.xlane.xlu0 %6650
  %6652 = vadd.xlane.f32.xlu0 %v6397
  %v6653 = vpop.xlane.xlu0 %6652
  %6654 = vadd.xlane.f32.xlu0 %v6399
  %v6655 = vpop.xlane.xlu0 %6654
  %6656 = vadd.xlane.f32.xlu0 %v6401
  %v6657 = vpop.xlane.xlu0 %6656
  %6658 = vadd.xlane.f32.xlu0 %v6403
  %v6659 = vpop.xlane.xlu0 %6658
  %6660 = vadd.xlane.f32.xlu0 %v6405
  %v6661 = vpop.xlane.xlu0 %6660
  %6662 = vadd.xlane.f32.xlu0 %v6407
  %v6663 = vpop.xlane.xlu0 %6662
  %6664 = vadd.xlane.f32.xlu0 %v6409
  %v6665 = vpop.xlane.xlu0 %6664
  %6666 = vadd.xlane.f32.xlu0 %v6411
  %v6667 = vpop.xlane.xlu0 %6666
  %6668 = vadd.xlane.f32.xlu0 %v6413
  %v6669 = vpop.xlane.xlu0 %6668
  %6670 = vadd.xlane.f32.xlu0 %v6415
  %v6671 = vpop.xlane.xlu0 %6670
  %6672 = vadd.xlane.f32.xlu0 %v6417
  %v6673 = vpop.xlane.xlu0 %6672
  %6674 = vadd.xlane.f32.xlu0 %v6419
  %v6675 = vpop.xlane.xlu0 %6674
  %6676 = vadd.xlane.f32.xlu0 %v6421
  %v6677 = vpop.xlane.xlu0 %6676
  %6678 = vadd.xlane.f32.xlu0 %v6423
  %v6679 = vpop.xlane.xlu0 %6678
  %6680 = vadd.xlane.f32.xlu0 %v6425
  %v6681 = vpop.xlane.xlu0 %6680
  %6682 = vadd.xlane.f32.xlu0 %v6427
  %v6683 = vpop.xlane.xlu0 %6682
  %6684 = vadd.xlane.f32.xlu0 %v6429
  %v6685 = vpop.xlane.xlu0 %6684
  %6686 = vadd.xlane.f32.xlu0 %v6431
  %v6687 = vpop.xlane.xlu0 %6686
  %6688 = vadd.xlane.f32.xlu0 %v6433
  %v6689 = vpop.xlane.xlu0 %6688
  %6690 = vadd.xlane.f32.xlu0 %v6435
  %v6691 = vpop.xlane.xlu0 %6690
  %6692 = vadd.xlane.f32.xlu0 %v6437
  %v6693 = vpop.xlane.xlu0 %6692
  %6694 = vadd.xlane.f32.xlu0 %v6439
  %v6695 = vpop.xlane.xlu0 %6694
  %6696 = vadd.xlane.f32.xlu0 %v6441
  %v6697 = vpop.xlane.xlu0 %6696
  %6698 = vadd.xlane.f32.xlu0 %v6443
  %v6699 = vpop.xlane.xlu0 %6698
  %6700 = vadd.xlane.f32.xlu0 %v6445
  %v6701 = vpop.xlane.xlu0 %6700
  %6702 = vadd.xlane.f32.xlu0 %v6447
  %v6703 = vpop.xlane.xlu0 %6702
  %6704 = vadd.xlane.f32.xlu0 %v6449
  %v6705 = vpop.xlane.xlu0 %6704
  %6706 = vadd.xlane.f32.xlu0 %v6451
  %v6707 = vpop.xlane.xlu0 %6706
  %6708 = vadd.xlane.f32.xlu0 %v6453
  %v6709 = vpop.xlane.xlu0 %6708
  %6710 = vadd.xlane.f32.xlu0 %v6455
  %v6711 = vpop.xlane.xlu0 %6710
  %6712 = vadd.xlane.f32.xlu0 %v6457
  %v6713 = vpop.xlane.xlu0 %6712
  %6714 = vadd.xlane.f32.xlu0 %v6459
  %v6715 = vpop.xlane.xlu0 %6714
  %6716 = vadd.xlane.f32.xlu0 %v6461
  %v6717 = vpop.xlane.xlu0 %6716
  %6718 = vadd.xlane.f32.xlu0 %v6463
  %v6719 = vpop.xlane.xlu0 %6718
  %6720 = vadd.xlane.f32.xlu0 %v6465
  %v6721 = vpop.xlane.xlu0 %6720
  %6722 = vadd.xlane.f32.xlu0 %v6467
  %v6723 = vpop.xlane.xlu0 %6722
  %v6724 = vrcp.pop %v6469
  %v6725 = vrcp.pop %v6471
  %v6726 = vrcp.pop %v6473
  %v6727 = vrcp.pop %v6475
  %v6728 = vrcp.pop %v6477
  %v6729 = vrcp.pop %v6479
  %v6730 = vrcp.pop %v6481
  %v6731 = vrcp.pop %v6483
  %v6732 = vrcp.pop %v6485
  %v6733 = vrcp.pop %v6487
  %v6734 = vrcp.pop %v6489
  %v6735 = vrcp.pop %v6491
  %v6736 = vrcp.pop %v6493
  %v6737 = vrcp.pop %v6495
  %v6738 = vrcp.pop %v6497
  %v6739 = vrcp.pop %v6499
  %v6740 = vrcp.pop %v6501
  %v6741 = vrcp.pop %v6503
  %v6742 = vrcp.pop %v6505
  %v6743 = vrcp.pop %v6507
  %v6744 = vrcp.pop %v6509
  %v6745 = vrcp.pop %v6511
  %v6746 = vrcp.pop %v6513
  %v6747 = vrcp.pop %v6515
  %v6748 = vrcp.pop %v6517
  %v6749 = vrcp.pop %v6519
  %v6750 = vrcp.pop %v6521
  %v6751 = vrcp.pop %v6523
  %v6752 = vrcp.pop %v6525
  %v6753 = vrcp.pop %v6527
  %v6754 = vrcp.pop %v6529
  %v6755 = vrcp.pop %v6531
  %v6756 = vrcp.pop %v6533
  %v6757 = vrcp.pop %v6535
  %v6758 = vrcp.pop %v6537
  %v6759 = vrcp.pop %v6539
  %v6760 = vrcp.pop %v6541
  %v6761 = vrcp.pop %v6543
  %v6762 = vrcp.pop %v6545
  %v6763 = vrcp.pop %v6547
  %v6764 = vrcp.pop %v6549
  %v6765 = vrcp.pop %v6551
  %v6766 = vrcp.pop %v6553
  %v6767 = vrcp.pop %v6555
  %v6768 = vrcp.pop %v6557
  %v6769 = vrcp.pop %v6559
  %v6770 = vrcp.pop %v6561
  %v6771 = vrcp.pop %v6563
  %v6772 = vrcp.pop %v6565
  %v6773 = vrcp.pop %v6567
  %v6774 = vrcp.pop %v6569
  %v6775 = vrcp.pop %v6571
  %v6776 = vrcp.pop %v6573
  %v6777 = vrcp.pop %v6575
  %v6778 = vrcp.pop %v6577
  %v6779 = vrcp.pop %v6579
  %v6780 = vrcp.pop %v6581
  %v6781 = vrcp.pop %v6583
  %v6782 = vrcp.pop %v6585
  %v6783 = vrcp.pop %v6587
  %v6784 = vrcp.pop %v6589
  %v6785 = vrcp.pop %v6591
  %v6786 = vrcp.pop %v6593
  %v6787 = vrcp.pop %v6595
  %v6788 = vrcp.pop %v6597
  %v6789 = vrcp.pop %v6599
  %v6790 = vrcp.pop %v6601
  %v6791 = vrcp.pop %v6603
  %v6792 = vrcp.pop %v6605
  %v6793 = vrcp.pop %v6607
  %v6794 = vrcp.pop %v6609
  %v6795 = vrcp.pop %v6611
  %v6796 = vrcp.pop %v6613
  %v6797 = vrcp.pop %v6615
  %v6798 = vrcp.pop %v6617
  %v6799 = vrcp.pop %v6619
  %v6800 = vrcp.pop %v6621
  %v6801 = vrcp.pop %v6623
  %v6802 = vrcp.pop %v6625
  %v6803 = vrcp.pop %v6627
  %v6804 = vrcp.pop %v6629
  %v6805 = vrcp.pop %v6631
  %v6806 = vrcp.pop %v6633
  %v6807 = vrcp.pop %v6635
  %v6808 = vrcp.pop %v6637
  %v6809 = vrcp.pop %v6639
  %v6810 = vrcp.pop %v6641
  %v6811 = vrcp.pop %v6643
  %v6812 = vrcp.pop %v6645
  %v6813 = vrcp.pop %v6647
  %v6814 = vrcp.pop %v6649
  %v6815 = vrcp.pop %v6651
  %v6816 = vrcp.pop %v6653
  %v6817 = vrcp.pop %v6655
  %v6818 = vrcp.pop %v6657
  %v6819 = vrcp.pop %v6659
  %v6820 = vrcp.pop %v6661
  %v6821 = vrcp.pop %v6663
  %v6822 = vrcp.pop %v6665
  %v6823 = vrcp.pop %v6667
  %v6824 = vrcp.pop %v6669
  %v6825 = vrcp.pop %v6671
  %v6826 = vrcp.pop %v6673
  %v6827 = vrcp.pop %v6675
  %v6828 = vrcp.pop %v6677
  %v6829 = vrcp.pop %v6679
  %v6830 = vrcp.pop %v6681
  %v6831 = vrcp.pop %v6683
  %v6832 = vrcp.pop %v6685
  %v6833 = vrcp.pop %v6687
  %v6834 = vrcp.pop %v6689
  %v6835 = vrcp.pop %v6691
  %v6836 = vrcp.pop %v6693
  %v6837 = vrcp.pop %v6695
  %v6838 = vrcp.pop %v6697
  %v6839 = vrcp.pop %v6699
  %v6840 = vrcp.pop %v6701
  %v6841 = vrcp.pop %v6703
  %v6842 = vrcp.pop %v6705
  %v6843 = vrcp.pop %v6707
  %v6844 = vrcp.pop %v6709
  %v6845 = vrcp.pop %v6711
  %v6846 = vrcp.pop %v6713
  %v6847 = vrcp.pop %v6715
  %v6848 = vrcp.pop %v6717
  %v6849 = vrcp.pop %v6719
  %v6850 = vrcp.pop %v6721
  %v6851 = vrcp.pop %v6723
  %v6852 = vmul.f32 %v6213, %v6724
  %v6853 = vmul.f32 %v6215, %v6725
  %v6854 = vmul.f32 %v6217, %v6726
  %v6855 = vmul.f32 %v6219, %v6727
  %v6856 = vmul.f32 %v6221, %v6728
  %v6857 = vmul.f32 %v6223, %v6729
  %v6858 = vmul.f32 %v6225, %v6730
  %v6859 = vmul.f32 %v6227, %v6731
  %v6860 = vmul.f32 %v6229, %v6732
  %v6861 = vmul.f32 %v6231, %v6733
  %v6862 = vmul.f32 %v6233, %v6734
  %v6863 = vmul.f32 %v6235, %v6735
  %v6864 = vmul.f32 %v6237, %v6736
  %v6865 = vmul.f32 %v6239, %v6737
  %v6866 = vmul.f32 %v6241, %v6738
  %v6867 = vmul.f32 %v6243, %v6739
  %v6868 = vmul.f32 %v6245, %v6740
  %v6869 = vmul.f32 %v6247, %v6741
  %v6870 = vmul.f32 %v6249, %v6742
  %v6871 = vmul.f32 %v6251, %v6743
  %v6872 = vmul.f32 %v6253, %v6744
  %v6873 = vmul.f32 %v6255, %v6745
  %v6874 = vmul.f32 %v6257, %v6746
  %v6875 = vmul.f32 %v6259, %v6747
  %v6876 = vmul.f32 %v6261, %v6748
  %v6877 = vmul.f32 %v6263, %v6749
  %v6878 = vmul.f32 %v6265, %v6750
  %v6879 = vmul.f32 %v6267, %v6751
  %v6880 = vmul.f32 %v6269, %v6752
  %v6881 = vmul.f32 %v6271, %v6753
  %v6882 = vmul.f32 %v6273, %v6754
  %v6883 = vmul.f32 %v6275, %v6755
  %v6884 = vmul.f32 %v6277, %v6756
  %v6885 = vmul.f32 %v6279, %v6757
  %v6886 = vmul.f32 %v6281, %v6758
  %v6887 = vmul.f32 %v6283, %v6759
  %v6888 = vmul.f32 %v6285, %v6760
  %v6889 = vmul.f32 %v6287, %v6761
  %v6890 = vmul.f32 %v6289, %v6762
  %v6891 = vmul.f32 %v6291, %v6763
  %v6892 = vmul.f32 %v6293, %v6764
  %v6893 = vmul.f32 %v6295, %v6765
  %v6894 = vmul.f32 %v6297, %v6766
  %v6895 = vmul.f32 %v6299, %v6767
  %v6896 = vmul.f32 %v6301, %v6768
  %v6897 = vmul.f32 %v6303, %v6769
  %v6898 = vmul.f32 %v6305, %v6770
  %v6899 = vmul.f32 %v6307, %v6771
  %v6900 = vmul.f32 %v6309, %v6772
  %v6901 = vmul.f32 %v6311, %v6773
  %v6902 = vmul.f32 %v6313, %v6774
  %v6903 = vmul.f32 %v6315, %v6775
  %v6904 = vmul.f32 %v6317, %v6776
  %v6905 = vmul.f32 %v6319, %v6777
  %v6906 = vmul.f32 %v6321, %v6778
  %v6907 = vmul.f32 %v6323, %v6779
  %v6908 = vmul.f32 %v6325, %v6780
  %v6909 = vmul.f32 %v6327, %v6781
  %v6910 = vmul.f32 %v6329, %v6782
  %v6911 = vmul.f32 %v6331, %v6783
  %v6912 = vmul.f32 %v6333, %v6784
  %v6913 = vmul.f32 %v6335, %v6785
  %v6914 = vmul.f32 %v6337, %v6786
  %v6915 = vmul.f32 %v6339, %v6787
  %v6916 = vmul.f32 %v6341, %v6788
  %v6917 = vmul.f32 %v6343, %v6789
  %v6918 = vmul.f32 %v6345, %v6790
  %v6919 = vmul.f32 %v6347, %v6791
  %v6920 = vmul.f32 %v6349, %v6792
  %v6921 = vmul.f32 %v6351, %v6793
  %v6922 = vmul.f32 %v6353, %v6794
  %v6923 = vmul.f32 %v6355, %v6795
  %v6924 = vmul.f32 %v6357, %v6796
  %v6925 = vmul.f32 %v6359, %v6797
  %v6926 = vmul.f32 %v6361, %v6798
  %v6927 = vmul.f32 %v6363, %v6799
  %v6928 = vmul.f32 %v6365, %v6800
  %v6929 = vmul.f32 %v6367, %v6801
  %v6930 = vmul.f32 %v6369, %v6802
  %v6931 = vmul.f32 %v6371, %v6803
  %v6932 = vmul.f32 %v6373, %v6804
  %v6933 = vmul.f32 %v6375, %v6805
  %v6934 = vmul.f32 %v6377, %v6806
  %v6935 = vmul.f32 %v6379, %v6807
  %v6936 = vmul.f32 %v6381, %v6808
  %v6937 = vmul.f32 %v6383, %v6809
  %v6938 = vmul.f32 %v6385, %v6810
  %v6939 = vmul.f32 %v6387, %v6811
  %v6940 = vmul.f32 %v6389, %v6812
  %v6941 = vmul.f32 %v6391, %v6813
  %v6942 = vmul.f32 %v6393, %v6814
  %v6943 = vmul.f32 %v6395, %v6815
  %v6944 = vmul.f32 %v6397, %v6816
  %v6945 = vmul.f32 %v6399, %v6817
  %v6946 = vmul.f32 %v6401, %v6818
  %v6947 = vmul.f32 %v6403, %v6819
  %v6948 = vmul.f32 %v6405, %v6820
  %v6949 = vmul.f32 %v6407, %v6821
  %v6950 = vmul.f32 %v6409, %v6822
  %v6951 = vmul.f32 %v6411, %v6823
  %v6952 = vmul.f32 %v6413, %v6824
  %v6953 = vmul.f32 %v6415, %v6825
  %v6954 = vmul.f32 %v6417, %v6826
  %v6955 = vmul.f32 %v6419, %v6827
  %v6956 = vmul.f32 %v6421, %v6828
  %v6957 = vmul.f32 %v6423, %v6829
  %v6958 = vmul.f32 %v6425, %v6830
  %v6959 = vmul.f32 %v6427, %v6831
  %v6960 = vmul.f32 %v6429, %v6832
  %v6961 = vmul.f32 %v6431, %v6833
  %v6962 = vmul.f32 %v6433, %v6834
  %v6963 = vmul.f32 %v6435, %v6835
  %v6964 = vmul.f32 %v6437, %v6836
  %v6965 = vmul.f32 %v6439, %v6837
  %v6966 = vmul.f32 %v6441, %v6838
  %v6967 = vmul.f32 %v6443, %v6839
  %v6968 = vmul.f32 %v6445, %v6840
  %v6969 = vmul.f32 %v6447, %v6841
  %v6970 = vmul.f32 %v6449, %v6842
  %v6971 = vmul.f32 %v6451, %v6843
  %v6972 = vmul.f32 %v6453, %v6844
  %v6973 = vmul.f32 %v6455, %v6845
  %v6974 = vmul.f32 %v6457, %v6846
  %v6975 = vmul.f32 %v6459, %v6847
  %v6976 = vmul.f32 %v6461, %v6848
  %v6977 = vmul.f32 %v6463, %v6849
  %v6978 = vmul.f32 %v6465, %v6850
  %v6979 = vmul.f32 %v6467, %v6851
  %vm6980 = vcmask 23552
  %6981 = vst.msk [vmem:[%s7] sm:$0xff] %vm6980, %v6852
  %6982 = vst.msk [vmem:[%s7 + $0x8] sm:$0xff] %vm6980, %v6853
  %6983 = vst.msk [vmem:[%s7 + $0x10] sm:$0xff] %vm6980, %v6854
  %6984 = vst.msk [vmem:[%s7 + $0x18] sm:$0xff] %vm6980, %v6855
  %6985 = vst.msk [vmem:[%s7 + $0x20] sm:$0xff] %vm6980, %v6856
  %6986 = vst.msk [vmem:[%s7 + $0x28] sm:$0xff] %vm6980, %v6857
  %6987 = vst.msk [vmem:[%s7 + $0x30] sm:$0xff] %vm6980, %v6858
  %6988 = vst.msk [vmem:[%s7 + $0x38] sm:$0xff] %vm6980, %v6859
  %6989 = vst.msk [vmem:[%s7 + $0x40] sm:$0xff] %vm6980, %v6860
  %6990 = vst.msk [vmem:[%s7 + $0x48] sm:$0xff] %vm6980, %v6861
  %6991 = vst.msk [vmem:[%s7 + $0x50] sm:$0xff] %vm6980, %v6862
  %6992 = vst.msk [vmem:[%s7 + $0x58] sm:$0xff] %vm6980, %v6863
  %6993 = vst.msk [vmem:[%s7 + $0x60] sm:$0xff] %vm6980, %v6864
  %6994 = vst.msk [vmem:[%s7 + $0x68] sm:$0xff] %vm6980, %v6865
  %6995 = vst.msk [vmem:[%s7 + $0x70] sm:$0xff] %vm6980, %v6866
  %6996 = vst.msk [vmem:[%s7 + $0x78] sm:$0xff] %vm6980, %v6867
  %6997 = vst.msk [vmem:[%s7 + $0x80] sm:$0xff] %vm6980, %v6868
  %6998 = vst.msk [vmem:[%s7 + $0x88] sm:$0xff] %vm6980, %v6869
  %6999 = vst.msk [vmem:[%s7 + $0x90] sm:$0xff] %vm6980, %v6870
  %7000 = vst.msk [vmem:[%s7 + $0x98] sm:$0xff] %vm6980, %v6871
  %7001 = vst.msk [vmem:[%s7 + $0xa0] sm:$0xff] %vm6980, %v6872
  %7002 = vst.msk [vmem:[%s7 + $0xa8] sm:$0xff] %vm6980, %v6873
  %7003 = vst.msk [vmem:[%s7 + $0xb0] sm:$0xff] %vm6980, %v6874
  %7004 = vst.msk [vmem:[%s7 + $0xb8] sm:$0xff] %vm6980, %v6875
  %7005 = vst.msk [vmem:[%s7 + $0xc0] sm:$0xff] %vm6980, %v6876
  %7006 = vst.msk [vmem:[%s7 + $0xc8] sm:$0xff] %vm6980, %v6877
  %7007 = vst.msk [vmem:[%s7 + $0xd0] sm:$0xff] %vm6980, %v6878
  %7008 = vst.msk [vmem:[%s7 + $0xd8] sm:$0xff] %vm6980, %v6879
  %7009 = vst.msk [vmem:[%s7 + $0xe0] sm:$0xff] %vm6980, %v6880
  %7010 = vst.msk [vmem:[%s7 + $0xe8] sm:$0xff] %vm6980, %v6881
  %7011 = vst.msk [vmem:[%s7 + $0xf0] sm:$0xff] %vm6980, %v6882
  %7012 = vst.msk [vmem:[%s7 + $0xf8] sm:$0xff] %vm6980, %v6883
  %7013 = vst.msk [vmem:[%s7 + $0x100] sm:$0xff] %vm6980, %v6884
  %7014 = vst.msk [vmem:[%s7 + $0x108] sm:$0xff] %vm6980, %v6885
  %7015 = vst.msk [vmem:[%s7 + $0x110] sm:$0xff] %vm6980, %v6886
  %7016 = vst.msk [vmem:[%s7 + $0x118] sm:$0xff] %vm6980, %v6887
  %7017 = vst.msk [vmem:[%s7 + $0x120] sm:$0xff] %vm6980, %v6888
  %7018 = vst.msk [vmem:[%s7 + $0x128] sm:$0xff] %vm6980, %v6889
  %7019 = vst.msk [vmem:[%s7 + $0x130] sm:$0xff] %vm6980, %v6890
  %7020 = vst.msk [vmem:[%s7 + $0x138] sm:$0xff] %vm6980, %v6891
  %7021 = vst.msk [vmem:[%s7 + $0x140] sm:$0xff] %vm6980, %v6892
  %7022 = vst.msk [vmem:[%s7 + $0x148] sm:$0xff] %vm6980, %v6893
  %7023 = vst.msk [vmem:[%s7 + $0x150] sm:$0xff] %vm6980, %v6894
  %7024 = vst.msk [vmem:[%s7 + $0x158] sm:$0xff] %vm6980, %v6895
  %7025 = vst.msk [vmem:[%s7 + $0x160] sm:$0xff] %vm6980, %v6896
  %7026 = vst.msk [vmem:[%s7 + $0x168] sm:$0xff] %vm6980, %v6897
  %7027 = vst.msk [vmem:[%s7 + $0x170] sm:$0xff] %vm6980, %v6898
  %7028 = vst.msk [vmem:[%s7 + $0x178] sm:$0xff] %vm6980, %v6899
  %7029 = vst.msk [vmem:[%s7 + $0x180] sm:$0xff] %vm6980, %v6900
  %7030 = vst.msk [vmem:[%s7 + $0x188] sm:$0xff] %vm6980, %v6901
  %7031 = vst.msk [vmem:[%s7 + $0x190] sm:$0xff] %vm6980, %v6902
  %7032 = vst.msk [vmem:[%s7 + $0x198] sm:$0xff] %vm6980, %v6903
  %7033 = vst.msk [vmem:[%s7 + $0x1a0] sm:$0xff] %vm6980, %v6904
  %7034 = vst.msk [vmem:[%s7 + $0x1a8] sm:$0xff] %vm6980, %v6905
  %7035 = vst.msk [vmem:[%s7 + $0x1b0] sm:$0xff] %vm6980, %v6906
  %7036 = vst.msk [vmem:[%s7 + $0x1b8] sm:$0xff] %vm6980, %v6907
  %7037 = vst.msk [vmem:[%s7 + $0x1c0] sm:$0xff] %vm6980, %v6908
  %7038 = vst.msk [vmem:[%s7 + $0x1c8] sm:$0xff] %vm6980, %v6909
  %7039 = vst.msk [vmem:[%s7 + $0x1d0] sm:$0xff] %vm6980, %v6910
  %7040 = vst.msk [vmem:[%s7 + $0x1d8] sm:$0xff] %vm6980, %v6911
  %7041 = vst.msk [vmem:[%s7 + $0x1e0] sm:$0xff] %vm6980, %v6912
  %7042 = vst.msk [vmem:[%s7 + $0x1e8] sm:$0xff] %vm6980, %v6913
  %7043 = vst.msk [vmem:[%s7 + $0x1f0] sm:$0xff] %vm6980, %v6914
  %7044 = vst.msk [vmem:[%s7 + $0x1f8] sm:$0xff] %vm6980, %v6915
  %7045 = vst.msk [vmem:[%s7 + $0x200] sm:$0xff] %vm6980, %v6916
  %7046 = vst.msk [vmem:[%s7 + $0x208] sm:$0xff] %vm6980, %v6917
  %7047 = vst.msk [vmem:[%s7 + $0x210] sm:$0xff] %vm6980, %v6918
  %7048 = vst.msk [vmem:[%s7 + $0x218] sm:$0xff] %vm6980, %v6919
  %7049 = vst.msk [vmem:[%s7 + $0x220] sm:$0xff] %vm6980, %v6920
  %7050 = vst.msk [vmem:[%s7 + $0x228] sm:$0xff] %vm6980, %v6921
  %7051 = vst.msk [vmem:[%s7 + $0x230] sm:$0xff] %vm6980, %v6922
  %7052 = vst.msk [vmem:[%s7 + $0x238] sm:$0xff] %vm6980, %v6923
  %7053 = vst.msk [vmem:[%s7 + $0x240] sm:$0xff] %vm6980, %v6924
  %7054 = vst.msk [vmem:[%s7 + $0x248] sm:$0xff] %vm6980, %v6925
  %7055 = vst.msk [vmem:[%s7 + $0x250] sm:$0xff] %vm6980, %v6926
  %7056 = vst.msk [vmem:[%s7 + $0x258] sm:$0xff] %vm6980, %v6927
  %7057 = vst.msk [vmem:[%s7 + $0x260] sm:$0xff] %vm6980, %v6928
  %7058 = vst.msk [vmem:[%s7 + $0x268] sm:$0xff] %vm6980, %v6929
  %7059 = vst.msk [vmem:[%s7 + $0x270] sm:$0xff] %vm6980, %v6930
  %7060 = vst.msk [vmem:[%s7 + $0x278] sm:$0xff] %vm6980, %v6931
  %7061 = vst.msk [vmem:[%s7 + $0x280] sm:$0xff] %vm6980, %v6932
  %7062 = vst.msk [vmem:[%s7 + $0x288] sm:$0xff] %vm6980, %v6933
  %7063 = vst.msk [vmem:[%s7 + $0x290] sm:$0xff] %vm6980, %v6934
  %7064 = vst.msk [vmem:[%s7 + $0x298] sm:$0xff] %vm6980, %v6935
  %7065 = vst.msk [vmem:[%s7 + $0x2a0] sm:$0xff] %vm6980, %v6936
  %7066 = vst.msk [vmem:[%s7 + $0x2a8] sm:$0xff] %vm6980, %v6937
  %7067 = vst.msk [vmem:[%s7 + $0x2b0] sm:$0xff] %vm6980, %v6938
  %7068 = vst.msk [vmem:[%s7 + $0x2b8] sm:$0xff] %vm6980, %v6939
  %7069 = vst.msk [vmem:[%s7 + $0x2c0] sm:$0xff] %vm6980, %v6940
  %7070 = vst.msk [vmem:[%s7 + $0x2c8] sm:$0xff] %vm6980, %v6941
  %7071 = vst.msk [vmem:[%s7 + $0x2d0] sm:$0xff] %vm6980, %v6942
  %7072 = vst.msk [vmem:[%s7 + $0x2d8] sm:$0xff] %vm6980, %v6943
  %7073 = vst.msk [vmem:[%s7 + $0x2e0] sm:$0xff] %vm6980, %v6944
  %7074 = vst.msk [vmem:[%s7 + $0x2e8] sm:$0xff] %vm6980, %v6945
  %7075 = vst.msk [vmem:[%s7 + $0x2f0] sm:$0xff] %vm6980, %v6946
  %7076 = vst.msk [vmem:[%s7 + $0x2f8] sm:$0xff] %vm6980, %v6947
  %7077 = vst.msk [vmem:[%s7 + $0x300] sm:$0xff] %vm6980, %v6948
  %7078 = vst.msk [vmem:[%s7 + $0x308] sm:$0xff] %vm6980, %v6949
  %7079 = vst.msk [vmem:[%s7 + $0x310] sm:$0xff] %vm6980, %v6950
  %7080 = vst.msk [vmem:[%s7 + $0x318] sm:$0xff] %vm6980, %v6951
  %7081 = vst.msk [vmem:[%s7 + $0x320] sm:$0xff] %vm6980, %v6952
  %7082 = vst.msk [vmem:[%s7 + $0x328] sm:$0xff] %vm6980, %v6953
  %7083 = vst.msk [vmem:[%s7 + $0x330] sm:$0xff] %vm6980, %v6954
  %7084 = vst.msk [vmem:[%s7 + $0x338] sm:$0xff] %vm6980, %v6955
  %7085 = vst.msk [vmem:[%s7 + $0x340] sm:$0xff] %vm6980, %v6956
  %7086 = vst.msk [vmem:[%s7 + $0x348] sm:$0xff] %vm6980, %v6957
  %7087 = vst.msk [vmem:[%s7 + $0x350] sm:$0xff] %vm6980, %v6958
  %7088 = vst.msk [vmem:[%s7 + $0x358] sm:$0xff] %vm6980, %v6959
  %7089 = vst.msk [vmem:[%s7 + $0x360] sm:$0xff] %vm6980, %v6960
  %7090 = vst.msk [vmem:[%s7 + $0x368] sm:$0xff] %vm6980, %v6961
  %7091 = vst.msk [vmem:[%s7 + $0x370] sm:$0xff] %vm6980, %v6962
  %7092 = vst.msk [vmem:[%s7 + $0x378] sm:$0xff] %vm6980, %v6963
  %7093 = vst.msk [vmem:[%s7 + $0x380] sm:$0xff] %vm6980, %v6964
  %7094 = vst.msk [vmem:[%s7 + $0x388] sm:$0xff] %vm6980, %v6965
  %7095 = vst.msk [vmem:[%s7 + $0x390] sm:$0xff] %vm6980, %v6966
  %7096 = vst.msk [vmem:[%s7 + $0x398] sm:$0xff] %vm6980, %v6967
  %7097 = vst.msk [vmem:[%s7 + $0x3a0] sm:$0xff] %vm6980, %v6968
  %7098 = vst.msk [vmem:[%s7 + $0x3a8] sm:$0xff] %vm6980, %v6969
  %7099 = vst.msk [vmem:[%s7 + $0x3b0] sm:$0xff] %vm6980, %v6970
  %7100 = vst.msk [vmem:[%s7 + $0x3b8] sm:$0xff] %vm6980, %v6971
  %7101 = vst.msk [vmem:[%s7 + $0x3c0] sm:$0xff] %vm6980, %v6972
  %7102 = vst.msk [vmem:[%s7 + $0x3c8] sm:$0xff] %vm6980, %v6973
  %7103 = vst.msk [vmem:[%s7 + $0x3d0] sm:$0xff] %vm6980, %v6974
  %7104 = vst.msk [vmem:[%s7 + $0x3d8] sm:$0xff] %vm6980, %v6975
  %7105 = vst.msk [vmem:[%s7 + $0x3e0] sm:$0xff] %vm6980, %v6976
  %7106 = vst.msk [vmem:[%s7 + $0x3e8] sm:$0xff] %vm6980, %v6977
  %7107 = vst.msk [vmem:[%s7 + $0x3f0] sm:$0xff] %vm6980, %v6978
  %7108 = vst.msk [vmem:[%s7 + $0x3f8] sm:$0xff] %vm6980, %v6979
  // Predicated region
  $region30: #{tpu_custom_call.1} parent=0 // pred_check
    _
  $region31: #{tpu_custom_call.1} parent=0 // pred_check_branch
    %7110 = sbr.rel (0) target = $region33
  $region32: #{tpu_custom_call.1} parent=0 // pred_region
    _
  $region33: #{tpu_custom_call.1} parent=0 // pred_fallthru
    _
  // Predicated region
  $region34: #{tpu_custom_call.1} parent=0 // pred_check
    _
  $region35: #{tpu_custom_call.1} parent=0 // pred_check_branch
    %7112 = sbr.rel (0) target = $region37
  $region36: #{tpu_custom_call.1} parent=0 // pred_region
    _
  $region37: #{tpu_custom_call.1} parent=0 // pred_fallthru
    _

</llo_original>
